<compile_context>
chip_gen: v6e
topology: v6e:2x2x1
jax: 0.10.0
libtpu: 0.0.40
codegen_flags: <defaults>
</compile_context>

<pallas_src>
import functools

import numpy as np

import jax
import jax.numpy as jnp
from jax import lax
from jax.experimental import pallas as pl
from jax.experimental.pallas import tpu as pltpu


# (Hi, Ho, Ci, Co) for the three conv layers (square images, k=5, s=2, VALID).
_LAYERS = ((44, 20, 3, 16), (20, 8, 16, 32), (8, 2, 32, 32))
_K = 5
_EPS = 1e-5


# ----------------------------- fused Pallas kernel ---------------------------

def _dqn_fused_kernel(
        xw_ref, xp_ref,
        s1_ref, wf1_ref, p1_ref, pt1_ref, g1_ref, bb1_ref,
        s2_ref, wf2_ref, p2_ref, pt2_ref, g2_ref, bb2_ref,
        s3_ref, wf3_ref, p3_ref, pt3_ref, g3_ref, bb3_ref,
        wp_ref, w5a_ref, w5b_ref, b5_ref, w6h_ref, ball_ref,
        o_ref, *, eps):
    f32, bf16 = jnp.float32, jnp.bfloat16

    def conv_bn_relu(x, s_ref, wf_ref, p_ref, pt_ref, g_ref, b_ref):
        # x: (B*Hi, Wi*Ci) bf16 -> (B*Ho, Wo*Co) f32, post BN(+batch stats)+ReLU.
        acc = jnp.zeros((s_ref.shape[1], wf_ref.shape[2]), f32)
        for kh in range(_K):                       # static unroll: 2 dots / tap
            rows = jnp.dot(s_ref[kh], x, preferred_element_type=f32).astype(bf16)
            acc = acc + jnp.dot(rows, wf_ref[kh], preferred_element_type=f32)
        # Training-mode BatchNorm2d folded to one FMA.  Single-pass f32 stats,
        # per-channel pooling over (batch*rows*width) via the 0/1 matmul P.
        # Conv bias omitted: it cancels exactly in (y - mean).
        co = g_ref.shape[1]
        inv_m = 1.0 / (acc.shape[0] * (acc.shape[1] // co))
        s1 = jnp.sum(acc, axis=0, keepdims=True)                     # (1, Lout)
        s2 = jnp.sum(acc * acc, axis=0, keepdims=True)
        mean = jnp.dot(s1, p_ref[...], preferred_element_type=f32) * inv_m
        ex2 = jnp.dot(s2, p_ref[...], preferred_element_type=f32) * inv_m
        var = jnp.maximum(ex2 - mean * mean, 0.0)                    # biased var
        scale = g_ref[...] * lax.rsqrt(var + eps)
        shift = b_ref[...] - mean * scale
        scale_w = jnp.dot(scale, pt_ref[...], preferred_element_type=f32)
        shift_w = jnp.dot(shift, pt_ref[...], preferred_element_type=f32)
        return jnp.maximum(acc * scale_w + shift_w, 0.0)

    x1 = xw_ref[...]                               # (B*44, 44*3) bf16
    y1 = conv_bn_relu(x1, s1_ref, wf1_ref, p1_ref, pt1_ref,
                      g1_ref, bb1_ref).astype(bf16)
    y2 = conv_bn_relu(y1, s2_ref, wf2_ref, p2_ref, pt2_ref,
                      g2_ref, bb2_ref).astype(bf16)
    y3 = conv_bn_relu(y2, s3_ref, wf3_ref, p3_ref, pt3_ref,
                      g3_ref, bb3_ref)             # (2*B, 64) f32, rows = (i, b)

    b = xp_ref.shape[0]
    y3b = y3.astype(bf16)
    # lin5 + ReLU:  w5 was pre-split by output-row i, so the "flatten" is just
    # two contiguous row slices of y3 -- no concat needed.
    h = (jnp.dot(y3b[0:b, :], w5a_ref[...], preferred_element_type=f32)
         + jnp.dot(y3b[b:2 * b, :], w5b_ref[...], preferred_element_type=f32)
         + b5_ref[...])
    h = jnp.maximum(h, 0.0).astype(bf16)
    # lin6 on the virtual concat [p, h]:  p-branch (lin1..lin4 + w6 p-half) is a
    # single precomputed matrix wp, so out = x_p @ wp + h @ w6h + const.
    o_ref[...] = (jnp.dot(xp_ref[...], wp_ref[...], preferred_element_type=jnp.float32)
                  + jnp.dot(h, w6h_ref[...], preferred_element_type=jnp.float32)
                  + ball_ref[...])


def _full_block(a):
    zeros = (0,) * a.ndim
    return pl.BlockSpec(a.shape, lambda i, z=zeros: z)


def dqn_forward(kp, x_p, x_img):
    """kp: prepared (kernel-layout) params; x_p: (B, ln); x_img: (B, 3, 44, 44)."""
    B, C, H, W = x_img.shape
    x_p = x_p.astype(jnp.float32)
    # NCHW -> wide layout (rows = b*H + h, lanes = w*C + c), bf16 for the MXU.
    x_wide = (x_img.astype(jnp.float32)
              .transpose(0, 2, 3, 1)
              .reshape(B * H, W * C)
              .astype(jnp.bfloat16))

    args = (x_wide, x_p,
            kp['s1'], kp['wf1'], kp['p1'], kp['pt1'], kp['g1'], kp['bb1'],
            kp['s2'], kp['wf2'], kp['p2'], kp['pt2'], kp['g2'], kp['bb2'],
            kp['s3'], kp['wf3'], kp['p3'], kp['pt3'], kp['g3'], kp['bb3'],
            kp['wp'], kp['w5a'], kp['w5b'], kp['b5'], kp['w6h'], kp['ball'])
    outputs = kp['ball'].shape[1]

    flops = 0
    for (hi, ho, ci, co) in _LAYERS:
        rin, rout, li, lo = B * hi, B * ho, hi * ci, ho * co
        flops += 2 * _K * (rout * rin * li + rout * li * lo)
    flops += 2 * B * (2 * 64 * 128 + 128 * outputs + x_p.shape[1] * outputs)
    bytes_accessed = sum(int(a.size) * a.dtype.itemsize for a in args) + B * outputs * 4

    return pl.pallas_call(
        functools.partial(_dqn_fused_kernel, eps=_EPS),
        grid=(1,),
        in_specs=[_full_block(a) for a in args],
        out_specs=pl.BlockSpec((B, outputs), lambda i: (0, 0)),
        out_shape=jax.ShapeDtypeStruct((B, outputs), jnp.float32),
        compiler_params=pltpu.CompilerParams(dimension_semantics=("arbitrary",)),
        cost_estimate=pl.CostEstimate(flops=flops, transcendentals=3 * 32,
                                      bytes_accessed=bytes_accessed),
    )(*args)


# --------------------- one-time weight preparation ----------------------------

def prepare_params(params, batch):
    """Torch-layout params -> kernel-layout constants (done once, outside jit)."""
    kp = {}
    for l, (hi, ho, ci, co) in enumerate(_LAYERS, start=1):
        w = np.asarray(params[f'cw{l}'], np.float32)           # OIHW (Co,Ci,5,5)
        li, lo = hi * ci, ho * co
        # Wfull_kh: kw taps + stride-2 width decimation folded into a
        # zero-padded (Wi*Ci, Wo*Co) matrix per kernel row kh.
        wf = np.zeros((_K, li, lo), np.float32)
        for kh in range(_K):
            for j in range(ho):                                 # Ho == Wo here
                for kw in range(_K):
                    r0 = (2 * j + kw) * ci
                    wf[kh, r0:r0 + ci, j * co:(j + 1) * co] = w[:, :, kh, kw].T
        kp[f'wf{l}'] = jnp.asarray(wf, jnp.bfloat16)
        # S_kh: 0/1 row-selection, output rows ordered (b, i) except the last
        # layer which uses (i, b) so lin5's halves are contiguous row slices.
        rin, rout = batch * hi, batch * ho
        s = np.zeros((_K, rout, rin), np.float32)
        for kh in range(_K):
            for b in range(batch):
                for i in range(ho):
                    r = (i * batch + b) if l == 3 else (b * ho + i)
                    s[kh, r, b * hi + 2 * i + kh] = 1.0
        kp[f's{l}'] = jnp.asarray(s, jnp.bfloat16)
        # Channel-pooling matrix (wide lanes -> channels) and its transpose.
        p = np.tile(np.eye(co, dtype=np.float32), (ho, 1))      # (Wo*Co, Co)
        kp[f'p{l}'] = jnp.asarray(p)
        kp[f'pt{l}'] = jnp.asarray(np.ascontiguousarray(p.T))
        kp[f'g{l}'] = jnp.asarray(np.asarray(params[f'g{l}'], np.float32).reshape(1, -1))
        kp[f'bb{l}'] = jnp.asarray(np.asarray(params[f'bb{l}'], np.float32).reshape(1, -1))
        # conv bias cb{l} intentionally dropped: cancels under training-mode BN.

    # p-branch: lin1..lin4 have no activations -> fold into one affine, then
    # fold its path through lin6's p-half as well.
    w6 = np.asarray(params['w6'], np.float32)                   # (256, outputs)
    w6p, w6h = w6[:128], w6[128:]
    wp = np.asarray(params['w1'], np.float32)
    bp = np.asarray(params['b1'], np.float32)
    for i in (2, 3, 4):
        wi = np.asarray(params[f'w{i}'], np.float32)
        bi = np.asarray(params[f'b{i}'], np.float32)
        bp = bp @ wi + bi
        wp = wp @ wi
    kp['wp'] = jnp.asarray(wp @ w6p)                            # (ln, outputs)
    kp['ball'] = jnp.asarray(
        (bp @ w6p + np.asarray(params['b6'], np.float32)).reshape(1, -1))
    # lin5: permute rows from torch's NCHW flatten (c*4 + i*2 + j) to the kernel
    # order (lanes j*32 + c), split by output-row i to avoid any concat.
    w5 = np.asarray(params['w5'], np.float32)                   # (128, 128)
    co3 = 32
    w5a = np.zeros((64, 128), np.float32)
    w5b = np.zeros((64, 128), np.float32)
    for i in range(2):
        dst = w5a if i == 0 else w5b
        for j in range(2):
            for c in range(co3):
                dst[j * co3 + c] = w5[c * 4 + i * 2 + j]
    kp['w5a'] = jnp.asarray(w5a, jnp.bfloat16)
    kp['w5b'] = jnp.asarray(w5b, jnp.bfloat16)
    kp['b5'] = jnp.asarray(np.asarray(params['b5'], np.float32).reshape(1, -1))
    kp['w6h'] = jnp.asarray(w6h, jnp.bfloat16)
    return kp


# --------------------------- pure-JAX reference -------------------------------

def dqn_reference(params, x_p, x_img, eps=_EPS):
    p = x_p.astype(jnp.float32)
    for i in (1, 2, 3, 4):
        p = p @ params[f'w{i}'] + params[f'b{i}']
    img = x_img.astype(jnp.float32)
    for idx in (1, 2, 3):
        w = params[f'cw{idx}']
        y = lax.conv_general_dilated(img, w, (2, 2), 'VALID',
                                     dimension_numbers=('NCHW', 'OIHW', 'NCHW'))
        y = y + params[f'cb{idx}'].reshape(1, -1, 1, 1)
        mean = y.mean(axis=(0, 2, 3), keepdims=True)
        var = ((y - mean) ** 2).mean(axis=(0, 2, 3), keepdims=True)
        y = (y - mean) / jnp.sqrt(var + eps)
        y = y * params[f'g{idx}'].reshape(1, -1, 1, 1) \
              + params[f'bb{idx}'].reshape(1, -1, 1, 1)
        img = jnp.maximum(y, 0.0)
    flat = img.reshape(img.shape[0], -1)                        # torch NCHW flatten
    h = jnp.maximum(flat @ params['w5'] + params['b5'], 0.0)
    combined = jnp.concatenate([p, h], axis=1)
    return combined @ params['w6'] + params['b6']


# ------------------------------- params ---------------------------------------

def init_params(key, ln, outputs):
    def uniform(k, shape, fan_in):
        bound = 1.0 / (fan_in ** 0.5)
        return jax.random.uniform(k, shape, jnp.float32, -bound, bound)

    keys = iter(jax.random.split(key, 32))
    params = {}
    # Linear weights stored transposed: (in, out)
    lin_dims = [(ln, 32), (32, 64), (64, 128), (128, 128), (128, 128),
                (256, outputs)]
    for i, (fi, fo) in enumerate(lin_dims, start=1):
        params[f'w{i}'] = uniform(next(keys), (fi, fo), fi)
        params[f'b{i}'] = uniform(next(keys), (fo,), fi)
    # Conv weights in OIHW (torch layout)
    conv_dims = [(16, 3), (32, 16), (32, 32)]
    for i, (co, ci) in enumerate(conv_dims, start=1):
        fan_in = ci * 5 * 5
        params[f'cw{i}'] = uniform(next(keys), (co, ci, 5, 5), fan_in)
        params[f'cb{i}'] = uniform(next(keys), (co,), fan_in)
        params[f'g{i}'] = 1.0 + 0.1 * jax.random.normal(next(keys), (co,), jnp.float32)
        params[f'bb{i}'] = 0.1 * jax.random.normal(next(keys), (co,), jnp.float32)
    return params


# --------------------------------- main ----------------------------------------

if __name__ == "__main__":
    # Image must be 44x44 so that after three (k=5, s=2) convs the feature map
    # is 32 x 2 x 2 = 128 features, matching lin5's input size.
    B, LN, OUTPUTS = 2, 8, 4
    H = W = 44

    key = jax.random.PRNGKey(0)
    kxp, kimg, kparams = jax.random.split(key, 3)
    x_p = jax.random.normal(kxp, (B, LN), jnp.float32)
    x_img = jax.random.normal(kimg, (B, 3, H, W), jnp.float32)
    params = init_params(kparams, LN, OUTPUTS)
    kp = prepare_params(params, B)              # one-time weight prep

    out = jax.jit(dqn_forward)(kp, x_p, x_img)
    out = jax.block_until_ready(out)

    ref = jax.jit(dqn_reference)(params, x_p, x_img)
    ref = jax.block_until_ready(ref)

    assert out.shape == (B, OUTPUTS), out.shape
    # Looser tolerance than the all-f32 version: conv-path MXU operands are
    # bf16 (per perf review); structural bugs would be orders larger than this.
    assert jnp.allclose(out, ref, atol=1e-1, rtol=1e-1), (out, ref)
    print("KERNEL_OK")
</pallas_src>

<mosaic_0001>
module attributes {stable_mosaic.version = 11 : i64} {
  func.func @_dqn_fused_kernel(%arg0: i32, %arg1: memref<88x132xbf16, #tpu.memory_space<vmem>>, %arg2: memref<2x8xf32, #tpu.memory_space<vmem>>, %arg3: memref<5x40x88xbf16, #tpu.memory_space<vmem>>, %arg4: memref<5x132x320xbf16, #tpu.memory_space<vmem>>, %arg5: memref<320x16xf32, #tpu.memory_space<vmem>>, %arg6: memref<16x320xf32, #tpu.memory_space<vmem>>, %arg7: memref<1x16xf32, #tpu.memory_space<vmem>>, %arg8: memref<1x16xf32, #tpu.memory_space<vmem>>, %arg9: memref<5x16x40xbf16, #tpu.memory_space<vmem>>, %arg10: memref<5x320x256xbf16, #tpu.memory_space<vmem>>, %arg11: memref<256x32xf32, #tpu.memory_space<vmem>>, %arg12: memref<32x256xf32, #tpu.memory_space<vmem>>, %arg13: memref<1x32xf32, #tpu.memory_space<vmem>>, %arg14: memref<1x32xf32, #tpu.memory_space<vmem>>, %arg15: memref<5x4x16xbf16, #tpu.memory_space<vmem>>, %arg16: memref<5x256x64xbf16, #tpu.memory_space<vmem>>, %arg17: memref<64x32xf32, #tpu.memory_space<vmem>>, %arg18: memref<32x64xf32, #tpu.memory_space<vmem>>, %arg19: memref<1x32xf32, #tpu.memory_space<vmem>>, %arg20: memref<1x32xf32, #tpu.memory_space<vmem>>, %arg21: memref<8x4xf32, #tpu.memory_space<vmem>>, %arg22: memref<64x128xbf16, #tpu.memory_space<vmem>>, %arg23: memref<64x128xbf16, #tpu.memory_space<vmem>>, %arg24: memref<1x128xf32, #tpu.memory_space<vmem>>, %arg25: memref<128x4xbf16, #tpu.memory_space<vmem>>, %arg26: memref<1x4xf32, #tpu.memory_space<vmem>>, %arg27: memref<2x4xf32, #tpu.memory_space<vmem>>) attributes {dimension_semantics = [#tpu.dimension_semantics<arbitrary>], iteration_bounds = array<i64: 1>, scalar_prefetch = 0 : i64, scratch_operands = 0 : i64, tpu.core_type = #tpu.core_type<tc>, window_params = [{pipeline_mode = #tpu.pipeline_mode<synchronous>, transform_indices = @transform_0, window_bounds = array<i64: 88, 132>}, {pipeline_mode = #tpu.pipeline_mode<synchronous>, transform_indices = @transform_1, window_bounds = array<i64: 2, 8>}, {pipeline_mode = #tpu.pipeline_mode<synchronous>, transform_indices = @transform_2, window_bounds = array<i64: 5, 40, 88>}, {pipeline_mode = #tpu.pipeline_mode<synchronous>, transform_indices = @transform_3, window_bounds = array<i64: 5, 132, 320>}, {pipeline_mode = #tpu.pipeline_mode<synchronous>, transform_indices = @transform_4, window_bounds = array<i64: 320, 16>}, {pipeline_mode = #tpu.pipeline_mode<synchronous>, transform_indices = @transform_5, window_bounds = array<i64: 16, 320>}, {pipeline_mode = #tpu.pipeline_mode<synchronous>, transform_indices = @transform_6, window_bounds = array<i64: 1, 16>}, {pipeline_mode = #tpu.pipeline_mode<synchronous>, transform_indices = @transform_7, window_bounds = array<i64: 1, 16>}, {pipeline_mode = #tpu.pipeline_mode<synchronous>, transform_indices = @transform_8, window_bounds = array<i64: 5, 16, 40>}, {pipeline_mode = #tpu.pipeline_mode<synchronous>, transform_indices = @transform_9, window_bounds = array<i64: 5, 320, 256>}, {pipeline_mode = #tpu.pipeline_mode<synchronous>, transform_indices = @transform_10, window_bounds = array<i64: 256, 32>}, {pipeline_mode = #tpu.pipeline_mode<synchronous>, transform_indices = @transform_11, window_bounds = array<i64: 32, 256>}, {pipeline_mode = #tpu.pipeline_mode<synchronous>, transform_indices = @transform_12, window_bounds = array<i64: 1, 32>}, {pipeline_mode = #tpu.pipeline_mode<synchronous>, transform_indices = @transform_13, window_bounds = array<i64: 1, 32>}, {pipeline_mode = #tpu.pipeline_mode<synchronous>, transform_indices = @transform_14, window_bounds = array<i64: 5, 4, 16>}, {pipeline_mode = #tpu.pipeline_mode<synchronous>, transform_indices = @transform_15, window_bounds = array<i64: 5, 256, 64>}, {pipeline_mode = #tpu.pipeline_mode<synchronous>, transform_indices = @transform_16, window_bounds = array<i64: 64, 32>}, {pipeline_mode = #tpu.pipeline_mode<synchronous>, transform_indices = @transform_17, window_bounds = array<i64: 32, 64>}, {pipeline_mode = #tpu.pipeline_mode<synchronous>, transform_indices = @transform_18, window_bounds = array<i64: 1, 32>}, {pipeline_mode = #tpu.pipeline_mode<synchronous>, transform_indices = @transform_19, window_bounds = array<i64: 1, 32>}, {pipeline_mode = #tpu.pipeline_mode<synchronous>, transform_indices = @transform_20, window_bounds = array<i64: 8, 4>}, {pipeline_mode = #tpu.pipeline_mode<synchronous>, transform_indices = @transform_21, window_bounds = array<i64: 64, 128>}, {pipeline_mode = #tpu.pipeline_mode<synchronous>, transform_indices = @transform_22, window_bounds = array<i64: 64, 128>}, {pipeline_mode = #tpu.pipeline_mode<synchronous>, transform_indices = @transform_23, window_bounds = array<i64: 1, 128>}, {pipeline_mode = #tpu.pipeline_mode<synchronous>, transform_indices = @transform_24, window_bounds = array<i64: 128, 4>}, {pipeline_mode = #tpu.pipeline_mode<synchronous>, transform_indices = @transform_25, window_bounds = array<i64: 1, 4>}, {pipeline_mode = #tpu.pipeline_mode<synchronous>, transform_indices = @transform_26, window_bounds = array<i64: 2, 4>}]} {
    %c0 = arith.constant 0 : index
    %c0_0 = arith.constant 0 : index
    %0 = vector.load %arg1[%c0, %c0_0] : memref<88x132xbf16, #tpu.memory_space<vmem>>, vector<88x132xbf16>
    %cst = arith.constant 0.000000e+00 : f32
    %1 = vector.broadcast %cst : f32 to vector<40x320xf32>
    %c0_1 = arith.constant 0 : index
    %c0_2 = arith.constant 0 : index
    %c0_3 = arith.constant 0 : index
    %2 = vector.load %arg3[%c0_1, %c0_2, %c0_3] : memref<5x40x88xbf16, #tpu.memory_space<vmem>>, vector<1x40x88xbf16>
    %3 = vector.shape_cast %2 : vector<1x40x88xbf16> to vector<40x88xbf16>
    %cst_4 = arith.constant dense<0.000000e+00> : vector<40x132xf32>
    %4 = tpu.matmul %3, %0, %cst_4 {dimension_numbers = #tpu.dot_dimension_numbers<[1], [0], [0], [1], [0, 0, 1, 1], [], []>} : vector<40x88xbf16>, vector<88x132xbf16>, vector<40x132xf32> -> vector<40x132xf32>
    %5 = arith.truncf %4 : vector<40x132xf32> to vector<40x132xbf16>
    %c0_5 = arith.constant 0 : index
    %c0_6 = arith.constant 0 : index
    %c0_7 = arith.constant 0 : index
    %6 = vector.load %arg4[%c0_5, %c0_6, %c0_7] : memref<5x132x320xbf16, #tpu.memory_space<vmem>>, vector<1x132x320xbf16>
    %7 = vector.shape_cast %6 : vector<1x132x320xbf16> to vector<132x320xbf16>
    %cst_8 = arith.constant dense<0.000000e+00> : vector<40x320xf32>
    %8 = tpu.matmul %5, %7, %cst_8 {dimension_numbers = #tpu.dot_dimension_numbers<[1], [0], [0], [1], [0, 0, 1, 1], [], []>} : vector<40x132xbf16>, vector<132x320xbf16>, vector<40x320xf32> -> vector<40x320xf32>
    %9 = arith.addf %1, %8 : vector<40x320xf32>
    %c1 = arith.constant 1 : index
    %c0_9 = arith.constant 0 : index
    %c0_10 = arith.constant 0 : index
    %10 = vector.load %arg3[%c1, %c0_9, %c0_10] : memref<5x40x88xbf16, #tpu.memory_space<vmem>>, vector<1x40x88xbf16>
    %11 = vector.shape_cast %10 : vector<1x40x88xbf16> to vector<40x88xbf16>
    %cst_11 = arith.constant dense<0.000000e+00> : vector<40x132xf32>
    %12 = tpu.matmul %11, %0, %cst_11 {dimension_numbers = #tpu.dot_dimension_numbers<[1], [0], [0], [1], [0, 0, 1, 1], [], []>} : vector<40x88xbf16>, vector<88x132xbf16>, vector<40x132xf32> -> vector<40x132xf32>
    %13 = arith.truncf %12 : vector<40x132xf32> to vector<40x132xbf16>
    %c1_12 = arith.constant 1 : index
    %c0_13 = arith.constant 0 : index
    %c0_14 = arith.constant 0 : index
    %14 = vector.load %arg4[%c1_12, %c0_13, %c0_14] : memref<5x132x320xbf16, #tpu.memory_space<vmem>>, vector<1x132x320xbf16>
    %15 = vector.shape_cast %14 : vector<1x132x320xbf16> to vector<132x320xbf16>
    %cst_15 = arith.constant dense<0.000000e+00> : vector<40x320xf32>
    %16 = tpu.matmul %13, %15, %cst_15 {dimension_numbers = #tpu.dot_dimension_numbers<[1], [0], [0], [1], [0, 0, 1, 1], [], []>} : vector<40x132xbf16>, vector<132x320xbf16>, vector<40x320xf32> -> vector<40x320xf32>
    %17 = arith.addf %9, %16 : vector<40x320xf32>
    %c2 = arith.constant 2 : index
    %c0_16 = arith.constant 0 : index
    %c0_17 = arith.constant 0 : index
    %18 = vector.load %arg3[%c2, %c0_16, %c0_17] : memref<5x40x88xbf16, #tpu.memory_space<vmem>>, vector<1x40x88xbf16>
    %19 = vector.shape_cast %18 : vector<1x40x88xbf16> to vector<40x88xbf16>
    %cst_18 = arith.constant dense<0.000000e+00> : vector<40x132xf32>
    %20 = tpu.matmul %19, %0, %cst_18 {dimension_numbers = #tpu.dot_dimension_numbers<[1], [0], [0], [1], [0, 0, 1, 1], [], []>} : vector<40x88xbf16>, vector<88x132xbf16>, vector<40x132xf32> -> vector<40x132xf32>
    %21 = arith.truncf %20 : vector<40x132xf32> to vector<40x132xbf16>
    %c2_19 = arith.constant 2 : index
    %c0_20 = arith.constant 0 : index
    %c0_21 = arith.constant 0 : index
    %22 = vector.load %arg4[%c2_19, %c0_20, %c0_21] : memref<5x132x320xbf16, #tpu.memory_space<vmem>>, vector<1x132x320xbf16>
    %23 = vector.shape_cast %22 : vector<1x132x320xbf16> to vector<132x320xbf16>
    %cst_22 = arith.constant dense<0.000000e+00> : vector<40x320xf32>
    %24 = tpu.matmul %21, %23, %cst_22 {dimension_numbers = #tpu.dot_dimension_numbers<[1], [0], [0], [1], [0, 0, 1, 1], [], []>} : vector<40x132xbf16>, vector<132x320xbf16>, vector<40x320xf32> -> vector<40x320xf32>
    %25 = arith.addf %17, %24 : vector<40x320xf32>
    %c3 = arith.constant 3 : index
    %c0_23 = arith.constant 0 : index
    %c0_24 = arith.constant 0 : index
    %26 = vector.load %arg3[%c3, %c0_23, %c0_24] : memref<5x40x88xbf16, #tpu.memory_space<vmem>>, vector<1x40x88xbf16>
    %27 = vector.shape_cast %26 : vector<1x40x88xbf16> to vector<40x88xbf16>
    %cst_25 = arith.constant dense<0.000000e+00> : vector<40x132xf32>
    %28 = tpu.matmul %27, %0, %cst_25 {dimension_numbers = #tpu.dot_dimension_numbers<[1], [0], [0], [1], [0, 0, 1, 1], [], []>} : vector<40x88xbf16>, vector<88x132xbf16>, vector<40x132xf32> -> vector<40x132xf32>
    %29 = arith.truncf %28 : vector<40x132xf32> to vector<40x132xbf16>
    %c3_26 = arith.constant 3 : index
    %c0_27 = arith.constant 0 : index
    %c0_28 = arith.constant 0 : index
    %30 = vector.load %arg4[%c3_26, %c0_27, %c0_28] : memref<5x132x320xbf16, #tpu.memory_space<vmem>>, vector<1x132x320xbf16>
    %31 = vector.shape_cast %30 : vector<1x132x320xbf16> to vector<132x320xbf16>
    %cst_29 = arith.constant dense<0.000000e+00> : vector<40x320xf32>
    %32 = tpu.matmul %29, %31, %cst_29 {dimension_numbers = #tpu.dot_dimension_numbers<[1], [0], [0], [1], [0, 0, 1, 1], [], []>} : vector<40x132xbf16>, vector<132x320xbf16>, vector<40x320xf32> -> vector<40x320xf32>
    %33 = arith.addf %25, %32 : vector<40x320xf32>
    %c4 = arith.constant 4 : index
    %c0_30 = arith.constant 0 : index
    %c0_31 = arith.constant 0 : index
    %34 = vector.load %arg3[%c4, %c0_30, %c0_31] : memref<5x40x88xbf16, #tpu.memory_space<vmem>>, vector<1x40x88xbf16>
    %35 = vector.shape_cast %34 : vector<1x40x88xbf16> to vector<40x88xbf16>
    %cst_32 = arith.constant dense<0.000000e+00> : vector<40x132xf32>
    %36 = tpu.matmul %35, %0, %cst_32 {dimension_numbers = #tpu.dot_dimension_numbers<[1], [0], [0], [1], [0, 0, 1, 1], [], []>} : vector<40x88xbf16>, vector<88x132xbf16>, vector<40x132xf32> -> vector<40x132xf32>
    %37 = arith.truncf %36 : vector<40x132xf32> to vector<40x132xbf16>
    %c4_33 = arith.constant 4 : index
    %c0_34 = arith.constant 0 : index
    %c0_35 = arith.constant 0 : index
    %38 = vector.load %arg4[%c4_33, %c0_34, %c0_35] : memref<5x132x320xbf16, #tpu.memory_space<vmem>>, vector<1x132x320xbf16>
    %39 = vector.shape_cast %38 : vector<1x132x320xbf16> to vector<132x320xbf16>
    %cst_36 = arith.constant dense<0.000000e+00> : vector<40x320xf32>
    %40 = tpu.matmul %37, %39, %cst_36 {dimension_numbers = #tpu.dot_dimension_numbers<[1], [0], [0], [1], [0, 0, 1, 1], [], []>} : vector<40x132xbf16>, vector<132x320xbf16>, vector<40x320xf32> -> vector<40x320xf32>
    %41 = arith.addf %33, %40 : vector<40x320xf32>
    %cst_37 = arith.constant dense<0.000000e+00> : vector<320xf32>
    %42 = vector.multi_reduction <add>, %41, %cst_37 [0] : vector<40x320xf32> to vector<320xf32>
    %43 = vector.shape_cast %42 : vector<320xf32> to vector<1x320xf32>
    %44 = arith.mulf %41, %41 : vector<40x320xf32>
    %cst_38 = arith.constant dense<0.000000e+00> : vector<320xf32>
    %45 = vector.multi_reduction <add>, %44, %cst_38 [0] : vector<40x320xf32> to vector<320xf32>
    %46 = vector.shape_cast %45 : vector<320xf32> to vector<1x320xf32>
    %c0_39 = arith.constant 0 : index
    %c0_40 = arith.constant 0 : index
    %47 = vector.load %arg5[%c0_39, %c0_40] : memref<320x16xf32, #tpu.memory_space<vmem>>, vector<320x16xf32>
    %cst_41 = arith.constant dense<0.000000e+00> : vector<1x16xf32>
    %48 = tpu.matmul %43, %47, %cst_41 {dimension_numbers = #tpu.dot_dimension_numbers<[1], [0], [0], [1], [0, 0, 1, 1], [], []>} : vector<1x320xf32>, vector<320x16xf32>, vector<1x16xf32> -> vector<1x16xf32>
    %cst_42 = arith.constant 1.250000e-03 : f32
    %49 = vector.broadcast %cst_42 : f32 to vector<1x16xf32>
    %50 = arith.mulf %48, %49 : vector<1x16xf32>
    %c0_43 = arith.constant 0 : index
    %c0_44 = arith.constant 0 : index
    %51 = vector.load %arg5[%c0_43, %c0_44] : memref<320x16xf32, #tpu.memory_space<vmem>>, vector<320x16xf32>
    %cst_45 = arith.constant dense<0.000000e+00> : vector<1x16xf32>
    %52 = tpu.matmul %46, %51, %cst_45 {dimension_numbers = #tpu.dot_dimension_numbers<[1], [0], [0], [1], [0, 0, 1, 1], [], []>} : vector<1x320xf32>, vector<320x16xf32>, vector<1x16xf32> -> vector<1x16xf32>
    %cst_46 = arith.constant 1.250000e-03 : f32
    %53 = vector.broadcast %cst_46 : f32 to vector<1x16xf32>
    %54 = arith.mulf %52, %53 : vector<1x16xf32>
    %55 = arith.mulf %50, %50 : vector<1x16xf32>
    %56 = arith.subf %54, %55 : vector<1x16xf32>
    %cst_47 = arith.constant 0.000000e+00 : f32
    %57 = vector.broadcast %cst_47 : f32 to vector<1x16xf32>
    %58 = arith.maximumf %56, %57 : vector<1x16xf32>
    %c0_48 = arith.constant 0 : index
    %c0_49 = arith.constant 0 : index
    %59 = vector.load %arg7[%c0_48, %c0_49] : memref<1x16xf32, #tpu.memory_space<vmem>>, vector<1x16xf32>
    %cst_50 = arith.constant 9.99999974E-6 : f32
    %60 = vector.broadcast %cst_50 : f32 to vector<1x16xf32>
    %61 = arith.addf %58, %60 : vector<1x16xf32>
    %62 = math.rsqrt %61 : vector<1x16xf32>
    %63 = arith.mulf %59, %62 : vector<1x16xf32>
    %c0_51 = arith.constant 0 : index
    %c0_52 = arith.constant 0 : index
    %64 = vector.load %arg8[%c0_51, %c0_52] : memref<1x16xf32, #tpu.memory_space<vmem>>, vector<1x16xf32>
    %65 = arith.mulf %50, %63 : vector<1x16xf32>
    %66 = arith.subf %64, %65 : vector<1x16xf32>
    %c0_53 = arith.constant 0 : index
    %c0_54 = arith.constant 0 : index
    %67 = vector.load %arg6[%c0_53, %c0_54] : memref<16x320xf32, #tpu.memory_space<vmem>>, vector<16x320xf32>
    %cst_55 = arith.constant dense<0.000000e+00> : vector<1x320xf32>
    %68 = tpu.matmul %63, %67, %cst_55 {dimension_numbers = #tpu.dot_dimension_numbers<[1], [0], [0], [1], [0, 0, 1, 1], [], []>} : vector<1x16xf32>, vector<16x320xf32>, vector<1x320xf32> -> vector<1x320xf32>
    %c0_56 = arith.constant 0 : index
    %c0_57 = arith.constant 0 : index
    %69 = vector.load %arg6[%c0_56, %c0_57] : memref<16x320xf32, #tpu.memory_space<vmem>>, vector<16x320xf32>
    %cst_58 = arith.constant dense<0.000000e+00> : vector<1x320xf32>
    %70 = tpu.matmul %66, %69, %cst_58 {dimension_numbers = #tpu.dot_dimension_numbers<[1], [0], [0], [1], [0, 0, 1, 1], [], []>} : vector<1x16xf32>, vector<16x320xf32>, vector<1x320xf32> -> vector<1x320xf32>
    %71 = vector.broadcast %68 : vector<1x320xf32> to vector<40x320xf32>
    %72 = arith.mulf %41, %71 : vector<40x320xf32>
    %73 = vector.broadcast %70 : vector<1x320xf32> to vector<40x320xf32>
    %74 = arith.addf %72, %73 : vector<40x320xf32>
    %cst_59 = arith.constant 0.000000e+00 : f32
    %75 = vector.broadcast %cst_59 : f32 to vector<40x320xf32>
    %76 = arith.maximumf %74, %75 : vector<40x320xf32>
    %77 = arith.truncf %76 : vector<40x320xf32> to vector<40x320xbf16>
    %cst_60 = arith.constant 0.000000e+00 : f32
    %78 = vector.broadcast %cst_60 : f32 to vector<16x256xf32>
    %c0_61 = arith.constant 0 : index
    %c0_62 = arith.constant 0 : index
    %c0_63 = arith.constant 0 : index
    %79 = vector.load %arg9[%c0_61, %c0_62, %c0_63] : memref<5x16x40xbf16, #tpu.memory_space<vmem>>, vector<1x16x40xbf16>
    %80 = vector.shape_cast %79 : vector<1x16x40xbf16> to vector<16x40xbf16>
    %cst_64 = arith.constant dense<0.000000e+00> : vector<16x320xf32>
    %81 = tpu.matmul %80, %77, %cst_64 {dimension_numbers = #tpu.dot_dimension_numbers<[1], [0], [0], [1], [0, 0, 1, 1], [], []>} : vector<16x40xbf16>, vector<40x320xbf16>, vector<16x320xf32> -> vector<16x320xf32>
    %82 = arith.truncf %81 : vector<16x320xf32> to vector<16x320xbf16>
    %c0_65 = arith.constant 0 : index
    %c0_66 = arith.constant 0 : index
    %c0_67 = arith.constant 0 : index
    %83 = vector.load %arg10[%c0_65, %c0_66, %c0_67] : memref<5x320x256xbf16, #tpu.memory_space<vmem>>, vector<1x320x256xbf16>
    %84 = vector.shape_cast %83 : vector<1x320x256xbf16> to vector<320x256xbf16>
    %cst_68 = arith.constant dense<0.000000e+00> : vector<16x256xf32>
    %85 = tpu.matmul %82, %84, %cst_68 {dimension_numbers = #tpu.dot_dimension_numbers<[1], [0], [0], [1], [0, 0, 1, 1], [], []>} : vector<16x320xbf16>, vector<320x256xbf16>, vector<16x256xf32> -> vector<16x256xf32>
    %86 = arith.addf %78, %85 : vector<16x256xf32>
    %c1_69 = arith.constant 1 : index
    %c0_70 = arith.constant 0 : index
    %c0_71 = arith.constant 0 : index
    %87 = vector.load %arg9[%c1_69, %c0_70, %c0_71] : memref<5x16x40xbf16, #tpu.memory_space<vmem>>, vector<1x16x40xbf16>
    %88 = vector.shape_cast %87 : vector<1x16x40xbf16> to vector<16x40xbf16>
    %cst_72 = arith.constant dense<0.000000e+00> : vector<16x320xf32>
    %89 = tpu.matmul %88, %77, %cst_72 {dimension_numbers = #tpu.dot_dimension_numbers<[1], [0], [0], [1], [0, 0, 1, 1], [], []>} : vector<16x40xbf16>, vector<40x320xbf16>, vector<16x320xf32> -> vector<16x320xf32>
    %90 = arith.truncf %89 : vector<16x320xf32> to vector<16x320xbf16>
    %c1_73 = arith.constant 1 : index
    %c0_74 = arith.constant 0 : index
    %c0_75 = arith.constant 0 : index
    %91 = vector.load %arg10[%c1_73, %c0_74, %c0_75] : memref<5x320x256xbf16, #tpu.memory_space<vmem>>, vector<1x320x256xbf16>
    %92 = vector.shape_cast %91 : vector<1x320x256xbf16> to vector<320x256xbf16>
    %cst_76 = arith.constant dense<0.000000e+00> : vector<16x256xf32>
    %93 = tpu.matmul %90, %92, %cst_76 {dimension_numbers = #tpu.dot_dimension_numbers<[1], [0], [0], [1], [0, 0, 1, 1], [], []>} : vector<16x320xbf16>, vector<320x256xbf16>, vector<16x256xf32> -> vector<16x256xf32>
    %94 = arith.addf %86, %93 : vector<16x256xf32>
    %c2_77 = arith.constant 2 : index
    %c0_78 = arith.constant 0 : index
    %c0_79 = arith.constant 0 : index
    %95 = vector.load %arg9[%c2_77, %c0_78, %c0_79] : memref<5x16x40xbf16, #tpu.memory_space<vmem>>, vector<1x16x40xbf16>
    %96 = vector.shape_cast %95 : vector<1x16x40xbf16> to vector<16x40xbf16>
    %cst_80 = arith.constant dense<0.000000e+00> : vector<16x320xf32>
    %97 = tpu.matmul %96, %77, %cst_80 {dimension_numbers = #tpu.dot_dimension_numbers<[1], [0], [0], [1], [0, 0, 1, 1], [], []>} : vector<16x40xbf16>, vector<40x320xbf16>, vector<16x320xf32> -> vector<16x320xf32>
    %98 = arith.truncf %97 : vector<16x320xf32> to vector<16x320xbf16>
    %c2_81 = arith.constant 2 : index
    %c0_82 = arith.constant 0 : index
    %c0_83 = arith.constant 0 : index
    %99 = vector.load %arg10[%c2_81, %c0_82, %c0_83] : memref<5x320x256xbf16, #tpu.memory_space<vmem>>, vector<1x320x256xbf16>
    %100 = vector.shape_cast %99 : vector<1x320x256xbf16> to vector<320x256xbf16>
    %cst_84 = arith.constant dense<0.000000e+00> : vector<16x256xf32>
    %101 = tpu.matmul %98, %100, %cst_84 {dimension_numbers = #tpu.dot_dimension_numbers<[1], [0], [0], [1], [0, 0, 1, 1], [], []>} : vector<16x320xbf16>, vector<320x256xbf16>, vector<16x256xf32> -> vector<16x256xf32>
    %102 = arith.addf %94, %101 : vector<16x256xf32>
    %c3_85 = arith.constant 3 : index
    %c0_86 = arith.constant 0 : index
    %c0_87 = arith.constant 0 : index
    %103 = vector.load %arg9[%c3_85, %c0_86, %c0_87] : memref<5x16x40xbf16, #tpu.memory_space<vmem>>, vector<1x16x40xbf16>
    %104 = vector.shape_cast %103 : vector<1x16x40xbf16> to vector<16x40xbf16>
    %cst_88 = arith.constant dense<0.000000e+00> : vector<16x320xf32>
    %105 = tpu.matmul %104, %77, %cst_88 {dimension_numbers = #tpu.dot_dimension_numbers<[1], [0], [0], [1], [0, 0, 1, 1], [], []>} : vector<16x40xbf16>, vector<40x320xbf16>, vector<16x320xf32> -> vector<16x320xf32>
    %106 = arith.truncf %105 : vector<16x320xf32> to vector<16x320xbf16>
    %c3_89 = arith.constant 3 : index
    %c0_90 = arith.constant 0 : index
    %c0_91 = arith.constant 0 : index
    %107 = vector.load %arg10[%c3_89, %c0_90, %c0_91] : memref<5x320x256xbf16, #tpu.memory_space<vmem>>, vector<1x320x256xbf16>
    %108 = vector.shape_cast %107 : vector<1x320x256xbf16> to vector<320x256xbf16>
    %cst_92 = arith.constant dense<0.000000e+00> : vector<16x256xf32>
    %109 = tpu.matmul %106, %108, %cst_92 {dimension_numbers = #tpu.dot_dimension_numbers<[1], [0], [0], [1], [0, 0, 1, 1], [], []>} : vector<16x320xbf16>, vector<320x256xbf16>, vector<16x256xf32> -> vector<16x256xf32>
    %110 = arith.addf %102, %109 : vector<16x256xf32>
    %c4_93 = arith.constant 4 : index
    %c0_94 = arith.constant 0 : index
    %c0_95 = arith.constant 0 : index
    %111 = vector.load %arg9[%c4_93, %c0_94, %c0_95] : memref<5x16x40xbf16, #tpu.memory_space<vmem>>, vector<1x16x40xbf16>
    %112 = vector.shape_cast %111 : vector<1x16x40xbf16> to vector<16x40xbf16>
    %cst_96 = arith.constant dense<0.000000e+00> : vector<16x320xf32>
    %113 = tpu.matmul %112, %77, %cst_96 {dimension_numbers = #tpu.dot_dimension_numbers<[1], [0], [0], [1], [0, 0, 1, 1], [], []>} : vector<16x40xbf16>, vector<40x320xbf16>, vector<16x320xf32> -> vector<16x320xf32>
    %114 = arith.truncf %113 : vector<16x320xf32> to vector<16x320xbf16>
    %c4_97 = arith.constant 4 : index
    %c0_98 = arith.constant 0 : index
    %c0_99 = arith.constant 0 : index
    %115 = vector.load %arg10[%c4_97, %c0_98, %c0_99] : memref<5x320x256xbf16, #tpu.memory_space<vmem>>, vector<1x320x256xbf16>
    %116 = vector.shape_cast %115 : vector<1x320x256xbf16> to vector<320x256xbf16>
    %cst_100 = arith.constant dense<0.000000e+00> : vector<16x256xf32>
    %117 = tpu.matmul %114, %116, %cst_100 {dimension_numbers = #tpu.dot_dimension_numbers<[1], [0], [0], [1], [0, 0, 1, 1], [], []>} : vector<16x320xbf16>, vector<320x256xbf16>, vector<16x256xf32> -> vector<16x256xf32>
    %118 = arith.addf %110, %117 : vector<16x256xf32>
    %cst_101 = arith.constant dense<0.000000e+00> : vector<256xf32>
    %119 = vector.multi_reduction <add>, %118, %cst_101 [0] : vector<16x256xf32> to vector<256xf32>
    %120 = vector.shape_cast %119 : vector<256xf32> to vector<1x256xf32>
    %121 = arith.mulf %118, %118 : vector<16x256xf32>
    %cst_102 = arith.constant dense<0.000000e+00> : vector<256xf32>
    %122 = vector.multi_reduction <add>, %121, %cst_102 [0] : vector<16x256xf32> to vector<256xf32>
    %123 = vector.shape_cast %122 : vector<256xf32> to vector<1x256xf32>
    %c0_103 = arith.constant 0 : index
    %c0_104 = arith.constant 0 : index
    %124 = vector.load %arg11[%c0_103, %c0_104] : memref<256x32xf32, #tpu.memory_space<vmem>>, vector<256x32xf32>
    %cst_105 = arith.constant dense<0.000000e+00> : vector<1x32xf32>
    %125 = tpu.matmul %120, %124, %cst_105 {dimension_numbers = #tpu.dot_dimension_numbers<[1], [0], [0], [1], [0, 0, 1, 1], [], []>} : vector<1x256xf32>, vector<256x32xf32>, vector<1x32xf32> -> vector<1x32xf32>
    %cst_106 = arith.constant 7.812500e-03 : f32
    %126 = vector.broadcast %cst_106 : f32 to vector<1x32xf32>
    %127 = arith.mulf %125, %126 : vector<1x32xf32>
    %c0_107 = arith.constant 0 : index
    %c0_108 = arith.constant 0 : index
    %128 = vector.load %arg11[%c0_107, %c0_108] : memref<256x32xf32, #tpu.memory_space<vmem>>, vector<256x32xf32>
    %cst_109 = arith.constant dense<0.000000e+00> : vector<1x32xf32>
    %129 = tpu.matmul %123, %128, %cst_109 {dimension_numbers = #tpu.dot_dimension_numbers<[1], [0], [0], [1], [0, 0, 1, 1], [], []>} : vector<1x256xf32>, vector<256x32xf32>, vector<1x32xf32> -> vector<1x32xf32>
    %cst_110 = arith.constant 7.812500e-03 : f32
    %130 = vector.broadcast %cst_110 : f32 to vector<1x32xf32>
    %131 = arith.mulf %129, %130 : vector<1x32xf32>
    %132 = arith.mulf %127, %127 : vector<1x32xf32>
    %133 = arith.subf %131, %132 : vector<1x32xf32>
    %cst_111 = arith.constant 0.000000e+00 : f32
    %134 = vector.broadcast %cst_111 : f32 to vector<1x32xf32>
    %135 = arith.maximumf %133, %134 : vector<1x32xf32>
    %c0_112 = arith.constant 0 : index
    %c0_113 = arith.constant 0 : index
    %136 = vector.load %arg13[%c0_112, %c0_113] : memref<1x32xf32, #tpu.memory_space<vmem>>, vector<1x32xf32>
    %cst_114 = arith.constant 9.99999974E-6 : f32
    %137 = vector.broadcast %cst_114 : f32 to vector<1x32xf32>
    %138 = arith.addf %135, %137 : vector<1x32xf32>
    %139 = math.rsqrt %138 : vector<1x32xf32>
    %140 = arith.mulf %136, %139 : vector<1x32xf32>
    %c0_115 = arith.constant 0 : index
    %c0_116 = arith.constant 0 : index
    %141 = vector.load %arg14[%c0_115, %c0_116] : memref<1x32xf32, #tpu.memory_space<vmem>>, vector<1x32xf32>
    %142 = arith.mulf %127, %140 : vector<1x32xf32>
    %143 = arith.subf %141, %142 : vector<1x32xf32>
    %c0_117 = arith.constant 0 : index
    %c0_118 = arith.constant 0 : index
    %144 = vector.load %arg12[%c0_117, %c0_118] : memref<32x256xf32, #tpu.memory_space<vmem>>, vector<32x256xf32>
    %cst_119 = arith.constant dense<0.000000e+00> : vector<1x256xf32>
    %145 = tpu.matmul %140, %144, %cst_119 {dimension_numbers = #tpu.dot_dimension_numbers<[1], [0], [0], [1], [0, 0, 1, 1], [], []>} : vector<1x32xf32>, vector<32x256xf32>, vector<1x256xf32> -> vector<1x256xf32>
    %c0_120 = arith.constant 0 : index
    %c0_121 = arith.constant 0 : index
    %146 = vector.load %arg12[%c0_120, %c0_121] : memref<32x256xf32, #tpu.memory_space<vmem>>, vector<32x256xf32>
    %cst_122 = arith.constant dense<0.000000e+00> : vector<1x256xf32>
    %147 = tpu.matmul %143, %146, %cst_122 {dimension_numbers = #tpu.dot_dimension_numbers<[1], [0], [0], [1], [0, 0, 1, 1], [], []>} : vector<1x32xf32>, vector<32x256xf32>, vector<1x256xf32> -> vector<1x256xf32>
    %148 = vector.broadcast %145 : vector<1x256xf32> to vector<16x256xf32>
    %149 = arith.mulf %118, %148 : vector<16x256xf32>
    %150 = vector.broadcast %147 : vector<1x256xf32> to vector<16x256xf32>
    %151 = arith.addf %149, %150 : vector<16x256xf32>
    %cst_123 = arith.constant 0.000000e+00 : f32
    %152 = vector.broadcast %cst_123 : f32 to vector<16x256xf32>
    %153 = arith.maximumf %151, %152 : vector<16x256xf32>
    %154 = arith.truncf %153 : vector<16x256xf32> to vector<16x256xbf16>
    %cst_124 = arith.constant 0.000000e+00 : f32
    %155 = vector.broadcast %cst_124 : f32 to vector<4x64xf32>
    %c0_125 = arith.constant 0 : index
    %c0_126 = arith.constant 0 : index
    %c0_127 = arith.constant 0 : index
    %156 = vector.load %arg15[%c0_125, %c0_126, %c0_127] : memref<5x4x16xbf16, #tpu.memory_space<vmem>>, vector<1x4x16xbf16>
    %157 = vector.shape_cast %156 : vector<1x4x16xbf16> to vector<4x16xbf16>
    %cst_128 = arith.constant dense<0.000000e+00> : vector<4x256xf32>
    %158 = tpu.matmul %157, %154, %cst_128 {dimension_numbers = #tpu.dot_dimension_numbers<[1], [0], [0], [1], [0, 0, 1, 1], [], []>} : vector<4x16xbf16>, vector<16x256xbf16>, vector<4x256xf32> -> vector<4x256xf32>
    %159 = arith.truncf %158 : vector<4x256xf32> to vector<4x256xbf16>
    %c0_129 = arith.constant 0 : index
    %c0_130 = arith.constant 0 : index
    %c0_131 = arith.constant 0 : index
    %160 = vector.load %arg16[%c0_129, %c0_130, %c0_131] : memref<5x256x64xbf16, #tpu.memory_space<vmem>>, vector<1x256x64xbf16>
    %161 = vector.shape_cast %160 : vector<1x256x64xbf16> to vector<256x64xbf16>
    %cst_132 = arith.constant dense<0.000000e+00> : vector<4x64xf32>
    %162 = tpu.matmul %159, %161, %cst_132 {dimension_numbers = #tpu.dot_dimension_numbers<[1], [0], [0], [1], [0, 0, 1, 1], [], []>} : vector<4x256xbf16>, vector<256x64xbf16>, vector<4x64xf32> -> vector<4x64xf32>
    %163 = arith.addf %155, %162 : vector<4x64xf32>
    %c1_133 = arith.constant 1 : index
    %c0_134 = arith.constant 0 : index
    %c0_135 = arith.constant 0 : index
    %164 = vector.load %arg15[%c1_133, %c0_134, %c0_135] : memref<5x4x16xbf16, #tpu.memory_space<vmem>>, vector<1x4x16xbf16>
    %165 = vector.shape_cast %164 : vector<1x4x16xbf16> to vector<4x16xbf16>
    %cst_136 = arith.constant dense<0.000000e+00> : vector<4x256xf32>
    %166 = tpu.matmul %165, %154, %cst_136 {dimension_numbers = #tpu.dot_dimension_numbers<[1], [0], [0], [1], [0, 0, 1, 1], [], []>} : vector<4x16xbf16>, vector<16x256xbf16>, vector<4x256xf32> -> vector<4x256xf32>
    %167 = arith.truncf %166 : vector<4x256xf32> to vector<4x256xbf16>
    %c1_137 = arith.constant 1 : index
    %c0_138 = arith.constant 0 : index
    %c0_139 = arith.constant 0 : index
    %168 = vector.load %arg16[%c1_137, %c0_138, %c0_139] : memref<5x256x64xbf16, #tpu.memory_space<vmem>>, vector<1x256x64xbf16>
    %169 = vector.shape_cast %168 : vector<1x256x64xbf16> to vector<256x64xbf16>
    %cst_140 = arith.constant dense<0.000000e+00> : vector<4x64xf32>
    %170 = tpu.matmul %167, %169, %cst_140 {dimension_numbers = #tpu.dot_dimension_numbers<[1], [0], [0], [1], [0, 0, 1, 1], [], []>} : vector<4x256xbf16>, vector<256x64xbf16>, vector<4x64xf32> -> vector<4x64xf32>
    %171 = arith.addf %163, %170 : vector<4x64xf32>
    %c2_141 = arith.constant 2 : index
    %c0_142 = arith.constant 0 : index
    %c0_143 = arith.constant 0 : index
    %172 = vector.load %arg15[%c2_141, %c0_142, %c0_143] : memref<5x4x16xbf16, #tpu.memory_space<vmem>>, vector<1x4x16xbf16>
    %173 = vector.shape_cast %172 : vector<1x4x16xbf16> to vector<4x16xbf16>
    %cst_144 = arith.constant dense<0.000000e+00> : vector<4x256xf32>
    %174 = tpu.matmul %173, %154, %cst_144 {dimension_numbers = #tpu.dot_dimension_numbers<[1], [0], [0], [1], [0, 0, 1, 1], [], []>} : vector<4x16xbf16>, vector<16x256xbf16>, vector<4x256xf32> -> vector<4x256xf32>
    %175 = arith.truncf %174 : vector<4x256xf32> to vector<4x256xbf16>
    %c2_145 = arith.constant 2 : index
    %c0_146 = arith.constant 0 : index
    %c0_147 = arith.constant 0 : index
    %176 = vector.load %arg16[%c2_145, %c0_146, %c0_147] : memref<5x256x64xbf16, #tpu.memory_space<vmem>>, vector<1x256x64xbf16>
    %177 = vector.shape_cast %176 : vector<1x256x64xbf16> to vector<256x64xbf16>
    %cst_148 = arith.constant dense<0.000000e+00> : vector<4x64xf32>
    %178 = tpu.matmul %175, %177, %cst_148 {dimension_numbers = #tpu.dot_dimension_numbers<[1], [0], [0], [1], [0, 0, 1, 1], [], []>} : vector<4x256xbf16>, vector<256x64xbf16>, vector<4x64xf32> -> vector<4x64xf32>
    %179 = arith.addf %171, %178 : vector<4x64xf32>
    %c3_149 = arith.constant 3 : index
    %c0_150 = arith.constant 0 : index
    %c0_151 = arith.constant 0 : index
    %180 = vector.load %arg15[%c3_149, %c0_150, %c0_151] : memref<5x4x16xbf16, #tpu.memory_space<vmem>>, vector<1x4x16xbf16>
    %181 = vector.shape_cast %180 : vector<1x4x16xbf16> to vector<4x16xbf16>
    %cst_152 = arith.constant dense<0.000000e+00> : vector<4x256xf32>
    %182 = tpu.matmul %181, %154, %cst_152 {dimension_numbers = #tpu.dot_dimension_numbers<[1], [0], [0], [1], [0, 0, 1, 1], [], []>} : vector<4x16xbf16>, vector<16x256xbf16>, vector<4x256xf32> -> vector<4x256xf32>
    %183 = arith.truncf %182 : vector<4x256xf32> to vector<4x256xbf16>
    %c3_153 = arith.constant 3 : index
    %c0_154 = arith.constant 0 : index
    %c0_155 = arith.constant 0 : index
    %184 = vector.load %arg16[%c3_153, %c0_154, %c0_155] : memref<5x256x64xbf16, #tpu.memory_space<vmem>>, vector<1x256x64xbf16>
    %185 = vector.shape_cast %184 : vector<1x256x64xbf16> to vector<256x64xbf16>
    %cst_156 = arith.constant dense<0.000000e+00> : vector<4x64xf32>
    %186 = tpu.matmul %183, %185, %cst_156 {dimension_numbers = #tpu.dot_dimension_numbers<[1], [0], [0], [1], [0, 0, 1, 1], [], []>} : vector<4x256xbf16>, vector<256x64xbf16>, vector<4x64xf32> -> vector<4x64xf32>
    %187 = arith.addf %179, %186 : vector<4x64xf32>
    %c4_157 = arith.constant 4 : index
    %c0_158 = arith.constant 0 : index
    %c0_159 = arith.constant 0 : index
    %188 = vector.load %arg15[%c4_157, %c0_158, %c0_159] : memref<5x4x16xbf16, #tpu.memory_space<vmem>>, vector<1x4x16xbf16>
    %189 = vector.shape_cast %188 : vector<1x4x16xbf16> to vector<4x16xbf16>
    %cst_160 = arith.constant dense<0.000000e+00> : vector<4x256xf32>
    %190 = tpu.matmul %189, %154, %cst_160 {dimension_numbers = #tpu.dot_dimension_numbers<[1], [0], [0], [1], [0, 0, 1, 1], [], []>} : vector<4x16xbf16>, vector<16x256xbf16>, vector<4x256xf32> -> vector<4x256xf32>
    %191 = arith.truncf %190 : vector<4x256xf32> to vector<4x256xbf16>
    %c4_161 = arith.constant 4 : index
    %c0_162 = arith.constant 0 : index
    %c0_163 = arith.constant 0 : index
    %192 = vector.load %arg16[%c4_161, %c0_162, %c0_163] : memref<5x256x64xbf16, #tpu.memory_space<vmem>>, vector<1x256x64xbf16>
    %193 = vector.shape_cast %192 : vector<1x256x64xbf16> to vector<256x64xbf16>
    %cst_164 = arith.constant dense<0.000000e+00> : vector<4x64xf32>
    %194 = tpu.matmul %191, %193, %cst_164 {dimension_numbers = #tpu.dot_dimension_numbers<[1], [0], [0], [1], [0, 0, 1, 1], [], []>} : vector<4x256xbf16>, vector<256x64xbf16>, vector<4x64xf32> -> vector<4x64xf32>
    %195 = arith.addf %187, %194 : vector<4x64xf32>
    %cst_165 = arith.constant dense<0.000000e+00> : vector<64xf32>
    %196 = vector.multi_reduction <add>, %195, %cst_165 [0] : vector<4x64xf32> to vector<64xf32>
    %197 = vector.shape_cast %196 : vector<64xf32> to vector<1x64xf32>
    %198 = arith.mulf %195, %195 : vector<4x64xf32>
    %cst_166 = arith.constant dense<0.000000e+00> : vector<64xf32>
    %199 = vector.multi_reduction <add>, %198, %cst_166 [0] : vector<4x64xf32> to vector<64xf32>
    %200 = vector.shape_cast %199 : vector<64xf32> to vector<1x64xf32>
    %c0_167 = arith.constant 0 : index
    %c0_168 = arith.constant 0 : index
    %201 = vector.load %arg17[%c0_167, %c0_168] : memref<64x32xf32, #tpu.memory_space<vmem>>, vector<64x32xf32>
    %cst_169 = arith.constant dense<0.000000e+00> : vector<1x32xf32>
    %202 = tpu.matmul %197, %201, %cst_169 {dimension_numbers = #tpu.dot_dimension_numbers<[1], [0], [0], [1], [0, 0, 1, 1], [], []>} : vector<1x64xf32>, vector<64x32xf32>, vector<1x32xf32> -> vector<1x32xf32>
    %cst_170 = arith.constant 1.250000e-01 : f32
    %203 = vector.broadcast %cst_170 : f32 to vector<1x32xf32>
    %204 = arith.mulf %202, %203 : vector<1x32xf32>
    %c0_171 = arith.constant 0 : index
    %c0_172 = arith.constant 0 : index
    %205 = vector.load %arg17[%c0_171, %c0_172] : memref<64x32xf32, #tpu.memory_space<vmem>>, vector<64x32xf32>
    %cst_173 = arith.constant dense<0.000000e+00> : vector<1x32xf32>
    %206 = tpu.matmul %200, %205, %cst_173 {dimension_numbers = #tpu.dot_dimension_numbers<[1], [0], [0], [1], [0, 0, 1, 1], [], []>} : vector<1x64xf32>, vector<64x32xf32>, vector<1x32xf32> -> vector<1x32xf32>
    %cst_174 = arith.constant 1.250000e-01 : f32
    %207 = vector.broadcast %cst_174 : f32 to vector<1x32xf32>
    %208 = arith.mulf %206, %207 : vector<1x32xf32>
    %209 = arith.mulf %204, %204 : vector<1x32xf32>
    %210 = arith.subf %208, %209 : vector<1x32xf32>
    %cst_175 = arith.constant 0.000000e+00 : f32
    %211 = vector.broadcast %cst_175 : f32 to vector<1x32xf32>
    %212 = arith.maximumf %210, %211 : vector<1x32xf32>
    %c0_176 = arith.constant 0 : index
    %c0_177 = arith.constant 0 : index
    %213 = vector.load %arg19[%c0_176, %c0_177] : memref<1x32xf32, #tpu.memory_space<vmem>>, vector<1x32xf32>
    %cst_178 = arith.constant 9.99999974E-6 : f32
    %214 = vector.broadcast %cst_178 : f32 to vector<1x32xf32>
    %215 = arith.addf %212, %214 : vector<1x32xf32>
    %216 = math.rsqrt %215 : vector<1x32xf32>
    %217 = arith.mulf %213, %216 : vector<1x32xf32>
    %c0_179 = arith.constant 0 : index
    %c0_180 = arith.constant 0 : index
    %218 = vector.load %arg20[%c0_179, %c0_180] : memref<1x32xf32, #tpu.memory_space<vmem>>, vector<1x32xf32>
    %219 = arith.mulf %204, %217 : vector<1x32xf32>
    %220 = arith.subf %218, %219 : vector<1x32xf32>
    %c0_181 = arith.constant 0 : index
    %c0_182 = arith.constant 0 : index
    %221 = vector.load %arg18[%c0_181, %c0_182] : memref<32x64xf32, #tpu.memory_space<vmem>>, vector<32x64xf32>
    %cst_183 = arith.constant dense<0.000000e+00> : vector<1x64xf32>
    %222 = tpu.matmul %217, %221, %cst_183 {dimension_numbers = #tpu.dot_dimension_numbers<[1], [0], [0], [1], [0, 0, 1, 1], [], []>} : vector<1x32xf32>, vector<32x64xf32>, vector<1x64xf32> -> vector<1x64xf32>
    %c0_184 = arith.constant 0 : index
    %c0_185 = arith.constant 0 : index
    %223 = vector.load %arg18[%c0_184, %c0_185] : memref<32x64xf32, #tpu.memory_space<vmem>>, vector<32x64xf32>
    %cst_186 = arith.constant dense<0.000000e+00> : vector<1x64xf32>
    %224 = tpu.matmul %220, %223, %cst_186 {dimension_numbers = #tpu.dot_dimension_numbers<[1], [0], [0], [1], [0, 0, 1, 1], [], []>} : vector<1x32xf32>, vector<32x64xf32>, vector<1x64xf32> -> vector<1x64xf32>
    %225 = vector.broadcast %222 : vector<1x64xf32> to vector<4x64xf32>
    %226 = arith.mulf %195, %225 : vector<4x64xf32>
    %227 = vector.broadcast %224 : vector<1x64xf32> to vector<4x64xf32>
    %228 = arith.addf %226, %227 : vector<4x64xf32>
    %cst_187 = arith.constant 0.000000e+00 : f32
    %229 = vector.broadcast %cst_187 : f32 to vector<4x64xf32>
    %230 = arith.maximumf %228, %229 : vector<4x64xf32>
    %231 = arith.truncf %230 : vector<4x64xf32> to vector<4x64xbf16>
    %232 = vector.extract_strided_slice %231 {offsets = [0, 0], sizes = [2, 64], strides = [1, 1]} : vector<4x64xbf16> to vector<2x64xbf16>
    %c0_188 = arith.constant 0 : index
    %c0_189 = arith.constant 0 : index
    %233 = vector.load %arg22[%c0_188, %c0_189] : memref<64x128xbf16, #tpu.memory_space<vmem>>, vector<64x128xbf16>
    %cst_190 = arith.constant dense<0.000000e+00> : vector<2x128xf32>
    %234 = tpu.matmul %232, %233, %cst_190 {dimension_numbers = #tpu.dot_dimension_numbers<[1], [0], [0], [1], [0, 0, 1, 1], [], []>} : vector<2x64xbf16>, vector<64x128xbf16>, vector<2x128xf32> -> vector<2x128xf32>
    %235 = vector.extract_strided_slice %231 {offsets = [2, 0], sizes = [2, 64], strides = [1, 1]} : vector<4x64xbf16> to vector<2x64xbf16>
    %c0_191 = arith.constant 0 : index
    %c0_192 = arith.constant 0 : index
    %236 = vector.load %arg23[%c0_191, %c0_192] : memref<64x128xbf16, #tpu.memory_space<vmem>>, vector<64x128xbf16>
    %cst_193 = arith.constant dense<0.000000e+00> : vector<2x128xf32>
    %237 = tpu.matmul %235, %236, %cst_193 {dimension_numbers = #tpu.dot_dimension_numbers<[1], [0], [0], [1], [0, 0, 1, 1], [], []>} : vector<2x64xbf16>, vector<64x128xbf16>, vector<2x128xf32> -> vector<2x128xf32>
    %238 = arith.addf %234, %237 : vector<2x128xf32>
    %c0_194 = arith.constant 0 : index
    %c0_195 = arith.constant 0 : index
    %239 = vector.load %arg24[%c0_194, %c0_195] : memref<1x128xf32, #tpu.memory_space<vmem>>, vector<1x128xf32>
    %240 = vector.broadcast %239 : vector<1x128xf32> to vector<2x128xf32>
    %241 = arith.addf %238, %240 : vector<2x128xf32>
    %cst_196 = arith.constant 0.000000e+00 : f32
    %242 = vector.broadcast %cst_196 : f32 to vector<2x128xf32>
    %243 = arith.maximumf %241, %242 : vector<2x128xf32>
    %244 = arith.truncf %243 : vector<2x128xf32> to vector<2x128xbf16>
    %c0_197 = arith.constant 0 : index
    %c0_198 = arith.constant 0 : index
    %245 = vector.load %arg2[%c0_197, %c0_198] : memref<2x8xf32, #tpu.memory_space<vmem>>, vector<2x8xf32>
    %c0_199 = arith.constant 0 : index
    %c0_200 = arith.constant 0 : index
    %246 = vector.load %arg21[%c0_199, %c0_200] : memref<8x4xf32, #tpu.memory_space<vmem>>, vector<8x4xf32>
    %cst_201 = arith.constant dense<0.000000e+00> : vector<2x4xf32>
    %247 = tpu.matmul %245, %246, %cst_201 {dimension_numbers = #tpu.dot_dimension_numbers<[1], [0], [0], [1], [0, 0, 1, 1], [], []>} : vector<2x8xf32>, vector<8x4xf32>, vector<2x4xf32> -> vector<2x4xf32>
    %c0_202 = arith.constant 0 : index
    %c0_203 = arith.constant 0 : index
    %248 = vector.load %arg25[%c0_202, %c0_203] : memref<128x4xbf16, #tpu.memory_space<vmem>>, vector<128x4xbf16>
    %cst_204 = arith.constant dense<0.000000e+00> : vector<2x4xf32>
    %249 = tpu.matmul %244, %248, %cst_204 {dimension_numbers = #tpu.dot_dimension_numbers<[1], [0], [0], [1], [0, 0, 1, 1], [], []>} : vector<2x128xbf16>, vector<128x4xbf16>, vector<2x4xf32> -> vector<2x4xf32>
    %250 = arith.addf %247, %249 : vector<2x4xf32>
    %c0_205 = arith.constant 0 : index
    %c0_206 = arith.constant 0 : index
    %251 = vector.load %arg26[%c0_205, %c0_206] : memref<1x4xf32, #tpu.memory_space<vmem>>, vector<1x4xf32>
    %252 = vector.broadcast %251 : vector<1x4xf32> to vector<2x4xf32>
    %253 = arith.addf %250, %252 : vector<2x4xf32>
    %c0_207 = arith.constant 0 : index
    %c0_208 = arith.constant 0 : index
    %254 = vector.load %arg27[%c0_207, %c0_208] : memref<2x4xf32, #tpu.memory_space<vmem>>, vector<2x4xf32>
    tpu.vector_store %arg27[%c0_207, %c0_208], %253 {strides = array<i32>} : memref<2x4xf32, #tpu.memory_space<vmem>>, vector<2x4xf32>,
    return
  }
  func.func @transform_0(%arg0: i32) -> (i32, i32) {
    %c0_i32 = arith.constant 0 : i32
    %c0_i32_0 = arith.constant 0 : i32
    %c0_i32_1 = arith.constant 0 : i32
    return %c0_i32, %c0_i32_0 : i32, i32
  }
  func.func @transform_1(%arg0: i32) -> (i32, i32) {
    %c0_i32 = arith.constant 0 : i32
    %c0_i32_0 = arith.constant 0 : i32
    %c0_i32_1 = arith.constant 0 : i32
    return %c0_i32, %c0_i32_0 : i32, i32
  }
  func.func @transform_2(%arg0: i32) -> (i32, i32, i32) {
    %c0_i32 = arith.constant 0 : i32
    %c0_i32_0 = arith.constant 0 : i32
    %c0_i32_1 = arith.constant 0 : i32
    %c0_i32_2 = arith.constant 0 : i32
    return %c0_i32, %c0_i32_0, %c0_i32_1 : i32, i32, i32
  }
  func.func @transform_3(%arg0: i32) -> (i32, i32, i32) {
    %c0_i32 = arith.constant 0 : i32
    %c0_i32_0 = arith.constant 0 : i32
    %c0_i32_1 = arith.constant 0 : i32
    %c0_i32_2 = arith.constant 0 : i32
    return %c0_i32, %c0_i32_0, %c0_i32_1 : i32, i32, i32
  }
  func.func @transform_4(%arg0: i32) -> (i32, i32) {
    %c0_i32 = arith.constant 0 : i32
    %c0_i32_0 = arith.constant 0 : i32
    %c0_i32_1 = arith.constant 0 : i32
    return %c0_i32, %c0_i32_0 : i32, i32
  }
  func.func @transform_5(%arg0: i32) -> (i32, i32) {
    %c0_i32 = arith.constant 0 : i32
    %c0_i32_0 = arith.constant 0 : i32
    %c0_i32_1 = arith.constant 0 : i32
    return %c0_i32, %c0_i32_0 : i32, i32
  }
  func.func @transform_6(%arg0: i32) -> (i32, i32) {
    %c0_i32 = arith.constant 0 : i32
    %c0_i32_0 = arith.constant 0 : i32
    %c0_i32_1 = arith.constant 0 : i32
    return %c0_i32, %c0_i32_0 : i32, i32
  }
  func.func @transform_7(%arg0: i32) -> (i32, i32) {
    %c0_i32 = arith.constant 0 : i32
    %c0_i32_0 = arith.constant 0 : i32
    %c0_i32_1 = arith.constant 0 : i32
    return %c0_i32, %c0_i32_0 : i32, i32
  }
  func.func @transform_8(%arg0: i32) -> (i32, i32, i32) {
    %c0_i32 = arith.constant 0 : i32
    %c0_i32_0 = arith.constant 0 : i32
    %c0_i32_1 = arith.constant 0 : i32
    %c0_i32_2 = arith.constant 0 : i32
    return %c0_i32, %c0_i32_0, %c0_i32_1 : i32, i32, i32
  }
  func.func @transform_9(%arg0: i32) -> (i32, i32, i32) {
    %c0_i32 = arith.constant 0 : i32
    %c0_i32_0 = arith.constant 0 : i32
    %c0_i32_1 = arith.constant 0 : i32
    %c0_i32_2 = arith.constant 0 : i32
    return %c0_i32, %c0_i32_0, %c0_i32_1 : i32, i32, i32
  }
  func.func @transform_10(%arg0: i32) -> (i32, i32) {
    %c0_i32 = arith.constant 0 : i32
    %c0_i32_0 = arith.constant 0 : i32
    %c0_i32_1 = arith.constant 0 : i32
    return %c0_i32, %c0_i32_0 : i32, i32
  }
  func.func @transform_11(%arg0: i32) -> (i32, i32) {
    %c0_i32 = arith.constant 0 : i32
    %c0_i32_0 = arith.constant 0 : i32
    %c0_i32_1 = arith.constant 0 : i32
    return %c0_i32, %c0_i32_0 : i32, i32
  }
  func.func @transform_12(%arg0: i32) -> (i32, i32) {
    %c0_i32 = arith.constant 0 : i32
    %c0_i32_0 = arith.constant 0 : i32
    %c0_i32_1 = arith.constant 0 : i32
    return %c0_i32, %c0_i32_0 : i32, i32
  }
  func.func @transform_13(%arg0: i32) -> (i32, i32) {
    %c0_i32 = arith.constant 0 : i32
    %c0_i32_0 = arith.constant 0 : i32
    %c0_i32_1 = arith.constant 0 : i32
    return %c0_i32, %c0_i32_0 : i32, i32
  }
  func.func @transform_14(%arg0: i32) -> (i32, i32, i32) {
    %c0_i32 = arith.constant 0 : i32
    %c0_i32_0 = arith.constant 0 : i32
    %c0_i32_1 = arith.constant 0 : i32
    %c0_i32_2 = arith.constant 0 : i32
    return %c0_i32, %c0_i32_0, %c0_i32_1 : i32, i32, i32
  }
  func.func @transform_15(%arg0: i32) -> (i32, i32, i32) {
    %c0_i32 = arith.constant 0 : i32
    %c0_i32_0 = arith.constant 0 : i32
    %c0_i32_1 = arith.constant 0 : i32
    %c0_i32_2 = arith.constant 0 : i32
    return %c0_i32, %c0_i32_0, %c0_i32_1 : i32, i32, i32
  }
  func.func @transform_16(%arg0: i32) -> (i32, i32) {
    %c0_i32 = arith.constant 0 : i32
    %c0_i32_0 = arith.constant 0 : i32
    %c0_i32_1 = arith.constant 0 : i32
    return %c0_i32, %c0_i32_0 : i32, i32
  }
  func.func @transform_17(%arg0: i32) -> (i32, i32) {
    %c0_i32 = arith.constant 0 : i32
    %c0_i32_0 = arith.constant 0 : i32
    %c0_i32_1 = arith.constant 0 : i32
    return %c0_i32, %c0_i32_0 : i32, i32
  }
  func.func @transform_18(%arg0: i32) -> (i32, i32) {
    %c0_i32 = arith.constant 0 : i32
    %c0_i32_0 = arith.constant 0 : i32
    %c0_i32_1 = arith.constant 0 : i32
    return %c0_i32, %c0_i32_0 : i32, i32
  }
  func.func @transform_19(%arg0: i32) -> (i32, i32) {
    %c0_i32 = arith.constant 0 : i32
    %c0_i32_0 = arith.constant 0 : i32
    %c0_i32_1 = arith.constant 0 : i32
    return %c0_i32, %c0_i32_0 : i32, i32
  }
  func.func @transform_20(%arg0: i32) -> (i32, i32) {
    %c0_i32 = arith.constant 0 : i32
    %c0_i32_0 = arith.constant 0 : i32
    %c0_i32_1 = arith.constant 0 : i32
    return %c0_i32, %c0_i32_0 : i32, i32
  }
  func.func @transform_21(%arg0: i32) -> (i32, i32) {
    %c0_i32 = arith.constant 0 : i32
    %c0_i32_0 = arith.constant 0 : i32
    %c0_i32_1 = arith.constant 0 : i32
    return %c0_i32, %c0_i32_0 : i32, i32
  }
  func.func @transform_22(%arg0: i32) -> (i32, i32) {
    %c0_i32 = arith.constant 0 : i32
    %c0_i32_0 = arith.constant 0 : i32
    %c0_i32_1 = arith.constant 0 : i32
    return %c0_i32, %c0_i32_0 : i32, i32
  }
  func.func @transform_23(%arg0: i32) -> (i32, i32) {
    %c0_i32 = arith.constant 0 : i32
    %c0_i32_0 = arith.constant 0 : i32
    %c0_i32_1 = arith.constant 0 : i32
    return %c0_i32, %c0_i32_0 : i32, i32
  }
  func.func @transform_24(%arg0: i32) -> (i32, i32) {
    %c0_i32 = arith.constant 0 : i32
    %c0_i32_0 = arith.constant 0 : i32
    %c0_i32_1 = arith.constant 0 : i32
    return %c0_i32, %c0_i32_0 : i32, i32
  }
  func.func @transform_25(%arg0: i32) -> (i32, i32) {
    %c0_i32 = arith.constant 0 : i32
    %c0_i32_0 = arith.constant 0 : i32
    %c0_i32_1 = arith.constant 0 : i32
    return %c0_i32, %c0_i32_0 : i32, i32
  }
  func.func @transform_26(%arg0: i32) -> (i32, i32) {
    %c0_i32 = arith.constant 0 : i32
    %c0_i32_0 = arith.constant 0 : i32
    %c0_i32_1 = arith.constant 0 : i32
    return %c0_i32, %c0_i32_0 : i32, i32
  }
}

</mosaic_0001>

<llo_original>
// kernel: dqn_forward.1
$region0: #{dqn_forward.1}
  #allocation0 [shape = 'u32[]', space=smem, size = 0x4, offset = 0x4, fixed_abs, tag = 'smem constant byte address 0x4 - core index']
  #allocation1 [shape = 'u32[144,128]{1,0:T(1,128)}', space=vmem, size = 0x12000, scoped, tag = 'internal scratch']
  %s0 = inlined_call_operand.vmem [shape: bf16[88,132], index: 0, kind: input, shape index: {}]
  %s1 = inlined_call_operand.vmem [shape: f32[2,8], index: 1, kind: input, shape index: {}]
  %s2 = inlined_call_operand.vmem [shape: bf16[5,40,88], index: 2, kind: input, shape index: {}]
  %s3 = inlined_call_operand.vmem [shape: bf16[5,132,320], index: 3, kind: input, shape index: {}]
  %s4 = inlined_call_operand.vmem [shape: f32[320,16], index: 4, kind: input, shape index: {}]
  %s5 = inlined_call_operand.vmem [shape: f32[16,320], index: 5, kind: input, shape index: {}]
  %s6 = inlined_call_operand.hbm [shape: f32[1,16], index: 6, kind: input, shape index: {}]
  %s7 = inlined_call_operand.hbm [shape: f32[1,16], index: 7, kind: input, shape index: {}]
  %s8 = inlined_call_operand.vmem [shape: bf16[5,16,40], index: 8, kind: input, shape index: {}]
  %s9 = inlined_call_operand.vmem [shape: bf16[5,320,256], index: 9, kind: input, shape index: {}]
  %s10 = inlined_call_operand.vmem [shape: f32[256,32], index: 10, kind: input, shape index: {}]
  %s11 = inlined_call_operand.vmem [shape: f32[32,256], index: 11, kind: input, shape index: {}]
  %s12 = inlined_call_operand.hbm [shape: f32[1,32], index: 12, kind: input, shape index: {}]
  %s13 = inlined_call_operand.hbm [shape: f32[1,32], index: 13, kind: input, shape index: {}]
  %s14 = inlined_call_operand.hbm [shape: bf16[5,4,16], index: 14, kind: input, shape index: {}]
  %s15 = inlined_call_operand.vmem [shape: bf16[5,256,64], index: 15, kind: input, shape index: {}]
  %s16 = inlined_call_operand.vmem [shape: f32[64,32], index: 16, kind: input, shape index: {}]
  %s17 = inlined_call_operand.hbm [shape: f32[32,64], index: 17, kind: input, shape index: {}]
  %s18 = inlined_call_operand.hbm [shape: f32[1,32], index: 18, kind: input, shape index: {}]
  %s19 = inlined_call_operand.hbm [shape: f32[1,32], index: 19, kind: input, shape index: {}]
  %s20 = inlined_call_operand.vmem [shape: f32[8,4], index: 20, kind: input, shape index: {}]
  %s21 = inlined_call_operand.hbm [shape: bf16[64,128], index: 21, kind: input, shape index: {}]
  %s22 = inlined_call_operand.hbm [shape: bf16[64,128], index: 22, kind: input, shape index: {}]
  %s23 = inlined_call_operand.hbm [shape: f32[1,128], index: 23, kind: input, shape index: {}]
  %s24 = inlined_call_operand.vmem [shape: bf16[128,4], index: 24, kind: input, shape index: {}]
  %s25 = inlined_call_operand.hbm [shape: f32[1,4], index: 25, kind: input, shape index: {}]
  %s26 = inlined_call_operand.hbm [shape: f32[2,4], index: 26, kind: output, shape index: {}]
  %s27 = sld [smem:[#allocation0]]
  $region162: #{dqn_forward.1} parent=0
    _
  %s29 = ssub.s32 1, %s27
  %s30 = scalar_select 0, %s29, %s27
  $region1: #{dqn_forward.1} parent=0
    #allocation2 [shape = 'u8[512]{0}', space=vmem, size = 0x400, scoped, tag = 'input window, operand 6, single buffered']
    #allocation3 [shape = 's32[1]{0}', space=sflag, size = 0x4, scoped, tag = 'scoped memory for dqn_forward.1']
    #allocation4 [shape = 's32[1]{0}', space=sflag, size = 0x4, scoped, tag = 'scoped memory for dqn_forward.1']
    #allocation5 [shape = 'u8[512]{0}', space=vmem, size = 0x400, scoped, tag = 'input window, operand 7, single buffered']
    #allocation6 [shape = 's32[1]{0}', space=sflag, size = 0x4, scoped, tag = 'scoped memory for dqn_forward.1']
    #allocation7 [shape = 'u8[512]{0}', space=vmem, size = 0x400, scoped, tag = 'input window, operand 12, single buffered']
    #allocation8 [shape = 'u8[512]{0}', space=vmem, size = 0x400, scoped, tag = 'input window, operand 13, single buffered']
    #allocation9 [shape = 's32[1]{0}', space=sflag, size = 0x4, scoped, tag = 'scoped memory for dqn_forward.1']
    #allocation10 [shape = 'u8[5120]{0}', space=vmem, size = 0x1400, scoped, tag = 'input window, operand 14, single buffered']
    #allocation11 [shape = 'u8[16384]{0}', space=vmem, size = 0x4000, scoped, tag = 'input window, operand 17, single buffered']
    #allocation12 [shape = 's32[1]{0}', space=sflag, size = 0x4, scoped, tag = 'scoped memory for dqn_forward.1']
    #allocation13 [shape = 'u8[512]{0}', space=vmem, size = 0x400, scoped, tag = 'input window, operand 18, single buffered']
    #allocation14 [shape = 'u8[512]{0}', space=vmem, size = 0x400, scoped, tag = 'input window, operand 19, single buffered']
    #allocation15 [shape = 's32[1]{0}', space=sflag, size = 0x4, scoped, tag = 'scoped memory for dqn_forward.1']
    #allocation16 [shape = 'u8[16384]{0}', space=vmem, size = 0x4000, scoped, tag = 'input window, operand 21, single buffered']
    #allocation17 [shape = 'u8[16384]{0}', space=vmem, size = 0x4000, scoped, tag = 'input window, operand 22, single buffered']
    #allocation18 [shape = 's32[1]{0}', space=sflag, size = 0x4, scoped, tag = 'scoped memory for dqn_forward.1']
    #allocation19 [shape = 'u8[512]{0}', space=vmem, size = 0x400, scoped, tag = 'input window, operand 23, single buffered']
    #allocation20 [shape = 'u8[512]{0}', space=vmem, size = 0x400, scoped, tag = 'input window, operand 25, single buffered']
    #allocation21 [shape = 's32[1]{0}', space=sflag, size = 0x4, scoped, tag = 'scoped memory for dqn_forward.1']
    #allocation22 [shape = 'u8[1024]{0}', space=vmem, size = 0x400, scoped, tag = 'output window, operand 0, single buffered']
    %31 = vsyncpa [#allocation3], 0
    %32 = vsyncpa [#allocation6], 0
    %33 = vsyncpa [#allocation9], 0
    %34 = vsyncpa [#allocation12], 0
    %35 = vsyncpa [#allocation15], 0
    %36 = vsyncpa [#allocation18], 0
    %37 = vsyncpa [#allocation21], 0
    %38 = vsyncpa [#allocation4], 0
    // Predicated region
    $region2: #{dqn_forward.1} parent=1 // pred_check
      _
    $region3: #{dqn_forward.1} parent=1 // pred_check_branch
      %40 = sbr.rel (0) target = $region5
    $region4: #{dqn_forward.1} parent=1 // pred_region
      _
    $region5: #{dqn_forward.1} parent=1 // pred_fallthru
      _
    // Predicated region
    $region6: #{dqn_forward.1} parent=1 // pred_check
      _
    $region7: #{dqn_forward.1} parent=1 // pred_check_branch
      %42 = sbr.rel (0) target = $region9
    $region8: #{dqn_forward.1} parent=1 // pred_region
      _
    $region9: #{dqn_forward.1} parent=1 // pred_fallthru
      _
    // Predicated region
    $region10: #{dqn_forward.1} parent=1 // pred_check
      _
    $region11: #{dqn_forward.1} parent=1 // pred_check_branch
      %44 = sbr.rel (0) target = $region13
    $region12: #{dqn_forward.1} parent=1 // pred_region
      _
    $region13: #{dqn_forward.1} parent=1 // pred_fallthru
      _
    // Predicated region
    $region14: #{dqn_forward.1} parent=1 // pred_check
      _
    $region15: #{dqn_forward.1} parent=1 // pred_check_branch
      %46 = sbr.rel (0) target = $region17
    $region16: #{dqn_forward.1} parent=1 // pred_region
      _
    $region17: #{dqn_forward.1} parent=1 // pred_fallthru
      _
    // Predicated region
    $region18: #{dqn_forward.1} parent=1 // pred_check
      _
    $region19: #{dqn_forward.1} parent=1 // pred_check_branch
      %48 = sbr.rel (0) target = $region21
    $region20: #{dqn_forward.1} parent=1 // pred_region
      _
    $region21: #{dqn_forward.1} parent=1 // pred_fallthru
      _
    // Predicated region
    $region22: #{dqn_forward.1} parent=1 // pred_check
      _
    $region23: #{dqn_forward.1} parent=1 // pred_check_branch
      %50 = sbr.rel (0) target = $region25
    $region24: #{dqn_forward.1} parent=1 // pred_region
      _
    $region25: #{dqn_forward.1} parent=1 // pred_fallthru
      _
    // Predicated region
    $region26: #{dqn_forward.1} parent=1 // pred_check
      _
    $region27: #{dqn_forward.1} parent=1 // pred_check_branch
      %52 = sbr.rel (0) target = $region29
    $region28: #{dqn_forward.1} parent=1 // pred_region
      %s54 = ssub.s32 16, 16
      %55 = vsyncadd [#allocation3], %s54
      %s57 = sshll.u32 [#allocation2], 4
      %s58 = int_to_ptr.vmem [resolvable:$true] %s57
      %60 = dma.hbm_to_vmem [thread:$0]  %s6, 16, %s58, [#allocation3]
    $region29: #{dqn_forward.1} parent=1 // pred_fallthru
      _
    // Predicated region
    $region30: #{dqn_forward.1} parent=1 // pred_check
      _
    $region31: #{dqn_forward.1} parent=1 // pred_check_branch
      %62 = sbr.rel (0) target = $region33
    $region32: #{dqn_forward.1} parent=1 // pred_region
      %s64 = ssub.s32 16, 16
      %65 = vsyncadd [#allocation6], %s64
      %s67 = sshll.u32 [#allocation5], 4
      %s68 = int_to_ptr.vmem [resolvable:$true] %s67
      %70 = dma.hbm_to_vmem [thread:$0]  %s7, 16, %s68, [#allocation6]
    $region33: #{dqn_forward.1} parent=1 // pred_fallthru
      _
    // Predicated region
    $region34: #{dqn_forward.1} parent=1 // pred_check
      _
    $region35: #{dqn_forward.1} parent=1 // pred_check_branch
      %72 = sbr.rel (0) target = $region37
    $region36: #{dqn_forward.1} parent=1 // pred_region
      _
    $region37: #{dqn_forward.1} parent=1 // pred_fallthru
      _
    // Predicated region
    $region38: #{dqn_forward.1} parent=1 // pred_check
      _
    $region39: #{dqn_forward.1} parent=1 // pred_check_branch
      %74 = sbr.rel (0) target = $region41
    $region40: #{dqn_forward.1} parent=1 // pred_region
      _
    $region41: #{dqn_forward.1} parent=1 // pred_fallthru
      _
    // Predicated region
    $region42: #{dqn_forward.1} parent=1 // pred_check
      _
    $region43: #{dqn_forward.1} parent=1 // pred_check_branch
      %76 = sbr.rel (0) target = $region45
    $region44: #{dqn_forward.1} parent=1 // pred_region
      _
    $region45: #{dqn_forward.1} parent=1 // pred_fallthru
      _
    // Predicated region
    $region46: #{dqn_forward.1} parent=1 // pred_check
      _
    $region47: #{dqn_forward.1} parent=1 // pred_check_branch
      %78 = sbr.rel (0) target = $region49
    $region48: #{dqn_forward.1} parent=1 // pred_region
      _
    $region49: #{dqn_forward.1} parent=1 // pred_fallthru
      _
    // Predicated region
    $region50: #{dqn_forward.1} parent=1 // pred_check
      _
    $region51: #{dqn_forward.1} parent=1 // pred_check_branch
      %80 = sbr.rel (0) target = $region53
    $region52: #{dqn_forward.1} parent=1 // pred_region
      %s82 = ssub.s32 16, 16
      %83 = vsyncadd [#allocation6], %s82
      %s85 = sshll.u32 [#allocation7], 4
      %s86 = int_to_ptr.vmem [resolvable:$true] %s85
      %88 = dma.hbm_to_vmem [thread:$0]  %s12, 16, %s86, [#allocation6]
    $region53: #{dqn_forward.1} parent=1 // pred_fallthru
      _
    // Predicated region
    $region54: #{dqn_forward.1} parent=1 // pred_check
      _
    $region55: #{dqn_forward.1} parent=1 // pred_check_branch
      %90 = sbr.rel (0) target = $region57
    $region56: #{dqn_forward.1} parent=1 // pred_region
      %s92 = ssub.s32 16, 16
      %93 = vsyncadd [#allocation9], %s92
      %s95 = sshll.u32 [#allocation8], 4
      %s96 = int_to_ptr.vmem [resolvable:$true] %s95
      %98 = dma.hbm_to_vmem [thread:$0]  %s13, 16, %s96, [#allocation9]
    $region57: #{dqn_forward.1} parent=1 // pred_fallthru
      _
    // Predicated region
    $region58: #{dqn_forward.1} parent=1 // pred_check
      _
    $region59: #{dqn_forward.1} parent=1 // pred_check_branch
      %100 = sbr.rel (0) target = $region61
    $region60: #{dqn_forward.1} parent=1 // pred_region
      %s102 = ssub.s32 160, 160
      %103 = vsyncadd [#allocation9], %s102
      %s104 = sshll.u32 [#allocation10], 4
      %s105 = int_to_ptr.vmem [resolvable:$true] %s104
      %110 = dma.hbm_to_vmem [thread:$0]  %s14, 160, %s105, [#allocation9], 32, 32, 2
    $region61: #{dqn_forward.1} parent=1 // pred_fallthru
      _
    // Predicated region
    $region62: #{dqn_forward.1} parent=1 // pred_check
      _
    $region63: #{dqn_forward.1} parent=1 // pred_check_branch
      %112 = sbr.rel (0) target = $region65
    $region64: #{dqn_forward.1} parent=1 // pred_region
      _
    $region65: #{dqn_forward.1} parent=1 // pred_fallthru
      _
    // Predicated region
    $region66: #{dqn_forward.1} parent=1 // pred_check
      _
    $region67: #{dqn_forward.1} parent=1 // pred_check_branch
      %114 = sbr.rel (0) target = $region69
    $region68: #{dqn_forward.1} parent=1 // pred_region
      _
    $region69: #{dqn_forward.1} parent=1 // pred_fallthru
      _
    // Predicated region
    $region70: #{dqn_forward.1} parent=1 // pred_check
      _
    $region71: #{dqn_forward.1} parent=1 // pred_check_branch
      %116 = sbr.rel (0) target = $region73
    $region72: #{dqn_forward.1} parent=1 // pred_region
      %s118 = ssub.s32 512, 512
      %119 = vsyncadd [#allocation12], %s118
      %s120 = sshll.u32 [#allocation11], 4
      %s121 = int_to_ptr.vmem [resolvable:$true] %s120
      %126 = dma.hbm_to_vmem [thread:$0]  %s17, 512, %s121, [#allocation12], 128, 128, 8
    $region73: #{dqn_forward.1} parent=1 // pred_fallthru
      _
    // Predicated region
    $region74: #{dqn_forward.1} parent=1 // pred_check
      _
    $region75: #{dqn_forward.1} parent=1 // pred_check_branch
      %128 = sbr.rel (0) target = $region77
    $region76: #{dqn_forward.1} parent=1 // pred_region
      %s130 = ssub.s32 16, 16
      %131 = vsyncadd [#allocation12], %s130
      %s133 = sshll.u32 [#allocation13], 4
      %s134 = int_to_ptr.vmem [resolvable:$true] %s133
      %136 = dma.hbm_to_vmem [thread:$0]  %s18, 16, %s134, [#allocation12]
    $region77: #{dqn_forward.1} parent=1 // pred_fallthru
      _
    // Predicated region
    $region78: #{dqn_forward.1} parent=1 // pred_check
      _
    $region79: #{dqn_forward.1} parent=1 // pred_check_branch
      %138 = sbr.rel (0) target = $region81
    $region80: #{dqn_forward.1} parent=1 // pred_region
      %s140 = ssub.s32 16, 16
      %141 = vsyncadd [#allocation15], %s140
      %s143 = sshll.u32 [#allocation14], 4
      %s144 = int_to_ptr.vmem [resolvable:$true] %s143
      %146 = dma.hbm_to_vmem [thread:$0]  %s19, 16, %s144, [#allocation15]
    $region81: #{dqn_forward.1} parent=1 // pred_fallthru
      _
    // Predicated region
    $region82: #{dqn_forward.1} parent=1 // pred_check
      _
    $region83: #{dqn_forward.1} parent=1 // pred_check_branch
      %148 = sbr.rel (0) target = $region85
    $region84: #{dqn_forward.1} parent=1 // pred_region
      _
    $region85: #{dqn_forward.1} parent=1 // pred_fallthru
      _
    // Predicated region
    $region86: #{dqn_forward.1} parent=1 // pred_check
      _
    $region87: #{dqn_forward.1} parent=1 // pred_check_branch
      %150 = sbr.rel (0) target = $region89
    $region88: #{dqn_forward.1} parent=1 // pred_region
      %s152 = ssub.s32 512, 512
      %153 = vsyncadd [#allocation15], %s152
      %s154 = sshll.u32 [#allocation16], 4
      %s155 = int_to_ptr.vmem [resolvable:$true] %s154
      %160 = dma.hbm_to_vmem [thread:$0]  %s21, 512, %s155, [#allocation15], 64, 64, 4
    $region89: #{dqn_forward.1} parent=1 // pred_fallthru
      _
    // Predicated region
    $region90: #{dqn_forward.1} parent=1 // pred_check
      _
    $region91: #{dqn_forward.1} parent=1 // pred_check_branch
      %162 = sbr.rel (0) target = $region93
    $region92: #{dqn_forward.1} parent=1 // pred_region
      %s164 = ssub.s32 512, 512
      %165 = vsyncadd [#allocation18], %s164
      %s166 = sshll.u32 [#allocation17], 4
      %s167 = int_to_ptr.vmem [resolvable:$true] %s166
      %172 = dma.hbm_to_vmem [thread:$0]  %s22, 512, %s167, [#allocation18], 64, 64, 4
    $region93: #{dqn_forward.1} parent=1 // pred_fallthru
      _
    // Predicated region
    $region94: #{dqn_forward.1} parent=1 // pred_check
      _
    $region95: #{dqn_forward.1} parent=1 // pred_check_branch
      %174 = sbr.rel (0) target = $region97
    $region96: #{dqn_forward.1} parent=1 // pred_region
      %s176 = ssub.s32 16, 16
      %177 = vsyncadd [#allocation18], %s176
      %s179 = sshll.u32 [#allocation19], 4
      %s180 = int_to_ptr.vmem [resolvable:$true] %s179
      %182 = dma.hbm_to_vmem [thread:$0]  %s23, 16, %s180, [#allocation18]
    $region97: #{dqn_forward.1} parent=1 // pred_fallthru
      _
    // Predicated region
    $region98: #{dqn_forward.1} parent=1 // pred_check
      _
    $region99: #{dqn_forward.1} parent=1 // pred_check_branch
      %184 = sbr.rel (0) target = $region101
    $region100: #{dqn_forward.1} parent=1 // pred_region
      _
    $region101: #{dqn_forward.1} parent=1 // pred_fallthru
      _
    // Predicated region
    $region102: #{dqn_forward.1} parent=1 // pred_check
      _
    $region103: #{dqn_forward.1} parent=1 // pred_check_branch
      %186 = sbr.rel (0) target = $region105
    $region104: #{dqn_forward.1} parent=1 // pred_region
      %s188 = ssub.s32 16, 16
      %189 = vsyncadd [#allocation21], %s188
      %s191 = sshll.u32 [#allocation20], 4
      %s192 = int_to_ptr.vmem [resolvable:$true] %s191
      %194 = dma.hbm_to_vmem [thread:$0]  %s25, 16, %s192, [#allocation21]
    $region105: #{dqn_forward.1} parent=1 // pred_fallthru
      _
    // Predicated region
    $region106: #{dqn_forward.1} parent=1 // pred_check
      _
    $region107: #{dqn_forward.1} parent=1 // pred_check_branch
      %196 = sbr.rel (0) target = $region109
    $region108: #{dqn_forward.1} parent=1 // pred_region
      %197 = dma.done [#allocation3], 16
    $region109: #{dqn_forward.1} parent=1 // pred_fallthru
      _
    // Predicated region
    $region110: #{dqn_forward.1} parent=1 // pred_check
      _
    $region111: #{dqn_forward.1} parent=1 // pred_check_branch
      %199 = sbr.rel (0) target = $region113
    $region112: #{dqn_forward.1} parent=1 // pred_region
      %200 = dma.done [#allocation6], 16
    $region113: #{dqn_forward.1} parent=1 // pred_fallthru
      _
    // Predicated region
    $region114: #{dqn_forward.1} parent=1 // pred_check
      _
    $region115: #{dqn_forward.1} parent=1 // pred_check_branch
      %202 = sbr.rel (0) target = $region117
    $region116: #{dqn_forward.1} parent=1 // pred_region
      %203 = dma.done [#allocation6], 16
    $region117: #{dqn_forward.1} parent=1 // pred_fallthru
      _
    // Predicated region
    $region118: #{dqn_forward.1} parent=1 // pred_check
      _
    $region119: #{dqn_forward.1} parent=1 // pred_check_branch
      %205 = sbr.rel (0) target = $region121
    $region120: #{dqn_forward.1} parent=1 // pred_region
      %206 = dma.done [#allocation9], 16
    $region121: #{dqn_forward.1} parent=1 // pred_fallthru
      _
    // Predicated region
    $region122: #{dqn_forward.1} parent=1 // pred_check
      _
    $region123: #{dqn_forward.1} parent=1 // pred_check_branch
      %208 = sbr.rel (0) target = $region125
    $region124: #{dqn_forward.1} parent=1 // pred_region
      %209 = dma.done [#allocation9], 160
    $region125: #{dqn_forward.1} parent=1 // pred_fallthru
      _
    // Predicated region
    $region126: #{dqn_forward.1} parent=1 // pred_check
      _
    $region127: #{dqn_forward.1} parent=1 // pred_check_branch
      %211 = sbr.rel (0) target = $region129
    $region128: #{dqn_forward.1} parent=1 // pred_region
      %212 = dma.done [#allocation12], 512
    $region129: #{dqn_forward.1} parent=1 // pred_fallthru
      _
    // Predicated region
    $region130: #{dqn_forward.1} parent=1 // pred_check
      _
    $region131: #{dqn_forward.1} parent=1 // pred_check_branch
      %214 = sbr.rel (0) target = $region133
    $region132: #{dqn_forward.1} parent=1 // pred_region
      %215 = dma.done [#allocation12], 16
    $region133: #{dqn_forward.1} parent=1 // pred_fallthru
      _
    // Predicated region
    $region134: #{dqn_forward.1} parent=1 // pred_check
      _
    $region135: #{dqn_forward.1} parent=1 // pred_check_branch
      %217 = sbr.rel (0) target = $region137
    $region136: #{dqn_forward.1} parent=1 // pred_region
      %218 = dma.done [#allocation15], 16
    $region137: #{dqn_forward.1} parent=1 // pred_fallthru
      _
    // Predicated region
    $region138: #{dqn_forward.1} parent=1 // pred_check
      _
    $region139: #{dqn_forward.1} parent=1 // pred_check_branch
      %220 = sbr.rel (0) target = $region141
    $region140: #{dqn_forward.1} parent=1 // pred_region
      %221 = dma.done [#allocation15], 512
    $region141: #{dqn_forward.1} parent=1 // pred_fallthru
      _
    // Predicated region
    $region142: #{dqn_forward.1} parent=1 // pred_check
      _
    $region143: #{dqn_forward.1} parent=1 // pred_check_branch
      %223 = sbr.rel (0) target = $region145
    $region144: #{dqn_forward.1} parent=1 // pred_region
      %224 = dma.done [#allocation18], 512
    $region145: #{dqn_forward.1} parent=1 // pred_fallthru
      _
    // Predicated region
    $region146: #{dqn_forward.1} parent=1 // pred_check
      _
    $region147: #{dqn_forward.1} parent=1 // pred_check_branch
      %226 = sbr.rel (0) target = $region149
    $region148: #{dqn_forward.1} parent=1 // pred_region
      %227 = dma.done [#allocation18], 16
    $region149: #{dqn_forward.1} parent=1 // pred_fallthru
      _
    // Predicated region
    $region150: #{dqn_forward.1} parent=1 // pred_check
      _
    $region151: #{dqn_forward.1} parent=1 // pred_check_branch
      %229 = sbr.rel (0) target = $region153
    $region152: #{dqn_forward.1} parent=1 // pred_region
      %230 = dma.done [#allocation21], 16
    $region153: #{dqn_forward.1} parent=1 // pred_fallthru
      _
    %v232 = vld [vmem:[%s0] sm:$0xff]
    %v233 = vld [vmem:[%s0 + $0x8] sm:$0xff]
    %v234 = vld [vmem:[%s0 + $0x10] sm:$0xff]
    %v235 = vld [vmem:[%s0 + $0x18] sm:$0xff]
    %v236 = vld [vmem:[%s0 + $0x20] sm:$0xff]
    %v237 = vld [vmem:[%s0 + $0x28] sm:$0xff]
    %v238 = vld [vmem:[%s0 + $0x30] sm:$0xff]
    %v239 = vld [vmem:[%s0 + $0x38] sm:$0xff]
    %v240 = vld [vmem:[%s0 + $0x40] sm:$0xff]
    %v241 = vld [vmem:[%s0 + $0x48] sm:$0xff]
    %v242 = vld [vmem:[%s0 + $0x50] sm:$0xff]
    %v243 = vld [vmem:[%s2] sm:$0xf]
    %v244 = vld [vmem:[%s2 + $0x4] sm:$0xf]
    %v245 = vld [vmem:[%s2 + $0x8] sm:$0xf]
    %v246 = vld [vmem:[%s2 + $0xc] sm:$0xf]
    %v247 = vld [vmem:[%s2 + $0x10] sm:$0xf]
    %v253 = vunpack.c.l.b16 %v243
    %v254 = vunpack.c.l.b16 %v244
    %v255 = vunpack.c.l.b16 %v245
    %v256 = vunpack.c.l.b16 %v246
    %v257 = vunpack.c.l.b16 %v247
    %v258 = vpack.c.b16 %v254, %v253
    %v259 = vpack.c.b16 %v256, %v255
    %v260 = vpack.c.b16 %v257, %v257
    %v272 = vunpack.c.l.b16 %v232
    %v273 = vunpack.c.h.b16 %v232
    %v274 = vunpack.c.l.b16 %v233
    %v275 = vunpack.c.h.b16 %v233
    %v276 = vunpack.c.l.b16 %v234
    %v277 = vunpack.c.h.b16 %v234
    %v278 = vunpack.c.l.b16 %v235
    %v279 = vunpack.c.h.b16 %v235
    %v280 = vunpack.c.l.b16 %v236
    %v281 = vunpack.c.h.b16 %v236
    %v282 = vunpack.c.l.b16 %v237
    %v283 = vunpack.c.h.b16 %v237
    %v284 = vunpack.c.l.b16 %v238
    %v285 = vunpack.c.h.b16 %v238
    %v286 = vunpack.c.l.b16 %v239
    %v287 = vunpack.c.h.b16 %v239
    %v288 = vunpack.c.l.b16 %v240
    %v289 = vunpack.c.h.b16 %v240
    %v290 = vunpack.c.l.b16 %v241
    %v291 = vunpack.c.h.b16 %v241
    %v292 = vunpack.c.l.b16 %v242
    %v293 = vunpack.c.h.b16 %v242
    %v294 = vpack.c.b16 %v274, %v272
    %v295 = vpack.c.b16 %v275, %v273
    %v296 = vpack.c.b16 %v278, %v276
    %v297 = vpack.c.b16 %v279, %v277
    %v298 = vpack.c.b16 %v282, %v280
    %v299 = vpack.c.b16 %v283, %v281
    %v300 = vpack.c.b16 %v286, %v284
    %v301 = vpack.c.b16 %v287, %v285
    %v302 = vpack.c.b16 %v290, %v288
    %v303 = vpack.c.b16 %v291, %v289
    %v304 = vpack.c.b16 %v292, %v292
    %v305 = vpack.c.b16 %v293, %v293
    %vm316 = vcmask 719872
    %v318 = vsel %vm316, %v258, 0
    %v321 = vsel %vm316, %v259, 0
    %v324 = vsel %vm316, %v260, 0
    %vm326 = vcmask 1043456
    %v328 = vsel %vm326, %v304, 0
    %v331 = vsel %vm326, %v305, 0
    %333 = vmatprep.subr.bf16.mxu0 0
    %334 = vmatpush1.bf16.msra.mxu0 0
    %335 = vmatprep.subr.bf16.mxu0 0
    %336 = vmatpush1.bf16.msra.mxu0 0
    %337 = vmatprep.subr.bf16.mxu0 %v331
    %338 = vmatpush1.bf16.msra.mxu0 %v328
    %339 = vmatprep.subr.bf16.mxu0 %v303
    %340 = vmatpush1.bf16.msra.mxu0 %v302
    %341 = vmatprep.subr.bf16.mxu0 %v301
    %342 = vmatpush1.bf16.msra.mxu0 %v300
    %343 = vmatprep.subr.bf16.mxu0 %v299
    %344 = vmatpush1.bf16.msra.mxu0 %v298
    %345 = vmatprep.subr.bf16.mxu0 %v297
    %346 = vmatpush1.bf16.msra.mxu0 %v296
    %347 = vmatprep.subr.bf16.mxu0 %v295
    %348 = vmatpush1.bf16.msra.mxu0 %v294
    %349 = vmatprep.subr.bf16.mxu0 0
    %350 = vmatpush2.bf16.msra.mxu0 0
    %351 = vmatprep.subr.bf16.mxu0 0
    %352 = vmatpush2.bf16.msra.mxu0 0
    %353 = vmatprep.subr.bf16.mxu0 0
    %354 = vmatpush2.bf16.msra.mxu0 0
    %355 = vmatprep.subr.bf16.mxu0 0
    %356 = vmatpush2.bf16.msra.mxu0 0
    %357 = vmatprep.subr.bf16.mxu0 0
    %358 = vmatpush2.bf16.msra.mxu0 0
    %359 = vmatprep.subr.bf16.mxu0 0
    %360 = vmatpush2.bf16.msra.mxu0 0
    %361 = vmatprep.subr.bf16.mxu0 0
    %362 = vmatpush2.bf16.msra.mxu0 0
    %363 = vmatprep.subr.bf16.mxu0 0
    %364 = vmatpush2.bf16.msra.mxu0 0
    %365 = vmatprep.mubr.bf16.mxu0 0
    %366 = vmatmul.mubr.bf16.gmra.mxu0 %v318
    %v367 = vpop.f32.mrf.mxu0
    %v368 = vadd.f32 0.0, %v367
    %v369 = vpop.f32.mrf.mxu0
    %v370 = vadd.f32 0.0, %v369
    %v371 = vpop.f32.mrf.mxu0
    %v372 = vadd.f32 0.0, %v371
    %v373 = vpop.f32.mrf.mxu0
    %v374 = vadd.f32 0.0, %v373
    %375 = vmatprep.mubr.bf16.mxu0 0
    %376 = vmatmul.mubr.bf16.gmra.mxu0 %v321
    %v377 = vpop.f32.mrf.mxu0
    %v378 = vadd.f32 0.0, %v377
    %v379 = vpop.f32.mrf.mxu0
    %v380 = vadd.f32 0.0, %v379
    %v381 = vpop.f32.mrf.mxu0
    %v382 = vadd.f32 0.0, %v381
    %v383 = vpop.f32.mrf.mxu0
    %v384 = vadd.f32 0.0, %v383
    %385 = vmatprep.mubr.bf16.mxu0 0
    %386 = vmatmul.mubr.bf16.gmra.mxu0 %v324
    %v387 = vpop.f32.mrf.mxu0
    %v388 = vadd.f32 0.0, %v387
    %v389 = vpop.f32.mrf.mxu0
    %v390 = vadd.f32 0.0, %v389
    %v391 = vpop.f32.mrf.mxu0
    %v392 = vpop.f32.mrf.mxu0
    %393 = vdwg.mxu0
    %v394 = vpack.c.bf16 %v372, %v368
    %v395 = vpack.c.bf16 %v374, %v370
    %v396 = vpack.c.bf16 %v382, %v378
    %v397 = vpack.c.bf16 %v384, %v380
    %v398 = vpack.c.bf16 %v388, %v388
    %v399 = vpack.c.bf16 %v390, %v390
    %v400 = vld [vmem:[%s3] sm:$0xff]
    %v401 = vld [vmem:[%s3 + $0x8] sm:$0xf]
    %v402 = vld [vmem:[%s3 + $0xc] sm:$0xff]
    %v403 = vld [vmem:[%s3 + $0x14] sm:$0xf]
    %v404 = vld [vmem:[%s3 + $0x18] sm:$0xff]
    %v405 = vld [vmem:[%s3 + $0x20] sm:$0xf]
    %v406 = vld [vmem:[%s3 + $0x24] sm:$0xff]
    %v407 = vld [vmem:[%s3 + $0x2c] sm:$0xf]
    %v408 = vld [vmem:[%s3 + $0x30] sm:$0xff]
    %v409 = vld [vmem:[%s3 + $0x38] sm:$0xf]
    %v410 = vld [vmem:[%s3 + $0x3c] sm:$0xff]
    %v411 = vld [vmem:[%s3 + $0x44] sm:$0xf]
    %v412 = vld [vmem:[%s3 + $0x48] sm:$0xff]
    %v413 = vld [vmem:[%s3 + $0x50] sm:$0xf]
    %v414 = vld [vmem:[%s3 + $0x54] sm:$0xff]
    %v415 = vld [vmem:[%s3 + $0x5c] sm:$0xf]
    %v416 = vld [vmem:[%s3 + $0x60] sm:$0xff]
    %v417 = vld [vmem:[%s3 + $0x68] sm:$0xf]
    %v418 = vld [vmem:[%s3 + $0x6c] sm:$0xff]
    %v419 = vld [vmem:[%s3 + $0x74] sm:$0xf]
    %v420 = vld [vmem:[%s3 + $0x78] sm:$0xff]
    %v421 = vld [vmem:[%s3 + $0x80] sm:$0xf]
    %v422 = vld [vmem:[%s3 + $0x84] sm:$0xff]
    %v423 = vld [vmem:[%s3 + $0x8c] sm:$0xf]
    %v424 = vld [vmem:[%s3 + $0x90] sm:$0xff]
    %v425 = vld [vmem:[%s3 + $0x98] sm:$0xf]
    %v426 = vld [vmem:[%s3 + $0x9c] sm:$0xff]
    %v427 = vld [vmem:[%s3 + $0xa4] sm:$0xf]
    %v428 = vld [vmem:[%s3 + $0xa8] sm:$0xff]
    %v429 = vld [vmem:[%s3 + $0xb0] sm:$0xf]
    %v430 = vld [vmem:[%s3 + $0xb4] sm:$0xff]
    %v431 = vld [vmem:[%s3 + $0xbc] sm:$0xf]
    %v432 = vld [vmem:[%s3 + $0xc0] sm:$0x33]
    %v433 = vld [vmem:[%s3 + $0xc8] sm:$0x3]
    %s434 = scalar_lea.vmem %s2, 20
    %v435 = vld [vmem:[%s434] sm:$0xf]
    %v436 = vld [vmem:[%s434 + $0x4] sm:$0xf]
    %v437 = vld [vmem:[%s434 + $0x8] sm:$0xf]
    %v438 = vld [vmem:[%s434 + $0xc] sm:$0xf]
    %v439 = vld [vmem:[%s434 + $0x10] sm:$0xf]
    %v445 = vunpack.c.l.b16 %v435
    %v446 = vunpack.c.l.b16 %v436
    %v447 = vunpack.c.l.b16 %v437
    %v448 = vunpack.c.l.b16 %v438
    %v449 = vunpack.c.l.b16 %v439
    %v450 = vpack.c.b16 %v446, %v445
    %v451 = vpack.c.b16 %v448, %v447
    %v452 = vpack.c.b16 %v449, %v449
    %v454 = vsel %vm316, %v450, 0
    %v457 = vsel %vm316, %v451, 0
    %v460 = vsel %vm316, %v452, 0
    %462 = vmatprep.subr.bf16.mxu0 0
    %463 = vmatpush1.bf16.msra.mxu0 0
    %464 = vmatprep.subr.bf16.mxu0 0
    %465 = vmatpush1.bf16.msra.mxu0 0
    %466 = vmatprep.subr.bf16.mxu0 %v331
    %467 = vmatpush1.bf16.msra.mxu0 %v328
    %468 = vmatprep.subr.bf16.mxu0 %v303
    %469 = vmatpush1.bf16.msra.mxu0 %v302
    %470 = vmatprep.subr.bf16.mxu0 %v301
    %471 = vmatpush1.bf16.msra.mxu0 %v300
    %472 = vmatprep.subr.bf16.mxu0 %v299
    %473 = vmatpush1.bf16.msra.mxu0 %v298
    %474 = vmatprep.subr.bf16.mxu0 %v297
    %475 = vmatpush1.bf16.msra.mxu0 %v296
    %476 = vmatprep.subr.bf16.mxu0 %v295
    %477 = vmatpush1.bf16.msra.mxu0 %v294
    %478 = vmatprep.subr.bf16.mxu0 0
    %479 = vmatpush2.bf16.msra.mxu0 0
    %480 = vmatprep.subr.bf16.mxu0 0
    %481 = vmatpush2.bf16.msra.mxu0 0
    %482 = vmatprep.subr.bf16.mxu0 0
    %483 = vmatpush2.bf16.msra.mxu0 0
    %484 = vmatprep.subr.bf16.mxu0 0
    %485 = vmatpush2.bf16.msra.mxu0 0
    %486 = vmatprep.subr.bf16.mxu0 0
    %487 = vmatpush2.bf16.msra.mxu0 0
    %488 = vmatprep.subr.bf16.mxu0 0
    %489 = vmatpush2.bf16.msra.mxu0 0
    %490 = vmatprep.subr.bf16.mxu0 0
    %491 = vmatpush2.bf16.msra.mxu0 0
    %492 = vmatprep.subr.bf16.mxu0 0
    %493 = vmatpush2.bf16.msra.mxu0 0
    %494 = vmatprep.mubr.bf16.mxu0 0
    %495 = vmatmul.mubr.bf16.gmra.mxu0 %v454
    %v496 = vpop.f32.mrf.mxu0
    %v497 = vadd.f32 0.0, %v496
    %v498 = vpop.f32.mrf.mxu0
    %v499 = vadd.f32 0.0, %v498
    %v500 = vpop.f32.mrf.mxu0
    %v501 = vadd.f32 0.0, %v500
    %v502 = vpop.f32.mrf.mxu0
    %v503 = vadd.f32 0.0, %v502
    %504 = vmatprep.mubr.bf16.mxu0 0
    %505 = vmatmul.mubr.bf16.gmra.mxu0 %v457
    %v506 = vpop.f32.mrf.mxu0
    %v507 = vadd.f32 0.0, %v506
    %v508 = vpop.f32.mrf.mxu0
    %v509 = vadd.f32 0.0, %v508
    %v510 = vpop.f32.mrf.mxu0
    %v511 = vadd.f32 0.0, %v510
    %v512 = vpop.f32.mrf.mxu0
    %v513 = vadd.f32 0.0, %v512
    %514 = vmatprep.mubr.bf16.mxu0 0
    %515 = vmatmul.mubr.bf16.gmra.mxu0 %v460
    %v516 = vpop.f32.mrf.mxu0
    %v517 = vadd.f32 0.0, %v516
    %v518 = vpop.f32.mrf.mxu0
    %v519 = vadd.f32 0.0, %v518
    %v520 = vpop.f32.mrf.mxu0
    %v521 = vpop.f32.mrf.mxu0
    %522 = vdwg.mxu0
    %v523 = vpack.c.bf16 %v501, %v497
    %v524 = vpack.c.bf16 %v503, %v499
    %v525 = vpack.c.bf16 %v511, %v507
    %v526 = vpack.c.bf16 %v513, %v509
    %v527 = vpack.c.bf16 %v517, %v517
    %v528 = vpack.c.bf16 %v519, %v519
    %s529 = scalar_lea.vmem %s3, 204
    %v530 = vld [vmem:[%s529] sm:$0xff]
    %v531 = vld [vmem:[%s529 + $0x8] sm:$0xf]
    %v532 = vld [vmem:[%s529 + $0xc] sm:$0xff]
    %v533 = vld [vmem:[%s529 + $0x14] sm:$0xf]
    %v534 = vld [vmem:[%s529 + $0x18] sm:$0xff]
    %v535 = vld [vmem:[%s529 + $0x20] sm:$0xf]
    %v536 = vld [vmem:[%s529 + $0x24] sm:$0xff]
    %v537 = vld [vmem:[%s529 + $0x2c] sm:$0xf]
    %v538 = vld [vmem:[%s529 + $0x30] sm:$0xff]
    %v539 = vld [vmem:[%s529 + $0x38] sm:$0xf]
    %v540 = vld [vmem:[%s529 + $0x3c] sm:$0xff]
    %v541 = vld [vmem:[%s529 + $0x44] sm:$0xf]
    %v542 = vld [vmem:[%s529 + $0x48] sm:$0xff]
    %v543 = vld [vmem:[%s529 + $0x50] sm:$0xf]
    %v544 = vld [vmem:[%s529 + $0x54] sm:$0xff]
    %v545 = vld [vmem:[%s529 + $0x5c] sm:$0xf]
    %v546 = vld [vmem:[%s529 + $0x60] sm:$0xff]
    %v547 = vld [vmem:[%s529 + $0x68] sm:$0xf]
    %v548 = vld [vmem:[%s529 + $0x6c] sm:$0xff]
    %v549 = vld [vmem:[%s529 + $0x74] sm:$0xf]
    %v550 = vld [vmem:[%s529 + $0x78] sm:$0xff]
    %v551 = vld [vmem:[%s529 + $0x80] sm:$0xf]
    %v552 = vld [vmem:[%s529 + $0x84] sm:$0xff]
    %v553 = vld [vmem:[%s529 + $0x8c] sm:$0xf]
    %v554 = vld [vmem:[%s529 + $0x90] sm:$0xff]
    %v555 = vld [vmem:[%s529 + $0x98] sm:$0xf]
    %v556 = vld [vmem:[%s529 + $0x9c] sm:$0xff]
    %v557 = vld [vmem:[%s529 + $0xa4] sm:$0xf]
    %v558 = vld [vmem:[%s529 + $0xa8] sm:$0xff]
    %v559 = vld [vmem:[%s529 + $0xb0] sm:$0xf]
    %v560 = vld [vmem:[%s529 + $0xb4] sm:$0xff]
    %v561 = vld [vmem:[%s529 + $0xbc] sm:$0xf]
    %v562 = vld [vmem:[%s529 + $0xc0] sm:$0x33]
    %v563 = vld [vmem:[%s529 + $0xc8] sm:$0x3]
    %v598 = vunpack.c.l.b16 %v530
    %v599 = vunpack.c.h.b16 %v530
    %v600 = vunpack.c.l.b16 %v531
    %v601 = vunpack.c.l.b16 %v532
    %v602 = vunpack.c.h.b16 %v532
    %v603 = vunpack.c.l.b16 %v533
    %v604 = vunpack.c.l.b16 %v534
    %v605 = vunpack.c.h.b16 %v534
    %v606 = vunpack.c.l.b16 %v535
    %v607 = vunpack.c.l.b16 %v536
    %v608 = vunpack.c.h.b16 %v536
    %v609 = vunpack.c.l.b16 %v537
    %v610 = vunpack.c.l.b16 %v538
    %v611 = vunpack.c.h.b16 %v538
    %v612 = vunpack.c.l.b16 %v539
    %v613 = vunpack.c.l.b16 %v540
    %v614 = vunpack.c.h.b16 %v540
    %v615 = vunpack.c.l.b16 %v541
    %v616 = vunpack.c.l.b16 %v542
    %v617 = vunpack.c.h.b16 %v542
    %v618 = vunpack.c.l.b16 %v543
    %v619 = vunpack.c.l.b16 %v544
    %v620 = vunpack.c.h.b16 %v544
    %v621 = vunpack.c.l.b16 %v545
    %v622 = vunpack.c.l.b16 %v546
    %v623 = vunpack.c.h.b16 %v546
    %v624 = vunpack.c.l.b16 %v547
    %v625 = vunpack.c.l.b16 %v548
    %v626 = vunpack.c.h.b16 %v548
    %v627 = vunpack.c.l.b16 %v549
    %v628 = vunpack.c.l.b16 %v550
    %v629 = vunpack.c.h.b16 %v550
    %v630 = vunpack.c.l.b16 %v551
    %v631 = vunpack.c.l.b16 %v552
    %v632 = vunpack.c.h.b16 %v552
    %v633 = vunpack.c.l.b16 %v553
    %v634 = vunpack.c.l.b16 %v554
    %v635 = vunpack.c.h.b16 %v554
    %v636 = vunpack.c.l.b16 %v555
    %v637 = vunpack.c.l.b16 %v556
    %v638 = vunpack.c.h.b16 %v556
    %v639 = vunpack.c.l.b16 %v557
    %v640 = vunpack.c.l.b16 %v558
    %v641 = vunpack.c.h.b16 %v558
    %v642 = vunpack.c.l.b16 %v559
    %v643 = vunpack.c.l.b16 %v560
    %v644 = vunpack.c.h.b16 %v560
    %v645 = vunpack.c.l.b16 %v561
    %v646 = vunpack.c.l.b16 %v562
    %v647 = vunpack.c.h.b16 %v562
    %v648 = vunpack.c.l.b16 %v563
    %v649 = vpack.c.b16 %v601, %v598
    %v650 = vpack.c.b16 %v602, %v599
    %v651 = vpack.c.b16 %v603, %v600
    %v652 = vpack.c.b16 %v607, %v604
    %v653 = vpack.c.b16 %v608, %v605
    %v654 = vpack.c.b16 %v609, %v606
    %v655 = vpack.c.b16 %v613, %v610
    %v656 = vpack.c.b16 %v614, %v611
    %v657 = vpack.c.b16 %v615, %v612
    %v658 = vpack.c.b16 %v619, %v616
    %v659 = vpack.c.b16 %v620, %v617
    %v660 = vpack.c.b16 %v621, %v618
    %v661 = vpack.c.b16 %v625, %v622
    %v662 = vpack.c.b16 %v626, %v623
    %v663 = vpack.c.b16 %v627, %v624
    %v664 = vpack.c.b16 %v631, %v628
    %v665 = vpack.c.b16 %v632, %v629
    %v666 = vpack.c.b16 %v633, %v630
    %v667 = vpack.c.b16 %v637, %v634
    %v668 = vpack.c.b16 %v638, %v635
    %v669 = vpack.c.b16 %v639, %v636
    %v670 = vpack.c.b16 %v643, %v640
    %v671 = vpack.c.b16 %v644, %v641
    %v672 = vpack.c.b16 %v645, %v642
    %v673 = vpack.c.b16 %v646, %v646
    %v674 = vpack.c.b16 %v647, %v647
    %v675 = vpack.c.b16 %v648, %v648
    %vm700 = vcmask 31744
    %v702 = vsel %vm700, %v524, 0
    %v705 = vsel %vm700, %v526, 0
    %v708 = vsel %vm700, %v528, 0
    %vm710 = vcmask 1041408
    %v712 = vsel %vm710, %v673, 0
    %v715 = vsel %vm710, %v674, 0
    %v718 = vsel %vm710, %v675, 0
    %720 = vmatprep.subr.bf16.mxu0 %v671
    %721 = vmatpush1.bf16.msra.mxu0 %v670
    %722 = vmatprep.subr.bf16.mxu0 %v668
    %723 = vmatpush1.bf16.msra.mxu0 %v667
    %724 = vmatprep.subr.bf16.mxu0 %v665
    %725 = vmatpush1.bf16.msra.mxu0 %v664
    %726 = vmatprep.subr.bf16.mxu0 %v662
    %727 = vmatpush1.bf16.msra.mxu0 %v661
    %728 = vmatprep.subr.bf16.mxu0 %v659
    %729 = vmatpush1.bf16.msra.mxu0 %v658
    %730 = vmatprep.subr.bf16.mxu0 %v656
    %731 = vmatpush1.bf16.msra.mxu0 %v655
    %732 = vmatprep.subr.bf16.mxu0 %v653
    %733 = vmatpush1.bf16.msra.mxu0 %v652
    %734 = vmatprep.subr.bf16.mxu0 %v650
    %735 = vmatpush1.bf16.msra.mxu0 %v649
    %736 = vmatprep.subr.bf16.mxu0 0
    %737 = vmatpush2.bf16.msra.mxu0 0
    %738 = vmatprep.subr.bf16.mxu0 0
    %739 = vmatpush2.bf16.msra.mxu0 0
    %740 = vmatprep.subr.bf16.mxu0 0
    %741 = vmatpush2.bf16.msra.mxu0 0
    %742 = vmatprep.subr.bf16.mxu0 0
    %743 = vmatpush2.bf16.msra.mxu0 0
    %744 = vmatprep.subr.bf16.mxu0 0
    %745 = vmatpush2.bf16.msra.mxu0 0
    %746 = vmatprep.subr.bf16.mxu0 0
    %747 = vmatpush2.bf16.msra.mxu0 0
    %748 = vmatprep.subr.bf16.mxu0 0
    %749 = vmatpush2.bf16.msra.mxu0 0
    %750 = vmatprep.subr.bf16.mxu0 %v715
    %751 = vmatpush2.bf16.msra.mxu0 %v712
    %752 = vmatprep.mubr.bf16.mxu0 %v702
    %753 = vmatmul.mubr.bf16.gmra.mxu0 %v523
    %v754 = vpop.f32.mrf.mxu0
    %v755 = vadd.f32 0.0, %v754
    %v756 = vpop.f32.mrf.mxu0
    %v757 = vadd.f32 0.0, %v756
    %v758 = vpop.f32.mrf.mxu0
    %v759 = vadd.f32 0.0, %v758
    %v760 = vpop.f32.mrf.mxu0
    %v761 = vadd.f32 0.0, %v760
    %762 = vmatprep.mubr.bf16.mxu0 %v705
    %763 = vmatmul.mubr.bf16.gmra.mxu0 %v525
    %v764 = vpop.f32.mrf.mxu0
    %v765 = vadd.f32 0.0, %v764
    %v766 = vpop.f32.mrf.mxu0
    %v767 = vadd.f32 0.0, %v766
    %v768 = vpop.f32.mrf.mxu0
    %v769 = vadd.f32 0.0, %v768
    %v770 = vpop.f32.mrf.mxu0
    %v771 = vadd.f32 0.0, %v770
    %772 = vmatprep.mubr.bf16.mxu0 %v708
    %773 = vmatmul.mubr.bf16.gmra.mxu0 %v527
    %v774 = vpop.f32.mrf.mxu0
    %v775 = vadd.f32 0.0, %v774
    %v776 = vpop.f32.mrf.mxu0
    %v777 = vadd.f32 0.0, %v776
    %v778 = vpop.f32.mrf.mxu0
    %v779 = vpop.f32.mrf.mxu0
    %780 = vdwg.mxu0
    %781 = vmatprep.subr.bf16.mxu0 0
    %782 = vmatpush1.bf16.msra.mxu0 %v672
    %783 = vmatprep.subr.bf16.mxu0 0
    %784 = vmatpush1.bf16.msra.mxu0 %v669
    %785 = vmatprep.subr.bf16.mxu0 0
    %786 = vmatpush1.bf16.msra.mxu0 %v666
    %787 = vmatprep.subr.bf16.mxu0 0
    %788 = vmatpush1.bf16.msra.mxu0 %v663
    %789 = vmatprep.subr.bf16.mxu0 0
    %790 = vmatpush1.bf16.msra.mxu0 %v660
    %791 = vmatprep.subr.bf16.mxu0 0
    %792 = vmatpush1.bf16.msra.mxu0 %v657
    %793 = vmatprep.subr.bf16.mxu0 0
    %794 = vmatpush1.bf16.msra.mxu0 %v654
    %795 = vmatprep.subr.bf16.mxu0 0
    %796 = vmatpush1.bf16.msra.mxu0 %v651
    %797 = vmatprep.subr.bf16.mxu0 0
    %798 = vmatpush2.bf16.msra.mxu0 0
    %799 = vmatprep.subr.bf16.mxu0 0
    %800 = vmatpush2.bf16.msra.mxu0 0
    %801 = vmatprep.subr.bf16.mxu0 0
    %802 = vmatpush2.bf16.msra.mxu0 0
    %803 = vmatprep.subr.bf16.mxu0 0
    %804 = vmatpush2.bf16.msra.mxu0 0
    %805 = vmatprep.subr.bf16.mxu0 0
    %806 = vmatpush2.bf16.msra.mxu0 0
    %807 = vmatprep.subr.bf16.mxu0 0
    %808 = vmatpush2.bf16.msra.mxu0 0
    %809 = vmatprep.subr.bf16.mxu0 0
    %810 = vmatpush2.bf16.msra.mxu0 0
    %811 = vmatprep.subr.bf16.mxu0 0
    %812 = vmatpush2.bf16.msra.mxu0 %v718
    %813 = vmatprep.mubr.bf16.mxu0 %v702
    %814 = vmatmul.mubr.bf16.gmra.mxu0 %v523
    %v815 = vpop.f32.mrf.mxu0
    %v816 = vadd.f32 0.0, %v815
    %v817 = vpop.f32.mrf.mxu0
    %v818 = vpop.f32.mrf.mxu0
    %v819 = vadd.f32 0.0, %v818
    %v820 = vpop.f32.mrf.mxu0
    %821 = vmatprep.mubr.bf16.mxu0 %v705
    %822 = vmatmul.mubr.bf16.gmra.mxu0 %v525
    %v823 = vpop.f32.mrf.mxu0
    %v824 = vadd.f32 0.0, %v823
    %v825 = vpop.f32.mrf.mxu0
    %v826 = vpop.f32.mrf.mxu0
    %v827 = vadd.f32 0.0, %v826
    %v828 = vpop.f32.mrf.mxu0
    %829 = vmatprep.mubr.bf16.mxu0 %v708
    %830 = vmatmul.mubr.bf16.gmra.mxu0 %v527
    %v831 = vpop.f32.mrf.mxu0
    %v832 = vadd.f32 0.0, %v831
    %v833 = vpop.f32.mrf.mxu0
    %v834 = vpop.f32.mrf.mxu0
    %v835 = vpop.f32.mrf.mxu0
    %836 = vdwg.mxu0
    %v871 = vunpack.c.l.b16 %v400
    %v872 = vunpack.c.h.b16 %v400
    %v873 = vunpack.c.l.b16 %v401
    %v874 = vunpack.c.l.b16 %v402
    %v875 = vunpack.c.h.b16 %v402
    %v876 = vunpack.c.l.b16 %v403
    %v877 = vunpack.c.l.b16 %v404
    %v878 = vunpack.c.h.b16 %v404
    %v879 = vunpack.c.l.b16 %v405
    %v880 = vunpack.c.l.b16 %v406
    %v881 = vunpack.c.h.b16 %v406
    %v882 = vunpack.c.l.b16 %v407
    %v883 = vunpack.c.l.b16 %v408
    %v884 = vunpack.c.h.b16 %v408
    %v885 = vunpack.c.l.b16 %v409
    %v886 = vunpack.c.l.b16 %v410
    %v887 = vunpack.c.h.b16 %v410
    %v888 = vunpack.c.l.b16 %v411
    %v889 = vunpack.c.l.b16 %v412
    %v890 = vunpack.c.h.b16 %v412
    %v891 = vunpack.c.l.b16 %v413
    %v892 = vunpack.c.l.b16 %v414
    %v893 = vunpack.c.h.b16 %v414
    %v894 = vunpack.c.l.b16 %v415
    %v895 = vunpack.c.l.b16 %v416
    %v896 = vunpack.c.h.b16 %v416
    %v897 = vunpack.c.l.b16 %v417
    %v898 = vunpack.c.l.b16 %v418
    %v899 = vunpack.c.h.b16 %v418
    %v900 = vunpack.c.l.b16 %v419
    %v901 = vunpack.c.l.b16 %v420
    %v902 = vunpack.c.h.b16 %v420
    %v903 = vunpack.c.l.b16 %v421
    %v904 = vunpack.c.l.b16 %v422
    %v905 = vunpack.c.h.b16 %v422
    %v906 = vunpack.c.l.b16 %v423
    %v907 = vunpack.c.l.b16 %v424
    %v908 = vunpack.c.h.b16 %v424
    %v909 = vunpack.c.l.b16 %v425
    %v910 = vunpack.c.l.b16 %v426
    %v911 = vunpack.c.h.b16 %v426
    %v912 = vunpack.c.l.b16 %v427
    %v913 = vunpack.c.l.b16 %v428
    %v914 = vunpack.c.h.b16 %v428
    %v915 = vunpack.c.l.b16 %v429
    %v916 = vunpack.c.l.b16 %v430
    %v917 = vunpack.c.h.b16 %v430
    %v918 = vunpack.c.l.b16 %v431
    %v919 = vunpack.c.l.b16 %v432
    %v920 = vunpack.c.h.b16 %v432
    %v921 = vunpack.c.l.b16 %v433
    %v922 = vpack.c.b16 %v874, %v871
    %v923 = vpack.c.b16 %v875, %v872
    %v924 = vpack.c.b16 %v876, %v873
    %v925 = vpack.c.b16 %v880, %v877
    %v926 = vpack.c.b16 %v881, %v878
    %v927 = vpack.c.b16 %v882, %v879
    %v928 = vpack.c.b16 %v886, %v883
    %v929 = vpack.c.b16 %v887, %v884
    %v930 = vpack.c.b16 %v888, %v885
    %v931 = vpack.c.b16 %v892, %v889
    %v932 = vpack.c.b16 %v893, %v890
    %v933 = vpack.c.b16 %v894, %v891
    %v934 = vpack.c.b16 %v898, %v895
    %v935 = vpack.c.b16 %v899, %v896
    %v936 = vpack.c.b16 %v900, %v897
    %v937 = vpack.c.b16 %v904, %v901
    %v938 = vpack.c.b16 %v905, %v902
    %v939 = vpack.c.b16 %v906, %v903
    %v940 = vpack.c.b16 %v910, %v907
    %v941 = vpack.c.b16 %v911, %v908
    %v942 = vpack.c.b16 %v912, %v909
    %v943 = vpack.c.b16 %v916, %v913
    %v944 = vpack.c.b16 %v917, %v914
    %v945 = vpack.c.b16 %v918, %v915
    %v946 = vpack.c.b16 %v919, %v919
    %v947 = vpack.c.b16 %v920, %v920
    %v948 = vpack.c.b16 %v921, %v921
    %v974 = vsel %vm700, %v395, 0
    %v977 = vsel %vm700, %v397, 0
    %v980 = vsel %vm700, %v399, 0
    %v983 = vsel %vm710, %v946, 0
    %v986 = vsel %vm710, %v947, 0
    %v989 = vsel %vm710, %v948, 0
    %991 = vmatprep.subr.bf16.mxu0 %v944
    %992 = vmatpush1.bf16.msra.mxu0 %v943
    %993 = vmatprep.subr.bf16.mxu0 %v941
    %994 = vmatpush1.bf16.msra.mxu0 %v940
    %995 = vmatprep.subr.bf16.mxu0 %v938
    %996 = vmatpush1.bf16.msra.mxu0 %v937
    %997 = vmatprep.subr.bf16.mxu0 %v935
    %998 = vmatpush1.bf16.msra.mxu0 %v934
    %999 = vmatprep.subr.bf16.mxu0 %v932
    %1000 = vmatpush1.bf16.msra.mxu0 %v931
    %1001 = vmatprep.subr.bf16.mxu0 %v929
    %1002 = vmatpush1.bf16.msra.mxu0 %v928
    %1003 = vmatprep.subr.bf16.mxu0 %v926
    %1004 = vmatpush1.bf16.msra.mxu0 %v925
    %1005 = vmatprep.subr.bf16.mxu0 %v923
    %1006 = vmatpush1.bf16.msra.mxu0 %v922
    %1007 = vmatprep.subr.bf16.mxu0 0
    %1008 = vmatpush2.bf16.msra.mxu0 0
    %1009 = vmatprep.subr.bf16.mxu0 0
    %1010 = vmatpush2.bf16.msra.mxu0 0
    %1011 = vmatprep.subr.bf16.mxu0 0
    %1012 = vmatpush2.bf16.msra.mxu0 0
    %1013 = vmatprep.subr.bf16.mxu0 0
    %1014 = vmatpush2.bf16.msra.mxu0 0
    %1015 = vmatprep.subr.bf16.mxu0 0
    %1016 = vmatpush2.bf16.msra.mxu0 0
    %1017 = vmatprep.subr.bf16.mxu0 0
    %1018 = vmatpush2.bf16.msra.mxu0 0
    %1019 = vmatprep.subr.bf16.mxu0 0
    %1020 = vmatpush2.bf16.msra.mxu0 0
    %1021 = vmatprep.subr.bf16.mxu0 %v986
    %1022 = vmatpush2.bf16.msra.mxu0 %v983
    %1023 = vmatprep.mubr.bf16.mxu0 %v974
    %1024 = vmatmul.mubr.bf16.gmra.mxu0 %v394
    %v1025 = vpop.f32.mrf.mxu0
    %v1026 = vadd.f32 %v755, %v1025
    %v1027 = vpop.f32.mrf.mxu0
    %v1028 = vadd.f32 %v757, %v1027
    %v1029 = vpop.f32.mrf.mxu0
    %v1030 = vadd.f32 %v759, %v1029
    %v1031 = vpop.f32.mrf.mxu0
    %v1032 = vadd.f32 %v761, %v1031
    %1033 = vmatprep.mubr.bf16.mxu0 %v977
    %1034 = vmatmul.mubr.bf16.gmra.mxu0 %v396
    %v1035 = vpop.f32.mrf.mxu0
    %v1036 = vadd.f32 %v765, %v1035
    %v1037 = vpop.f32.mrf.mxu0
    %v1038 = vadd.f32 %v767, %v1037
    %v1039 = vpop.f32.mrf.mxu0
    %v1040 = vadd.f32 %v769, %v1039
    %v1041 = vpop.f32.mrf.mxu0
    %v1042 = vadd.f32 %v771, %v1041
    %1043 = vmatprep.mubr.bf16.mxu0 %v980
    %1044 = vmatmul.mubr.bf16.gmra.mxu0 %v398
    %v1045 = vpop.f32.mrf.mxu0
    %v1046 = vadd.f32 %v775, %v1045
    %v1047 = vpop.f32.mrf.mxu0
    %v1048 = vadd.f32 %v777, %v1047
    %v1049 = vpop.f32.mrf.mxu0
    %v1050 = vpop.f32.mrf.mxu0
    %1051 = vdwg.mxu0
    %1052 = vmatprep.subr.bf16.mxu0 0
    %1053 = vmatpush1.bf16.msra.mxu0 %v945
    %1054 = vmatprep.subr.bf16.mxu0 0
    %1055 = vmatpush1.bf16.msra.mxu0 %v942
    %1056 = vmatprep.subr.bf16.mxu0 0
    %1057 = vmatpush1.bf16.msra.mxu0 %v939
    %1058 = vmatprep.subr.bf16.mxu0 0
    %1059 = vmatpush1.bf16.msra.mxu0 %v936
    %1060 = vmatprep.subr.bf16.mxu0 0
    %1061 = vmatpush1.bf16.msra.mxu0 %v933
    %1062 = vmatprep.subr.bf16.mxu0 0
    %1063 = vmatpush1.bf16.msra.mxu0 %v930
    %1064 = vmatprep.subr.bf16.mxu0 0
    %1065 = vmatpush1.bf16.msra.mxu0 %v927
    %1066 = vmatprep.subr.bf16.mxu0 0
    %1067 = vmatpush1.bf16.msra.mxu0 %v924
    %1068 = vmatprep.subr.bf16.mxu0 0
    %1069 = vmatpush2.bf16.msra.mxu0 0
    %1070 = vmatprep.subr.bf16.mxu0 0
    %1071 = vmatpush2.bf16.msra.mxu0 0
    %1072 = vmatprep.subr.bf16.mxu0 0
    %1073 = vmatpush2.bf16.msra.mxu0 0
    %1074 = vmatprep.subr.bf16.mxu0 0
    %1075 = vmatpush2.bf16.msra.mxu0 0
    %1076 = vmatprep.subr.bf16.mxu0 0
    %1077 = vmatpush2.bf16.msra.mxu0 0
    %1078 = vmatprep.subr.bf16.mxu0 0
    %1079 = vmatpush2.bf16.msra.mxu0 0
    %1080 = vmatprep.subr.bf16.mxu0 0
    %1081 = vmatpush2.bf16.msra.mxu0 0
    %1082 = vmatprep.subr.bf16.mxu0 0
    %1083 = vmatpush2.bf16.msra.mxu0 %v989
    %1084 = vmatprep.mubr.bf16.mxu0 %v974
    %1085 = vmatmul.mubr.bf16.gmra.mxu0 %v394
    %v1086 = vpop.f32.mrf.mxu0
    %v1087 = vadd.f32 %v816, %v1086
    %v1088 = vpop.f32.mrf.mxu0
    %v1089 = vpop.f32.mrf.mxu0
    %v1090 = vadd.f32 %v819, %v1089
    %v1091 = vpop.f32.mrf.mxu0
    %1092 = vmatprep.mubr.bf16.mxu0 %v977
    %1093 = vmatmul.mubr.bf16.gmra.mxu0 %v396
    %v1094 = vpop.f32.mrf.mxu0
    %v1095 = vadd.f32 %v824, %v1094
    %v1096 = vpop.f32.mrf.mxu0
    %v1097 = vpop.f32.mrf.mxu0
    %v1098 = vadd.f32 %v827, %v1097
    %v1099 = vpop.f32.mrf.mxu0
    %1100 = vmatprep.mubr.bf16.mxu0 %v980
    %1101 = vmatmul.mubr.bf16.gmra.mxu0 %v398
    %v1102 = vpop.f32.mrf.mxu0
    %v1103 = vadd.f32 %v832, %v1102
    %v1104 = vpop.f32.mrf.mxu0
    %v1105 = vpop.f32.mrf.mxu0
    %v1106 = vpop.f32.mrf.mxu0
    %1107 = vdwg.mxu0
    %s1108 = scalar_lea.vmem %s2, 40
    %v1109 = vld [vmem:[%s1108] sm:$0xf]
    %v1110 = vld [vmem:[%s1108 + $0x4] sm:$0xf]
    %v1111 = vld [vmem:[%s1108 + $0x8] sm:$0xf]
    %v1112 = vld [vmem:[%s1108 + $0xc] sm:$0xf]
    %v1113 = vld [vmem:[%s1108 + $0x10] sm:$0xf]
    %v1119 = vunpack.c.l.b16 %v1109
    %v1120 = vunpack.c.l.b16 %v1110
    %v1121 = vunpack.c.l.b16 %v1111
    %v1122 = vunpack.c.l.b16 %v1112
    %v1123 = vunpack.c.l.b16 %v1113
    %v1124 = vpack.c.b16 %v1120, %v1119
    %v1125 = vpack.c.b16 %v1122, %v1121
    %v1126 = vpack.c.b16 %v1123, %v1123
    %v1128 = vsel %vm316, %v1124, 0
    %v1131 = vsel %vm316, %v1125, 0
    %v1134 = vsel %vm316, %v1126, 0
    %1136 = vmatprep.subr.bf16.mxu0 0
    %1137 = vmatpush1.bf16.msra.mxu0 0
    %1138 = vmatprep.subr.bf16.mxu0 0
    %1139 = vmatpush1.bf16.msra.mxu0 0
    %1140 = vmatprep.subr.bf16.mxu0 %v331
    %1141 = vmatpush1.bf16.msra.mxu0 %v328
    %1142 = vmatprep.subr.bf16.mxu0 %v303
    %1143 = vmatpush1.bf16.msra.mxu0 %v302
    %1144 = vmatprep.subr.bf16.mxu0 %v301
    %1145 = vmatpush1.bf16.msra.mxu0 %v300
    %1146 = vmatprep.subr.bf16.mxu0 %v299
    %1147 = vmatpush1.bf16.msra.mxu0 %v298
    %1148 = vmatprep.subr.bf16.mxu0 %v297
    %1149 = vmatpush1.bf16.msra.mxu0 %v296
    %1150 = vmatprep.subr.bf16.mxu0 %v295
    %1151 = vmatpush1.bf16.msra.mxu0 %v294
    %1152 = vmatprep.subr.bf16.mxu0 0
    %1153 = vmatpush2.bf16.msra.mxu0 0
    %1154 = vmatprep.subr.bf16.mxu0 0
    %1155 = vmatpush2.bf16.msra.mxu0 0
    %1156 = vmatprep.subr.bf16.mxu0 0
    %1157 = vmatpush2.bf16.msra.mxu0 0
    %1158 = vmatprep.subr.bf16.mxu0 0
    %1159 = vmatpush2.bf16.msra.mxu0 0
    %1160 = vmatprep.subr.bf16.mxu0 0
    %1161 = vmatpush2.bf16.msra.mxu0 0
    %1162 = vmatprep.subr.bf16.mxu0 0
    %1163 = vmatpush2.bf16.msra.mxu0 0
    %1164 = vmatprep.subr.bf16.mxu0 0
    %1165 = vmatpush2.bf16.msra.mxu0 0
    %1166 = vmatprep.subr.bf16.mxu0 0
    %1167 = vmatpush2.bf16.msra.mxu0 0
    %1168 = vmatprep.mubr.bf16.mxu0 0
    %1169 = vmatmul.mubr.bf16.gmra.mxu0 %v1128
    %v1170 = vpop.f32.mrf.mxu0
    %v1171 = vadd.f32 0.0, %v1170
    %v1172 = vpop.f32.mrf.mxu0
    %v1173 = vadd.f32 0.0, %v1172
    %v1174 = vpop.f32.mrf.mxu0
    %v1175 = vadd.f32 0.0, %v1174
    %v1176 = vpop.f32.mrf.mxu0
    %v1177 = vadd.f32 0.0, %v1176
    %1178 = vmatprep.mubr.bf16.mxu0 0
    %1179 = vmatmul.mubr.bf16.gmra.mxu0 %v1131
    %v1180 = vpop.f32.mrf.mxu0
    %v1181 = vadd.f32 0.0, %v1180
    %v1182 = vpop.f32.mrf.mxu0
    %v1183 = vadd.f32 0.0, %v1182
    %v1184 = vpop.f32.mrf.mxu0
    %v1185 = vadd.f32 0.0, %v1184
    %v1186 = vpop.f32.mrf.mxu0
    %v1187 = vadd.f32 0.0, %v1186
    %1188 = vmatprep.mubr.bf16.mxu0 0
    %1189 = vmatmul.mubr.bf16.gmra.mxu0 %v1134
    %v1190 = vpop.f32.mrf.mxu0
    %v1191 = vadd.f32 0.0, %v1190
    %v1192 = vpop.f32.mrf.mxu0
    %v1193 = vadd.f32 0.0, %v1192
    %v1194 = vpop.f32.mrf.mxu0
    %v1195 = vpop.f32.mrf.mxu0
    %1196 = vdwg.mxu0
    %v1197 = vpack.c.bf16 %v1175, %v1171
    %v1198 = vpack.c.bf16 %v1177, %v1173
    %v1199 = vpack.c.bf16 %v1185, %v1181
    %v1200 = vpack.c.bf16 %v1187, %v1183
    %v1201 = vpack.c.bf16 %v1191, %v1191
    %v1202 = vpack.c.bf16 %v1193, %v1193
    %s1203 = scalar_lea.vmem %s3, 408
    %v1204 = vld [vmem:[%s1203] sm:$0xff]
    %v1205 = vld [vmem:[%s1203 + $0x8] sm:$0xf]
    %v1206 = vld [vmem:[%s1203 + $0xc] sm:$0xff]
    %v1207 = vld [vmem:[%s1203 + $0x14] sm:$0xf]
    %v1208 = vld [vmem:[%s1203 + $0x18] sm:$0xff]
    %v1209 = vld [vmem:[%s1203 + $0x20] sm:$0xf]
    %v1210 = vld [vmem:[%s1203 + $0x24] sm:$0xff]
    %v1211 = vld [vmem:[%s1203 + $0x2c] sm:$0xf]
    %v1212 = vld [vmem:[%s1203 + $0x30] sm:$0xff]
    %v1213 = vld [vmem:[%s1203 + $0x38] sm:$0xf]
    %v1214 = vld [vmem:[%s1203 + $0x3c] sm:$0xff]
    %v1215 = vld [vmem:[%s1203 + $0x44] sm:$0xf]
    %v1216 = vld [vmem:[%s1203 + $0x48] sm:$0xff]
    %v1217 = vld [vmem:[%s1203 + $0x50] sm:$0xf]
    %v1218 = vld [vmem:[%s1203 + $0x54] sm:$0xff]
    %v1219 = vld [vmem:[%s1203 + $0x5c] sm:$0xf]
    %v1220 = vld [vmem:[%s1203 + $0x60] sm:$0xff]
    %v1221 = vld [vmem:[%s1203 + $0x68] sm:$0xf]
    %v1222 = vld [vmem:[%s1203 + $0x6c] sm:$0xff]
    %v1223 = vld [vmem:[%s1203 + $0x74] sm:$0xf]
    %v1224 = vld [vmem:[%s1203 + $0x78] sm:$0xff]
    %v1225 = vld [vmem:[%s1203 + $0x80] sm:$0xf]
    %v1226 = vld [vmem:[%s1203 + $0x84] sm:$0xff]
    %v1227 = vld [vmem:[%s1203 + $0x8c] sm:$0xf]
    %v1228 = vld [vmem:[%s1203 + $0x90] sm:$0xff]
    %v1229 = vld [vmem:[%s1203 + $0x98] sm:$0xf]
    %v1230 = vld [vmem:[%s1203 + $0x9c] sm:$0xff]
    %v1231 = vld [vmem:[%s1203 + $0xa4] sm:$0xf]
    %v1232 = vld [vmem:[%s1203 + $0xa8] sm:$0xff]
    %v1233 = vld [vmem:[%s1203 + $0xb0] sm:$0xf]
    %v1234 = vld [vmem:[%s1203 + $0xb4] sm:$0xff]
    %v1235 = vld [vmem:[%s1203 + $0xbc] sm:$0xf]
    %v1236 = vld [vmem:[%s1203 + $0xc0] sm:$0x33]
    %v1237 = vld [vmem:[%s1203 + $0xc8] sm:$0x3]
    %v1272 = vunpack.c.l.b16 %v1204
    %v1273 = vunpack.c.h.b16 %v1204
    %v1274 = vunpack.c.l.b16 %v1205
    %v1275 = vunpack.c.l.b16 %v1206
    %v1276 = vunpack.c.h.b16 %v1206
    %v1277 = vunpack.c.l.b16 %v1207
    %v1278 = vunpack.c.l.b16 %v1208
    %v1279 = vunpack.c.h.b16 %v1208
    %v1280 = vunpack.c.l.b16 %v1209
    %v1281 = vunpack.c.l.b16 %v1210
    %v1282 = vunpack.c.h.b16 %v1210
    %v1283 = vunpack.c.l.b16 %v1211
    %v1284 = vunpack.c.l.b16 %v1212
    %v1285 = vunpack.c.h.b16 %v1212
    %v1286 = vunpack.c.l.b16 %v1213
    %v1287 = vunpack.c.l.b16 %v1214
    %v1288 = vunpack.c.h.b16 %v1214
    %v1289 = vunpack.c.l.b16 %v1215
    %v1290 = vunpack.c.l.b16 %v1216
    %v1291 = vunpack.c.h.b16 %v1216
    %v1292 = vunpack.c.l.b16 %v1217
    %v1293 = vunpack.c.l.b16 %v1218
    %v1294 = vunpack.c.h.b16 %v1218
    %v1295 = vunpack.c.l.b16 %v1219
    %v1296 = vunpack.c.l.b16 %v1220
    %v1297 = vunpack.c.h.b16 %v1220
    %v1298 = vunpack.c.l.b16 %v1221
    %v1299 = vunpack.c.l.b16 %v1222
    %v1300 = vunpack.c.h.b16 %v1222
    %v1301 = vunpack.c.l.b16 %v1223
    %v1302 = vunpack.c.l.b16 %v1224
    %v1303 = vunpack.c.h.b16 %v1224
    %v1304 = vunpack.c.l.b16 %v1225
    %v1305 = vunpack.c.l.b16 %v1226
    %v1306 = vunpack.c.h.b16 %v1226
    %v1307 = vunpack.c.l.b16 %v1227
    %v1308 = vunpack.c.l.b16 %v1228
    %v1309 = vunpack.c.h.b16 %v1228
    %v1310 = vunpack.c.l.b16 %v1229
    %v1311 = vunpack.c.l.b16 %v1230
    %v1312 = vunpack.c.h.b16 %v1230
    %v1313 = vunpack.c.l.b16 %v1231
    %v1314 = vunpack.c.l.b16 %v1232
    %v1315 = vunpack.c.h.b16 %v1232
    %v1316 = vunpack.c.l.b16 %v1233
    %v1317 = vunpack.c.l.b16 %v1234
    %v1318 = vunpack.c.h.b16 %v1234
    %v1319 = vunpack.c.l.b16 %v1235
    %v1320 = vunpack.c.l.b16 %v1236
    %v1321 = vunpack.c.h.b16 %v1236
    %v1322 = vunpack.c.l.b16 %v1237
    %v1323 = vpack.c.b16 %v1275, %v1272
    %v1324 = vpack.c.b16 %v1276, %v1273
    %v1325 = vpack.c.b16 %v1277, %v1274
    %v1326 = vpack.c.b16 %v1281, %v1278
    %v1327 = vpack.c.b16 %v1282, %v1279
    %v1328 = vpack.c.b16 %v1283, %v1280
    %v1329 = vpack.c.b16 %v1287, %v1284
    %v1330 = vpack.c.b16 %v1288, %v1285
    %v1331 = vpack.c.b16 %v1289, %v1286
    %v1332 = vpack.c.b16 %v1293, %v1290
    %v1333 = vpack.c.b16 %v1294, %v1291
    %v1334 = vpack.c.b16 %v1295, %v1292
    %v1335 = vpack.c.b16 %v1299, %v1296
    %v1336 = vpack.c.b16 %v1300, %v1297
    %v1337 = vpack.c.b16 %v1301, %v1298
    %v1338 = vpack.c.b16 %v1305, %v1302
    %v1339 = vpack.c.b16 %v1306, %v1303
    %v1340 = vpack.c.b16 %v1307, %v1304
    %v1341 = vpack.c.b16 %v1311, %v1308
    %v1342 = vpack.c.b16 %v1312, %v1309
    %v1343 = vpack.c.b16 %v1313, %v1310
    %v1344 = vpack.c.b16 %v1317, %v1314
    %v1345 = vpack.c.b16 %v1318, %v1315
    %v1346 = vpack.c.b16 %v1319, %v1316
    %v1347 = vpack.c.b16 %v1320, %v1320
    %v1348 = vpack.c.b16 %v1321, %v1321
    %v1349 = vpack.c.b16 %v1322, %v1322
    %v1375 = vsel %vm700, %v1198, 0
    %v1378 = vsel %vm700, %v1200, 0
    %v1381 = vsel %vm700, %v1202, 0
    %v1384 = vsel %vm710, %v1347, 0
    %v1387 = vsel %vm710, %v1348, 0
    %v1390 = vsel %vm710, %v1349, 0
    %1392 = vmatprep.subr.bf16.mxu0 %v1345
    %1393 = vmatpush1.bf16.msra.mxu0 %v1344
    %1394 = vmatprep.subr.bf16.mxu0 %v1342
    %1395 = vmatpush1.bf16.msra.mxu0 %v1341
    %1396 = vmatprep.subr.bf16.mxu0 %v1339
    %1397 = vmatpush1.bf16.msra.mxu0 %v1338
    %1398 = vmatprep.subr.bf16.mxu0 %v1336
    %1399 = vmatpush1.bf16.msra.mxu0 %v1335
    %1400 = vmatprep.subr.bf16.mxu0 %v1333
    %1401 = vmatpush1.bf16.msra.mxu0 %v1332
    %1402 = vmatprep.subr.bf16.mxu0 %v1330
    %1403 = vmatpush1.bf16.msra.mxu0 %v1329
    %1404 = vmatprep.subr.bf16.mxu0 %v1327
    %1405 = vmatpush1.bf16.msra.mxu0 %v1326
    %1406 = vmatprep.subr.bf16.mxu0 %v1324
    %1407 = vmatpush1.bf16.msra.mxu0 %v1323
    %1408 = vmatprep.subr.bf16.mxu0 0
    %1409 = vmatpush2.bf16.msra.mxu0 0
    %1410 = vmatprep.subr.bf16.mxu0 0
    %1411 = vmatpush2.bf16.msra.mxu0 0
    %1412 = vmatprep.subr.bf16.mxu0 0
    %1413 = vmatpush2.bf16.msra.mxu0 0
    %1414 = vmatprep.subr.bf16.mxu0 0
    %1415 = vmatpush2.bf16.msra.mxu0 0
    %1416 = vmatprep.subr.bf16.mxu0 0
    %1417 = vmatpush2.bf16.msra.mxu0 0
    %1418 = vmatprep.subr.bf16.mxu0 0
    %1419 = vmatpush2.bf16.msra.mxu0 0
    %1420 = vmatprep.subr.bf16.mxu0 0
    %1421 = vmatpush2.bf16.msra.mxu0 0
    %1422 = vmatprep.subr.bf16.mxu0 %v1387
    %1423 = vmatpush2.bf16.msra.mxu0 %v1384
    %1424 = vmatprep.mubr.bf16.mxu0 %v1375
    %1425 = vmatmul.mubr.bf16.gmra.mxu0 %v1197
    %v1426 = vpop.f32.mrf.mxu0
    %v1427 = vadd.f32 0.0, %v1426
    %v1428 = vpop.f32.mrf.mxu0
    %v1429 = vadd.f32 0.0, %v1428
    %v1430 = vpop.f32.mrf.mxu0
    %v1431 = vadd.f32 0.0, %v1430
    %v1432 = vpop.f32.mrf.mxu0
    %v1433 = vadd.f32 0.0, %v1432
    %1434 = vmatprep.mubr.bf16.mxu0 %v1378
    %1435 = vmatmul.mubr.bf16.gmra.mxu0 %v1199
    %v1436 = vpop.f32.mrf.mxu0
    %v1437 = vadd.f32 0.0, %v1436
    %v1438 = vpop.f32.mrf.mxu0
    %v1439 = vadd.f32 0.0, %v1438
    %v1440 = vpop.f32.mrf.mxu0
    %v1441 = vadd.f32 0.0, %v1440
    %v1442 = vpop.f32.mrf.mxu0
    %v1443 = vadd.f32 0.0, %v1442
    %1444 = vmatprep.mubr.bf16.mxu0 %v1381
    %1445 = vmatmul.mubr.bf16.gmra.mxu0 %v1201
    %v1446 = vpop.f32.mrf.mxu0
    %v1447 = vadd.f32 0.0, %v1446
    %v1448 = vpop.f32.mrf.mxu0
    %v1449 = vadd.f32 0.0, %v1448
    %v1450 = vpop.f32.mrf.mxu0
    %v1451 = vpop.f32.mrf.mxu0
    %1452 = vdwg.mxu0
    %1453 = vmatprep.subr.bf16.mxu0 0
    %1454 = vmatpush1.bf16.msra.mxu0 %v1346
    %1455 = vmatprep.subr.bf16.mxu0 0
    %1456 = vmatpush1.bf16.msra.mxu0 %v1343
    %1457 = vmatprep.subr.bf16.mxu0 0
    %1458 = vmatpush1.bf16.msra.mxu0 %v1340
    %1459 = vmatprep.subr.bf16.mxu0 0
    %1460 = vmatpush1.bf16.msra.mxu0 %v1337
    %1461 = vmatprep.subr.bf16.mxu0 0
    %1462 = vmatpush1.bf16.msra.mxu0 %v1334
    %1463 = vmatprep.subr.bf16.mxu0 0
    %1464 = vmatpush1.bf16.msra.mxu0 %v1331
    %1465 = vmatprep.subr.bf16.mxu0 0
    %1466 = vmatpush1.bf16.msra.mxu0 %v1328
    %1467 = vmatprep.subr.bf16.mxu0 0
    %1468 = vmatpush1.bf16.msra.mxu0 %v1325
    %1469 = vmatprep.subr.bf16.mxu0 0
    %1470 = vmatpush2.bf16.msra.mxu0 0
    %1471 = vmatprep.subr.bf16.mxu0 0
    %1472 = vmatpush2.bf16.msra.mxu0 0
    %1473 = vmatprep.subr.bf16.mxu0 0
    %1474 = vmatpush2.bf16.msra.mxu0 0
    %1475 = vmatprep.subr.bf16.mxu0 0
    %1476 = vmatpush2.bf16.msra.mxu0 0
    %1477 = vmatprep.subr.bf16.mxu0 0
    %1478 = vmatpush2.bf16.msra.mxu0 0
    %1479 = vmatprep.subr.bf16.mxu0 0
    %1480 = vmatpush2.bf16.msra.mxu0 0
    %1481 = vmatprep.subr.bf16.mxu0 0
    %1482 = vmatpush2.bf16.msra.mxu0 0
    %1483 = vmatprep.subr.bf16.mxu0 0
    %1484 = vmatpush2.bf16.msra.mxu0 %v1390
    %1485 = vmatprep.mubr.bf16.mxu0 %v1375
    %1486 = vmatmul.mubr.bf16.gmra.mxu0 %v1197
    %v1487 = vpop.f32.mrf.mxu0
    %v1488 = vadd.f32 0.0, %v1487
    %v1489 = vpop.f32.mrf.mxu0
    %v1490 = vpop.f32.mrf.mxu0
    %v1491 = vadd.f32 0.0, %v1490
    %v1492 = vpop.f32.mrf.mxu0
    %1493 = vmatprep.mubr.bf16.mxu0 %v1378
    %1494 = vmatmul.mubr.bf16.gmra.mxu0 %v1199
    %v1495 = vpop.f32.mrf.mxu0
    %v1496 = vadd.f32 0.0, %v1495
    %v1497 = vpop.f32.mrf.mxu0
    %v1498 = vpop.f32.mrf.mxu0
    %v1499 = vadd.f32 0.0, %v1498
    %v1500 = vpop.f32.mrf.mxu0
    %1501 = vmatprep.mubr.bf16.mxu0 %v1381
    %1502 = vmatmul.mubr.bf16.gmra.mxu0 %v1201
    %v1503 = vpop.f32.mrf.mxu0
    %v1504 = vadd.f32 0.0, %v1503
    %v1505 = vpop.f32.mrf.mxu0
    %v1506 = vpop.f32.mrf.mxu0
    %v1507 = vpop.f32.mrf.mxu0
    %1508 = vdwg.mxu0
    %v1509 = vadd.f32 %v1026, %v1427
    %v1510 = vadd.f32 %v1028, %v1429
    %v1511 = vadd.f32 %v1087, %v1488
    %v1512 = vadd.f32 %v1030, %v1431
    %v1513 = vadd.f32 %v1032, %v1433
    %v1514 = vadd.f32 %v1090, %v1491
    %v1515 = vadd.f32 %v1036, %v1437
    %v1516 = vadd.f32 %v1038, %v1439
    %v1517 = vadd.f32 %v1095, %v1496
    %v1518 = vadd.f32 %v1040, %v1441
    %v1519 = vadd.f32 %v1042, %v1443
    %v1520 = vadd.f32 %v1098, %v1499
    %v1521 = vadd.f32 %v1046, %v1447
    %v1522 = vadd.f32 %v1048, %v1449
    %v1523 = vadd.f32 %v1103, %v1504
    %s1524 = scalar_lea.vmem %s2, 60
    %v1525 = vld [vmem:[%s1524] sm:$0xf]
    %v1526 = vld [vmem:[%s1524 + $0x4] sm:$0xf]
    %v1527 = vld [vmem:[%s1524 + $0x8] sm:$0xf]
    %v1528 = vld [vmem:[%s1524 + $0xc] sm:$0xf]
    %v1529 = vld [vmem:[%s1524 + $0x10] sm:$0xf]
    %v1535 = vunpack.c.l.b16 %v1525
    %v1536 = vunpack.c.l.b16 %v1526
    %v1537 = vunpack.c.l.b16 %v1527
    %v1538 = vunpack.c.l.b16 %v1528
    %v1539 = vunpack.c.l.b16 %v1529
    %v1540 = vpack.c.b16 %v1536, %v1535
    %v1541 = vpack.c.b16 %v1538, %v1537
    %v1542 = vpack.c.b16 %v1539, %v1539
    %v1544 = vsel %vm316, %v1540, 0
    %v1547 = vsel %vm316, %v1541, 0
    %v1550 = vsel %vm316, %v1542, 0
    %1552 = vmatprep.subr.bf16.mxu0 0
    %1553 = vmatpush1.bf16.msra.mxu0 0
    %1554 = vmatprep.subr.bf16.mxu0 0
    %1555 = vmatpush1.bf16.msra.mxu0 0
    %1556 = vmatprep.subr.bf16.mxu0 %v331
    %1557 = vmatpush1.bf16.msra.mxu0 %v328
    %1558 = vmatprep.subr.bf16.mxu0 %v303
    %1559 = vmatpush1.bf16.msra.mxu0 %v302
    %1560 = vmatprep.subr.bf16.mxu0 %v301
    %1561 = vmatpush1.bf16.msra.mxu0 %v300
    %1562 = vmatprep.subr.bf16.mxu0 %v299
    %1563 = vmatpush1.bf16.msra.mxu0 %v298
    %1564 = vmatprep.subr.bf16.mxu0 %v297
    %1565 = vmatpush1.bf16.msra.mxu0 %v296
    %1566 = vmatprep.subr.bf16.mxu0 %v295
    %1567 = vmatpush1.bf16.msra.mxu0 %v294
    %1568 = vmatprep.subr.bf16.mxu0 0
    %1569 = vmatpush2.bf16.msra.mxu0 0
    %1570 = vmatprep.subr.bf16.mxu0 0
    %1571 = vmatpush2.bf16.msra.mxu0 0
    %1572 = vmatprep.subr.bf16.mxu0 0
    %1573 = vmatpush2.bf16.msra.mxu0 0
    %1574 = vmatprep.subr.bf16.mxu0 0
    %1575 = vmatpush2.bf16.msra.mxu0 0
    %1576 = vmatprep.subr.bf16.mxu0 0
    %1577 = vmatpush2.bf16.msra.mxu0 0
    %1578 = vmatprep.subr.bf16.mxu0 0
    %1579 = vmatpush2.bf16.msra.mxu0 0
    %1580 = vmatprep.subr.bf16.mxu0 0
    %1581 = vmatpush2.bf16.msra.mxu0 0
    %1582 = vmatprep.subr.bf16.mxu0 0
    %1583 = vmatpush2.bf16.msra.mxu0 0
    %1584 = vmatprep.mubr.bf16.mxu0 0
    %1585 = vmatmul.mubr.bf16.gmra.mxu0 %v1544
    %v1586 = vpop.f32.mrf.mxu0
    %v1587 = vadd.f32 0.0, %v1586
    %v1588 = vpop.f32.mrf.mxu0
    %v1589 = vadd.f32 0.0, %v1588
    %v1590 = vpop.f32.mrf.mxu0
    %v1591 = vadd.f32 0.0, %v1590
    %v1592 = vpop.f32.mrf.mxu0
    %v1593 = vadd.f32 0.0, %v1592
    %1594 = vmatprep.mubr.bf16.mxu0 0
    %1595 = vmatmul.mubr.bf16.gmra.mxu0 %v1547
    %v1596 = vpop.f32.mrf.mxu0
    %v1597 = vadd.f32 0.0, %v1596
    %v1598 = vpop.f32.mrf.mxu0
    %v1599 = vadd.f32 0.0, %v1598
    %v1600 = vpop.f32.mrf.mxu0
    %v1601 = vadd.f32 0.0, %v1600
    %v1602 = vpop.f32.mrf.mxu0
    %v1603 = vadd.f32 0.0, %v1602
    %1604 = vmatprep.mubr.bf16.mxu0 0
    %1605 = vmatmul.mubr.bf16.gmra.mxu0 %v1550
    %v1606 = vpop.f32.mrf.mxu0
    %v1607 = vadd.f32 0.0, %v1606
    %v1608 = vpop.f32.mrf.mxu0
    %v1609 = vadd.f32 0.0, %v1608
    %v1610 = vpop.f32.mrf.mxu0
    %v1611 = vpop.f32.mrf.mxu0
    %1612 = vdwg.mxu0
    %v1613 = vpack.c.bf16 %v1591, %v1587
    %v1614 = vpack.c.bf16 %v1593, %v1589
    %v1615 = vpack.c.bf16 %v1601, %v1597
    %v1616 = vpack.c.bf16 %v1603, %v1599
    %v1617 = vpack.c.bf16 %v1607, %v1607
    %v1618 = vpack.c.bf16 %v1609, %v1609
    %s1619 = scalar_lea.vmem %s3, 612
    %v1620 = vld [vmem:[%s1619] sm:$0xff]
    %v1621 = vld [vmem:[%s1619 + $0x8] sm:$0xf]
    %v1622 = vld [vmem:[%s1619 + $0xc] sm:$0xff]
    %v1623 = vld [vmem:[%s1619 + $0x14] sm:$0xf]
    %v1624 = vld [vmem:[%s1619 + $0x18] sm:$0xff]
    %v1625 = vld [vmem:[%s1619 + $0x20] sm:$0xf]
    %v1626 = vld [vmem:[%s1619 + $0x24] sm:$0xff]
    %v1627 = vld [vmem:[%s1619 + $0x2c] sm:$0xf]
    %v1628 = vld [vmem:[%s1619 + $0x30] sm:$0xff]
    %v1629 = vld [vmem:[%s1619 + $0x38] sm:$0xf]
    %v1630 = vld [vmem:[%s1619 + $0x3c] sm:$0xff]
    %v1631 = vld [vmem:[%s1619 + $0x44] sm:$0xf]
    %v1632 = vld [vmem:[%s1619 + $0x48] sm:$0xff]
    %v1633 = vld [vmem:[%s1619 + $0x50] sm:$0xf]
    %v1634 = vld [vmem:[%s1619 + $0x54] sm:$0xff]
    %v1635 = vld [vmem:[%s1619 + $0x5c] sm:$0xf]
    %v1636 = vld [vmem:[%s1619 + $0x60] sm:$0xff]
    %v1637 = vld [vmem:[%s1619 + $0x68] sm:$0xf]
    %v1638 = vld [vmem:[%s1619 + $0x6c] sm:$0xff]
    %v1639 = vld [vmem:[%s1619 + $0x74] sm:$0xf]
    %v1640 = vld [vmem:[%s1619 + $0x78] sm:$0xff]
    %v1641 = vld [vmem:[%s1619 + $0x80] sm:$0xf]
    %v1642 = vld [vmem:[%s1619 + $0x84] sm:$0xff]
    %v1643 = vld [vmem:[%s1619 + $0x8c] sm:$0xf]
    %v1644 = vld [vmem:[%s1619 + $0x90] sm:$0xff]
    %v1645 = vld [vmem:[%s1619 + $0x98] sm:$0xf]
    %v1646 = vld [vmem:[%s1619 + $0x9c] sm:$0xff]
    %v1647 = vld [vmem:[%s1619 + $0xa4] sm:$0xf]
    %v1648 = vld [vmem:[%s1619 + $0xa8] sm:$0xff]
    %v1649 = vld [vmem:[%s1619 + $0xb0] sm:$0xf]
    %v1650 = vld [vmem:[%s1619 + $0xb4] sm:$0xff]
    %v1651 = vld [vmem:[%s1619 + $0xbc] sm:$0xf]
    %v1652 = vld [vmem:[%s1619 + $0xc0] sm:$0x33]
    %v1653 = vld [vmem:[%s1619 + $0xc8] sm:$0x3]
    %v1688 = vunpack.c.l.b16 %v1620
    %v1689 = vunpack.c.h.b16 %v1620
    %v1690 = vunpack.c.l.b16 %v1621
    %v1691 = vunpack.c.l.b16 %v1622
    %v1692 = vunpack.c.h.b16 %v1622
    %v1693 = vunpack.c.l.b16 %v1623
    %v1694 = vunpack.c.l.b16 %v1624
    %v1695 = vunpack.c.h.b16 %v1624
    %v1696 = vunpack.c.l.b16 %v1625
    %v1697 = vunpack.c.l.b16 %v1626
    %v1698 = vunpack.c.h.b16 %v1626
    %v1699 = vunpack.c.l.b16 %v1627
    %v1700 = vunpack.c.l.b16 %v1628
    %v1701 = vunpack.c.h.b16 %v1628
    %v1702 = vunpack.c.l.b16 %v1629
    %v1703 = vunpack.c.l.b16 %v1630
    %v1704 = vunpack.c.h.b16 %v1630
    %v1705 = vunpack.c.l.b16 %v1631
    %v1706 = vunpack.c.l.b16 %v1632
    %v1707 = vunpack.c.h.b16 %v1632
    %v1708 = vunpack.c.l.b16 %v1633
    %v1709 = vunpack.c.l.b16 %v1634
    %v1710 = vunpack.c.h.b16 %v1634
    %v1711 = vunpack.c.l.b16 %v1635
    %v1712 = vunpack.c.l.b16 %v1636
    %v1713 = vunpack.c.h.b16 %v1636
    %v1714 = vunpack.c.l.b16 %v1637
    %v1715 = vunpack.c.l.b16 %v1638
    %v1716 = vunpack.c.h.b16 %v1638
    %v1717 = vunpack.c.l.b16 %v1639
    %v1718 = vunpack.c.l.b16 %v1640
    %v1719 = vunpack.c.h.b16 %v1640
    %v1720 = vunpack.c.l.b16 %v1641
    %v1721 = vunpack.c.l.b16 %v1642
    %v1722 = vunpack.c.h.b16 %v1642
    %v1723 = vunpack.c.l.b16 %v1643
    %v1724 = vunpack.c.l.b16 %v1644
    %v1725 = vunpack.c.h.b16 %v1644
    %v1726 = vunpack.c.l.b16 %v1645
    %v1727 = vunpack.c.l.b16 %v1646
    %v1728 = vunpack.c.h.b16 %v1646
    %v1729 = vunpack.c.l.b16 %v1647
    %v1730 = vunpack.c.l.b16 %v1648
    %v1731 = vunpack.c.h.b16 %v1648
    %v1732 = vunpack.c.l.b16 %v1649
    %v1733 = vunpack.c.l.b16 %v1650
    %v1734 = vunpack.c.h.b16 %v1650
    %v1735 = vunpack.c.l.b16 %v1651
    %v1736 = vunpack.c.l.b16 %v1652
    %v1737 = vunpack.c.h.b16 %v1652
    %v1738 = vunpack.c.l.b16 %v1653
    %v1739 = vpack.c.b16 %v1691, %v1688
    %v1740 = vpack.c.b16 %v1692, %v1689
    %v1741 = vpack.c.b16 %v1693, %v1690
    %v1742 = vpack.c.b16 %v1697, %v1694
    %v1743 = vpack.c.b16 %v1698, %v1695
    %v1744 = vpack.c.b16 %v1699, %v1696
    %v1745 = vpack.c.b16 %v1703, %v1700
    %v1746 = vpack.c.b16 %v1704, %v1701
    %v1747 = vpack.c.b16 %v1705, %v1702
    %v1748 = vpack.c.b16 %v1709, %v1706
    %v1749 = vpack.c.b16 %v1710, %v1707
    %v1750 = vpack.c.b16 %v1711, %v1708
    %v1751 = vpack.c.b16 %v1715, %v1712
    %v1752 = vpack.c.b16 %v1716, %v1713
    %v1753 = vpack.c.b16 %v1717, %v1714
    %v1754 = vpack.c.b16 %v1721, %v1718
    %v1755 = vpack.c.b16 %v1722, %v1719
    %v1756 = vpack.c.b16 %v1723, %v1720
    %v1757 = vpack.c.b16 %v1727, %v1724
    %v1758 = vpack.c.b16 %v1728, %v1725
    %v1759 = vpack.c.b16 %v1729, %v1726
    %v1760 = vpack.c.b16 %v1733, %v1730
    %v1761 = vpack.c.b16 %v1734, %v1731
    %v1762 = vpack.c.b16 %v1735, %v1732
    %v1763 = vpack.c.b16 %v1736, %v1736
    %v1764 = vpack.c.b16 %v1737, %v1737
    %v1765 = vpack.c.b16 %v1738, %v1738
    %v1791 = vsel %vm700, %v1614, 0
    %v1794 = vsel %vm700, %v1616, 0
    %v1797 = vsel %vm700, %v1618, 0
    %v1800 = vsel %vm710, %v1763, 0
    %v1803 = vsel %vm710, %v1764, 0
    %v1806 = vsel %vm710, %v1765, 0
    %1808 = vmatprep.subr.bf16.mxu0 %v1761
    %1809 = vmatpush1.bf16.msra.mxu0 %v1760
    %1810 = vmatprep.subr.bf16.mxu0 %v1758
    %1811 = vmatpush1.bf16.msra.mxu0 %v1757
    %1812 = vmatprep.subr.bf16.mxu0 %v1755
    %1813 = vmatpush1.bf16.msra.mxu0 %v1754
    %1814 = vmatprep.subr.bf16.mxu0 %v1752
    %1815 = vmatpush1.bf16.msra.mxu0 %v1751
    %1816 = vmatprep.subr.bf16.mxu0 %v1749
    %1817 = vmatpush1.bf16.msra.mxu0 %v1748
    %1818 = vmatprep.subr.bf16.mxu0 %v1746
    %1819 = vmatpush1.bf16.msra.mxu0 %v1745
    %1820 = vmatprep.subr.bf16.mxu0 %v1743
    %1821 = vmatpush1.bf16.msra.mxu0 %v1742
    %1822 = vmatprep.subr.bf16.mxu0 %v1740
    %1823 = vmatpush1.bf16.msra.mxu0 %v1739
    %1824 = vmatprep.subr.bf16.mxu0 0
    %1825 = vmatpush2.bf16.msra.mxu0 0
    %1826 = vmatprep.subr.bf16.mxu0 0
    %1827 = vmatpush2.bf16.msra.mxu0 0
    %1828 = vmatprep.subr.bf16.mxu0 0
    %1829 = vmatpush2.bf16.msra.mxu0 0
    %1830 = vmatprep.subr.bf16.mxu0 0
    %1831 = vmatpush2.bf16.msra.mxu0 0
    %1832 = vmatprep.subr.bf16.mxu0 0
    %1833 = vmatpush2.bf16.msra.mxu0 0
    %1834 = vmatprep.subr.bf16.mxu0 0
    %1835 = vmatpush2.bf16.msra.mxu0 0
    %1836 = vmatprep.subr.bf16.mxu0 0
    %1837 = vmatpush2.bf16.msra.mxu0 0
    %1838 = vmatprep.subr.bf16.mxu0 %v1803
    %1839 = vmatpush2.bf16.msra.mxu0 %v1800
    %1840 = vmatprep.mubr.bf16.mxu0 %v1791
    %1841 = vmatmul.mubr.bf16.gmra.mxu0 %v1613
    %v1842 = vpop.f32.mrf.mxu0
    %v1843 = vadd.f32 0.0, %v1842
    %v1844 = vpop.f32.mrf.mxu0
    %v1845 = vadd.f32 0.0, %v1844
    %v1846 = vpop.f32.mrf.mxu0
    %v1847 = vadd.f32 0.0, %v1846
    %v1848 = vpop.f32.mrf.mxu0
    %v1849 = vadd.f32 0.0, %v1848
    %1850 = vmatprep.mubr.bf16.mxu0 %v1794
    %1851 = vmatmul.mubr.bf16.gmra.mxu0 %v1615
    %v1852 = vpop.f32.mrf.mxu0
    %v1853 = vadd.f32 0.0, %v1852
    %v1854 = vpop.f32.mrf.mxu0
    %v1855 = vadd.f32 0.0, %v1854
    %v1856 = vpop.f32.mrf.mxu0
    %v1857 = vadd.f32 0.0, %v1856
    %v1858 = vpop.f32.mrf.mxu0
    %v1859 = vadd.f32 0.0, %v1858
    %1860 = vmatprep.mubr.bf16.mxu0 %v1797
    %1861 = vmatmul.mubr.bf16.gmra.mxu0 %v1617
    %v1862 = vpop.f32.mrf.mxu0
    %v1863 = vadd.f32 0.0, %v1862
    %v1864 = vpop.f32.mrf.mxu0
    %v1865 = vadd.f32 0.0, %v1864
    %v1866 = vpop.f32.mrf.mxu0
    %v1867 = vpop.f32.mrf.mxu0
    %1868 = vdwg.mxu0
    %1869 = vmatprep.subr.bf16.mxu0 0
    %1870 = vmatpush1.bf16.msra.mxu0 %v1762
    %1871 = vmatprep.subr.bf16.mxu0 0
    %1872 = vmatpush1.bf16.msra.mxu0 %v1759
    %1873 = vmatprep.subr.bf16.mxu0 0
    %1874 = vmatpush1.bf16.msra.mxu0 %v1756
    %1875 = vmatprep.subr.bf16.mxu0 0
    %1876 = vmatpush1.bf16.msra.mxu0 %v1753
    %1877 = vmatprep.subr.bf16.mxu0 0
    %1878 = vmatpush1.bf16.msra.mxu0 %v1750
    %1879 = vmatprep.subr.bf16.mxu0 0
    %1880 = vmatpush1.bf16.msra.mxu0 %v1747
    %1881 = vmatprep.subr.bf16.mxu0 0
    %1882 = vmatpush1.bf16.msra.mxu0 %v1744
    %1883 = vmatprep.subr.bf16.mxu0 0
    %1884 = vmatpush1.bf16.msra.mxu0 %v1741
    %1885 = vmatprep.subr.bf16.mxu0 0
    %1886 = vmatpush2.bf16.msra.mxu0 0
    %1887 = vmatprep.subr.bf16.mxu0 0
    %1888 = vmatpush2.bf16.msra.mxu0 0
    %1889 = vmatprep.subr.bf16.mxu0 0
    %1890 = vmatpush2.bf16.msra.mxu0 0
    %1891 = vmatprep.subr.bf16.mxu0 0
    %1892 = vmatpush2.bf16.msra.mxu0 0
    %1893 = vmatprep.subr.bf16.mxu0 0
    %1894 = vmatpush2.bf16.msra.mxu0 0
    %1895 = vmatprep.subr.bf16.mxu0 0
    %1896 = vmatpush2.bf16.msra.mxu0 0
    %1897 = vmatprep.subr.bf16.mxu0 0
    %1898 = vmatpush2.bf16.msra.mxu0 0
    %1899 = vmatprep.subr.bf16.mxu0 0
    %1900 = vmatpush2.bf16.msra.mxu0 %v1806
    %1901 = vmatprep.mubr.bf16.mxu0 %v1791
    %1902 = vmatmul.mubr.bf16.gmra.mxu0 %v1613
    %v1903 = vpop.f32.mrf.mxu0
    %v1904 = vadd.f32 0.0, %v1903
    %v1905 = vpop.f32.mrf.mxu0
    %v1906 = vpop.f32.mrf.mxu0
    %v1907 = vadd.f32 0.0, %v1906
    %v1908 = vpop.f32.mrf.mxu0
    %1909 = vmatprep.mubr.bf16.mxu0 %v1794
    %1910 = vmatmul.mubr.bf16.gmra.mxu0 %v1615
    %v1911 = vpop.f32.mrf.mxu0
    %v1912 = vadd.f32 0.0, %v1911
    %v1913 = vpop.f32.mrf.mxu0
    %v1914 = vpop.f32.mrf.mxu0
    %v1915 = vadd.f32 0.0, %v1914
    %v1916 = vpop.f32.mrf.mxu0
    %1917 = vmatprep.mubr.bf16.mxu0 %v1797
    %1918 = vmatmul.mubr.bf16.gmra.mxu0 %v1617
    %v1919 = vpop.f32.mrf.mxu0
    %v1920 = vadd.f32 0.0, %v1919
    %v1921 = vpop.f32.mrf.mxu0
    %v1922 = vpop.f32.mrf.mxu0
    %v1923 = vpop.f32.mrf.mxu0
    %1924 = vdwg.mxu0
    %v1925 = vadd.f32 %v1509, %v1843
    %v1926 = vadd.f32 %v1510, %v1845
    %v1927 = vadd.f32 %v1511, %v1904
    %v1928 = vadd.f32 %v1512, %v1847
    %v1929 = vadd.f32 %v1513, %v1849
    %v1930 = vadd.f32 %v1514, %v1907
    %v1931 = vadd.f32 %v1515, %v1853
    %v1932 = vadd.f32 %v1516, %v1855
    %v1933 = vadd.f32 %v1517, %v1912
    %v1934 = vadd.f32 %v1518, %v1857
    %v1935 = vadd.f32 %v1519, %v1859
    %v1936 = vadd.f32 %v1520, %v1915
    %v1937 = vadd.f32 %v1521, %v1863
    %v1938 = vadd.f32 %v1522, %v1865
    %v1939 = vadd.f32 %v1523, %v1920
    %s1940 = scalar_lea.vmem %s2, 80
    %v1941 = vld [vmem:[%s1940] sm:$0xf]
    %v1942 = vld [vmem:[%s1940 + $0x4] sm:$0xf]
    %v1943 = vld [vmem:[%s1940 + $0x8] sm:$0xf]
    %v1944 = vld [vmem:[%s1940 + $0xc] sm:$0xf]
    %v1945 = vld [vmem:[%s1940 + $0x10] sm:$0xf]
    %v1951 = vunpack.c.l.b16 %v1941
    %v1952 = vunpack.c.l.b16 %v1942
    %v1953 = vunpack.c.l.b16 %v1943
    %v1954 = vunpack.c.l.b16 %v1944
    %v1955 = vunpack.c.l.b16 %v1945
    %v1956 = vpack.c.b16 %v1952, %v1951
    %v1957 = vpack.c.b16 %v1954, %v1953
    %v1958 = vpack.c.b16 %v1955, %v1955
    %v1960 = vsel %vm316, %v1956, 0
    %v1963 = vsel %vm316, %v1957, 0
    %v1966 = vsel %vm316, %v1958, 0
    %1968 = vmatprep.subr.bf16.mxu0 0
    %1969 = vmatpush1.bf16.msra.mxu0 0
    %1970 = vmatprep.subr.bf16.mxu0 0
    %1971 = vmatpush1.bf16.msra.mxu0 0
    %1972 = vmatprep.subr.bf16.mxu0 %v331
    %1973 = vmatpush1.bf16.msra.mxu0 %v328
    %1974 = vmatprep.subr.bf16.mxu0 %v303
    %1975 = vmatpush1.bf16.msra.mxu0 %v302
    %1976 = vmatprep.subr.bf16.mxu0 %v301
    %1977 = vmatpush1.bf16.msra.mxu0 %v300
    %1978 = vmatprep.subr.bf16.mxu0 %v299
    %1979 = vmatpush1.bf16.msra.mxu0 %v298
    %1980 = vmatprep.subr.bf16.mxu0 %v297
    %1981 = vmatpush1.bf16.msra.mxu0 %v296
    %1982 = vmatprep.subr.bf16.mxu0 %v295
    %1983 = vmatpush1.bf16.msra.mxu0 %v294
    %1984 = vmatprep.subr.bf16.mxu0 0
    %1985 = vmatpush2.bf16.msra.mxu0 0
    %1986 = vmatprep.subr.bf16.mxu0 0
    %1987 = vmatpush2.bf16.msra.mxu0 0
    %1988 = vmatprep.subr.bf16.mxu0 0
    %1989 = vmatpush2.bf16.msra.mxu0 0
    %1990 = vmatprep.subr.bf16.mxu0 0
    %1991 = vmatpush2.bf16.msra.mxu0 0
    %1992 = vmatprep.subr.bf16.mxu0 0
    %1993 = vmatpush2.bf16.msra.mxu0 0
    %1994 = vmatprep.subr.bf16.mxu0 0
    %1995 = vmatpush2.bf16.msra.mxu0 0
    %1996 = vmatprep.subr.bf16.mxu0 0
    %1997 = vmatpush2.bf16.msra.mxu0 0
    %1998 = vmatprep.subr.bf16.mxu0 0
    %1999 = vmatpush2.bf16.msra.mxu0 0
    %2000 = vmatprep.mubr.bf16.mxu0 0
    %2001 = vmatmul.mubr.bf16.gmra.mxu0 %v1960
    %v2002 = vpop.f32.mrf.mxu0
    %v2003 = vadd.f32 0.0, %v2002
    %v2004 = vpop.f32.mrf.mxu0
    %v2005 = vadd.f32 0.0, %v2004
    %v2006 = vpop.f32.mrf.mxu0
    %v2007 = vadd.f32 0.0, %v2006
    %v2008 = vpop.f32.mrf.mxu0
    %v2009 = vadd.f32 0.0, %v2008
    %2010 = vmatprep.mubr.bf16.mxu0 0
    %2011 = vmatmul.mubr.bf16.gmra.mxu0 %v1963
    %v2012 = vpop.f32.mrf.mxu0
    %v2013 = vadd.f32 0.0, %v2012
    %v2014 = vpop.f32.mrf.mxu0
    %v2015 = vadd.f32 0.0, %v2014
    %v2016 = vpop.f32.mrf.mxu0
    %v2017 = vadd.f32 0.0, %v2016
    %v2018 = vpop.f32.mrf.mxu0
    %v2019 = vadd.f32 0.0, %v2018
    %2020 = vmatprep.mubr.bf16.mxu0 0
    %2021 = vmatmul.mubr.bf16.gmra.mxu0 %v1966
    %v2022 = vpop.f32.mrf.mxu0
    %v2023 = vadd.f32 0.0, %v2022
    %v2024 = vpop.f32.mrf.mxu0
    %v2025 = vadd.f32 0.0, %v2024
    %v2026 = vpop.f32.mrf.mxu0
    %v2027 = vpop.f32.mrf.mxu0
    %2028 = vdwg.mxu0
    %v2029 = vpack.c.bf16 %v2007, %v2003
    %v2030 = vpack.c.bf16 %v2009, %v2005
    %v2031 = vpack.c.bf16 %v2017, %v2013
    %v2032 = vpack.c.bf16 %v2019, %v2015
    %v2033 = vpack.c.bf16 %v2023, %v2023
    %v2034 = vpack.c.bf16 %v2025, %v2025
    %s2035 = scalar_lea.vmem %s3, 816
    %v2036 = vld [vmem:[%s2035] sm:$0xff]
    %v2037 = vld [vmem:[%s2035 + $0x8] sm:$0xf]
    %v2038 = vld [vmem:[%s2035 + $0xc] sm:$0xff]
    %v2039 = vld [vmem:[%s2035 + $0x14] sm:$0xf]
    %v2040 = vld [vmem:[%s2035 + $0x18] sm:$0xff]
    %v2041 = vld [vmem:[%s2035 + $0x20] sm:$0xf]
    %v2042 = vld [vmem:[%s2035 + $0x24] sm:$0xff]
    %v2043 = vld [vmem:[%s2035 + $0x2c] sm:$0xf]
    %v2044 = vld [vmem:[%s2035 + $0x30] sm:$0xff]
    %v2045 = vld [vmem:[%s2035 + $0x38] sm:$0xf]
    %v2046 = vld [vmem:[%s2035 + $0x3c] sm:$0xff]
    %v2047 = vld [vmem:[%s2035 + $0x44] sm:$0xf]
    %v2048 = vld [vmem:[%s2035 + $0x48] sm:$0xff]
    %v2049 = vld [vmem:[%s2035 + $0x50] sm:$0xf]
    %v2050 = vld [vmem:[%s2035 + $0x54] sm:$0xff]
    %v2051 = vld [vmem:[%s2035 + $0x5c] sm:$0xf]
    %v2052 = vld [vmem:[%s2035 + $0x60] sm:$0xff]
    %v2053 = vld [vmem:[%s2035 + $0x68] sm:$0xf]
    %v2054 = vld [vmem:[%s2035 + $0x6c] sm:$0xff]
    %v2055 = vld [vmem:[%s2035 + $0x74] sm:$0xf]
    %v2056 = vld [vmem:[%s2035 + $0x78] sm:$0xff]
    %v2057 = vld [vmem:[%s2035 + $0x80] sm:$0xf]
    %v2058 = vld [vmem:[%s2035 + $0x84] sm:$0xff]
    %v2059 = vld [vmem:[%s2035 + $0x8c] sm:$0xf]
    %v2060 = vld [vmem:[%s2035 + $0x90] sm:$0xff]
    %v2061 = vld [vmem:[%s2035 + $0x98] sm:$0xf]
    %v2062 = vld [vmem:[%s2035 + $0x9c] sm:$0xff]
    %v2063 = vld [vmem:[%s2035 + $0xa4] sm:$0xf]
    %v2064 = vld [vmem:[%s2035 + $0xa8] sm:$0xff]
    %v2065 = vld [vmem:[%s2035 + $0xb0] sm:$0xf]
    %v2066 = vld [vmem:[%s2035 + $0xb4] sm:$0xff]
    %v2067 = vld [vmem:[%s2035 + $0xbc] sm:$0xf]
    %v2068 = vld [vmem:[%s2035 + $0xc0] sm:$0x33]
    %v2069 = vld [vmem:[%s2035 + $0xc8] sm:$0x3]
    %v2104 = vunpack.c.l.b16 %v2036
    %v2105 = vunpack.c.h.b16 %v2036
    %v2106 = vunpack.c.l.b16 %v2037
    %v2107 = vunpack.c.l.b16 %v2038
    %v2108 = vunpack.c.h.b16 %v2038
    %v2109 = vunpack.c.l.b16 %v2039
    %v2110 = vunpack.c.l.b16 %v2040
    %v2111 = vunpack.c.h.b16 %v2040
    %v2112 = vunpack.c.l.b16 %v2041
    %v2113 = vunpack.c.l.b16 %v2042
    %v2114 = vunpack.c.h.b16 %v2042
    %v2115 = vunpack.c.l.b16 %v2043
    %v2116 = vunpack.c.l.b16 %v2044
    %v2117 = vunpack.c.h.b16 %v2044
    %v2118 = vunpack.c.l.b16 %v2045
    %v2119 = vunpack.c.l.b16 %v2046
    %v2120 = vunpack.c.h.b16 %v2046
    %v2121 = vunpack.c.l.b16 %v2047
    %v2122 = vunpack.c.l.b16 %v2048
    %v2123 = vunpack.c.h.b16 %v2048
    %v2124 = vunpack.c.l.b16 %v2049
    %v2125 = vunpack.c.l.b16 %v2050
    %v2126 = vunpack.c.h.b16 %v2050
    %v2127 = vunpack.c.l.b16 %v2051
    %v2128 = vunpack.c.l.b16 %v2052
    %v2129 = vunpack.c.h.b16 %v2052
    %v2130 = vunpack.c.l.b16 %v2053
    %v2131 = vunpack.c.l.b16 %v2054
    %v2132 = vunpack.c.h.b16 %v2054
    %v2133 = vunpack.c.l.b16 %v2055
    %v2134 = vunpack.c.l.b16 %v2056
    %v2135 = vunpack.c.h.b16 %v2056
    %v2136 = vunpack.c.l.b16 %v2057
    %v2137 = vunpack.c.l.b16 %v2058
    %v2138 = vunpack.c.h.b16 %v2058
    %v2139 = vunpack.c.l.b16 %v2059
    %v2140 = vunpack.c.l.b16 %v2060
    %v2141 = vunpack.c.h.b16 %v2060
    %v2142 = vunpack.c.l.b16 %v2061
    %v2143 = vunpack.c.l.b16 %v2062
    %v2144 = vunpack.c.h.b16 %v2062
    %v2145 = vunpack.c.l.b16 %v2063
    %v2146 = vunpack.c.l.b16 %v2064
    %v2147 = vunpack.c.h.b16 %v2064
    %v2148 = vunpack.c.l.b16 %v2065
    %v2149 = vunpack.c.l.b16 %v2066
    %v2150 = vunpack.c.h.b16 %v2066
    %v2151 = vunpack.c.l.b16 %v2067
    %v2152 = vunpack.c.l.b16 %v2068
    %v2153 = vunpack.c.h.b16 %v2068
    %v2154 = vunpack.c.l.b16 %v2069
    %v2155 = vpack.c.b16 %v2107, %v2104
    %v2156 = vpack.c.b16 %v2108, %v2105
    %v2157 = vpack.c.b16 %v2109, %v2106
    %v2158 = vpack.c.b16 %v2113, %v2110
    %v2159 = vpack.c.b16 %v2114, %v2111
    %v2160 = vpack.c.b16 %v2115, %v2112
    %v2161 = vpack.c.b16 %v2119, %v2116
    %v2162 = vpack.c.b16 %v2120, %v2117
    %v2163 = vpack.c.b16 %v2121, %v2118
    %v2164 = vpack.c.b16 %v2125, %v2122
    %v2165 = vpack.c.b16 %v2126, %v2123
    %v2166 = vpack.c.b16 %v2127, %v2124
    %v2167 = vpack.c.b16 %v2131, %v2128
    %v2168 = vpack.c.b16 %v2132, %v2129
    %v2169 = vpack.c.b16 %v2133, %v2130
    %v2170 = vpack.c.b16 %v2137, %v2134
    %v2171 = vpack.c.b16 %v2138, %v2135
    %v2172 = vpack.c.b16 %v2139, %v2136
    %v2173 = vpack.c.b16 %v2143, %v2140
    %v2174 = vpack.c.b16 %v2144, %v2141
    %v2175 = vpack.c.b16 %v2145, %v2142
    %v2176 = vpack.c.b16 %v2149, %v2146
    %v2177 = vpack.c.b16 %v2150, %v2147
    %v2178 = vpack.c.b16 %v2151, %v2148
    %v2179 = vpack.c.b16 %v2152, %v2152
    %v2180 = vpack.c.b16 %v2153, %v2153
    %v2181 = vpack.c.b16 %v2154, %v2154
    %v2207 = vsel %vm700, %v2030, 0
    %v2210 = vsel %vm700, %v2032, 0
    %v2213 = vsel %vm700, %v2034, 0
    %v2216 = vsel %vm710, %v2179, 0
    %v2219 = vsel %vm710, %v2180, 0
    %v2222 = vsel %vm710, %v2181, 0
    %2224 = vmatprep.subr.bf16.mxu0 %v2177
    %2225 = vmatpush1.bf16.msra.mxu0 %v2176
    %2226 = vmatprep.subr.bf16.mxu0 %v2174
    %2227 = vmatpush1.bf16.msra.mxu0 %v2173
    %2228 = vmatprep.subr.bf16.mxu0 %v2171
    %2229 = vmatpush1.bf16.msra.mxu0 %v2170
    %2230 = vmatprep.subr.bf16.mxu0 %v2168
    %2231 = vmatpush1.bf16.msra.mxu0 %v2167
    %2232 = vmatprep.subr.bf16.mxu0 %v2165
    %2233 = vmatpush1.bf16.msra.mxu0 %v2164
    %2234 = vmatprep.subr.bf16.mxu0 %v2162
    %2235 = vmatpush1.bf16.msra.mxu0 %v2161
    %2236 = vmatprep.subr.bf16.mxu0 %v2159
    %2237 = vmatpush1.bf16.msra.mxu0 %v2158
    %2238 = vmatprep.subr.bf16.mxu0 %v2156
    %2239 = vmatpush1.bf16.msra.mxu0 %v2155
    %2240 = vmatprep.subr.bf16.mxu0 0
    %2241 = vmatpush2.bf16.msra.mxu0 0
    %2242 = vmatprep.subr.bf16.mxu0 0
    %2243 = vmatpush2.bf16.msra.mxu0 0
    %2244 = vmatprep.subr.bf16.mxu0 0
    %2245 = vmatpush2.bf16.msra.mxu0 0
    %2246 = vmatprep.subr.bf16.mxu0 0
    %2247 = vmatpush2.bf16.msra.mxu0 0
    %2248 = vmatprep.subr.bf16.mxu0 0
    %2249 = vmatpush2.bf16.msra.mxu0 0
    %2250 = vmatprep.subr.bf16.mxu0 0
    %2251 = vmatpush2.bf16.msra.mxu0 0
    %2252 = vmatprep.subr.bf16.mxu0 0
    %2253 = vmatpush2.bf16.msra.mxu0 0
    %2254 = vmatprep.subr.bf16.mxu0 %v2219
    %2255 = vmatpush2.bf16.msra.mxu0 %v2216
    %2256 = vmatprep.mubr.bf16.mxu0 %v2207
    %2257 = vmatmul.mubr.bf16.gmra.mxu0 %v2029
    %v2258 = vpop.f32.mrf.mxu0
    %v2259 = vadd.f32 0.0, %v2258
    %v2260 = vpop.f32.mrf.mxu0
    %v2261 = vadd.f32 0.0, %v2260
    %v2262 = vpop.f32.mrf.mxu0
    %v2263 = vadd.f32 0.0, %v2262
    %v2264 = vpop.f32.mrf.mxu0
    %v2265 = vadd.f32 0.0, %v2264
    %2266 = vmatprep.mubr.bf16.mxu0 %v2210
    %2267 = vmatmul.mubr.bf16.gmra.mxu0 %v2031
    %v2268 = vpop.f32.mrf.mxu0
    %v2269 = vadd.f32 0.0, %v2268
    %v2270 = vpop.f32.mrf.mxu0
    %v2271 = vadd.f32 0.0, %v2270
    %v2272 = vpop.f32.mrf.mxu0
    %v2273 = vadd.f32 0.0, %v2272
    %v2274 = vpop.f32.mrf.mxu0
    %v2275 = vadd.f32 0.0, %v2274
    %2276 = vmatprep.mubr.bf16.mxu0 %v2213
    %2277 = vmatmul.mubr.bf16.gmra.mxu0 %v2033
    %v2278 = vpop.f32.mrf.mxu0
    %v2279 = vadd.f32 0.0, %v2278
    %v2280 = vpop.f32.mrf.mxu0
    %v2281 = vadd.f32 0.0, %v2280
    %v2282 = vpop.f32.mrf.mxu0
    %v2283 = vpop.f32.mrf.mxu0
    %2284 = vdwg.mxu0
    %2285 = vmatprep.subr.bf16.mxu0 0
    %2286 = vmatpush1.bf16.msra.mxu0 %v2178
    %2287 = vmatprep.subr.bf16.mxu0 0
    %2288 = vmatpush1.bf16.msra.mxu0 %v2175
    %2289 = vmatprep.subr.bf16.mxu0 0
    %2290 = vmatpush1.bf16.msra.mxu0 %v2172
    %2291 = vmatprep.subr.bf16.mxu0 0
    %2292 = vmatpush1.bf16.msra.mxu0 %v2169
    %2293 = vmatprep.subr.bf16.mxu0 0
    %2294 = vmatpush1.bf16.msra.mxu0 %v2166
    %2295 = vmatprep.subr.bf16.mxu0 0
    %2296 = vmatpush1.bf16.msra.mxu0 %v2163
    %2297 = vmatprep.subr.bf16.mxu0 0
    %2298 = vmatpush1.bf16.msra.mxu0 %v2160
    %2299 = vmatprep.subr.bf16.mxu0 0
    %2300 = vmatpush1.bf16.msra.mxu0 %v2157
    %2301 = vmatprep.subr.bf16.mxu0 0
    %2302 = vmatpush2.bf16.msra.mxu0 0
    %2303 = vmatprep.subr.bf16.mxu0 0
    %2304 = vmatpush2.bf16.msra.mxu0 0
    %2305 = vmatprep.subr.bf16.mxu0 0
    %2306 = vmatpush2.bf16.msra.mxu0 0
    %2307 = vmatprep.subr.bf16.mxu0 0
    %2308 = vmatpush2.bf16.msra.mxu0 0
    %2309 = vmatprep.subr.bf16.mxu0 0
    %2310 = vmatpush2.bf16.msra.mxu0 0
    %2311 = vmatprep.subr.bf16.mxu0 0
    %2312 = vmatpush2.bf16.msra.mxu0 0
    %2313 = vmatprep.subr.bf16.mxu0 0
    %2314 = vmatpush2.bf16.msra.mxu0 0
    %2315 = vmatprep.subr.bf16.mxu0 0
    %2316 = vmatpush2.bf16.msra.mxu0 %v2222
    %2317 = vmatprep.mubr.bf16.mxu0 %v2207
    %2318 = vmatmul.mubr.bf16.gmra.mxu0 %v2029
    %v2319 = vpop.f32.mrf.mxu0
    %v2320 = vadd.f32 0.0, %v2319
    %v2321 = vpop.f32.mrf.mxu0
    %v2322 = vpop.f32.mrf.mxu0
    %v2323 = vadd.f32 0.0, %v2322
    %v2324 = vpop.f32.mrf.mxu0
    %2325 = vmatprep.mubr.bf16.mxu0 %v2210
    %2326 = vmatmul.mubr.bf16.gmra.mxu0 %v2031
    %v2327 = vpop.f32.mrf.mxu0
    %v2328 = vadd.f32 0.0, %v2327
    %v2329 = vpop.f32.mrf.mxu0
    %v2330 = vpop.f32.mrf.mxu0
    %v2331 = vadd.f32 0.0, %v2330
    %v2332 = vpop.f32.mrf.mxu0
    %2333 = vmatprep.mubr.bf16.mxu0 %v2213
    %2334 = vmatmul.mubr.bf16.gmra.mxu0 %v2033
    %v2335 = vpop.f32.mrf.mxu0
    %v2336 = vadd.f32 0.0, %v2335
    %v2337 = vpop.f32.mrf.mxu0
    %v2338 = vpop.f32.mrf.mxu0
    %v2339 = vpop.f32.mrf.mxu0
    %2340 = vdwg.mxu0
    %v2341 = vadd.f32 %v1925, %v2259
    %v2342 = vadd.f32 %v1926, %v2261
    %v2343 = vadd.f32 %v1927, %v2320
    %v2344 = vadd.f32 %v1928, %v2263
    %v2345 = vadd.f32 %v1929, %v2265
    %v2346 = vadd.f32 %v1930, %v2323
    %v2347 = vadd.f32 %v1931, %v2269
    %v2348 = vadd.f32 %v1932, %v2271
    %v2349 = vadd.f32 %v1933, %v2328
    %v2350 = vadd.f32 %v1934, %v2273
    %v2351 = vadd.f32 %v1935, %v2275
    %v2352 = vadd.f32 %v1936, %v2331
    %v2353 = vadd.f32 %v1937, %v2279
    %v2354 = vadd.f32 %v1938, %v2281
    %v2355 = vadd.f32 %v1939, %v2336
    %v2356 = vadd.f32 %v2341, %v2344
    %v2357 = vadd.f32 %v2356, %v2347
    %v2358 = vadd.f32 %v2357, %v2350
    %v2359 = vadd.f32 %v2358, %v2353
    %v2360 = vrot.slane %v2359, 4
    %v2361 = vadd.f32 %v2359, %v2360
    %v2362 = vrot.slane %v2361, 2
    %v2363 = vadd.f32 %v2361, %v2362
    %v2364 = vrot.slane %v2363, 1
    %v2365 = vadd.f32 %v2363, %v2364
    %v2366 = vadd.f32 %v2342, %v2345
    %v2367 = vadd.f32 %v2366, %v2348
    %v2368 = vadd.f32 %v2367, %v2351
    %v2369 = vadd.f32 %v2368, %v2354
    %v2370 = vrot.slane %v2369, 4
    %v2371 = vadd.f32 %v2369, %v2370
    %v2372 = vrot.slane %v2371, 2
    %v2373 = vadd.f32 %v2371, %v2372
    %v2374 = vrot.slane %v2373, 1
    %v2375 = vadd.f32 %v2373, %v2374
    %vm2376 = vcmask 523264
    %v2377 = vsel %vm2376, %v2343, 0.0
    %v2378 = vsel %vm2376, %v2346, 0.0
    %v2379 = vadd.f32 %v2377, %v2378
    %v2380 = vsel %vm2376, %v2349, 0.0
    %v2381 = vadd.f32 %v2379, %v2380
    %v2382 = vsel %vm2376, %v2352, 0.0
    %v2383 = vadd.f32 %v2381, %v2382
    %v2384 = vsel %vm2376, %v2355, 0.0
    %v2385 = vadd.f32 %v2383, %v2384
    %v2386 = vrot.slane %v2385, 4
    %v2387 = vadd.f32 %v2385, %v2386
    %v2388 = vrot.slane %v2387, 2
    %v2389 = vadd.f32 %v2387, %v2388
    %v2390 = vrot.slane %v2389, 1
    %v2391 = vadd.f32 %v2389, %v2390
    %v2392 = vmul.f32 %v2341, %v2341
    %v2393 = vmul.f32 %v2342, %v2342
    %v2394 = vmul.f32 %v2343, %v2343
    %v2395 = vmul.f32 %v2344, %v2344
    %v2396 = vmul.f32 %v2345, %v2345
    %v2397 = vmul.f32 %v2346, %v2346
    %v2398 = vmul.f32 %v2347, %v2347
    %v2399 = vmul.f32 %v2348, %v2348
    %v2400 = vmul.f32 %v2349, %v2349
    %v2401 = vmul.f32 %v2350, %v2350
    %v2402 = vmul.f32 %v2351, %v2351
    %v2403 = vmul.f32 %v2352, %v2352
    %v2404 = vmul.f32 %v2353, %v2353
    %v2405 = vmul.f32 %v2354, %v2354
    %v2406 = vmul.f32 %v2355, %v2355
    %v2407 = vadd.f32 %v2392, %v2395
    %v2408 = vadd.f32 %v2407, %v2398
    %v2409 = vadd.f32 %v2408, %v2401
    %v2410 = vadd.f32 %v2409, %v2404
    %v2411 = vrot.slane %v2410, 4
    %v2412 = vadd.f32 %v2410, %v2411
    %v2413 = vrot.slane %v2412, 2
    %v2414 = vadd.f32 %v2412, %v2413
    %v2415 = vrot.slane %v2414, 1
    %v2416 = vadd.f32 %v2414, %v2415
    %v2417 = vadd.f32 %v2393, %v2396
    %v2418 = vadd.f32 %v2417, %v2399
    %v2419 = vadd.f32 %v2418, %v2402
    %v2420 = vadd.f32 %v2419, %v2405
    %v2421 = vrot.slane %v2420, 4
    %v2422 = vadd.f32 %v2420, %v2421
    %v2423 = vrot.slane %v2422, 2
    %v2424 = vadd.f32 %v2422, %v2423
    %v2425 = vrot.slane %v2424, 1
    %v2426 = vadd.f32 %v2424, %v2425
    %v2427 = vsel %vm2376, %v2394, 0.0
    %v2428 = vsel %vm2376, %v2397, 0.0
    %v2429 = vadd.f32 %v2427, %v2428
    %v2430 = vsel %vm2376, %v2400, 0.0
    %v2431 = vadd.f32 %v2429, %v2430
    %v2432 = vsel %vm2376, %v2403, 0.0
    %v2433 = vadd.f32 %v2431, %v2432
    %v2434 = vsel %vm2376, %v2406, 0.0
    %v2435 = vadd.f32 %v2433, %v2434
    %v2436 = vrot.slane %v2435, 4
    %v2437 = vadd.f32 %v2435, %v2436
    %v2438 = vrot.slane %v2437, 2
    %v2439 = vadd.f32 %v2437, %v2438
    %v2440 = vrot.slane %v2439, 1
    %v2441 = vadd.f32 %v2439, %v2440
    %v2442 = vld [vmem:[%s4] sm:$0xff]
    %v2443 = vld [vmem:[%s4 + $0x8] sm:$0xff]
    %v2444 = vld [vmem:[%s4 + $0x10] sm:$0xff]
    %v2445 = vld [vmem:[%s4 + $0x18] sm:$0xff]
    %v2446 = vld [vmem:[%s4 + $0x20] sm:$0xff]
    %v2447 = vld [vmem:[%s4 + $0x28] sm:$0xff]
    %v2448 = vld [vmem:[%s4 + $0x30] sm:$0xff]
    %v2449 = vld [vmem:[%s4 + $0x38] sm:$0xff]
    %v2450 = vld [vmem:[%s4 + $0x40] sm:$0xff]
    %v2451 = vld [vmem:[%s4 + $0x48] sm:$0xff]
    %v2452 = vld [vmem:[%s4 + $0x50] sm:$0xff]
    %v2453 = vld [vmem:[%s4 + $0x58] sm:$0xff]
    %v2454 = vld [vmem:[%s4 + $0x60] sm:$0xff]
    %v2455 = vld [vmem:[%s4 + $0x68] sm:$0xff]
    %v2456 = vld [vmem:[%s4 + $0x70] sm:$0xff]
    %v2457 = vld [vmem:[%s4 + $0x78] sm:$0xff]
    %v2458 = vld [vmem:[%s4 + $0x80] sm:$0xff]
    %v2459 = vld [vmem:[%s4 + $0x88] sm:$0xff]
    %v2460 = vld [vmem:[%s4 + $0x90] sm:$0xff]
    %v2461 = vld [vmem:[%s4 + $0x98] sm:$0xff]
    %v2462 = vld [vmem:[%s4 + $0xa0] sm:$0xff]
    %v2463 = vld [vmem:[%s4 + $0xa8] sm:$0xff]
    %v2464 = vld [vmem:[%s4 + $0xb0] sm:$0xff]
    %v2465 = vld [vmem:[%s4 + $0xb8] sm:$0xff]
    %v2466 = vld [vmem:[%s4 + $0xc0] sm:$0xff]
    %v2467 = vld [vmem:[%s4 + $0xc8] sm:$0xff]
    %v2468 = vld [vmem:[%s4 + $0xd0] sm:$0xff]
    %v2469 = vld [vmem:[%s4 + $0xd8] sm:$0xff]
    %v2470 = vld [vmem:[%s4 + $0xe0] sm:$0xff]
    %v2471 = vld [vmem:[%s4 + $0xe8] sm:$0xff]
    %v2472 = vld [vmem:[%s4 + $0xf0] sm:$0xff]
    %v2473 = vld [vmem:[%s4 + $0xf8] sm:$0xff]
    %v2474 = vld [vmem:[%s4 + $0x100] sm:$0xff]
    %v2475 = vld [vmem:[%s4 + $0x108] sm:$0xff]
    %v2476 = vld [vmem:[%s4 + $0x110] sm:$0xff]
    %v2477 = vld [vmem:[%s4 + $0x118] sm:$0xff]
    %v2478 = vld [vmem:[%s4 + $0x120] sm:$0xff]
    %v2479 = vld [vmem:[%s4 + $0x128] sm:$0xff]
    %v2480 = vld [vmem:[%s4 + $0x130] sm:$0xff]
    %v2481 = vld [vmem:[%s4 + $0x138] sm:$0xff]
    %v2483 = vsel %vm2376, %v2391, 0
    %2485 = vmatprep.subr.mxu0 0.0
    %2486 = vmatpush1.msra.mxu0 %v2457
    %2487 = vmatprep.subr.mxu0 0.0
    %2488 = vmatpush1.msra.mxu0 %v2456
    %2489 = vmatprep.subr.mxu0 0.0
    %2490 = vmatpush1.msra.mxu0 %v2455
    %2491 = vmatprep.subr.mxu0 0.0
    %2492 = vmatpush1.msra.mxu0 %v2454
    %2493 = vmatprep.subr.mxu0 0.0
    %2494 = vmatpush1.msra.mxu0 %v2453
    %2495 = vmatprep.subr.mxu0 0.0
    %2496 = vmatpush1.msra.mxu0 %v2452
    %2497 = vmatprep.subr.mxu0 0.0
    %2498 = vmatpush1.msra.mxu0 %v2451
    %2499 = vmatprep.subr.mxu0 0.0
    %2500 = vmatpush1.msra.mxu0 %v2450
    %2501 = vmatprep.subr.mxu0 0.0
    %2502 = vmatpush1.msra.mxu0 %v2449
    %2503 = vmatprep.subr.mxu0 0.0
    %2504 = vmatpush1.msra.mxu0 %v2448
    %2505 = vmatprep.subr.mxu0 0.0
    %2506 = vmatpush1.msra.mxu0 %v2447
    %2507 = vmatprep.subr.mxu0 0.0
    %2508 = vmatpush1.msra.mxu0 %v2446
    %2509 = vmatprep.subr.mxu0 0.0
    %2510 = vmatpush1.msra.mxu0 %v2445
    %2511 = vmatprep.subr.mxu0 0.0
    %2512 = vmatpush1.msra.mxu0 %v2444
    %2513 = vmatprep.subr.mxu0 0.0
    %2514 = vmatpush1.msra.mxu0 %v2443
    %2515 = vmatprep.subr.mxu0 0.0
    %2516 = vmatpush1.msra.mxu0 %v2442
    %2517 = vmatprep.subr.mxu0 0.0
    %2518 = vmatpush2.msra.mxu0 %v2473
    %2519 = vmatprep.subr.mxu0 0.0
    %2520 = vmatpush2.msra.mxu0 %v2472
    %2521 = vmatprep.subr.mxu0 0.0
    %2522 = vmatpush2.msra.mxu0 %v2471
    %2523 = vmatprep.subr.mxu0 0.0
    %2524 = vmatpush2.msra.mxu0 %v2470
    %2525 = vmatprep.subr.mxu0 0.0
    %2526 = vmatpush2.msra.mxu0 %v2469
    %2527 = vmatprep.subr.mxu0 0.0
    %2528 = vmatpush2.msra.mxu0 %v2468
    %2529 = vmatprep.subr.mxu0 0.0
    %2530 = vmatpush2.msra.mxu0 %v2467
    %2531 = vmatprep.subr.mxu0 0.0
    %2532 = vmatpush2.msra.mxu0 %v2466
    %2533 = vmatprep.subr.mxu0 0.0
    %2534 = vmatpush2.msra.mxu0 %v2465
    %2535 = vmatprep.subr.mxu0 0.0
    %2536 = vmatpush2.msra.mxu0 %v2464
    %2537 = vmatprep.subr.mxu0 0.0
    %2538 = vmatpush2.msra.mxu0 %v2463
    %2539 = vmatprep.subr.mxu0 0.0
    %2540 = vmatpush2.msra.mxu0 %v2462
    %2541 = vmatprep.subr.mxu0 0.0
    %2542 = vmatpush2.msra.mxu0 %v2461
    %2543 = vmatprep.subr.mxu0 0.0
    %2544 = vmatpush2.msra.mxu0 %v2460
    %2545 = vmatprep.subr.mxu0 0.0
    %2546 = vmatpush2.msra.mxu0 %v2459
    %2547 = vmatprep.subr.mxu0 0.0
    %2548 = vmatpush2.msra.mxu0 %v2458
    %2549 = vmatprep.mubr.f32.mxu0 %v2375
    %2550 = vmatmul.mubr.f32.gmra.mxu0 %v2365
    %v2551 = vpop.f32.mrf.mxu0
    %v2552 = vadd.f32 0.0, %v2551
    %v2553 = vpop.f32.mrf.mxu0
    %2554 = vdwg.mxu0
    %2555 = vmatprep.subr.mxu0 0.0
    %2556 = vmatpush1.msra.mxu0 0.0
    %2557 = vmatprep.subr.mxu0 0.0
    %2558 = vmatpush1.msra.mxu0 0.0
    %2559 = vmatprep.subr.mxu0 0.0
    %2560 = vmatpush1.msra.mxu0 0.0
    %2561 = vmatprep.subr.mxu0 0.0
    %2562 = vmatpush1.msra.mxu0 0.0
    %2563 = vmatprep.subr.mxu0 0.0
    %2564 = vmatpush1.msra.mxu0 0.0
    %2565 = vmatprep.subr.mxu0 0.0
    %2566 = vmatpush1.msra.mxu0 0.0
    %2567 = vmatprep.subr.mxu0 0.0
    %2568 = vmatpush1.msra.mxu0 0.0
    %2569 = vmatprep.subr.mxu0 0.0
    %2570 = vmatpush1.msra.mxu0 0.0
    %2571 = vmatprep.subr.mxu0 0.0
    %2572 = vmatpush1.msra.mxu0 %v2481
    %2573 = vmatprep.subr.mxu0 0.0
    %2574 = vmatpush1.msra.mxu0 %v2480
    %2575 = vmatprep.subr.mxu0 0.0
    %2576 = vmatpush1.msra.mxu0 %v2479
    %2577 = vmatprep.subr.mxu0 0.0
    %2578 = vmatpush1.msra.mxu0 %v2478
    %2579 = vmatprep.subr.mxu0 0.0
    %2580 = vmatpush1.msra.mxu0 %v2477
    %2581 = vmatprep.subr.mxu0 0.0
    %2582 = vmatpush1.msra.mxu0 %v2476
    %2583 = vmatprep.subr.mxu0 0.0
    %2584 = vmatpush1.msra.mxu0 %v2475
    %2585 = vmatprep.subr.mxu0 0.0
    %2586 = vmatpush1.msra.mxu0 %v2474
    %2587 = vmatprep.subr.mxu0 0.0
    %2588 = vmatpush2.msra.mxu0 0.0
    %2589 = vmatprep.subr.mxu0 0.0
    %2590 = vmatpush2.msra.mxu0 0.0
    %2591 = vmatprep.subr.mxu0 0.0
    %2592 = vmatpush2.msra.mxu0 0.0
    %2593 = vmatprep.subr.mxu0 0.0
    %2594 = vmatpush2.msra.mxu0 0.0
    %2595 = vmatprep.subr.mxu0 0.0
    %2596 = vmatpush2.msra.mxu0 0.0
    %2597 = vmatprep.subr.mxu0 0.0
    %2598 = vmatpush2.msra.mxu0 0.0
    %2599 = vmatprep.subr.mxu0 0.0
    %2600 = vmatpush2.msra.mxu0 0.0
    %2601 = vmatprep.subr.mxu0 0.0
    %2602 = vmatpush2.msra.mxu0 0.0
    %2603 = vmatprep.subr.mxu0 0.0
    %2604 = vmatpush2.msra.mxu0 0.0
    %2605 = vmatprep.subr.mxu0 0.0
    %2606 = vmatpush2.msra.mxu0 0.0
    %2607 = vmatprep.subr.mxu0 0.0
    %2608 = vmatpush2.msra.mxu0 0.0
    %2609 = vmatprep.subr.mxu0 0.0
    %2610 = vmatpush2.msra.mxu0 0.0
    %2611 = vmatprep.subr.mxu0 0.0
    %2612 = vmatpush2.msra.mxu0 0.0
    %2613 = vmatprep.subr.mxu0 0.0
    %2614 = vmatpush2.msra.mxu0 0.0
    %2615 = vmatprep.subr.mxu0 0.0
    %2616 = vmatpush2.msra.mxu0 0.0
    %2617 = vmatprep.subr.mxu0 0.0
    %2618 = vmatpush2.msra.mxu0 0.0
    %2619 = vmatprep.mubr.f32.mxu0 0.0
    %2620 = vmatmul.mubr.f32.gmra.mxu0 %v2483
    %v2621 = vpop.f32.mrf.mxu0
    %v2622 = vadd.f32 %v2552, %v2621
    %v2623 = vpop.f32.mrf.mxu0
    %2624 = vdwg.mxu0
    %v2625 = vmul.f32 %v2622, 0.00125
    %v2627 = vsel %vm2376, %v2441, 0
    %2629 = vmatprep.subr.mxu0 0.0
    %2630 = vmatpush1.msra.mxu0 %v2457
    %2631 = vmatprep.subr.mxu0 0.0
    %2632 = vmatpush1.msra.mxu0 %v2456
    %2633 = vmatprep.subr.mxu0 0.0
    %2634 = vmatpush1.msra.mxu0 %v2455
    %2635 = vmatprep.subr.mxu0 0.0
    %2636 = vmatpush1.msra.mxu0 %v2454
    %2637 = vmatprep.subr.mxu0 0.0
    %2638 = vmatpush1.msra.mxu0 %v2453
    %2639 = vmatprep.subr.mxu0 0.0
    %2640 = vmatpush1.msra.mxu0 %v2452
    %2641 = vmatprep.subr.mxu0 0.0
    %2642 = vmatpush1.msra.mxu0 %v2451
    %2643 = vmatprep.subr.mxu0 0.0
    %2644 = vmatpush1.msra.mxu0 %v2450
    %2645 = vmatprep.subr.mxu0 0.0
    %2646 = vmatpush1.msra.mxu0 %v2449
    %2647 = vmatprep.subr.mxu0 0.0
    %2648 = vmatpush1.msra.mxu0 %v2448
    %2649 = vmatprep.subr.mxu0 0.0
    %2650 = vmatpush1.msra.mxu0 %v2447
    %2651 = vmatprep.subr.mxu0 0.0
    %2652 = vmatpush1.msra.mxu0 %v2446
    %2653 = vmatprep.subr.mxu0 0.0
    %2654 = vmatpush1.msra.mxu0 %v2445
    %2655 = vmatprep.subr.mxu0 0.0
    %2656 = vmatpush1.msra.mxu0 %v2444
    %2657 = vmatprep.subr.mxu0 0.0
    %2658 = vmatpush1.msra.mxu0 %v2443
    %2659 = vmatprep.subr.mxu0 0.0
    %2660 = vmatpush1.msra.mxu0 %v2442
    %2661 = vmatprep.subr.mxu0 0.0
    %2662 = vmatpush2.msra.mxu0 %v2473
    %2663 = vmatprep.subr.mxu0 0.0
    %2664 = vmatpush2.msra.mxu0 %v2472
    %2665 = vmatprep.subr.mxu0 0.0
    %2666 = vmatpush2.msra.mxu0 %v2471
    %2667 = vmatprep.subr.mxu0 0.0
    %2668 = vmatpush2.msra.mxu0 %v2470
    %2669 = vmatprep.subr.mxu0 0.0
    %2670 = vmatpush2.msra.mxu0 %v2469
    %2671 = vmatprep.subr.mxu0 0.0
    %2672 = vmatpush2.msra.mxu0 %v2468
    %2673 = vmatprep.subr.mxu0 0.0
    %2674 = vmatpush2.msra.mxu0 %v2467
    %2675 = vmatprep.subr.mxu0 0.0
    %2676 = vmatpush2.msra.mxu0 %v2466
    %2677 = vmatprep.subr.mxu0 0.0
    %2678 = vmatpush2.msra.mxu0 %v2465
    %2679 = vmatprep.subr.mxu0 0.0
    %2680 = vmatpush2.msra.mxu0 %v2464
    %2681 = vmatprep.subr.mxu0 0.0
    %2682 = vmatpush2.msra.mxu0 %v2463
    %2683 = vmatprep.subr.mxu0 0.0
    %2684 = vmatpush2.msra.mxu0 %v2462
    %2685 = vmatprep.subr.mxu0 0.0
    %2686 = vmatpush2.msra.mxu0 %v2461
    %2687 = vmatprep.subr.mxu0 0.0
    %2688 = vmatpush2.msra.mxu0 %v2460
    %2689 = vmatprep.subr.mxu0 0.0
    %2690 = vmatpush2.msra.mxu0 %v2459
    %2691 = vmatprep.subr.mxu0 0.0
    %2692 = vmatpush2.msra.mxu0 %v2458
    %2693 = vmatprep.mubr.f32.mxu0 %v2426
    %2694 = vmatmul.mubr.f32.gmra.mxu0 %v2416
    %v2695 = vpop.f32.mrf.mxu0
    %v2696 = vadd.f32 0.0, %v2695
    %v2697 = vpop.f32.mrf.mxu0
    %2698 = vdwg.mxu0
    %2699 = vmatprep.subr.mxu0 0.0
    %2700 = vmatpush1.msra.mxu0 0.0
    %2701 = vmatprep.subr.mxu0 0.0
    %2702 = vmatpush1.msra.mxu0 0.0
    %2703 = vmatprep.subr.mxu0 0.0
    %2704 = vmatpush1.msra.mxu0 0.0
    %2705 = vmatprep.subr.mxu0 0.0
    %2706 = vmatpush1.msra.mxu0 0.0
    %2707 = vmatprep.subr.mxu0 0.0
    %2708 = vmatpush1.msra.mxu0 0.0
    %2709 = vmatprep.subr.mxu0 0.0
    %2710 = vmatpush1.msra.mxu0 0.0
    %2711 = vmatprep.subr.mxu0 0.0
    %2712 = vmatpush1.msra.mxu0 0.0
    %2713 = vmatprep.subr.mxu0 0.0
    %2714 = vmatpush1.msra.mxu0 0.0
    %2715 = vmatprep.subr.mxu0 0.0
    %2716 = vmatpush1.msra.mxu0 %v2481
    %2717 = vmatprep.subr.mxu0 0.0
    %2718 = vmatpush1.msra.mxu0 %v2480
    %2719 = vmatprep.subr.mxu0 0.0
    %2720 = vmatpush1.msra.mxu0 %v2479
    %2721 = vmatprep.subr.mxu0 0.0
    %2722 = vmatpush1.msra.mxu0 %v2478
    %2723 = vmatprep.subr.mxu0 0.0
    %2724 = vmatpush1.msra.mxu0 %v2477
    %2725 = vmatprep.subr.mxu0 0.0
    %2726 = vmatpush1.msra.mxu0 %v2476
    %2727 = vmatprep.subr.mxu0 0.0
    %2728 = vmatpush1.msra.mxu0 %v2475
    %2729 = vmatprep.subr.mxu0 0.0
    %2730 = vmatpush1.msra.mxu0 %v2474
    %2731 = vmatprep.subr.mxu0 0.0
    %2732 = vmatpush2.msra.mxu0 0.0
    %2733 = vmatprep.subr.mxu0 0.0
    %2734 = vmatpush2.msra.mxu0 0.0
    %2735 = vmatprep.subr.mxu0 0.0
    %2736 = vmatpush2.msra.mxu0 0.0
    %2737 = vmatprep.subr.mxu0 0.0
    %2738 = vmatpush2.msra.mxu0 0.0
    %2739 = vmatprep.subr.mxu0 0.0
    %2740 = vmatpush2.msra.mxu0 0.0
    %2741 = vmatprep.subr.mxu0 0.0
    %2742 = vmatpush2.msra.mxu0 0.0
    %2743 = vmatprep.subr.mxu0 0.0
    %2744 = vmatpush2.msra.mxu0 0.0
    %2745 = vmatprep.subr.mxu0 0.0
    %2746 = vmatpush2.msra.mxu0 0.0
    %2747 = vmatprep.subr.mxu0 0.0
    %2748 = vmatpush2.msra.mxu0 0.0
    %2749 = vmatprep.subr.mxu0 0.0
    %2750 = vmatpush2.msra.mxu0 0.0
    %2751 = vmatprep.subr.mxu0 0.0
    %2752 = vmatpush2.msra.mxu0 0.0
    %2753 = vmatprep.subr.mxu0 0.0
    %2754 = vmatpush2.msra.mxu0 0.0
    %2755 = vmatprep.subr.mxu0 0.0
    %2756 = vmatpush2.msra.mxu0 0.0
    %2757 = vmatprep.subr.mxu0 0.0
    %2758 = vmatpush2.msra.mxu0 0.0
    %2759 = vmatprep.subr.mxu0 0.0
    %2760 = vmatpush2.msra.mxu0 0.0
    %2761 = vmatprep.subr.mxu0 0.0
    %2762 = vmatpush2.msra.mxu0 0.0
    %2763 = vmatprep.mubr.f32.mxu0 0.0
    %2764 = vmatmul.mubr.f32.gmra.mxu0 %v2627
    %v2765 = vpop.f32.mrf.mxu0
    %v2766 = vadd.f32 %v2696, %v2765
    %v2767 = vpop.f32.mrf.mxu0
    %2768 = vdwg.mxu0
    %v2769 = vmul.f32 %v2766, 0.00125
    %v2770 = vmul.f32 %v2625, %v2625
    %v2771 = vsub.f32 %v2769, %v2770
    %v2772 = vmax.f32 %v2771, 0.0
    %v2773 = vld [vmem:[#allocation2] sm:$0x1]
    %v2774 = vadd.f32 %v2772, 1e-05
    %v2775 = vrsqrt.pop %v2774
    %v2776 = vmul.f32 %v2773, %v2775
    %v2777 = vld [vmem:[#allocation5] sm:$0x1]
    %v2778 = vmul.f32 %v2625, %v2776
    %v2779 = vsub.f32 %v2777, %v2778
    %v2780 = vld [vmem:[%s5] sm:$0xff]
    %v2781 = vld [vmem:[%s5 + $0x8] sm:$0xff]
    %v2782 = vld [vmem:[%s5 + $0x10] sm:$0xff]
    %v2783 = vld [vmem:[%s5 + $0x18] sm:$0xff]
    %v2784 = vld [vmem:[%s5 + $0x20] sm:$0xff]
    %v2785 = vld [vmem:[%s5 + $0x28] sm:$0xff]
    %vm2786 = vcmask 130048
    %v2788 = vsel %vm2786, %v2776, 0
    %2790 = vmatprep.subr.mxu0 0.0
    %2791 = vmatpush1.msra.mxu0 0.0
    %2792 = vmatprep.subr.mxu0 0.0
    %2793 = vmatpush1.msra.mxu0 0.0
    %2794 = vmatprep.subr.mxu0 0.0
    %2795 = vmatpush1.msra.mxu0 0.0
    %2796 = vmatprep.subr.mxu0 0.0
    %2797 = vmatpush1.msra.mxu0 0.0
    %2798 = vmatprep.subr.mxu0 0.0
    %2799 = vmatpush1.msra.mxu0 0.0
    %2800 = vmatprep.subr.mxu0 0.0
    %2801 = vmatpush1.msra.mxu0 0.0
    %2802 = vmatprep.subr.mxu0 0.0
    %2803 = vmatpush1.msra.mxu0 0.0
    %2804 = vmatprep.subr.mxu0 0.0
    %2805 = vmatpush1.msra.mxu0 0.0
    %2806 = vmatprep.subr.mxu0 0.0
    %2807 = vmatpush1.msra.mxu0 0.0
    %2808 = vmatprep.subr.mxu0 0.0
    %2809 = vmatpush1.msra.mxu0 0.0
    %2810 = vmatprep.subr.mxu0 0.0
    %2811 = vmatpush1.msra.mxu0 0.0
    %2812 = vmatprep.subr.mxu0 0.0
    %2813 = vmatpush1.msra.mxu0 0.0
    %2814 = vmatprep.subr.mxu0 0.0
    %2815 = vmatpush1.msra.mxu0 0.0
    %2816 = vmatprep.subr.mxu0 0.0
    %2817 = vmatpush1.msra.mxu0 0.0
    %2818 = vmatprep.subr.mxu0 %v2784
    %2819 = vmatpush1.msra.mxu0 %v2783
    %2820 = vmatprep.subr.mxu0 %v2781
    %2821 = vmatpush1.msra.mxu0 %v2780
    %2822 = vmatprep.subr.mxu0 0.0
    %2823 = vmatpush2.msra.mxu0 0.0
    %2824 = vmatprep.subr.mxu0 0.0
    %2825 = vmatpush2.msra.mxu0 0.0
    %2826 = vmatprep.subr.mxu0 0.0
    %2827 = vmatpush2.msra.mxu0 0.0
    %2828 = vmatprep.subr.mxu0 0.0
    %2829 = vmatpush2.msra.mxu0 0.0
    %2830 = vmatprep.subr.mxu0 0.0
    %2831 = vmatpush2.msra.mxu0 0.0
    %2832 = vmatprep.subr.mxu0 0.0
    %2833 = vmatpush2.msra.mxu0 0.0
    %2834 = vmatprep.subr.mxu0 0.0
    %2835 = vmatpush2.msra.mxu0 0.0
    %2836 = vmatprep.subr.mxu0 0.0
    %2837 = vmatpush2.msra.mxu0 0.0
    %2838 = vmatprep.subr.mxu0 0.0
    %2839 = vmatpush2.msra.mxu0 0.0
    %2840 = vmatprep.subr.mxu0 0.0
    %2841 = vmatpush2.msra.mxu0 0.0
    %2842 = vmatprep.subr.mxu0 0.0
    %2843 = vmatpush2.msra.mxu0 0.0
    %2844 = vmatprep.subr.mxu0 0.0
    %2845 = vmatpush2.msra.mxu0 0.0
    %2846 = vmatprep.subr.mxu0 0.0
    %2847 = vmatpush2.msra.mxu0 0.0
    %2848 = vmatprep.subr.mxu0 0.0
    %2849 = vmatpush2.msra.mxu0 0.0
    %2850 = vmatprep.subr.mxu0 0.0
    %2851 = vmatpush2.msra.mxu0 0.0
    %2852 = vmatprep.subr.mxu0 0.0
    %2853 = vmatpush2.msra.mxu0 0.0
    %2854 = vmatprep.mubr.f32.mxu0 0.0
    %2855 = vmatmul.mubr.f32.gmra.mxu0 %v2788
    %v2856 = vpop.f32.mrf.mxu0
    %v2857 = vadd.f32 0.0, %v2856
    %v2858 = vpop.f32.mrf.mxu0
    %v2859 = vadd.f32 0.0, %v2858
    %2860 = vdwg.mxu0
    %2861 = vmatprep.subr.mxu0 0.0
    %2862 = vmatpush1.msra.mxu0 0.0
    %2863 = vmatprep.subr.mxu0 0.0
    %2864 = vmatpush1.msra.mxu0 0.0
    %2865 = vmatprep.subr.mxu0 0.0
    %2866 = vmatpush1.msra.mxu0 0.0
    %2867 = vmatprep.subr.mxu0 0.0
    %2868 = vmatpush1.msra.mxu0 0.0
    %2869 = vmatprep.subr.mxu0 0.0
    %2870 = vmatpush1.msra.mxu0 0.0
    %2871 = vmatprep.subr.mxu0 0.0
    %2872 = vmatpush1.msra.mxu0 0.0
    %2873 = vmatprep.subr.mxu0 0.0
    %2874 = vmatpush1.msra.mxu0 0.0
    %2875 = vmatprep.subr.mxu0 0.0
    %2876 = vmatpush1.msra.mxu0 0.0
    %2877 = vmatprep.subr.mxu0 0.0
    %2878 = vmatpush1.msra.mxu0 0.0
    %2879 = vmatprep.subr.mxu0 0.0
    %2880 = vmatpush1.msra.mxu0 0.0
    %2881 = vmatprep.subr.mxu0 0.0
    %2882 = vmatpush1.msra.mxu0 0.0
    %2883 = vmatprep.subr.mxu0 0.0
    %2884 = vmatpush1.msra.mxu0 0.0
    %2885 = vmatprep.subr.mxu0 0.0
    %2886 = vmatpush1.msra.mxu0 0.0
    %2887 = vmatprep.subr.mxu0 0.0
    %2888 = vmatpush1.msra.mxu0 0.0
    %2889 = vmatprep.subr.mxu0 0.0
    %2890 = vmatpush1.msra.mxu0 %v2785
    %2891 = vmatprep.subr.mxu0 0.0
    %2892 = vmatpush1.msra.mxu0 %v2782
    %2893 = vmatprep.subr.mxu0 0.0
    %2894 = vmatpush2.msra.mxu0 0.0
    %2895 = vmatprep.subr.mxu0 0.0
    %2896 = vmatpush2.msra.mxu0 0.0
    %2897 = vmatprep.subr.mxu0 0.0
    %2898 = vmatpush2.msra.mxu0 0.0
    %2899 = vmatprep.subr.mxu0 0.0
    %2900 = vmatpush2.msra.mxu0 0.0
    %2901 = vmatprep.subr.mxu0 0.0
    %2902 = vmatpush2.msra.mxu0 0.0
    %2903 = vmatprep.subr.mxu0 0.0
    %2904 = vmatpush2.msra.mxu0 0.0
    %2905 = vmatprep.subr.mxu0 0.0
    %2906 = vmatpush2.msra.mxu0 0.0
    %2907 = vmatprep.subr.mxu0 0.0
    %2908 = vmatpush2.msra.mxu0 0.0
    %2909 = vmatprep.subr.mxu0 0.0
    %2910 = vmatpush2.msra.mxu0 0.0
    %2911 = vmatprep.subr.mxu0 0.0
    %2912 = vmatpush2.msra.mxu0 0.0
    %2913 = vmatprep.subr.mxu0 0.0
    %2914 = vmatpush2.msra.mxu0 0.0
    %2915 = vmatprep.subr.mxu0 0.0
    %2916 = vmatpush2.msra.mxu0 0.0
    %2917 = vmatprep.subr.mxu0 0.0
    %2918 = vmatpush2.msra.mxu0 0.0
    %2919 = vmatprep.subr.mxu0 0.0
    %2920 = vmatpush2.msra.mxu0 0.0
    %2921 = vmatprep.subr.mxu0 0.0
    %2922 = vmatpush2.msra.mxu0 0.0
    %2923 = vmatprep.subr.mxu0 0.0
    %2924 = vmatpush2.msra.mxu0 0.0
    %2925 = vmatprep.mubr.f32.mxu0 0.0
    %2926 = vmatmul.mubr.f32.gmra.mxu0 %v2788
    %v2927 = vpop.f32.mrf.mxu0
    %v2928 = vadd.f32 0.0, %v2927
    %v2929 = vpop.f32.mrf.mxu0
    %2930 = vdwg.mxu0
    %v2932 = vsel %vm2786, %v2779, 0
    %2934 = vmatprep.subr.mxu0 0.0
    %2935 = vmatpush1.msra.mxu0 0.0
    %2936 = vmatprep.subr.mxu0 0.0
    %2937 = vmatpush1.msra.mxu0 0.0
    %2938 = vmatprep.subr.mxu0 0.0
    %2939 = vmatpush1.msra.mxu0 0.0
    %2940 = vmatprep.subr.mxu0 0.0
    %2941 = vmatpush1.msra.mxu0 0.0
    %2942 = vmatprep.subr.mxu0 0.0
    %2943 = vmatpush1.msra.mxu0 0.0
    %2944 = vmatprep.subr.mxu0 0.0
    %2945 = vmatpush1.msra.mxu0 0.0
    %2946 = vmatprep.subr.mxu0 0.0
    %2947 = vmatpush1.msra.mxu0 0.0
    %2948 = vmatprep.subr.mxu0 0.0
    %2949 = vmatpush1.msra.mxu0 0.0
    %2950 = vmatprep.subr.mxu0 0.0
    %2951 = vmatpush1.msra.mxu0 0.0
    %2952 = vmatprep.subr.mxu0 0.0
    %2953 = vmatpush1.msra.mxu0 0.0
    %2954 = vmatprep.subr.mxu0 0.0
    %2955 = vmatpush1.msra.mxu0 0.0
    %2956 = vmatprep.subr.mxu0 0.0
    %2957 = vmatpush1.msra.mxu0 0.0
    %2958 = vmatprep.subr.mxu0 0.0
    %2959 = vmatpush1.msra.mxu0 0.0
    %2960 = vmatprep.subr.mxu0 0.0
    %2961 = vmatpush1.msra.mxu0 0.0
    %2962 = vmatprep.subr.mxu0 %v2784
    %2963 = vmatpush1.msra.mxu0 %v2783
    %2964 = vmatprep.subr.mxu0 %v2781
    %2965 = vmatpush1.msra.mxu0 %v2780
    %2966 = vmatprep.subr.mxu0 0.0
    %2967 = vmatpush2.msra.mxu0 0.0
    %2968 = vmatprep.subr.mxu0 0.0
    %2969 = vmatpush2.msra.mxu0 0.0
    %2970 = vmatprep.subr.mxu0 0.0
    %2971 = vmatpush2.msra.mxu0 0.0
    %2972 = vmatprep.subr.mxu0 0.0
    %2973 = vmatpush2.msra.mxu0 0.0
    %2974 = vmatprep.subr.mxu0 0.0
    %2975 = vmatpush2.msra.mxu0 0.0
    %2976 = vmatprep.subr.mxu0 0.0
    %2977 = vmatpush2.msra.mxu0 0.0
    %2978 = vmatprep.subr.mxu0 0.0
    %2979 = vmatpush2.msra.mxu0 0.0
    %2980 = vmatprep.subr.mxu0 0.0
    %2981 = vmatpush2.msra.mxu0 0.0
    %2982 = vmatprep.subr.mxu0 0.0
    %2983 = vmatpush2.msra.mxu0 0.0
    %2984 = vmatprep.subr.mxu0 0.0
    %2985 = vmatpush2.msra.mxu0 0.0
    %2986 = vmatprep.subr.mxu0 0.0
    %2987 = vmatpush2.msra.mxu0 0.0
    %2988 = vmatprep.subr.mxu0 0.0
    %2989 = vmatpush2.msra.mxu0 0.0
    %2990 = vmatprep.subr.mxu0 0.0
    %2991 = vmatpush2.msra.mxu0 0.0
    %2992 = vmatprep.subr.mxu0 0.0
    %2993 = vmatpush2.msra.mxu0 0.0
    %2994 = vmatprep.subr.mxu0 0.0
    %2995 = vmatpush2.msra.mxu0 0.0
    %2996 = vmatprep.subr.mxu0 0.0
    %2997 = vmatpush2.msra.mxu0 0.0
    %2998 = vmatprep.mubr.f32.mxu0 0.0
    %2999 = vmatmul.mubr.f32.gmra.mxu0 %v2932
    %v3000 = vpop.f32.mrf.mxu0
    %v3001 = vadd.f32 0.0, %v3000
    %v3002 = vpop.f32.mrf.mxu0
    %v3003 = vadd.f32 0.0, %v3002
    %3004 = vdwg.mxu0
    %3005 = vmatprep.subr.mxu0 0.0
    %3006 = vmatpush1.msra.mxu0 0.0
    %3007 = vmatprep.subr.mxu0 0.0
    %3008 = vmatpush1.msra.mxu0 0.0
    %3009 = vmatprep.subr.mxu0 0.0
    %3010 = vmatpush1.msra.mxu0 0.0
    %3011 = vmatprep.subr.mxu0 0.0
    %3012 = vmatpush1.msra.mxu0 0.0
    %3013 = vmatprep.subr.mxu0 0.0
    %3014 = vmatpush1.msra.mxu0 0.0
    %3015 = vmatprep.subr.mxu0 0.0
    %3016 = vmatpush1.msra.mxu0 0.0
    %3017 = vmatprep.subr.mxu0 0.0
    %3018 = vmatpush1.msra.mxu0 0.0
    %3019 = vmatprep.subr.mxu0 0.0
    %3020 = vmatpush1.msra.mxu0 0.0
    %3021 = vmatprep.subr.mxu0 0.0
    %3022 = vmatpush1.msra.mxu0 0.0
    %3023 = vmatprep.subr.mxu0 0.0
    %3024 = vmatpush1.msra.mxu0 0.0
    %3025 = vmatprep.subr.mxu0 0.0
    %3026 = vmatpush1.msra.mxu0 0.0
    %3027 = vmatprep.subr.mxu0 0.0
    %3028 = vmatpush1.msra.mxu0 0.0
    %3029 = vmatprep.subr.mxu0 0.0
    %3030 = vmatpush1.msra.mxu0 0.0
    %3031 = vmatprep.subr.mxu0 0.0
    %3032 = vmatpush1.msra.mxu0 0.0
    %3033 = vmatprep.subr.mxu0 0.0
    %3034 = vmatpush1.msra.mxu0 %v2785
    %3035 = vmatprep.subr.mxu0 0.0
    %3036 = vmatpush1.msra.mxu0 %v2782
    %3037 = vmatprep.subr.mxu0 0.0
    %3038 = vmatpush2.msra.mxu0 0.0
    %3039 = vmatprep.subr.mxu0 0.0
    %3040 = vmatpush2.msra.mxu0 0.0
    %3041 = vmatprep.subr.mxu0 0.0
    %3042 = vmatpush2.msra.mxu0 0.0
    %3043 = vmatprep.subr.mxu0 0.0
    %3044 = vmatpush2.msra.mxu0 0.0
    %3045 = vmatprep.subr.mxu0 0.0
    %3046 = vmatpush2.msra.mxu0 0.0
    %3047 = vmatprep.subr.mxu0 0.0
    %3048 = vmatpush2.msra.mxu0 0.0
    %3049 = vmatprep.subr.mxu0 0.0
    %3050 = vmatpush2.msra.mxu0 0.0
    %3051 = vmatprep.subr.mxu0 0.0
    %3052 = vmatpush2.msra.mxu0 0.0
    %3053 = vmatprep.subr.mxu0 0.0
    %3054 = vmatpush2.msra.mxu0 0.0
    %3055 = vmatprep.subr.mxu0 0.0
    %3056 = vmatpush2.msra.mxu0 0.0
    %3057 = vmatprep.subr.mxu0 0.0
    %3058 = vmatpush2.msra.mxu0 0.0
    %3059 = vmatprep.subr.mxu0 0.0
    %3060 = vmatpush2.msra.mxu0 0.0
    %3061 = vmatprep.subr.mxu0 0.0
    %3062 = vmatpush2.msra.mxu0 0.0
    %3063 = vmatprep.subr.mxu0 0.0
    %3064 = vmatpush2.msra.mxu0 0.0
    %3065 = vmatprep.subr.mxu0 0.0
    %3066 = vmatpush2.msra.mxu0 0.0
    %3067 = vmatprep.subr.mxu0 0.0
    %3068 = vmatpush2.msra.mxu0 0.0
    %3069 = vmatprep.mubr.f32.mxu0 0.0
    %3070 = vmatmul.mubr.f32.gmra.mxu0 %v2932
    %v3071 = vpop.f32.mrf.mxu0
    %v3072 = vadd.f32 0.0, %v3071
    %v3073 = vpop.f32.mrf.mxu0
    %3074 = vdwg.mxu0
    %v3075 = vlaneseq
    %v3076 = vshrl.u32 %v3075, 7
    %v3077 = vsub.s32 0, %v3076
    %v3078 = vrot.slane %v2857, %v3077
    %v3079 = vlaneseq
    %v3080 = vshrl.u32 %v3079, 7
    %v3081 = vsub.s32 0, %v3080
    %v3082 = vrot.slane %v2859, %v3081
    %v3083 = vlaneseq
    %v3084 = vshrl.u32 %v3083, 7
    %v3085 = vsub.s32 0, %v3084
    %v3086 = vrot.slane %v2928, %v3085
    %v3087 = vmul.f32 %v2341, %v3078
    %v3088 = vmul.f32 %v2342, %v3082
    %v3089 = vmul.f32 %v2343, %v3086
    %v3090 = vmul.f32 %v2344, %v3078
    %v3091 = vmul.f32 %v2345, %v3082
    %v3092 = vmul.f32 %v2346, %v3086
    %v3093 = vmul.f32 %v2347, %v3078
    %v3094 = vmul.f32 %v2348, %v3082
    %v3095 = vmul.f32 %v2349, %v3086
    %v3096 = vmul.f32 %v2350, %v3078
    %v3097 = vmul.f32 %v2351, %v3082
    %v3098 = vmul.f32 %v2352, %v3086
    %v3099 = vmul.f32 %v2353, %v3078
    %v3100 = vmul.f32 %v2354, %v3082
    %v3101 = vmul.f32 %v2355, %v3086
    %v3102 = vlaneseq
    %v3103 = vshrl.u32 %v3102, 7
    %v3104 = vsub.s32 0, %v3103
    %v3105 = vrot.slane %v3001, %v3104
    %v3106 = vlaneseq
    %v3107 = vshrl.u32 %v3106, 7
    %v3108 = vsub.s32 0, %v3107
    %v3109 = vrot.slane %v3003, %v3108
    %v3110 = vlaneseq
    %v3111 = vshrl.u32 %v3110, 7
    %v3112 = vsub.s32 0, %v3111
    %v3113 = vrot.slane %v3072, %v3112
    %v3114 = vadd.f32 %v3087, %v3105
    %v3115 = vadd.f32 %v3088, %v3109
    %v3116 = vadd.f32 %v3089, %v3113
    %v3117 = vadd.f32 %v3090, %v3105
    %v3118 = vadd.f32 %v3091, %v3109
    %v3119 = vadd.f32 %v3092, %v3113
    %v3120 = vadd.f32 %v3093, %v3105
    %v3121 = vadd.f32 %v3094, %v3109
    %v3122 = vadd.f32 %v3095, %v3113
    %v3123 = vadd.f32 %v3096, %v3105
    %v3124 = vadd.f32 %v3097, %v3109
    %v3125 = vadd.f32 %v3098, %v3113
    %v3126 = vadd.f32 %v3099, %v3105
    %v3127 = vadd.f32 %v3100, %v3109
    %v3128 = vadd.f32 %v3101, %v3113
    %v3129 = vmax.f32 %v3114, 0.0
    %v3130 = vmax.f32 %v3115, 0.0
    %v3131 = vmax.f32 %v3116, 0.0
    %v3132 = vmax.f32 %v3117, 0.0
    %v3133 = vmax.f32 %v3118, 0.0
    %v3134 = vmax.f32 %v3119, 0.0
    %v3135 = vmax.f32 %v3120, 0.0
    %v3136 = vmax.f32 %v3121, 0.0
    %v3137 = vmax.f32 %v3122, 0.0
    %v3138 = vmax.f32 %v3123, 0.0
    %v3139 = vmax.f32 %v3124, 0.0
    %v3140 = vmax.f32 %v3125, 0.0
    %v3141 = vmax.f32 %v3126, 0.0
    %v3142 = vmax.f32 %v3127, 0.0
    %v3143 = vmax.f32 %v3128, 0.0
    %v3144 = vpack.c.bf16 %v3132, %v3129
    %v3145 = vpack.c.bf16 %v3133, %v3130
    %v3146 = vpack.c.bf16 %v3134, %v3131
    %v3147 = vpack.c.bf16 %v3138, %v3135
    %v3148 = vpack.c.bf16 %v3139, %v3136
    %v3149 = vpack.c.bf16 %v3140, %v3137
    %v3150 = vpack.c.bf16 %v3141, %v3141
    %v3151 = vpack.c.bf16 %v3142, %v3142
    %v3152 = vpack.c.bf16 %v3143, %v3143
    %v3153 = vld [vmem:[%s8] sm:$0xf]
    %v3154 = vld [vmem:[%s8 + $0x4] sm:$0xf]
    %v3157 = vunpack.c.l.b16 %v3153
    %v3158 = vunpack.c.l.b16 %v3154
    %v3159 = vpack.c.b16 %v3158, %v3157
    %vm3160 = vcmask 326656
    %v3162 = vsel %vm3160, %v3159, 0
    %v3165 = vsel %vm326, %v3150, 0
    %v3168 = vsel %vm326, %v3151, 0
    %v3171 = vsel %vm326, %v3152, 0
    %3173 = vmatprep.subr.bf16.mxu0 0
    %3174 = vmatpush1.bf16.msra.mxu0 0
    %3175 = vmatprep.subr.bf16.mxu0 0
    %3176 = vmatpush1.bf16.msra.mxu0 0
    %3177 = vmatprep.subr.bf16.mxu0 0
    %3178 = vmatpush1.bf16.msra.mxu0 0
    %3179 = vmatprep.subr.bf16.mxu0 0
    %3180 = vmatpush1.bf16.msra.mxu0 0
    %3181 = vmatprep.subr.bf16.mxu0 0
    %3182 = vmatpush1.bf16.msra.mxu0 0
    %3183 = vmatprep.subr.bf16.mxu0 %v3168
    %3184 = vmatpush1.bf16.msra.mxu0 %v3165
    %3185 = vmatprep.subr.bf16.mxu0 %v3148
    %3186 = vmatpush1.bf16.msra.mxu0 %v3147
    %3187 = vmatprep.subr.bf16.mxu0 %v3145
    %3188 = vmatpush1.bf16.msra.mxu0 %v3144
    %3189 = vmatprep.subr.bf16.mxu0 0
    %3190 = vmatpush2.bf16.msra.mxu0 0
    %3191 = vmatprep.subr.bf16.mxu0 0
    %3192 = vmatpush2.bf16.msra.mxu0 0
    %3193 = vmatprep.subr.bf16.mxu0 0
    %3194 = vmatpush2.bf16.msra.mxu0 0
    %3195 = vmatprep.subr.bf16.mxu0 0
    %3196 = vmatpush2.bf16.msra.mxu0 0
    %3197 = vmatprep.subr.bf16.mxu0 0
    %3198 = vmatpush2.bf16.msra.mxu0 0
    %3199 = vmatprep.subr.bf16.mxu0 0
    %3200 = vmatpush2.bf16.msra.mxu0 0
    %3201 = vmatprep.subr.bf16.mxu0 0
    %3202 = vmatpush2.bf16.msra.mxu0 0
    %3203 = vmatprep.subr.bf16.mxu0 0
    %3204 = vmatpush2.bf16.msra.mxu0 0
    %3205 = vmatprep.mubr.bf16.mxu0 0
    %3206 = vmatmul.mubr.bf16.gmra.mxu0 %v3162
    %v3207 = vpop.f32.mrf.mxu0
    %v3208 = vadd.f32 0.0, %v3207
    %v3209 = vpop.f32.mrf.mxu0
    %v3210 = vadd.f32 0.0, %v3209
    %v3211 = vpop.f32.mrf.mxu0
    %v3212 = vadd.f32 0.0, %v3211
    %v3213 = vpop.f32.mrf.mxu0
    %v3214 = vadd.f32 0.0, %v3213
    %3215 = vdwg.mxu0
    %3216 = vmatprep.subr.bf16.mxu0 0
    %3217 = vmatpush1.bf16.msra.mxu0 0
    %3218 = vmatprep.subr.bf16.mxu0 0
    %3219 = vmatpush1.bf16.msra.mxu0 0
    %3220 = vmatprep.subr.bf16.mxu0 0
    %3221 = vmatpush1.bf16.msra.mxu0 0
    %3222 = vmatprep.subr.bf16.mxu0 0
    %3223 = vmatpush1.bf16.msra.mxu0 0
    %3224 = vmatprep.subr.bf16.mxu0 0
    %3225 = vmatpush1.bf16.msra.mxu0 0
    %3226 = vmatprep.subr.bf16.mxu0 0
    %3227 = vmatpush1.bf16.msra.mxu0 %v3171
    %3228 = vmatprep.subr.bf16.mxu0 0
    %3229 = vmatpush1.bf16.msra.mxu0 %v3149
    %3230 = vmatprep.subr.bf16.mxu0 0
    %3231 = vmatpush1.bf16.msra.mxu0 %v3146
    %3232 = vmatprep.subr.bf16.mxu0 0
    %3233 = vmatpush2.bf16.msra.mxu0 0
    %3234 = vmatprep.subr.bf16.mxu0 0
    %3235 = vmatpush2.bf16.msra.mxu0 0
    %3236 = vmatprep.subr.bf16.mxu0 0
    %3237 = vmatpush2.bf16.msra.mxu0 0
    %3238 = vmatprep.subr.bf16.mxu0 0
    %3239 = vmatpush2.bf16.msra.mxu0 0
    %3240 = vmatprep.subr.bf16.mxu0 0
    %3241 = vmatpush2.bf16.msra.mxu0 0
    %3242 = vmatprep.subr.bf16.mxu0 0
    %3243 = vmatpush2.bf16.msra.mxu0 0
    %3244 = vmatprep.subr.bf16.mxu0 0
    %3245 = vmatpush2.bf16.msra.mxu0 0
    %3246 = vmatprep.subr.bf16.mxu0 0
    %3247 = vmatpush2.bf16.msra.mxu0 0
    %3248 = vmatprep.mubr.bf16.mxu0 0
    %3249 = vmatmul.mubr.bf16.gmra.mxu0 %v3162
    %v3250 = vpop.f32.mrf.mxu0
    %v3251 = vadd.f32 0.0, %v3250
    %v3252 = vpop.f32.mrf.mxu0
    %v3253 = vpop.f32.mrf.mxu0
    %v3254 = vadd.f32 0.0, %v3253
    %v3255 = vpop.f32.mrf.mxu0
    %3256 = vdwg.mxu0
    %v3257 = vpack.c.bf16 %v3212, %v3208
    %v3258 = vpack.c.bf16 %v3214, %v3210
    %v3259 = vpack.c.bf16 %v3254, %v3251
    %v3260 = vld [vmem:[%s9] sm:$0xff]
    %v3261 = vld [vmem:[%s9 + $0x8] sm:$0xff]
    %v3262 = vld [vmem:[%s9 + $0x10] sm:$0xff]
    %v3263 = vld [vmem:[%s9 + $0x18] sm:$0xff]
    %v3264 = vld [vmem:[%s9 + $0x20] sm:$0xff]
    %v3265 = vld [vmem:[%s9 + $0x28] sm:$0xff]
    %v3266 = vld [vmem:[%s9 + $0x30] sm:$0xff]
    %v3267 = vld [vmem:[%s9 + $0x38] sm:$0xff]
    %v3268 = vld [vmem:[%s9 + $0x40] sm:$0xff]
    %v3269 = vld [vmem:[%s9 + $0x48] sm:$0xff]
    %v3270 = vld [vmem:[%s9 + $0x50] sm:$0xff]
    %v3271 = vld [vmem:[%s9 + $0x58] sm:$0xff]
    %v3272 = vld [vmem:[%s9 + $0x60] sm:$0xff]
    %v3273 = vld [vmem:[%s9 + $0x68] sm:$0xff]
    %v3274 = vld [vmem:[%s9 + $0x70] sm:$0xff]
    %v3275 = vld [vmem:[%s9 + $0x78] sm:$0xff]
    %v3276 = vld [vmem:[%s9 + $0x80] sm:$0xff]
    %v3277 = vld [vmem:[%s9 + $0x88] sm:$0xff]
    %v3278 = vld [vmem:[%s9 + $0x90] sm:$0xff]
    %v3279 = vld [vmem:[%s9 + $0x98] sm:$0xff]
    %v3280 = vld [vmem:[%s9 + $0xa0] sm:$0xff]
    %v3281 = vld [vmem:[%s9 + $0xa8] sm:$0xff]
    %v3282 = vld [vmem:[%s9 + $0xb0] sm:$0xff]
    %v3283 = vld [vmem:[%s9 + $0xb8] sm:$0xff]
    %v3284 = vld [vmem:[%s9 + $0xc0] sm:$0xff]
    %v3285 = vld [vmem:[%s9 + $0xc8] sm:$0xff]
    %v3286 = vld [vmem:[%s9 + $0xd0] sm:$0xff]
    %v3287 = vld [vmem:[%s9 + $0xd8] sm:$0xff]
    %v3288 = vld [vmem:[%s9 + $0xe0] sm:$0xff]
    %v3289 = vld [vmem:[%s9 + $0xe8] sm:$0xff]
    %v3290 = vld [vmem:[%s9 + $0xf0] sm:$0xff]
    %v3291 = vld [vmem:[%s9 + $0xf8] sm:$0xff]
    %v3292 = vld [vmem:[%s9 + $0x100] sm:$0xff]
    %v3293 = vld [vmem:[%s9 + $0x108] sm:$0xff]
    %v3294 = vld [vmem:[%s9 + $0x110] sm:$0xff]
    %v3295 = vld [vmem:[%s9 + $0x118] sm:$0xff]
    %v3296 = vld [vmem:[%s9 + $0x120] sm:$0xff]
    %v3297 = vld [vmem:[%s9 + $0x128] sm:$0xff]
    %v3298 = vld [vmem:[%s9 + $0x130] sm:$0xff]
    %v3299 = vld [vmem:[%s9 + $0x138] sm:$0xff]
    %s3300 = scalar_lea.vmem %s8, 8
    %v3301 = vld [vmem:[%s3300] sm:$0xf]
    %v3302 = vld [vmem:[%s3300 + $0x4] sm:$0xf]
    %v3305 = vunpack.c.l.b16 %v3301
    %v3306 = vunpack.c.l.b16 %v3302
    %v3307 = vpack.c.b16 %v3306, %v3305
    %v3309 = vsel %vm3160, %v3307, 0
    %3311 = vmatprep.subr.bf16.mxu0 0
    %3312 = vmatpush1.bf16.msra.mxu0 0
    %3313 = vmatprep.subr.bf16.mxu0 0
    %3314 = vmatpush1.bf16.msra.mxu0 0
    %3315 = vmatprep.subr.bf16.mxu0 0
    %3316 = vmatpush1.bf16.msra.mxu0 0
    %3317 = vmatprep.subr.bf16.mxu0 0
    %3318 = vmatpush1.bf16.msra.mxu0 0
    %3319 = vmatprep.subr.bf16.mxu0 0
    %3320 = vmatpush1.bf16.msra.mxu0 0
    %3321 = vmatprep.subr.bf16.mxu0 %v3168
    %3322 = vmatpush1.bf16.msra.mxu0 %v3165
    %3323 = vmatprep.subr.bf16.mxu0 %v3148
    %3324 = vmatpush1.bf16.msra.mxu0 %v3147
    %3325 = vmatprep.subr.bf16.mxu0 %v3145
    %3326 = vmatpush1.bf16.msra.mxu0 %v3144
    %3327 = vmatprep.subr.bf16.mxu0 0
    %3328 = vmatpush2.bf16.msra.mxu0 0
    %3329 = vmatprep.subr.bf16.mxu0 0
    %3330 = vmatpush2.bf16.msra.mxu0 0
    %3331 = vmatprep.subr.bf16.mxu0 0
    %3332 = vmatpush2.bf16.msra.mxu0 0
    %3333 = vmatprep.subr.bf16.mxu0 0
    %3334 = vmatpush2.bf16.msra.mxu0 0
    %3335 = vmatprep.subr.bf16.mxu0 0
    %3336 = vmatpush2.bf16.msra.mxu0 0
    %3337 = vmatprep.subr.bf16.mxu0 0
    %3338 = vmatpush2.bf16.msra.mxu0 0
    %3339 = vmatprep.subr.bf16.mxu0 0
    %3340 = vmatpush2.bf16.msra.mxu0 0
    %3341 = vmatprep.subr.bf16.mxu0 0
    %3342 = vmatpush2.bf16.msra.mxu0 0
    %3343 = vmatprep.mubr.bf16.mxu0 0
    %3344 = vmatmul.mubr.bf16.gmra.mxu0 %v3309
    %v3345 = vpop.f32.mrf.mxu0
    %v3346 = vadd.f32 0.0, %v3345
    %v3347 = vpop.f32.mrf.mxu0
    %v3348 = vadd.f32 0.0, %v3347
    %v3349 = vpop.f32.mrf.mxu0
    %v3350 = vadd.f32 0.0, %v3349
    %v3351 = vpop.f32.mrf.mxu0
    %v3352 = vadd.f32 0.0, %v3351
    %3353 = vdwg.mxu0
    %3354 = vmatprep.subr.bf16.mxu0 0
    %3355 = vmatpush1.bf16.msra.mxu0 0
    %3356 = vmatprep.subr.bf16.mxu0 0
    %3357 = vmatpush1.bf16.msra.mxu0 0
    %3358 = vmatprep.subr.bf16.mxu0 0
    %3359 = vmatpush1.bf16.msra.mxu0 0
    %3360 = vmatprep.subr.bf16.mxu0 0
    %3361 = vmatpush1.bf16.msra.mxu0 0
    %3362 = vmatprep.subr.bf16.mxu0 0
    %3363 = vmatpush1.bf16.msra.mxu0 0
    %3364 = vmatprep.subr.bf16.mxu0 0
    %3365 = vmatpush1.bf16.msra.mxu0 %v3171
    %3366 = vmatprep.subr.bf16.mxu0 0
    %3367 = vmatpush1.bf16.msra.mxu0 %v3149
    %3368 = vmatprep.subr.bf16.mxu0 0
    %3369 = vmatpush1.bf16.msra.mxu0 %v3146
    %3370 = vmatprep.subr.bf16.mxu0 0
    %3371 = vmatpush2.bf16.msra.mxu0 0
    %3372 = vmatprep.subr.bf16.mxu0 0
    %3373 = vmatpush2.bf16.msra.mxu0 0
    %3374 = vmatprep.subr.bf16.mxu0 0
    %3375 = vmatpush2.bf16.msra.mxu0 0
    %3376 = vmatprep.subr.bf16.mxu0 0
    %3377 = vmatpush2.bf16.msra.mxu0 0
    %3378 = vmatprep.subr.bf16.mxu0 0
    %3379 = vmatpush2.bf16.msra.mxu0 0
    %3380 = vmatprep.subr.bf16.mxu0 0
    %3381 = vmatpush2.bf16.msra.mxu0 0
    %3382 = vmatprep.subr.bf16.mxu0 0
    %3383 = vmatpush2.bf16.msra.mxu0 0
    %3384 = vmatprep.subr.bf16.mxu0 0
    %3385 = vmatpush2.bf16.msra.mxu0 0
    %3386 = vmatprep.mubr.bf16.mxu0 0
    %3387 = vmatmul.mubr.bf16.gmra.mxu0 %v3309
    %v3388 = vpop.f32.mrf.mxu0
    %v3389 = vadd.f32 0.0, %v3388
    %v3390 = vpop.f32.mrf.mxu0
    %v3391 = vpop.f32.mrf.mxu0
    %v3392 = vadd.f32 0.0, %v3391
    %v3393 = vpop.f32.mrf.mxu0
    %3394 = vdwg.mxu0
    %v3395 = vpack.c.bf16 %v3350, %v3346
    %v3396 = vpack.c.bf16 %v3352, %v3348
    %v3397 = vpack.c.bf16 %v3392, %v3389
    %s3398 = scalar_lea.vmem %s9, 320
    %v3399 = vld [vmem:[%s3398] sm:$0xff]
    %v3400 = vld [vmem:[%s3398 + $0x8] sm:$0xff]
    %v3401 = vld [vmem:[%s3398 + $0x10] sm:$0xff]
    %v3402 = vld [vmem:[%s3398 + $0x18] sm:$0xff]
    %v3403 = vld [vmem:[%s3398 + $0x20] sm:$0xff]
    %v3404 = vld [vmem:[%s3398 + $0x28] sm:$0xff]
    %v3405 = vld [vmem:[%s3398 + $0x30] sm:$0xff]
    %v3406 = vld [vmem:[%s3398 + $0x38] sm:$0xff]
    %v3407 = vld [vmem:[%s3398 + $0x40] sm:$0xff]
    %v3408 = vld [vmem:[%s3398 + $0x48] sm:$0xff]
    %v3409 = vld [vmem:[%s3398 + $0x50] sm:$0xff]
    %v3410 = vld [vmem:[%s3398 + $0x58] sm:$0xff]
    %v3411 = vld [vmem:[%s3398 + $0x60] sm:$0xff]
    %v3412 = vld [vmem:[%s3398 + $0x68] sm:$0xff]
    %v3413 = vld [vmem:[%s3398 + $0x70] sm:$0xff]
    %v3414 = vld [vmem:[%s3398 + $0x78] sm:$0xff]
    %v3415 = vld [vmem:[%s3398 + $0x80] sm:$0xff]
    %v3416 = vld [vmem:[%s3398 + $0x88] sm:$0xff]
    %v3417 = vld [vmem:[%s3398 + $0x90] sm:$0xff]
    %v3418 = vld [vmem:[%s3398 + $0x98] sm:$0xff]
    %v3419 = vld [vmem:[%s3398 + $0xa0] sm:$0xff]
    %v3420 = vld [vmem:[%s3398 + $0xa8] sm:$0xff]
    %v3421 = vld [vmem:[%s3398 + $0xb0] sm:$0xff]
    %v3422 = vld [vmem:[%s3398 + $0xb8] sm:$0xff]
    %v3423 = vld [vmem:[%s3398 + $0xc0] sm:$0xff]
    %v3424 = vld [vmem:[%s3398 + $0xc8] sm:$0xff]
    %v3425 = vld [vmem:[%s3398 + $0xd0] sm:$0xff]
    %v3426 = vld [vmem:[%s3398 + $0xd8] sm:$0xff]
    %v3427 = vld [vmem:[%s3398 + $0xe0] sm:$0xff]
    %v3428 = vld [vmem:[%s3398 + $0xe8] sm:$0xff]
    %v3429 = vld [vmem:[%s3398 + $0xf0] sm:$0xff]
    %v3430 = vld [vmem:[%s3398 + $0xf8] sm:$0xff]
    %v3431 = vld [vmem:[%s3398 + $0x100] sm:$0xff]
    %v3432 = vld [vmem:[%s3398 + $0x108] sm:$0xff]
    %v3433 = vld [vmem:[%s3398 + $0x110] sm:$0xff]
    %v3434 = vld [vmem:[%s3398 + $0x118] sm:$0xff]
    %v3435 = vld [vmem:[%s3398 + $0x120] sm:$0xff]
    %v3436 = vld [vmem:[%s3398 + $0x128] sm:$0xff]
    %v3437 = vld [vmem:[%s3398 + $0x130] sm:$0xff]
    %v3438 = vld [vmem:[%s3398 + $0x138] sm:$0xff]
    %v3479 = vunpack.c.l.b16 %v3399
    %v3480 = vunpack.c.h.b16 %v3399
    %v3481 = vunpack.c.l.b16 %v3400
    %v3482 = vunpack.c.h.b16 %v3400
    %v3483 = vunpack.c.l.b16 %v3401
    %v3484 = vunpack.c.h.b16 %v3401
    %v3485 = vunpack.c.l.b16 %v3402
    %v3486 = vunpack.c.h.b16 %v3402
    %v3487 = vunpack.c.l.b16 %v3403
    %v3488 = vunpack.c.h.b16 %v3403
    %v3489 = vunpack.c.l.b16 %v3404
    %v3490 = vunpack.c.h.b16 %v3404
    %v3491 = vunpack.c.l.b16 %v3405
    %v3492 = vunpack.c.h.b16 %v3405
    %v3493 = vunpack.c.l.b16 %v3406
    %v3494 = vunpack.c.h.b16 %v3406
    %v3495 = vunpack.c.l.b16 %v3407
    %v3496 = vunpack.c.h.b16 %v3407
    %v3497 = vunpack.c.l.b16 %v3408
    %v3498 = vunpack.c.h.b16 %v3408
    %v3499 = vunpack.c.l.b16 %v3409
    %v3500 = vunpack.c.h.b16 %v3409
    %v3501 = vunpack.c.l.b16 %v3410
    %v3502 = vunpack.c.h.b16 %v3410
    %v3503 = vunpack.c.l.b16 %v3411
    %v3504 = vunpack.c.h.b16 %v3411
    %v3505 = vunpack.c.l.b16 %v3412
    %v3506 = vunpack.c.h.b16 %v3412
    %v3507 = vunpack.c.l.b16 %v3413
    %v3508 = vunpack.c.h.b16 %v3413
    %v3509 = vunpack.c.l.b16 %v3414
    %v3510 = vunpack.c.h.b16 %v3414
    %v3511 = vunpack.c.l.b16 %v3415
    %v3512 = vunpack.c.h.b16 %v3415
    %v3513 = vunpack.c.l.b16 %v3416
    %v3514 = vunpack.c.h.b16 %v3416
    %v3515 = vunpack.c.l.b16 %v3417
    %v3516 = vunpack.c.h.b16 %v3417
    %v3517 = vunpack.c.l.b16 %v3418
    %v3518 = vunpack.c.h.b16 %v3418
    %v3519 = vunpack.c.l.b16 %v3419
    %v3520 = vunpack.c.h.b16 %v3419
    %v3521 = vunpack.c.l.b16 %v3420
    %v3522 = vunpack.c.h.b16 %v3420
    %v3523 = vunpack.c.l.b16 %v3421
    %v3524 = vunpack.c.h.b16 %v3421
    %v3525 = vunpack.c.l.b16 %v3422
    %v3526 = vunpack.c.h.b16 %v3422
    %v3527 = vunpack.c.l.b16 %v3423
    %v3528 = vunpack.c.h.b16 %v3423
    %v3529 = vunpack.c.l.b16 %v3424
    %v3530 = vunpack.c.h.b16 %v3424
    %v3531 = vunpack.c.l.b16 %v3425
    %v3532 = vunpack.c.h.b16 %v3425
    %v3533 = vunpack.c.l.b16 %v3426
    %v3534 = vunpack.c.h.b16 %v3426
    %v3535 = vunpack.c.l.b16 %v3427
    %v3536 = vunpack.c.h.b16 %v3427
    %v3537 = vunpack.c.l.b16 %v3428
    %v3538 = vunpack.c.h.b16 %v3428
    %v3539 = vunpack.c.l.b16 %v3429
    %v3540 = vunpack.c.h.b16 %v3429
    %v3541 = vunpack.c.l.b16 %v3430
    %v3542 = vunpack.c.h.b16 %v3430
    %v3543 = vunpack.c.l.b16 %v3431
    %v3544 = vunpack.c.h.b16 %v3431
    %v3545 = vunpack.c.l.b16 %v3432
    %v3546 = vunpack.c.h.b16 %v3432
    %v3547 = vunpack.c.l.b16 %v3433
    %v3548 = vunpack.c.h.b16 %v3433
    %v3549 = vunpack.c.l.b16 %v3434
    %v3550 = vunpack.c.h.b16 %v3434
    %v3551 = vunpack.c.l.b16 %v3435
    %v3552 = vunpack.c.h.b16 %v3435
    %v3553 = vunpack.c.l.b16 %v3436
    %v3554 = vunpack.c.h.b16 %v3436
    %v3555 = vunpack.c.l.b16 %v3437
    %v3556 = vunpack.c.h.b16 %v3437
    %v3557 = vunpack.c.l.b16 %v3438
    %v3558 = vunpack.c.h.b16 %v3438
    %v3559 = vpack.c.b16 %v3481, %v3479
    %v3560 = vpack.c.b16 %v3482, %v3480
    %v3561 = vpack.c.b16 %v3485, %v3483
    %v3562 = vpack.c.b16 %v3486, %v3484
    %v3563 = vpack.c.b16 %v3489, %v3487
    %v3564 = vpack.c.b16 %v3490, %v3488
    %v3565 = vpack.c.b16 %v3493, %v3491
    %v3566 = vpack.c.b16 %v3494, %v3492
    %v3567 = vpack.c.b16 %v3497, %v3495
    %v3568 = vpack.c.b16 %v3498, %v3496
    %v3569 = vpack.c.b16 %v3501, %v3499
    %v3570 = vpack.c.b16 %v3502, %v3500
    %v3571 = vpack.c.b16 %v3505, %v3503
    %v3572 = vpack.c.b16 %v3506, %v3504
    %v3573 = vpack.c.b16 %v3509, %v3507
    %v3574 = vpack.c.b16 %v3510, %v3508
    %v3575 = vpack.c.b16 %v3513, %v3511
    %v3576 = vpack.c.b16 %v3514, %v3512
    %v3577 = vpack.c.b16 %v3517, %v3515
    %v3578 = vpack.c.b16 %v3518, %v3516
    %v3579 = vpack.c.b16 %v3521, %v3519
    %v3580 = vpack.c.b16 %v3522, %v3520
    %v3581 = vpack.c.b16 %v3525, %v3523
    %v3582 = vpack.c.b16 %v3526, %v3524
    %v3583 = vpack.c.b16 %v3529, %v3527
    %v3584 = vpack.c.b16 %v3530, %v3528
    %v3585 = vpack.c.b16 %v3533, %v3531
    %v3586 = vpack.c.b16 %v3534, %v3532
    %v3587 = vpack.c.b16 %v3537, %v3535
    %v3588 = vpack.c.b16 %v3538, %v3536
    %v3589 = vpack.c.b16 %v3541, %v3539
    %v3590 = vpack.c.b16 %v3542, %v3540
    %v3591 = vpack.c.b16 %v3545, %v3543
    %v3592 = vpack.c.b16 %v3546, %v3544
    %v3593 = vpack.c.b16 %v3549, %v3547
    %v3594 = vpack.c.b16 %v3550, %v3548
    %v3595 = vpack.c.b16 %v3553, %v3551
    %v3596 = vpack.c.b16 %v3554, %v3552
    %v3597 = vpack.c.b16 %v3557, %v3555
    %v3598 = vpack.c.b16 %v3558, %v3556
    %v3640 = vsel %vm2376, %v3397, 0
    %3642 = vmatprep.subr.bf16.mxu0 %v3574
    %3643 = vmatpush1.bf16.msra.mxu0 %v3573
    %3644 = vmatprep.subr.bf16.mxu0 %v3572
    %3645 = vmatpush1.bf16.msra.mxu0 %v3571
    %3646 = vmatprep.subr.bf16.mxu0 %v3570
    %3647 = vmatpush1.bf16.msra.mxu0 %v3569
    %3648 = vmatprep.subr.bf16.mxu0 %v3568
    %3649 = vmatpush1.bf16.msra.mxu0 %v3567
    %3650 = vmatprep.subr.bf16.mxu0 %v3566
    %3651 = vmatpush1.bf16.msra.mxu0 %v3565
    %3652 = vmatprep.subr.bf16.mxu0 %v3564
    %3653 = vmatpush1.bf16.msra.mxu0 %v3563
    %3654 = vmatprep.subr.bf16.mxu0 %v3562
    %3655 = vmatpush1.bf16.msra.mxu0 %v3561
    %3656 = vmatprep.subr.bf16.mxu0 %v3560
    %3657 = vmatpush1.bf16.msra.mxu0 %v3559
    %3658 = vmatprep.subr.bf16.mxu0 %v3590
    %3659 = vmatpush2.bf16.msra.mxu0 %v3589
    %3660 = vmatprep.subr.bf16.mxu0 %v3588
    %3661 = vmatpush2.bf16.msra.mxu0 %v3587
    %3662 = vmatprep.subr.bf16.mxu0 %v3586
    %3663 = vmatpush2.bf16.msra.mxu0 %v3585
    %3664 = vmatprep.subr.bf16.mxu0 %v3584
    %3665 = vmatpush2.bf16.msra.mxu0 %v3583
    %3666 = vmatprep.subr.bf16.mxu0 %v3582
    %3667 = vmatpush2.bf16.msra.mxu0 %v3581
    %3668 = vmatprep.subr.bf16.mxu0 %v3580
    %3669 = vmatpush2.bf16.msra.mxu0 %v3579
    %3670 = vmatprep.subr.bf16.mxu0 %v3578
    %3671 = vmatpush2.bf16.msra.mxu0 %v3577
    %3672 = vmatprep.subr.bf16.mxu0 %v3576
    %3673 = vmatpush2.bf16.msra.mxu0 %v3575
    %3674 = vmatprep.mubr.bf16.mxu0 %v3396
    %3675 = vmatmul.mubr.bf16.gmra.mxu0 %v3395
    %v3676 = vpop.f32.mrf.mxu0
    %v3677 = vadd.f32 0.0, %v3676
    %v3678 = vpop.f32.mrf.mxu0
    %v3679 = vadd.f32 0.0, %v3678
    %v3680 = vpop.f32.mrf.mxu0
    %v3681 = vadd.f32 0.0, %v3680
    %v3682 = vpop.f32.mrf.mxu0
    %v3683 = vadd.f32 0.0, %v3682
    %3684 = vdwg.mxu0
    %3685 = vmatprep.subr.bf16.mxu0 0
    %3686 = vmatpush1.bf16.msra.mxu0 0
    %3687 = vmatprep.subr.bf16.mxu0 0
    %3688 = vmatpush1.bf16.msra.mxu0 0
    %3689 = vmatprep.subr.bf16.mxu0 0
    %3690 = vmatpush1.bf16.msra.mxu0 0
    %3691 = vmatprep.subr.bf16.mxu0 0
    %3692 = vmatpush1.bf16.msra.mxu0 0
    %3693 = vmatprep.subr.bf16.mxu0 %v3598
    %3694 = vmatpush1.bf16.msra.mxu0 %v3597
    %3695 = vmatprep.subr.bf16.mxu0 %v3596
    %3696 = vmatpush1.bf16.msra.mxu0 %v3595
    %3697 = vmatprep.subr.bf16.mxu0 %v3594
    %3698 = vmatpush1.bf16.msra.mxu0 %v3593
    %3699 = vmatprep.subr.bf16.mxu0 %v3592
    %3700 = vmatpush1.bf16.msra.mxu0 %v3591
    %3701 = vmatprep.subr.bf16.mxu0 0
    %3702 = vmatpush2.bf16.msra.mxu0 0
    %3703 = vmatprep.subr.bf16.mxu0 0
    %3704 = vmatpush2.bf16.msra.mxu0 0
    %3705 = vmatprep.subr.bf16.mxu0 0
    %3706 = vmatpush2.bf16.msra.mxu0 0
    %3707 = vmatprep.subr.bf16.mxu0 0
    %3708 = vmatpush2.bf16.msra.mxu0 0
    %3709 = vmatprep.subr.bf16.mxu0 0
    %3710 = vmatpush2.bf16.msra.mxu0 0
    %3711 = vmatprep.subr.bf16.mxu0 0
    %3712 = vmatpush2.bf16.msra.mxu0 0
    %3713 = vmatprep.subr.bf16.mxu0 0
    %3714 = vmatpush2.bf16.msra.mxu0 0
    %3715 = vmatprep.subr.bf16.mxu0 0
    %3716 = vmatpush2.bf16.msra.mxu0 0
    %3717 = vmatprep.mubr.bf16.mxu0 0
    %3718 = vmatmul.mubr.bf16.gmra.mxu0 %v3640
    %v3719 = vpop.f32.mrf.mxu0
    %v3720 = vadd.f32 %v3677, %v3719
    %v3721 = vpop.f32.mrf.mxu0
    %v3722 = vadd.f32 %v3679, %v3721
    %v3723 = vpop.f32.mrf.mxu0
    %v3724 = vadd.f32 %v3681, %v3723
    %v3725 = vpop.f32.mrf.mxu0
    %v3726 = vadd.f32 %v3683, %v3725
    %3727 = vdwg.mxu0
    %v3768 = vunpack.c.l.b16 %v3260
    %v3769 = vunpack.c.h.b16 %v3260
    %v3770 = vunpack.c.l.b16 %v3261
    %v3771 = vunpack.c.h.b16 %v3261
    %v3772 = vunpack.c.l.b16 %v3262
    %v3773 = vunpack.c.h.b16 %v3262
    %v3774 = vunpack.c.l.b16 %v3263
    %v3775 = vunpack.c.h.b16 %v3263
    %v3776 = vunpack.c.l.b16 %v3264
    %v3777 = vunpack.c.h.b16 %v3264
    %v3778 = vunpack.c.l.b16 %v3265
    %v3779 = vunpack.c.h.b16 %v3265
    %v3780 = vunpack.c.l.b16 %v3266
    %v3781 = vunpack.c.h.b16 %v3266
    %v3782 = vunpack.c.l.b16 %v3267
    %v3783 = vunpack.c.h.b16 %v3267
    %v3784 = vunpack.c.l.b16 %v3268
    %v3785 = vunpack.c.h.b16 %v3268
    %v3786 = vunpack.c.l.b16 %v3269
    %v3787 = vunpack.c.h.b16 %v3269
    %v3788 = vunpack.c.l.b16 %v3270
    %v3789 = vunpack.c.h.b16 %v3270
    %v3790 = vunpack.c.l.b16 %v3271
    %v3791 = vunpack.c.h.b16 %v3271
    %v3792 = vunpack.c.l.b16 %v3272
    %v3793 = vunpack.c.h.b16 %v3272
    %v3794 = vunpack.c.l.b16 %v3273
    %v3795 = vunpack.c.h.b16 %v3273
    %v3796 = vunpack.c.l.b16 %v3274
    %v3797 = vunpack.c.h.b16 %v3274
    %v3798 = vunpack.c.l.b16 %v3275
    %v3799 = vunpack.c.h.b16 %v3275
    %v3800 = vunpack.c.l.b16 %v3276
    %v3801 = vunpack.c.h.b16 %v3276
    %v3802 = vunpack.c.l.b16 %v3277
    %v3803 = vunpack.c.h.b16 %v3277
    %v3804 = vunpack.c.l.b16 %v3278
    %v3805 = vunpack.c.h.b16 %v3278
    %v3806 = vunpack.c.l.b16 %v3279
    %v3807 = vunpack.c.h.b16 %v3279
    %v3808 = vunpack.c.l.b16 %v3280
    %v3809 = vunpack.c.h.b16 %v3280
    %v3810 = vunpack.c.l.b16 %v3281
    %v3811 = vunpack.c.h.b16 %v3281
    %v3812 = vunpack.c.l.b16 %v3282
    %v3813 = vunpack.c.h.b16 %v3282
    %v3814 = vunpack.c.l.b16 %v3283
    %v3815 = vunpack.c.h.b16 %v3283
    %v3816 = vunpack.c.l.b16 %v3284
    %v3817 = vunpack.c.h.b16 %v3284
    %v3818 = vunpack.c.l.b16 %v3285
    %v3819 = vunpack.c.h.b16 %v3285
    %v3820 = vunpack.c.l.b16 %v3286
    %v3821 = vunpack.c.h.b16 %v3286
    %v3822 = vunpack.c.l.b16 %v3287
    %v3823 = vunpack.c.h.b16 %v3287
    %v3824 = vunpack.c.l.b16 %v3288
    %v3825 = vunpack.c.h.b16 %v3288
    %v3826 = vunpack.c.l.b16 %v3289
    %v3827 = vunpack.c.h.b16 %v3289
    %v3828 = vunpack.c.l.b16 %v3290
    %v3829 = vunpack.c.h.b16 %v3290
    %v3830 = vunpack.c.l.b16 %v3291
    %v3831 = vunpack.c.h.b16 %v3291
    %v3832 = vunpack.c.l.b16 %v3292
    %v3833 = vunpack.c.h.b16 %v3292
    %v3834 = vunpack.c.l.b16 %v3293
    %v3835 = vunpack.c.h.b16 %v3293
    %v3836 = vunpack.c.l.b16 %v3294
    %v3837 = vunpack.c.h.b16 %v3294
    %v3838 = vunpack.c.l.b16 %v3295
    %v3839 = vunpack.c.h.b16 %v3295
    %v3840 = vunpack.c.l.b16 %v3296
    %v3841 = vunpack.c.h.b16 %v3296
    %v3842 = vunpack.c.l.b16 %v3297
    %v3843 = vunpack.c.h.b16 %v3297
    %v3844 = vunpack.c.l.b16 %v3298
    %v3845 = vunpack.c.h.b16 %v3298
    %v3846 = vunpack.c.l.b16 %v3299
    %v3847 = vunpack.c.h.b16 %v3299
    %v3848 = vpack.c.b16 %v3770, %v3768
    %v3849 = vpack.c.b16 %v3771, %v3769
    %v3850 = vpack.c.b16 %v3774, %v3772
    %v3851 = vpack.c.b16 %v3775, %v3773
    %v3852 = vpack.c.b16 %v3778, %v3776
    %v3853 = vpack.c.b16 %v3779, %v3777
    %v3854 = vpack.c.b16 %v3782, %v3780
    %v3855 = vpack.c.b16 %v3783, %v3781
    %v3856 = vpack.c.b16 %v3786, %v3784
    %v3857 = vpack.c.b16 %v3787, %v3785
    %v3858 = vpack.c.b16 %v3790, %v3788
    %v3859 = vpack.c.b16 %v3791, %v3789
    %v3860 = vpack.c.b16 %v3794, %v3792
    %v3861 = vpack.c.b16 %v3795, %v3793
    %v3862 = vpack.c.b16 %v3798, %v3796
    %v3863 = vpack.c.b16 %v3799, %v3797
    %v3864 = vpack.c.b16 %v3802, %v3800
    %v3865 = vpack.c.b16 %v3803, %v3801
    %v3866 = vpack.c.b16 %v3806, %v3804
    %v3867 = vpack.c.b16 %v3807, %v3805
    %v3868 = vpack.c.b16 %v3810, %v3808
    %v3869 = vpack.c.b16 %v3811, %v3809
    %v3870 = vpack.c.b16 %v3814, %v3812
    %v3871 = vpack.c.b16 %v3815, %v3813
    %v3872 = vpack.c.b16 %v3818, %v3816
    %v3873 = vpack.c.b16 %v3819, %v3817
    %v3874 = vpack.c.b16 %v3822, %v3820
    %v3875 = vpack.c.b16 %v3823, %v3821
    %v3876 = vpack.c.b16 %v3826, %v3824
    %v3877 = vpack.c.b16 %v3827, %v3825
    %v3878 = vpack.c.b16 %v3830, %v3828
    %v3879 = vpack.c.b16 %v3831, %v3829
    %v3880 = vpack.c.b16 %v3834, %v3832
    %v3881 = vpack.c.b16 %v3835, %v3833
    %v3882 = vpack.c.b16 %v3838, %v3836
    %v3883 = vpack.c.b16 %v3839, %v3837
    %v3884 = vpack.c.b16 %v3842, %v3840
    %v3885 = vpack.c.b16 %v3843, %v3841
    %v3886 = vpack.c.b16 %v3846, %v3844
    %v3887 = vpack.c.b16 %v3847, %v3845
    %v3929 = vsel %vm2376, %v3259, 0
    %3931 = vmatprep.subr.bf16.mxu0 %v3863
    %3932 = vmatpush1.bf16.msra.mxu0 %v3862
    %3933 = vmatprep.subr.bf16.mxu0 %v3861
    %3934 = vmatpush1.bf16.msra.mxu0 %v3860
    %3935 = vmatprep.subr.bf16.mxu0 %v3859
    %3936 = vmatpush1.bf16.msra.mxu0 %v3858
    %3937 = vmatprep.subr.bf16.mxu0 %v3857
    %3938 = vmatpush1.bf16.msra.mxu0 %v3856
    %3939 = vmatprep.subr.bf16.mxu0 %v3855
    %3940 = vmatpush1.bf16.msra.mxu0 %v3854
    %3941 = vmatprep.subr.bf16.mxu0 %v3853
    %3942 = vmatpush1.bf16.msra.mxu0 %v3852
    %3943 = vmatprep.subr.bf16.mxu0 %v3851
    %3944 = vmatpush1.bf16.msra.mxu0 %v3850
    %3945 = vmatprep.subr.bf16.mxu0 %v3849
    %3946 = vmatpush1.bf16.msra.mxu0 %v3848
    %3947 = vmatprep.subr.bf16.mxu0 %v3879
    %3948 = vmatpush2.bf16.msra.mxu0 %v3878
    %3949 = vmatprep.subr.bf16.mxu0 %v3877
    %3950 = vmatpush2.bf16.msra.mxu0 %v3876
    %3951 = vmatprep.subr.bf16.mxu0 %v3875
    %3952 = vmatpush2.bf16.msra.mxu0 %v3874
    %3953 = vmatprep.subr.bf16.mxu0 %v3873
    %3954 = vmatpush2.bf16.msra.mxu0 %v3872
    %3955 = vmatprep.subr.bf16.mxu0 %v3871
    %3956 = vmatpush2.bf16.msra.mxu0 %v3870
    %3957 = vmatprep.subr.bf16.mxu0 %v3869
    %3958 = vmatpush2.bf16.msra.mxu0 %v3868
    %3959 = vmatprep.subr.bf16.mxu0 %v3867
    %3960 = vmatpush2.bf16.msra.mxu0 %v3866
    %3961 = vmatprep.subr.bf16.mxu0 %v3865
    %3962 = vmatpush2.bf16.msra.mxu0 %v3864
    %3963 = vmatprep.mubr.bf16.mxu0 %v3258
    %3964 = vmatmul.mubr.bf16.gmra.mxu0 %v3257
    %v3965 = vpop.f32.mrf.mxu0
    %v3966 = vadd.f32 %v3720, %v3965
    %v3967 = vpop.f32.mrf.mxu0
    %v3968 = vadd.f32 %v3722, %v3967
    %v3969 = vpop.f32.mrf.mxu0
    %v3970 = vadd.f32 %v3724, %v3969
    %v3971 = vpop.f32.mrf.mxu0
    %v3972 = vadd.f32 %v3726, %v3971
    %3973 = vdwg.mxu0
    %3974 = vmatprep.subr.bf16.mxu0 0
    %3975 = vmatpush1.bf16.msra.mxu0 0
    %3976 = vmatprep.subr.bf16.mxu0 0
    %3977 = vmatpush1.bf16.msra.mxu0 0
    %3978 = vmatprep.subr.bf16.mxu0 0
    %3979 = vmatpush1.bf16.msra.mxu0 0
    %3980 = vmatprep.subr.bf16.mxu0 0
    %3981 = vmatpush1.bf16.msra.mxu0 0
    %3982 = vmatprep.subr.bf16.mxu0 %v3887
    %3983 = vmatpush1.bf16.msra.mxu0 %v3886
    %3984 = vmatprep.subr.bf16.mxu0 %v3885
    %3985 = vmatpush1.bf16.msra.mxu0 %v3884
    %3986 = vmatprep.subr.bf16.mxu0 %v3883
    %3987 = vmatpush1.bf16.msra.mxu0 %v3882
    %3988 = vmatprep.subr.bf16.mxu0 %v3881
    %3989 = vmatpush1.bf16.msra.mxu0 %v3880
    %3990 = vmatprep.subr.bf16.mxu0 0
    %3991 = vmatpush2.bf16.msra.mxu0 0
    %3992 = vmatprep.subr.bf16.mxu0 0
    %3993 = vmatpush2.bf16.msra.mxu0 0
    %3994 = vmatprep.subr.bf16.mxu0 0
    %3995 = vmatpush2.bf16.msra.mxu0 0
    %3996 = vmatprep.subr.bf16.mxu0 0
    %3997 = vmatpush2.bf16.msra.mxu0 0
    %3998 = vmatprep.subr.bf16.mxu0 0
    %3999 = vmatpush2.bf16.msra.mxu0 0
    %4000 = vmatprep.subr.bf16.mxu0 0
    %4001 = vmatpush2.bf16.msra.mxu0 0
    %4002 = vmatprep.subr.bf16.mxu0 0
    %4003 = vmatpush2.bf16.msra.mxu0 0
    %4004 = vmatprep.subr.bf16.mxu0 0
    %4005 = vmatpush2.bf16.msra.mxu0 0
    %4006 = vmatprep.mubr.bf16.mxu0 0
    %4007 = vmatmul.mubr.bf16.gmra.mxu0 %v3929
    %v4008 = vpop.f32.mrf.mxu0
    %v4009 = vadd.f32 %v3966, %v4008
    %v4010 = vpop.f32.mrf.mxu0
    %v4011 = vadd.f32 %v3968, %v4010
    %v4012 = vpop.f32.mrf.mxu0
    %v4013 = vadd.f32 %v3970, %v4012
    %v4014 = vpop.f32.mrf.mxu0
    %v4015 = vadd.f32 %v3972, %v4014
    %4016 = vdwg.mxu0
    %s4017 = scalar_lea.vmem %s8, 16
    %v4018 = vld [vmem:[%s4017] sm:$0xf]
    %v4019 = vld [vmem:[%s4017 + $0x4] sm:$0xf]
    %v4022 = vunpack.c.l.b16 %v4018
    %v4023 = vunpack.c.l.b16 %v4019
    %v4024 = vpack.c.b16 %v4023, %v4022
    %v4026 = vsel %vm3160, %v4024, 0
    %4028 = vmatprep.subr.bf16.mxu0 0
    %4029 = vmatpush1.bf16.msra.mxu0 0
    %4030 = vmatprep.subr.bf16.mxu0 0
    %4031 = vmatpush1.bf16.msra.mxu0 0
    %4032 = vmatprep.subr.bf16.mxu0 0
    %4033 = vmatpush1.bf16.msra.mxu0 0
    %4034 = vmatprep.subr.bf16.mxu0 0
    %4035 = vmatpush1.bf16.msra.mxu0 0
    %4036 = vmatprep.subr.bf16.mxu0 0
    %4037 = vmatpush1.bf16.msra.mxu0 0
    %4038 = vmatprep.subr.bf16.mxu0 %v3168
    %4039 = vmatpush1.bf16.msra.mxu0 %v3165
    %4040 = vmatprep.subr.bf16.mxu0 %v3148
    %4041 = vmatpush1.bf16.msra.mxu0 %v3147
    %4042 = vmatprep.subr.bf16.mxu0 %v3145
    %4043 = vmatpush1.bf16.msra.mxu0 %v3144
    %4044 = vmatprep.subr.bf16.mxu0 0
    %4045 = vmatpush2.bf16.msra.mxu0 0
    %4046 = vmatprep.subr.bf16.mxu0 0
    %4047 = vmatpush2.bf16.msra.mxu0 0
    %4048 = vmatprep.subr.bf16.mxu0 0
    %4049 = vmatpush2.bf16.msra.mxu0 0
    %4050 = vmatprep.subr.bf16.mxu0 0
    %4051 = vmatpush2.bf16.msra.mxu0 0
    %4052 = vmatprep.subr.bf16.mxu0 0
    %4053 = vmatpush2.bf16.msra.mxu0 0
    %4054 = vmatprep.subr.bf16.mxu0 0
    %4055 = vmatpush2.bf16.msra.mxu0 0
    %4056 = vmatprep.subr.bf16.mxu0 0
    %4057 = vmatpush2.bf16.msra.mxu0 0
    %4058 = vmatprep.subr.bf16.mxu0 0
    %4059 = vmatpush2.bf16.msra.mxu0 0
    %4060 = vmatprep.mubr.bf16.mxu0 0
    %4061 = vmatmul.mubr.bf16.gmra.mxu0 %v4026
    %v4062 = vpop.f32.mrf.mxu0
    %v4063 = vadd.f32 0.0, %v4062
    %v4064 = vpop.f32.mrf.mxu0
    %v4065 = vadd.f32 0.0, %v4064
    %v4066 = vpop.f32.mrf.mxu0
    %v4067 = vadd.f32 0.0, %v4066
    %v4068 = vpop.f32.mrf.mxu0
    %v4069 = vadd.f32 0.0, %v4068
    %4070 = vdwg.mxu0
    %4071 = vmatprep.subr.bf16.mxu0 0
    %4072 = vmatpush1.bf16.msra.mxu0 0
    %4073 = vmatprep.subr.bf16.mxu0 0
    %4074 = vmatpush1.bf16.msra.mxu0 0
    %4075 = vmatprep.subr.bf16.mxu0 0
    %4076 = vmatpush1.bf16.msra.mxu0 0
    %4077 = vmatprep.subr.bf16.mxu0 0
    %4078 = vmatpush1.bf16.msra.mxu0 0
    %4079 = vmatprep.subr.bf16.mxu0 0
    %4080 = vmatpush1.bf16.msra.mxu0 0
    %4081 = vmatprep.subr.bf16.mxu0 0
    %4082 = vmatpush1.bf16.msra.mxu0 %v3171
    %4083 = vmatprep.subr.bf16.mxu0 0
    %4084 = vmatpush1.bf16.msra.mxu0 %v3149
    %4085 = vmatprep.subr.bf16.mxu0 0
    %4086 = vmatpush1.bf16.msra.mxu0 %v3146
    %4087 = vmatprep.subr.bf16.mxu0 0
    %4088 = vmatpush2.bf16.msra.mxu0 0
    %4089 = vmatprep.subr.bf16.mxu0 0
    %4090 = vmatpush2.bf16.msra.mxu0 0
    %4091 = vmatprep.subr.bf16.mxu0 0
    %4092 = vmatpush2.bf16.msra.mxu0 0
    %4093 = vmatprep.subr.bf16.mxu0 0
    %4094 = vmatpush2.bf16.msra.mxu0 0
    %4095 = vmatprep.subr.bf16.mxu0 0
    %4096 = vmatpush2.bf16.msra.mxu0 0
    %4097 = vmatprep.subr.bf16.mxu0 0
    %4098 = vmatpush2.bf16.msra.mxu0 0
    %4099 = vmatprep.subr.bf16.mxu0 0
    %4100 = vmatpush2.bf16.msra.mxu0 0
    %4101 = vmatprep.subr.bf16.mxu0 0
    %4102 = vmatpush2.bf16.msra.mxu0 0
    %4103 = vmatprep.mubr.bf16.mxu0 0
    %4104 = vmatmul.mubr.bf16.gmra.mxu0 %v4026
    %v4105 = vpop.f32.mrf.mxu0
    %v4106 = vadd.f32 0.0, %v4105
    %v4107 = vpop.f32.mrf.mxu0
    %v4108 = vpop.f32.mrf.mxu0
    %v4109 = vadd.f32 0.0, %v4108
    %v4110 = vpop.f32.mrf.mxu0
    %4111 = vdwg.mxu0
    %v4112 = vpack.c.bf16 %v4067, %v4063
    %v4113 = vpack.c.bf16 %v4069, %v4065
    %v4114 = vpack.c.bf16 %v4109, %v4106
    %s4115 = scalar_lea.vmem %s9, 640
    %v4116 = vld [vmem:[%s4115] sm:$0xff]
    %v4117 = vld [vmem:[%s4115 + $0x8] sm:$0xff]
    %v4118 = vld [vmem:[%s4115 + $0x10] sm:$0xff]
    %v4119 = vld [vmem:[%s4115 + $0x18] sm:$0xff]
    %v4120 = vld [vmem:[%s4115 + $0x20] sm:$0xff]
    %v4121 = vld [vmem:[%s4115 + $0x28] sm:$0xff]
    %v4122 = vld [vmem:[%s4115 + $0x30] sm:$0xff]
    %v4123 = vld [vmem:[%s4115 + $0x38] sm:$0xff]
    %v4124 = vld [vmem:[%s4115 + $0x40] sm:$0xff]
    %v4125 = vld [vmem:[%s4115 + $0x48] sm:$0xff]
    %v4126 = vld [vmem:[%s4115 + $0x50] sm:$0xff]
    %v4127 = vld [vmem:[%s4115 + $0x58] sm:$0xff]
    %v4128 = vld [vmem:[%s4115 + $0x60] sm:$0xff]
    %v4129 = vld [vmem:[%s4115 + $0x68] sm:$0xff]
    %v4130 = vld [vmem:[%s4115 + $0x70] sm:$0xff]
    %v4131 = vld [vmem:[%s4115 + $0x78] sm:$0xff]
    %v4132 = vld [vmem:[%s4115 + $0x80] sm:$0xff]
    %v4133 = vld [vmem:[%s4115 + $0x88] sm:$0xff]
    %v4134 = vld [vmem:[%s4115 + $0x90] sm:$0xff]
    %v4135 = vld [vmem:[%s4115 + $0x98] sm:$0xff]
    %v4136 = vld [vmem:[%s4115 + $0xa0] sm:$0xff]
    %v4137 = vld [vmem:[%s4115 + $0xa8] sm:$0xff]
    %v4138 = vld [vmem:[%s4115 + $0xb0] sm:$0xff]
    %v4139 = vld [vmem:[%s4115 + $0xb8] sm:$0xff]
    %v4140 = vld [vmem:[%s4115 + $0xc0] sm:$0xff]
    %v4141 = vld [vmem:[%s4115 + $0xc8] sm:$0xff]
    %v4142 = vld [vmem:[%s4115 + $0xd0] sm:$0xff]
    %v4143 = vld [vmem:[%s4115 + $0xd8] sm:$0xff]
    %v4144 = vld [vmem:[%s4115 + $0xe0] sm:$0xff]
    %v4145 = vld [vmem:[%s4115 + $0xe8] sm:$0xff]
    %v4146 = vld [vmem:[%s4115 + $0xf0] sm:$0xff]
    %v4147 = vld [vmem:[%s4115 + $0xf8] sm:$0xff]
    %v4148 = vld [vmem:[%s4115 + $0x100] sm:$0xff]
    %v4149 = vld [vmem:[%s4115 + $0x108] sm:$0xff]
    %v4150 = vld [vmem:[%s4115 + $0x110] sm:$0xff]
    %v4151 = vld [vmem:[%s4115 + $0x118] sm:$0xff]
    %v4152 = vld [vmem:[%s4115 + $0x120] sm:$0xff]
    %v4153 = vld [vmem:[%s4115 + $0x128] sm:$0xff]
    %v4154 = vld [vmem:[%s4115 + $0x130] sm:$0xff]
    %v4155 = vld [vmem:[%s4115 + $0x138] sm:$0xff]
    %v4196 = vunpack.c.l.b16 %v4116
    %v4197 = vunpack.c.h.b16 %v4116
    %v4198 = vunpack.c.l.b16 %v4117
    %v4199 = vunpack.c.h.b16 %v4117
    %v4200 = vunpack.c.l.b16 %v4118
    %v4201 = vunpack.c.h.b16 %v4118
    %v4202 = vunpack.c.l.b16 %v4119
    %v4203 = vunpack.c.h.b16 %v4119
    %v4204 = vunpack.c.l.b16 %v4120
    %v4205 = vunpack.c.h.b16 %v4120
    %v4206 = vunpack.c.l.b16 %v4121
    %v4207 = vunpack.c.h.b16 %v4121
    %v4208 = vunpack.c.l.b16 %v4122
    %v4209 = vunpack.c.h.b16 %v4122
    %v4210 = vunpack.c.l.b16 %v4123
    %v4211 = vunpack.c.h.b16 %v4123
    %v4212 = vunpack.c.l.b16 %v4124
    %v4213 = vunpack.c.h.b16 %v4124
    %v4214 = vunpack.c.l.b16 %v4125
    %v4215 = vunpack.c.h.b16 %v4125
    %v4216 = vunpack.c.l.b16 %v4126
    %v4217 = vunpack.c.h.b16 %v4126
    %v4218 = vunpack.c.l.b16 %v4127
    %v4219 = vunpack.c.h.b16 %v4127
    %v4220 = vunpack.c.l.b16 %v4128
    %v4221 = vunpack.c.h.b16 %v4128
    %v4222 = vunpack.c.l.b16 %v4129
    %v4223 = vunpack.c.h.b16 %v4129
    %v4224 = vunpack.c.l.b16 %v4130
    %v4225 = vunpack.c.h.b16 %v4130
    %v4226 = vunpack.c.l.b16 %v4131
    %v4227 = vunpack.c.h.b16 %v4131
    %v4228 = vunpack.c.l.b16 %v4132
    %v4229 = vunpack.c.h.b16 %v4132
    %v4230 = vunpack.c.l.b16 %v4133
    %v4231 = vunpack.c.h.b16 %v4133
    %v4232 = vunpack.c.l.b16 %v4134
    %v4233 = vunpack.c.h.b16 %v4134
    %v4234 = vunpack.c.l.b16 %v4135
    %v4235 = vunpack.c.h.b16 %v4135
    %v4236 = vunpack.c.l.b16 %v4136
    %v4237 = vunpack.c.h.b16 %v4136
    %v4238 = vunpack.c.l.b16 %v4137
    %v4239 = vunpack.c.h.b16 %v4137
    %v4240 = vunpack.c.l.b16 %v4138
    %v4241 = vunpack.c.h.b16 %v4138
    %v4242 = vunpack.c.l.b16 %v4139
    %v4243 = vunpack.c.h.b16 %v4139
    %v4244 = vunpack.c.l.b16 %v4140
    %v4245 = vunpack.c.h.b16 %v4140
    %v4246 = vunpack.c.l.b16 %v4141
    %v4247 = vunpack.c.h.b16 %v4141
    %v4248 = vunpack.c.l.b16 %v4142
    %v4249 = vunpack.c.h.b16 %v4142
    %v4250 = vunpack.c.l.b16 %v4143
    %v4251 = vunpack.c.h.b16 %v4143
    %v4252 = vunpack.c.l.b16 %v4144
    %v4253 = vunpack.c.h.b16 %v4144
    %v4254 = vunpack.c.l.b16 %v4145
    %v4255 = vunpack.c.h.b16 %v4145
    %v4256 = vunpack.c.l.b16 %v4146
    %v4257 = vunpack.c.h.b16 %v4146
    %v4258 = vunpack.c.l.b16 %v4147
    %v4259 = vunpack.c.h.b16 %v4147
    %v4260 = vunpack.c.l.b16 %v4148
    %v4261 = vunpack.c.h.b16 %v4148
    %v4262 = vunpack.c.l.b16 %v4149
    %v4263 = vunpack.c.h.b16 %v4149
    %v4264 = vunpack.c.l.b16 %v4150
    %v4265 = vunpack.c.h.b16 %v4150
    %v4266 = vunpack.c.l.b16 %v4151
    %v4267 = vunpack.c.h.b16 %v4151
    %v4268 = vunpack.c.l.b16 %v4152
    %v4269 = vunpack.c.h.b16 %v4152
    %v4270 = vunpack.c.l.b16 %v4153
    %v4271 = vunpack.c.h.b16 %v4153
    %v4272 = vunpack.c.l.b16 %v4154
    %v4273 = vunpack.c.h.b16 %v4154
    %v4274 = vunpack.c.l.b16 %v4155
    %v4275 = vunpack.c.h.b16 %v4155
    %v4276 = vpack.c.b16 %v4198, %v4196
    %v4277 = vpack.c.b16 %v4199, %v4197
    %v4278 = vpack.c.b16 %v4202, %v4200
    %v4279 = vpack.c.b16 %v4203, %v4201
    %v4280 = vpack.c.b16 %v4206, %v4204
    %v4281 = vpack.c.b16 %v4207, %v4205
    %v4282 = vpack.c.b16 %v4210, %v4208
    %v4283 = vpack.c.b16 %v4211, %v4209
    %v4284 = vpack.c.b16 %v4214, %v4212
    %v4285 = vpack.c.b16 %v4215, %v4213
    %v4286 = vpack.c.b16 %v4218, %v4216
    %v4287 = vpack.c.b16 %v4219, %v4217
    %v4288 = vpack.c.b16 %v4222, %v4220
    %v4289 = vpack.c.b16 %v4223, %v4221
    %v4290 = vpack.c.b16 %v4226, %v4224
    %v4291 = vpack.c.b16 %v4227, %v4225
    %v4292 = vpack.c.b16 %v4230, %v4228
    %v4293 = vpack.c.b16 %v4231, %v4229
    %v4294 = vpack.c.b16 %v4234, %v4232
    %v4295 = vpack.c.b16 %v4235, %v4233
    %v4296 = vpack.c.b16 %v4238, %v4236
    %v4297 = vpack.c.b16 %v4239, %v4237
    %v4298 = vpack.c.b16 %v4242, %v4240
    %v4299 = vpack.c.b16 %v4243, %v4241
    %v4300 = vpack.c.b16 %v4246, %v4244
    %v4301 = vpack.c.b16 %v4247, %v4245
    %v4302 = vpack.c.b16 %v4250, %v4248
    %v4303 = vpack.c.b16 %v4251, %v4249
    %v4304 = vpack.c.b16 %v4254, %v4252
    %v4305 = vpack.c.b16 %v4255, %v4253
    %v4306 = vpack.c.b16 %v4258, %v4256
    %v4307 = vpack.c.b16 %v4259, %v4257
    %v4308 = vpack.c.b16 %v4262, %v4260
    %v4309 = vpack.c.b16 %v4263, %v4261
    %v4310 = vpack.c.b16 %v4266, %v4264
    %v4311 = vpack.c.b16 %v4267, %v4265
    %v4312 = vpack.c.b16 %v4270, %v4268
    %v4313 = vpack.c.b16 %v4271, %v4269
    %v4314 = vpack.c.b16 %v4274, %v4272
    %v4315 = vpack.c.b16 %v4275, %v4273
    %v4357 = vsel %vm2376, %v4114, 0
    %4359 = vmatprep.subr.bf16.mxu0 %v4291
    %4360 = vmatpush1.bf16.msra.mxu0 %v4290
    %4361 = vmatprep.subr.bf16.mxu0 %v4289
    %4362 = vmatpush1.bf16.msra.mxu0 %v4288
    %4363 = vmatprep.subr.bf16.mxu0 %v4287
    %4364 = vmatpush1.bf16.msra.mxu0 %v4286
    %4365 = vmatprep.subr.bf16.mxu0 %v4285
    %4366 = vmatpush1.bf16.msra.mxu0 %v4284
    %4367 = vmatprep.subr.bf16.mxu0 %v4283
    %4368 = vmatpush1.bf16.msra.mxu0 %v4282
    %4369 = vmatprep.subr.bf16.mxu0 %v4281
    %4370 = vmatpush1.bf16.msra.mxu0 %v4280
    %4371 = vmatprep.subr.bf16.mxu0 %v4279
    %4372 = vmatpush1.bf16.msra.mxu0 %v4278
    %4373 = vmatprep.subr.bf16.mxu0 %v4277
    %4374 = vmatpush1.bf16.msra.mxu0 %v4276
    %4375 = vmatprep.subr.bf16.mxu0 %v4307
    %4376 = vmatpush2.bf16.msra.mxu0 %v4306
    %4377 = vmatprep.subr.bf16.mxu0 %v4305
    %4378 = vmatpush2.bf16.msra.mxu0 %v4304
    %4379 = vmatprep.subr.bf16.mxu0 %v4303
    %4380 = vmatpush2.bf16.msra.mxu0 %v4302
    %4381 = vmatprep.subr.bf16.mxu0 %v4301
    %4382 = vmatpush2.bf16.msra.mxu0 %v4300
    %4383 = vmatprep.subr.bf16.mxu0 %v4299
    %4384 = vmatpush2.bf16.msra.mxu0 %v4298
    %4385 = vmatprep.subr.bf16.mxu0 %v4297
    %4386 = vmatpush2.bf16.msra.mxu0 %v4296
    %4387 = vmatprep.subr.bf16.mxu0 %v4295
    %4388 = vmatpush2.bf16.msra.mxu0 %v4294
    %4389 = vmatprep.subr.bf16.mxu0 %v4293
    %4390 = vmatpush2.bf16.msra.mxu0 %v4292
    %4391 = vmatprep.mubr.bf16.mxu0 %v4113
    %4392 = vmatmul.mubr.bf16.gmra.mxu0 %v4112
    %v4393 = vpop.f32.mrf.mxu0
    %v4394 = vadd.f32 0.0, %v4393
    %v4395 = vpop.f32.mrf.mxu0
    %v4396 = vadd.f32 0.0, %v4395
    %v4397 = vpop.f32.mrf.mxu0
    %v4398 = vadd.f32 0.0, %v4397
    %v4399 = vpop.f32.mrf.mxu0
    %v4400 = vadd.f32 0.0, %v4399
    %4401 = vdwg.mxu0
    %4402 = vmatprep.subr.bf16.mxu0 0
    %4403 = vmatpush1.bf16.msra.mxu0 0
    %4404 = vmatprep.subr.bf16.mxu0 0
    %4405 = vmatpush1.bf16.msra.mxu0 0
    %4406 = vmatprep.subr.bf16.mxu0 0
    %4407 = vmatpush1.bf16.msra.mxu0 0
    %4408 = vmatprep.subr.bf16.mxu0 0
    %4409 = vmatpush1.bf16.msra.mxu0 0
    %4410 = vmatprep.subr.bf16.mxu0 %v4315
    %4411 = vmatpush1.bf16.msra.mxu0 %v4314
    %4412 = vmatprep.subr.bf16.mxu0 %v4313
    %4413 = vmatpush1.bf16.msra.mxu0 %v4312
    %4414 = vmatprep.subr.bf16.mxu0 %v4311
    %4415 = vmatpush1.bf16.msra.mxu0 %v4310
    %4416 = vmatprep.subr.bf16.mxu0 %v4309
    %4417 = vmatpush1.bf16.msra.mxu0 %v4308
    %4418 = vmatprep.subr.bf16.mxu0 0
    %4419 = vmatpush2.bf16.msra.mxu0 0
    %4420 = vmatprep.subr.bf16.mxu0 0
    %4421 = vmatpush2.bf16.msra.mxu0 0
    %4422 = vmatprep.subr.bf16.mxu0 0
    %4423 = vmatpush2.bf16.msra.mxu0 0
    %4424 = vmatprep.subr.bf16.mxu0 0
    %4425 = vmatpush2.bf16.msra.mxu0 0
    %4426 = vmatprep.subr.bf16.mxu0 0
    %4427 = vmatpush2.bf16.msra.mxu0 0
    %4428 = vmatprep.subr.bf16.mxu0 0
    %4429 = vmatpush2.bf16.msra.mxu0 0
    %4430 = vmatprep.subr.bf16.mxu0 0
    %4431 = vmatpush2.bf16.msra.mxu0 0
    %4432 = vmatprep.subr.bf16.mxu0 0
    %4433 = vmatpush2.bf16.msra.mxu0 0
    %4434 = vmatprep.mubr.bf16.mxu0 0
    %4435 = vmatmul.mubr.bf16.gmra.mxu0 %v4357
    %v4436 = vpop.f32.mrf.mxu0
    %v4437 = vadd.f32 %v4394, %v4436
    %v4438 = vpop.f32.mrf.mxu0
    %v4439 = vadd.f32 %v4396, %v4438
    %v4440 = vpop.f32.mrf.mxu0
    %v4441 = vadd.f32 %v4398, %v4440
    %v4442 = vpop.f32.mrf.mxu0
    %v4443 = vadd.f32 %v4400, %v4442
    %4444 = vdwg.mxu0
    %v4445 = vadd.f32 %v4009, %v4437
    %v4446 = vadd.f32 %v4011, %v4439
    %v4447 = vadd.f32 %v4013, %v4441
    %v4448 = vadd.f32 %v4015, %v4443
    %s4449 = scalar_lea.vmem %s8, 24
    %v4450 = vld [vmem:[%s4449] sm:$0xf]
    %v4451 = vld [vmem:[%s4449 + $0x4] sm:$0xf]
    %v4454 = vunpack.c.l.b16 %v4450
    %v4455 = vunpack.c.l.b16 %v4451
    %v4456 = vpack.c.b16 %v4455, %v4454
    %v4458 = vsel %vm3160, %v4456, 0
    %4460 = vmatprep.subr.bf16.mxu0 0
    %4461 = vmatpush1.bf16.msra.mxu0 0
    %4462 = vmatprep.subr.bf16.mxu0 0
    %4463 = vmatpush1.bf16.msra.mxu0 0
    %4464 = vmatprep.subr.bf16.mxu0 0
    %4465 = vmatpush1.bf16.msra.mxu0 0
    %4466 = vmatprep.subr.bf16.mxu0 0
    %4467 = vmatpush1.bf16.msra.mxu0 0
    %4468 = vmatprep.subr.bf16.mxu0 0
    %4469 = vmatpush1.bf16.msra.mxu0 0
    %4470 = vmatprep.subr.bf16.mxu0 %v3168
    %4471 = vmatpush1.bf16.msra.mxu0 %v3165
    %4472 = vmatprep.subr.bf16.mxu0 %v3148
    %4473 = vmatpush1.bf16.msra.mxu0 %v3147
    %4474 = vmatprep.subr.bf16.mxu0 %v3145
    %4475 = vmatpush1.bf16.msra.mxu0 %v3144
    %4476 = vmatprep.subr.bf16.mxu0 0
    %4477 = vmatpush2.bf16.msra.mxu0 0
    %4478 = vmatprep.subr.bf16.mxu0 0
    %4479 = vmatpush2.bf16.msra.mxu0 0
    %4480 = vmatprep.subr.bf16.mxu0 0
    %4481 = vmatpush2.bf16.msra.mxu0 0
    %4482 = vmatprep.subr.bf16.mxu0 0
    %4483 = vmatpush2.bf16.msra.mxu0 0
    %4484 = vmatprep.subr.bf16.mxu0 0
    %4485 = vmatpush2.bf16.msra.mxu0 0
    %4486 = vmatprep.subr.bf16.mxu0 0
    %4487 = vmatpush2.bf16.msra.mxu0 0
    %4488 = vmatprep.subr.bf16.mxu0 0
    %4489 = vmatpush2.bf16.msra.mxu0 0
    %4490 = vmatprep.subr.bf16.mxu0 0
    %4491 = vmatpush2.bf16.msra.mxu0 0
    %4492 = vmatprep.mubr.bf16.mxu0 0
    %4493 = vmatmul.mubr.bf16.gmra.mxu0 %v4458
    %v4494 = vpop.f32.mrf.mxu0
    %v4495 = vadd.f32 0.0, %v4494
    %v4496 = vpop.f32.mrf.mxu0
    %v4497 = vadd.f32 0.0, %v4496
    %v4498 = vpop.f32.mrf.mxu0
    %v4499 = vadd.f32 0.0, %v4498
    %v4500 = vpop.f32.mrf.mxu0
    %v4501 = vadd.f32 0.0, %v4500
    %4502 = vdwg.mxu0
    %4503 = vmatprep.subr.bf16.mxu0 0
    %4504 = vmatpush1.bf16.msra.mxu0 0
    %4505 = vmatprep.subr.bf16.mxu0 0
    %4506 = vmatpush1.bf16.msra.mxu0 0
    %4507 = vmatprep.subr.bf16.mxu0 0
    %4508 = vmatpush1.bf16.msra.mxu0 0
    %4509 = vmatprep.subr.bf16.mxu0 0
    %4510 = vmatpush1.bf16.msra.mxu0 0
    %4511 = vmatprep.subr.bf16.mxu0 0
    %4512 = vmatpush1.bf16.msra.mxu0 0
    %4513 = vmatprep.subr.bf16.mxu0 0
    %4514 = vmatpush1.bf16.msra.mxu0 %v3171
    %4515 = vmatprep.subr.bf16.mxu0 0
    %4516 = vmatpush1.bf16.msra.mxu0 %v3149
    %4517 = vmatprep.subr.bf16.mxu0 0
    %4518 = vmatpush1.bf16.msra.mxu0 %v3146
    %4519 = vmatprep.subr.bf16.mxu0 0
    %4520 = vmatpush2.bf16.msra.mxu0 0
    %4521 = vmatprep.subr.bf16.mxu0 0
    %4522 = vmatpush2.bf16.msra.mxu0 0
    %4523 = vmatprep.subr.bf16.mxu0 0
    %4524 = vmatpush2.bf16.msra.mxu0 0
    %4525 = vmatprep.subr.bf16.mxu0 0
    %4526 = vmatpush2.bf16.msra.mxu0 0
    %4527 = vmatprep.subr.bf16.mxu0 0
    %4528 = vmatpush2.bf16.msra.mxu0 0
    %4529 = vmatprep.subr.bf16.mxu0 0
    %4530 = vmatpush2.bf16.msra.mxu0 0
    %4531 = vmatprep.subr.bf16.mxu0 0
    %4532 = vmatpush2.bf16.msra.mxu0 0
    %4533 = vmatprep.subr.bf16.mxu0 0
    %4534 = vmatpush2.bf16.msra.mxu0 0
    %4535 = vmatprep.mubr.bf16.mxu0 0
    %4536 = vmatmul.mubr.bf16.gmra.mxu0 %v4458
    %v4537 = vpop.f32.mrf.mxu0
    %v4538 = vadd.f32 0.0, %v4537
    %v4539 = vpop.f32.mrf.mxu0
    %v4540 = vpop.f32.mrf.mxu0
    %v4541 = vadd.f32 0.0, %v4540
    %v4542 = vpop.f32.mrf.mxu0
    %4543 = vdwg.mxu0
    %v4544 = vpack.c.bf16 %v4499, %v4495
    %v4545 = vpack.c.bf16 %v4501, %v4497
    %v4546 = vpack.c.bf16 %v4541, %v4538
    %s4547 = scalar_lea.vmem %s9, 960
    %v4548 = vld [vmem:[%s4547] sm:$0xff]
    %v4549 = vld [vmem:[%s4547 + $0x8] sm:$0xff]
    %v4550 = vld [vmem:[%s4547 + $0x10] sm:$0xff]
    %v4551 = vld [vmem:[%s4547 + $0x18] sm:$0xff]
    %v4552 = vld [vmem:[%s4547 + $0x20] sm:$0xff]
    %v4553 = vld [vmem:[%s4547 + $0x28] sm:$0xff]
    %v4554 = vld [vmem:[%s4547 + $0x30] sm:$0xff]
    %v4555 = vld [vmem:[%s4547 + $0x38] sm:$0xff]
    %v4556 = vld [vmem:[%s4547 + $0x40] sm:$0xff]
    %v4557 = vld [vmem:[%s4547 + $0x48] sm:$0xff]
    %v4558 = vld [vmem:[%s4547 + $0x50] sm:$0xff]
    %v4559 = vld [vmem:[%s4547 + $0x58] sm:$0xff]
    %v4560 = vld [vmem:[%s4547 + $0x60] sm:$0xff]
    %v4561 = vld [vmem:[%s4547 + $0x68] sm:$0xff]
    %v4562 = vld [vmem:[%s4547 + $0x70] sm:$0xff]
    %v4563 = vld [vmem:[%s4547 + $0x78] sm:$0xff]
    %v4564 = vld [vmem:[%s4547 + $0x80] sm:$0xff]
    %v4565 = vld [vmem:[%s4547 + $0x88] sm:$0xff]
    %v4566 = vld [vmem:[%s4547 + $0x90] sm:$0xff]
    %v4567 = vld [vmem:[%s4547 + $0x98] sm:$0xff]
    %v4568 = vld [vmem:[%s4547 + $0xa0] sm:$0xff]
    %v4569 = vld [vmem:[%s4547 + $0xa8] sm:$0xff]
    %v4570 = vld [vmem:[%s4547 + $0xb0] sm:$0xff]
    %v4571 = vld [vmem:[%s4547 + $0xb8] sm:$0xff]
    %v4572 = vld [vmem:[%s4547 + $0xc0] sm:$0xff]
    %v4573 = vld [vmem:[%s4547 + $0xc8] sm:$0xff]
    %v4574 = vld [vmem:[%s4547 + $0xd0] sm:$0xff]
    %v4575 = vld [vmem:[%s4547 + $0xd8] sm:$0xff]
    %v4576 = vld [vmem:[%s4547 + $0xe0] sm:$0xff]
    %v4577 = vld [vmem:[%s4547 + $0xe8] sm:$0xff]
    %v4578 = vld [vmem:[%s4547 + $0xf0] sm:$0xff]
    %v4579 = vld [vmem:[%s4547 + $0xf8] sm:$0xff]
    %v4580 = vld [vmem:[%s4547 + $0x100] sm:$0xff]
    %v4581 = vld [vmem:[%s4547 + $0x108] sm:$0xff]
    %v4582 = vld [vmem:[%s4547 + $0x110] sm:$0xff]
    %v4583 = vld [vmem:[%s4547 + $0x118] sm:$0xff]
    %v4584 = vld [vmem:[%s4547 + $0x120] sm:$0xff]
    %v4585 = vld [vmem:[%s4547 + $0x128] sm:$0xff]
    %v4586 = vld [vmem:[%s4547 + $0x130] sm:$0xff]
    %v4587 = vld [vmem:[%s4547 + $0x138] sm:$0xff]
    %v4628 = vunpack.c.l.b16 %v4548
    %v4629 = vunpack.c.h.b16 %v4548
    %v4630 = vunpack.c.l.b16 %v4549
    %v4631 = vunpack.c.h.b16 %v4549
    %v4632 = vunpack.c.l.b16 %v4550
    %v4633 = vunpack.c.h.b16 %v4550
    %v4634 = vunpack.c.l.b16 %v4551
    %v4635 = vunpack.c.h.b16 %v4551
    %v4636 = vunpack.c.l.b16 %v4552
    %v4637 = vunpack.c.h.b16 %v4552
    %v4638 = vunpack.c.l.b16 %v4553
    %v4639 = vunpack.c.h.b16 %v4553
    %v4640 = vunpack.c.l.b16 %v4554
    %v4641 = vunpack.c.h.b16 %v4554
    %v4642 = vunpack.c.l.b16 %v4555
    %v4643 = vunpack.c.h.b16 %v4555
    %v4644 = vunpack.c.l.b16 %v4556
    %v4645 = vunpack.c.h.b16 %v4556
    %v4646 = vunpack.c.l.b16 %v4557
    %v4647 = vunpack.c.h.b16 %v4557
    %v4648 = vunpack.c.l.b16 %v4558
    %v4649 = vunpack.c.h.b16 %v4558
    %v4650 = vunpack.c.l.b16 %v4559
    %v4651 = vunpack.c.h.b16 %v4559
    %v4652 = vunpack.c.l.b16 %v4560
    %v4653 = vunpack.c.h.b16 %v4560
    %v4654 = vunpack.c.l.b16 %v4561
    %v4655 = vunpack.c.h.b16 %v4561
    %v4656 = vunpack.c.l.b16 %v4562
    %v4657 = vunpack.c.h.b16 %v4562
    %v4658 = vunpack.c.l.b16 %v4563
    %v4659 = vunpack.c.h.b16 %v4563
    %v4660 = vunpack.c.l.b16 %v4564
    %v4661 = vunpack.c.h.b16 %v4564
    %v4662 = vunpack.c.l.b16 %v4565
    %v4663 = vunpack.c.h.b16 %v4565
    %v4664 = vunpack.c.l.b16 %v4566
    %v4665 = vunpack.c.h.b16 %v4566
    %v4666 = vunpack.c.l.b16 %v4567
    %v4667 = vunpack.c.h.b16 %v4567
    %v4668 = vunpack.c.l.b16 %v4568
    %v4669 = vunpack.c.h.b16 %v4568
    %v4670 = vunpack.c.l.b16 %v4569
    %v4671 = vunpack.c.h.b16 %v4569
    %v4672 = vunpack.c.l.b16 %v4570
    %v4673 = vunpack.c.h.b16 %v4570
    %v4674 = vunpack.c.l.b16 %v4571
    %v4675 = vunpack.c.h.b16 %v4571
    %v4676 = vunpack.c.l.b16 %v4572
    %v4677 = vunpack.c.h.b16 %v4572
    %v4678 = vunpack.c.l.b16 %v4573
    %v4679 = vunpack.c.h.b16 %v4573
    %v4680 = vunpack.c.l.b16 %v4574
    %v4681 = vunpack.c.h.b16 %v4574
    %v4682 = vunpack.c.l.b16 %v4575
    %v4683 = vunpack.c.h.b16 %v4575
    %v4684 = vunpack.c.l.b16 %v4576
    %v4685 = vunpack.c.h.b16 %v4576
    %v4686 = vunpack.c.l.b16 %v4577
    %v4687 = vunpack.c.h.b16 %v4577
    %v4688 = vunpack.c.l.b16 %v4578
    %v4689 = vunpack.c.h.b16 %v4578
    %v4690 = vunpack.c.l.b16 %v4579
    %v4691 = vunpack.c.h.b16 %v4579
    %v4692 = vunpack.c.l.b16 %v4580
    %v4693 = vunpack.c.h.b16 %v4580
    %v4694 = vunpack.c.l.b16 %v4581
    %v4695 = vunpack.c.h.b16 %v4581
    %v4696 = vunpack.c.l.b16 %v4582
    %v4697 = vunpack.c.h.b16 %v4582
    %v4698 = vunpack.c.l.b16 %v4583
    %v4699 = vunpack.c.h.b16 %v4583
    %v4700 = vunpack.c.l.b16 %v4584
    %v4701 = vunpack.c.h.b16 %v4584
    %v4702 = vunpack.c.l.b16 %v4585
    %v4703 = vunpack.c.h.b16 %v4585
    %v4704 = vunpack.c.l.b16 %v4586
    %v4705 = vunpack.c.h.b16 %v4586
    %v4706 = vunpack.c.l.b16 %v4587
    %v4707 = vunpack.c.h.b16 %v4587
    %v4708 = vpack.c.b16 %v4630, %v4628
    %v4709 = vpack.c.b16 %v4631, %v4629
    %v4710 = vpack.c.b16 %v4634, %v4632
    %v4711 = vpack.c.b16 %v4635, %v4633
    %v4712 = vpack.c.b16 %v4638, %v4636
    %v4713 = vpack.c.b16 %v4639, %v4637
    %v4714 = vpack.c.b16 %v4642, %v4640
    %v4715 = vpack.c.b16 %v4643, %v4641
    %v4716 = vpack.c.b16 %v4646, %v4644
    %v4717 = vpack.c.b16 %v4647, %v4645
    %v4718 = vpack.c.b16 %v4650, %v4648
    %v4719 = vpack.c.b16 %v4651, %v4649
    %v4720 = vpack.c.b16 %v4654, %v4652
    %v4721 = vpack.c.b16 %v4655, %v4653
    %v4722 = vpack.c.b16 %v4658, %v4656
    %v4723 = vpack.c.b16 %v4659, %v4657
    %v4724 = vpack.c.b16 %v4662, %v4660
    %v4725 = vpack.c.b16 %v4663, %v4661
    %v4726 = vpack.c.b16 %v4666, %v4664
    %v4727 = vpack.c.b16 %v4667, %v4665
    %v4728 = vpack.c.b16 %v4670, %v4668
    %v4729 = vpack.c.b16 %v4671, %v4669
    %v4730 = vpack.c.b16 %v4674, %v4672
    %v4731 = vpack.c.b16 %v4675, %v4673
    %v4732 = vpack.c.b16 %v4678, %v4676
    %v4733 = vpack.c.b16 %v4679, %v4677
    %v4734 = vpack.c.b16 %v4682, %v4680
    %v4735 = vpack.c.b16 %v4683, %v4681
    %v4736 = vpack.c.b16 %v4686, %v4684
    %v4737 = vpack.c.b16 %v4687, %v4685
    %v4738 = vpack.c.b16 %v4690, %v4688
    %v4739 = vpack.c.b16 %v4691, %v4689
    %v4740 = vpack.c.b16 %v4694, %v4692
    %v4741 = vpack.c.b16 %v4695, %v4693
    %v4742 = vpack.c.b16 %v4698, %v4696
    %v4743 = vpack.c.b16 %v4699, %v4697
    %v4744 = vpack.c.b16 %v4702, %v4700
    %v4745 = vpack.c.b16 %v4703, %v4701
    %v4746 = vpack.c.b16 %v4706, %v4704
    %v4747 = vpack.c.b16 %v4707, %v4705
    %v4789 = vsel %vm2376, %v4546, 0
    %4791 = vmatprep.subr.bf16.mxu0 %v4723
    %4792 = vmatpush1.bf16.msra.mxu0 %v4722
    %4793 = vmatprep.subr.bf16.mxu0 %v4721
    %4794 = vmatpush1.bf16.msra.mxu0 %v4720
    %4795 = vmatprep.subr.bf16.mxu0 %v4719
    %4796 = vmatpush1.bf16.msra.mxu0 %v4718
    %4797 = vmatprep.subr.bf16.mxu0 %v4717
    %4798 = vmatpush1.bf16.msra.mxu0 %v4716
    %4799 = vmatprep.subr.bf16.mxu0 %v4715
    %4800 = vmatpush1.bf16.msra.mxu0 %v4714
    %4801 = vmatprep.subr.bf16.mxu0 %v4713
    %4802 = vmatpush1.bf16.msra.mxu0 %v4712
    %4803 = vmatprep.subr.bf16.mxu0 %v4711
    %4804 = vmatpush1.bf16.msra.mxu0 %v4710
    %4805 = vmatprep.subr.bf16.mxu0 %v4709
    %4806 = vmatpush1.bf16.msra.mxu0 %v4708
    %4807 = vmatprep.subr.bf16.mxu0 %v4739
    %4808 = vmatpush2.bf16.msra.mxu0 %v4738
    %4809 = vmatprep.subr.bf16.mxu0 %v4737
    %4810 = vmatpush2.bf16.msra.mxu0 %v4736
    %4811 = vmatprep.subr.bf16.mxu0 %v4735
    %4812 = vmatpush2.bf16.msra.mxu0 %v4734
    %4813 = vmatprep.subr.bf16.mxu0 %v4733
    %4814 = vmatpush2.bf16.msra.mxu0 %v4732
    %4815 = vmatprep.subr.bf16.mxu0 %v4731
    %4816 = vmatpush2.bf16.msra.mxu0 %v4730
    %4817 = vmatprep.subr.bf16.mxu0 %v4729
    %4818 = vmatpush2.bf16.msra.mxu0 %v4728
    %4819 = vmatprep.subr.bf16.mxu0 %v4727
    %4820 = vmatpush2.bf16.msra.mxu0 %v4726
    %4821 = vmatprep.subr.bf16.mxu0 %v4725
    %4822 = vmatpush2.bf16.msra.mxu0 %v4724
    %4823 = vmatprep.mubr.bf16.mxu0 %v4545
    %4824 = vmatmul.mubr.bf16.gmra.mxu0 %v4544
    %v4825 = vpop.f32.mrf.mxu0
    %v4826 = vadd.f32 0.0, %v4825
    %v4827 = vpop.f32.mrf.mxu0
    %v4828 = vadd.f32 0.0, %v4827
    %v4829 = vpop.f32.mrf.mxu0
    %v4830 = vadd.f32 0.0, %v4829
    %v4831 = vpop.f32.mrf.mxu0
    %v4832 = vadd.f32 0.0, %v4831
    %4833 = vdwg.mxu0
    %4834 = vmatprep.subr.bf16.mxu0 0
    %4835 = vmatpush1.bf16.msra.mxu0 0
    %4836 = vmatprep.subr.bf16.mxu0 0
    %4837 = vmatpush1.bf16.msra.mxu0 0
    %4838 = vmatprep.subr.bf16.mxu0 0
    %4839 = vmatpush1.bf16.msra.mxu0 0
    %4840 = vmatprep.subr.bf16.mxu0 0
    %4841 = vmatpush1.bf16.msra.mxu0 0
    %4842 = vmatprep.subr.bf16.mxu0 %v4747
    %4843 = vmatpush1.bf16.msra.mxu0 %v4746
    %4844 = vmatprep.subr.bf16.mxu0 %v4745
    %4845 = vmatpush1.bf16.msra.mxu0 %v4744
    %4846 = vmatprep.subr.bf16.mxu0 %v4743
    %4847 = vmatpush1.bf16.msra.mxu0 %v4742
    %4848 = vmatprep.subr.bf16.mxu0 %v4741
    %4849 = vmatpush1.bf16.msra.mxu0 %v4740
    %4850 = vmatprep.subr.bf16.mxu0 0
    %4851 = vmatpush2.bf16.msra.mxu0 0
    %4852 = vmatprep.subr.bf16.mxu0 0
    %4853 = vmatpush2.bf16.msra.mxu0 0
    %4854 = vmatprep.subr.bf16.mxu0 0
    %4855 = vmatpush2.bf16.msra.mxu0 0
    %4856 = vmatprep.subr.bf16.mxu0 0
    %4857 = vmatpush2.bf16.msra.mxu0 0
    %4858 = vmatprep.subr.bf16.mxu0 0
    %4859 = vmatpush2.bf16.msra.mxu0 0
    %4860 = vmatprep.subr.bf16.mxu0 0
    %4861 = vmatpush2.bf16.msra.mxu0 0
    %4862 = vmatprep.subr.bf16.mxu0 0
    %4863 = vmatpush2.bf16.msra.mxu0 0
    %4864 = vmatprep.subr.bf16.mxu0 0
    %4865 = vmatpush2.bf16.msra.mxu0 0
    %4866 = vmatprep.mubr.bf16.mxu0 0
    %4867 = vmatmul.mubr.bf16.gmra.mxu0 %v4789
    %v4868 = vpop.f32.mrf.mxu0
    %v4869 = vadd.f32 %v4826, %v4868
    %v4870 = vpop.f32.mrf.mxu0
    %v4871 = vadd.f32 %v4828, %v4870
    %v4872 = vpop.f32.mrf.mxu0
    %v4873 = vadd.f32 %v4830, %v4872
    %v4874 = vpop.f32.mrf.mxu0
    %v4875 = vadd.f32 %v4832, %v4874
    %4876 = vdwg.mxu0
    %v4877 = vadd.f32 %v4445, %v4869
    %v4878 = vadd.f32 %v4446, %v4871
    %v4879 = vadd.f32 %v4447, %v4873
    %v4880 = vadd.f32 %v4448, %v4875
    %s4881 = scalar_lea.vmem %s8, 32
    %v4882 = vld [vmem:[%s4881] sm:$0xf]
    %v4883 = vld [vmem:[%s4881 + $0x4] sm:$0xf]
    %v4886 = vunpack.c.l.b16 %v4882
    %v4887 = vunpack.c.l.b16 %v4883
    %v4888 = vpack.c.b16 %v4887, %v4886
    %v4890 = vsel %vm3160, %v4888, 0
    %4892 = vmatprep.subr.bf16.mxu0 0
    %4893 = vmatpush1.bf16.msra.mxu0 0
    %4894 = vmatprep.subr.bf16.mxu0 0
    %4895 = vmatpush1.bf16.msra.mxu0 0
    %4896 = vmatprep.subr.bf16.mxu0 0
    %4897 = vmatpush1.bf16.msra.mxu0 0
    %4898 = vmatprep.subr.bf16.mxu0 0
    %4899 = vmatpush1.bf16.msra.mxu0 0
    %4900 = vmatprep.subr.bf16.mxu0 0
    %4901 = vmatpush1.bf16.msra.mxu0 0
    %4902 = vmatprep.subr.bf16.mxu0 %v3168
    %4903 = vmatpush1.bf16.msra.mxu0 %v3165
    %4904 = vmatprep.subr.bf16.mxu0 %v3148
    %4905 = vmatpush1.bf16.msra.mxu0 %v3147
    %4906 = vmatprep.subr.bf16.mxu0 %v3145
    %4907 = vmatpush1.bf16.msra.mxu0 %v3144
    %4908 = vmatprep.subr.bf16.mxu0 0
    %4909 = vmatpush2.bf16.msra.mxu0 0
    %4910 = vmatprep.subr.bf16.mxu0 0
    %4911 = vmatpush2.bf16.msra.mxu0 0
    %4912 = vmatprep.subr.bf16.mxu0 0
    %4913 = vmatpush2.bf16.msra.mxu0 0
    %4914 = vmatprep.subr.bf16.mxu0 0
    %4915 = vmatpush2.bf16.msra.mxu0 0
    %4916 = vmatprep.subr.bf16.mxu0 0
    %4917 = vmatpush2.bf16.msra.mxu0 0
    %4918 = vmatprep.subr.bf16.mxu0 0
    %4919 = vmatpush2.bf16.msra.mxu0 0
    %4920 = vmatprep.subr.bf16.mxu0 0
    %4921 = vmatpush2.bf16.msra.mxu0 0
    %4922 = vmatprep.subr.bf16.mxu0 0
    %4923 = vmatpush2.bf16.msra.mxu0 0
    %4924 = vmatprep.mubr.bf16.mxu0 0
    %4925 = vmatmul.mubr.bf16.gmra.mxu0 %v4890
    %v4926 = vpop.f32.mrf.mxu0
    %v4927 = vadd.f32 0.0, %v4926
    %v4928 = vpop.f32.mrf.mxu0
    %v4929 = vadd.f32 0.0, %v4928
    %v4930 = vpop.f32.mrf.mxu0
    %v4931 = vadd.f32 0.0, %v4930
    %v4932 = vpop.f32.mrf.mxu0
    %v4933 = vadd.f32 0.0, %v4932
    %4934 = vdwg.mxu0
    %4935 = vmatprep.subr.bf16.mxu0 0
    %4936 = vmatpush1.bf16.msra.mxu0 0
    %4937 = vmatprep.subr.bf16.mxu0 0
    %4938 = vmatpush1.bf16.msra.mxu0 0
    %4939 = vmatprep.subr.bf16.mxu0 0
    %4940 = vmatpush1.bf16.msra.mxu0 0
    %4941 = vmatprep.subr.bf16.mxu0 0
    %4942 = vmatpush1.bf16.msra.mxu0 0
    %4943 = vmatprep.subr.bf16.mxu0 0
    %4944 = vmatpush1.bf16.msra.mxu0 0
    %4945 = vmatprep.subr.bf16.mxu0 0
    %4946 = vmatpush1.bf16.msra.mxu0 %v3171
    %4947 = vmatprep.subr.bf16.mxu0 0
    %4948 = vmatpush1.bf16.msra.mxu0 %v3149
    %4949 = vmatprep.subr.bf16.mxu0 0
    %4950 = vmatpush1.bf16.msra.mxu0 %v3146
    %4951 = vmatprep.subr.bf16.mxu0 0
    %4952 = vmatpush2.bf16.msra.mxu0 0
    %4953 = vmatprep.subr.bf16.mxu0 0
    %4954 = vmatpush2.bf16.msra.mxu0 0
    %4955 = vmatprep.subr.bf16.mxu0 0
    %4956 = vmatpush2.bf16.msra.mxu0 0
    %4957 = vmatprep.subr.bf16.mxu0 0
    %4958 = vmatpush2.bf16.msra.mxu0 0
    %4959 = vmatprep.subr.bf16.mxu0 0
    %4960 = vmatpush2.bf16.msra.mxu0 0
    %4961 = vmatprep.subr.bf16.mxu0 0
    %4962 = vmatpush2.bf16.msra.mxu0 0
    %4963 = vmatprep.subr.bf16.mxu0 0
    %4964 = vmatpush2.bf16.msra.mxu0 0
    %4965 = vmatprep.subr.bf16.mxu0 0
    %4966 = vmatpush2.bf16.msra.mxu0 0
    %4967 = vmatprep.mubr.bf16.mxu0 0
    %4968 = vmatmul.mubr.bf16.gmra.mxu0 %v4890
    %v4969 = vpop.f32.mrf.mxu0
    %v4970 = vadd.f32 0.0, %v4969
    %v4971 = vpop.f32.mrf.mxu0
    %v4972 = vpop.f32.mrf.mxu0
    %v4973 = vadd.f32 0.0, %v4972
    %v4974 = vpop.f32.mrf.mxu0
    %4975 = vdwg.mxu0
    %v4976 = vpack.c.bf16 %v4931, %v4927
    %v4977 = vpack.c.bf16 %v4933, %v4929
    %v4978 = vpack.c.bf16 %v4973, %v4970
    %s4979 = scalar_lea.vmem %s9, 1280
    %v4980 = vld [vmem:[%s4979] sm:$0xff]
    %v4981 = vld [vmem:[%s4979 + $0x8] sm:$0xff]
    %v4982 = vld [vmem:[%s4979 + $0x10] sm:$0xff]
    %v4983 = vld [vmem:[%s4979 + $0x18] sm:$0xff]
    %v4984 = vld [vmem:[%s4979 + $0x20] sm:$0xff]
    %v4985 = vld [vmem:[%s4979 + $0x28] sm:$0xff]
    %v4986 = vld [vmem:[%s4979 + $0x30] sm:$0xff]
    %v4987 = vld [vmem:[%s4979 + $0x38] sm:$0xff]
    %v4988 = vld [vmem:[%s4979 + $0x40] sm:$0xff]
    %v4989 = vld [vmem:[%s4979 + $0x48] sm:$0xff]
    %v4990 = vld [vmem:[%s4979 + $0x50] sm:$0xff]
    %v4991 = vld [vmem:[%s4979 + $0x58] sm:$0xff]
    %v4992 = vld [vmem:[%s4979 + $0x60] sm:$0xff]
    %v4993 = vld [vmem:[%s4979 + $0x68] sm:$0xff]
    %v4994 = vld [vmem:[%s4979 + $0x70] sm:$0xff]
    %v4995 = vld [vmem:[%s4979 + $0x78] sm:$0xff]
    %v4996 = vld [vmem:[%s4979 + $0x80] sm:$0xff]
    %v4997 = vld [vmem:[%s4979 + $0x88] sm:$0xff]
    %v4998 = vld [vmem:[%s4979 + $0x90] sm:$0xff]
    %v4999 = vld [vmem:[%s4979 + $0x98] sm:$0xff]
    %v5000 = vld [vmem:[%s4979 + $0xa0] sm:$0xff]
    %v5001 = vld [vmem:[%s4979 + $0xa8] sm:$0xff]
    %v5002 = vld [vmem:[%s4979 + $0xb0] sm:$0xff]
    %v5003 = vld [vmem:[%s4979 + $0xb8] sm:$0xff]
    %v5004 = vld [vmem:[%s4979 + $0xc0] sm:$0xff]
    %v5005 = vld [vmem:[%s4979 + $0xc8] sm:$0xff]
    %v5006 = vld [vmem:[%s4979 + $0xd0] sm:$0xff]
    %v5007 = vld [vmem:[%s4979 + $0xd8] sm:$0xff]
    %v5008 = vld [vmem:[%s4979 + $0xe0] sm:$0xff]
    %v5009 = vld [vmem:[%s4979 + $0xe8] sm:$0xff]
    %v5010 = vld [vmem:[%s4979 + $0xf0] sm:$0xff]
    %v5011 = vld [vmem:[%s4979 + $0xf8] sm:$0xff]
    %v5012 = vld [vmem:[%s4979 + $0x100] sm:$0xff]
    %v5013 = vld [vmem:[%s4979 + $0x108] sm:$0xff]
    %v5014 = vld [vmem:[%s4979 + $0x110] sm:$0xff]
    %v5015 = vld [vmem:[%s4979 + $0x118] sm:$0xff]
    %v5016 = vld [vmem:[%s4979 + $0x120] sm:$0xff]
    %v5017 = vld [vmem:[%s4979 + $0x128] sm:$0xff]
    %v5018 = vld [vmem:[%s4979 + $0x130] sm:$0xff]
    %v5019 = vld [vmem:[%s4979 + $0x138] sm:$0xff]
    %v5060 = vunpack.c.l.b16 %v4980
    %v5061 = vunpack.c.h.b16 %v4980
    %v5062 = vunpack.c.l.b16 %v4981
    %v5063 = vunpack.c.h.b16 %v4981
    %v5064 = vunpack.c.l.b16 %v4982
    %v5065 = vunpack.c.h.b16 %v4982
    %v5066 = vunpack.c.l.b16 %v4983
    %v5067 = vunpack.c.h.b16 %v4983
    %v5068 = vunpack.c.l.b16 %v4984
    %v5069 = vunpack.c.h.b16 %v4984
    %v5070 = vunpack.c.l.b16 %v4985
    %v5071 = vunpack.c.h.b16 %v4985
    %v5072 = vunpack.c.l.b16 %v4986
    %v5073 = vunpack.c.h.b16 %v4986
    %v5074 = vunpack.c.l.b16 %v4987
    %v5075 = vunpack.c.h.b16 %v4987
    %v5076 = vunpack.c.l.b16 %v4988
    %v5077 = vunpack.c.h.b16 %v4988
    %v5078 = vunpack.c.l.b16 %v4989
    %v5079 = vunpack.c.h.b16 %v4989
    %v5080 = vunpack.c.l.b16 %v4990
    %v5081 = vunpack.c.h.b16 %v4990
    %v5082 = vunpack.c.l.b16 %v4991
    %v5083 = vunpack.c.h.b16 %v4991
    %v5084 = vunpack.c.l.b16 %v4992
    %v5085 = vunpack.c.h.b16 %v4992
    %v5086 = vunpack.c.l.b16 %v4993
    %v5087 = vunpack.c.h.b16 %v4993
    %v5088 = vunpack.c.l.b16 %v4994
    %v5089 = vunpack.c.h.b16 %v4994
    %v5090 = vunpack.c.l.b16 %v4995
    %v5091 = vunpack.c.h.b16 %v4995
    %v5092 = vunpack.c.l.b16 %v4996
    %v5093 = vunpack.c.h.b16 %v4996
    %v5094 = vunpack.c.l.b16 %v4997
    %v5095 = vunpack.c.h.b16 %v4997
    %v5096 = vunpack.c.l.b16 %v4998
    %v5097 = vunpack.c.h.b16 %v4998
    %v5098 = vunpack.c.l.b16 %v4999
    %v5099 = vunpack.c.h.b16 %v4999
    %v5100 = vunpack.c.l.b16 %v5000
    %v5101 = vunpack.c.h.b16 %v5000
    %v5102 = vunpack.c.l.b16 %v5001
    %v5103 = vunpack.c.h.b16 %v5001
    %v5104 = vunpack.c.l.b16 %v5002
    %v5105 = vunpack.c.h.b16 %v5002
    %v5106 = vunpack.c.l.b16 %v5003
    %v5107 = vunpack.c.h.b16 %v5003
    %v5108 = vunpack.c.l.b16 %v5004
    %v5109 = vunpack.c.h.b16 %v5004
    %v5110 = vunpack.c.l.b16 %v5005
    %v5111 = vunpack.c.h.b16 %v5005
    %v5112 = vunpack.c.l.b16 %v5006
    %v5113 = vunpack.c.h.b16 %v5006
    %v5114 = vunpack.c.l.b16 %v5007
    %v5115 = vunpack.c.h.b16 %v5007
    %v5116 = vunpack.c.l.b16 %v5008
    %v5117 = vunpack.c.h.b16 %v5008
    %v5118 = vunpack.c.l.b16 %v5009
    %v5119 = vunpack.c.h.b16 %v5009
    %v5120 = vunpack.c.l.b16 %v5010
    %v5121 = vunpack.c.h.b16 %v5010
    %v5122 = vunpack.c.l.b16 %v5011
    %v5123 = vunpack.c.h.b16 %v5011
    %v5124 = vunpack.c.l.b16 %v5012
    %v5125 = vunpack.c.h.b16 %v5012
    %v5126 = vunpack.c.l.b16 %v5013
    %v5127 = vunpack.c.h.b16 %v5013
    %v5128 = vunpack.c.l.b16 %v5014
    %v5129 = vunpack.c.h.b16 %v5014
    %v5130 = vunpack.c.l.b16 %v5015
    %v5131 = vunpack.c.h.b16 %v5015
    %v5132 = vunpack.c.l.b16 %v5016
    %v5133 = vunpack.c.h.b16 %v5016
    %v5134 = vunpack.c.l.b16 %v5017
    %v5135 = vunpack.c.h.b16 %v5017
    %v5136 = vunpack.c.l.b16 %v5018
    %v5137 = vunpack.c.h.b16 %v5018
    %v5138 = vunpack.c.l.b16 %v5019
    %v5139 = vunpack.c.h.b16 %v5019
    %v5140 = vpack.c.b16 %v5062, %v5060
    %v5141 = vpack.c.b16 %v5063, %v5061
    %v5142 = vpack.c.b16 %v5066, %v5064
    %v5143 = vpack.c.b16 %v5067, %v5065
    %v5144 = vpack.c.b16 %v5070, %v5068
    %v5145 = vpack.c.b16 %v5071, %v5069
    %v5146 = vpack.c.b16 %v5074, %v5072
    %v5147 = vpack.c.b16 %v5075, %v5073
    %v5148 = vpack.c.b16 %v5078, %v5076
    %v5149 = vpack.c.b16 %v5079, %v5077
    %v5150 = vpack.c.b16 %v5082, %v5080
    %v5151 = vpack.c.b16 %v5083, %v5081
    %v5152 = vpack.c.b16 %v5086, %v5084
    %v5153 = vpack.c.b16 %v5087, %v5085
    %v5154 = vpack.c.b16 %v5090, %v5088
    %v5155 = vpack.c.b16 %v5091, %v5089
    %v5156 = vpack.c.b16 %v5094, %v5092
    %v5157 = vpack.c.b16 %v5095, %v5093
    %v5158 = vpack.c.b16 %v5098, %v5096
    %v5159 = vpack.c.b16 %v5099, %v5097
    %v5160 = vpack.c.b16 %v5102, %v5100
    %v5161 = vpack.c.b16 %v5103, %v5101
    %v5162 = vpack.c.b16 %v5106, %v5104
    %v5163 = vpack.c.b16 %v5107, %v5105
    %v5164 = vpack.c.b16 %v5110, %v5108
    %v5165 = vpack.c.b16 %v5111, %v5109
    %v5166 = vpack.c.b16 %v5114, %v5112
    %v5167 = vpack.c.b16 %v5115, %v5113
    %v5168 = vpack.c.b16 %v5118, %v5116
    %v5169 = vpack.c.b16 %v5119, %v5117
    %v5170 = vpack.c.b16 %v5122, %v5120
    %v5171 = vpack.c.b16 %v5123, %v5121
    %v5172 = vpack.c.b16 %v5126, %v5124
    %v5173 = vpack.c.b16 %v5127, %v5125
    %v5174 = vpack.c.b16 %v5130, %v5128
    %v5175 = vpack.c.b16 %v5131, %v5129
    %v5176 = vpack.c.b16 %v5134, %v5132
    %v5177 = vpack.c.b16 %v5135, %v5133
    %v5178 = vpack.c.b16 %v5138, %v5136
    %v5179 = vpack.c.b16 %v5139, %v5137
    %v5221 = vsel %vm2376, %v4978, 0
    %5223 = vmatprep.subr.bf16.mxu0 %v5155
    %5224 = vmatpush1.bf16.msra.mxu0 %v5154
    %5225 = vmatprep.subr.bf16.mxu0 %v5153
    %5226 = vmatpush1.bf16.msra.mxu0 %v5152
    %5227 = vmatprep.subr.bf16.mxu0 %v5151
    %5228 = vmatpush1.bf16.msra.mxu0 %v5150
    %5229 = vmatprep.subr.bf16.mxu0 %v5149
    %5230 = vmatpush1.bf16.msra.mxu0 %v5148
    %5231 = vmatprep.subr.bf16.mxu0 %v5147
    %5232 = vmatpush1.bf16.msra.mxu0 %v5146
    %5233 = vmatprep.subr.bf16.mxu0 %v5145
    %5234 = vmatpush1.bf16.msra.mxu0 %v5144
    %5235 = vmatprep.subr.bf16.mxu0 %v5143
    %5236 = vmatpush1.bf16.msra.mxu0 %v5142
    %5237 = vmatprep.subr.bf16.mxu0 %v5141
    %5238 = vmatpush1.bf16.msra.mxu0 %v5140
    %5239 = vmatprep.subr.bf16.mxu0 %v5171
    %5240 = vmatpush2.bf16.msra.mxu0 %v5170
    %5241 = vmatprep.subr.bf16.mxu0 %v5169
    %5242 = vmatpush2.bf16.msra.mxu0 %v5168
    %5243 = vmatprep.subr.bf16.mxu0 %v5167
    %5244 = vmatpush2.bf16.msra.mxu0 %v5166
    %5245 = vmatprep.subr.bf16.mxu0 %v5165
    %5246 = vmatpush2.bf16.msra.mxu0 %v5164
    %5247 = vmatprep.subr.bf16.mxu0 %v5163
    %5248 = vmatpush2.bf16.msra.mxu0 %v5162
    %5249 = vmatprep.subr.bf16.mxu0 %v5161
    %5250 = vmatpush2.bf16.msra.mxu0 %v5160
    %5251 = vmatprep.subr.bf16.mxu0 %v5159
    %5252 = vmatpush2.bf16.msra.mxu0 %v5158
    %5253 = vmatprep.subr.bf16.mxu0 %v5157
    %5254 = vmatpush2.bf16.msra.mxu0 %v5156
    %5255 = vmatprep.mubr.bf16.mxu0 %v4977
    %5256 = vmatmul.mubr.bf16.gmra.mxu0 %v4976
    %v5257 = vpop.f32.mrf.mxu0
    %v5258 = vadd.f32 0.0, %v5257
    %v5259 = vpop.f32.mrf.mxu0
    %v5260 = vadd.f32 0.0, %v5259
    %v5261 = vpop.f32.mrf.mxu0
    %v5262 = vadd.f32 0.0, %v5261
    %v5263 = vpop.f32.mrf.mxu0
    %v5264 = vadd.f32 0.0, %v5263
    %5265 = vdwg.mxu0
    %5266 = vmatprep.subr.bf16.mxu0 0
    %5267 = vmatpush1.bf16.msra.mxu0 0
    %5268 = vmatprep.subr.bf16.mxu0 0
    %5269 = vmatpush1.bf16.msra.mxu0 0
    %5270 = vmatprep.subr.bf16.mxu0 0
    %5271 = vmatpush1.bf16.msra.mxu0 0
    %5272 = vmatprep.subr.bf16.mxu0 0
    %5273 = vmatpush1.bf16.msra.mxu0 0
    %5274 = vmatprep.subr.bf16.mxu0 %v5179
    %5275 = vmatpush1.bf16.msra.mxu0 %v5178
    %5276 = vmatprep.subr.bf16.mxu0 %v5177
    %5277 = vmatpush1.bf16.msra.mxu0 %v5176
    %5278 = vmatprep.subr.bf16.mxu0 %v5175
    %5279 = vmatpush1.bf16.msra.mxu0 %v5174
    %5280 = vmatprep.subr.bf16.mxu0 %v5173
    %5281 = vmatpush1.bf16.msra.mxu0 %v5172
    %5282 = vmatprep.subr.bf16.mxu0 0
    %5283 = vmatpush2.bf16.msra.mxu0 0
    %5284 = vmatprep.subr.bf16.mxu0 0
    %5285 = vmatpush2.bf16.msra.mxu0 0
    %5286 = vmatprep.subr.bf16.mxu0 0
    %5287 = vmatpush2.bf16.msra.mxu0 0
    %5288 = vmatprep.subr.bf16.mxu0 0
    %5289 = vmatpush2.bf16.msra.mxu0 0
    %5290 = vmatprep.subr.bf16.mxu0 0
    %5291 = vmatpush2.bf16.msra.mxu0 0
    %5292 = vmatprep.subr.bf16.mxu0 0
    %5293 = vmatpush2.bf16.msra.mxu0 0
    %5294 = vmatprep.subr.bf16.mxu0 0
    %5295 = vmatpush2.bf16.msra.mxu0 0
    %5296 = vmatprep.subr.bf16.mxu0 0
    %5297 = vmatpush2.bf16.msra.mxu0 0
    %5298 = vmatprep.mubr.bf16.mxu0 0
    %5299 = vmatmul.mubr.bf16.gmra.mxu0 %v5221
    %v5300 = vpop.f32.mrf.mxu0
    %v5301 = vadd.f32 %v5258, %v5300
    %v5302 = vpop.f32.mrf.mxu0
    %v5303 = vadd.f32 %v5260, %v5302
    %v5304 = vpop.f32.mrf.mxu0
    %v5305 = vadd.f32 %v5262, %v5304
    %v5306 = vpop.f32.mrf.mxu0
    %v5307 = vadd.f32 %v5264, %v5306
    %5308 = vdwg.mxu0
    %v5309 = vadd.f32 %v4877, %v5301
    %v5310 = vadd.f32 %v4878, %v5303
    %v5311 = vadd.f32 %v4879, %v5305
    %v5312 = vadd.f32 %v4880, %v5307
    %v5313 = vadd.f32 %v5309, %v5311
    %v5314 = vrot.slane %v5313, 4
    %v5315 = vadd.f32 %v5313, %v5314
    %v5316 = vrot.slane %v5315, 2
    %v5317 = vadd.f32 %v5315, %v5316
    %v5318 = vrot.slane %v5317, 1
    %v5319 = vadd.f32 %v5317, %v5318
    %v5320 = vadd.f32 %v5310, %v5312
    %v5321 = vrot.slane %v5320, 4
    %v5322 = vadd.f32 %v5320, %v5321
    %v5323 = vrot.slane %v5322, 2
    %v5324 = vadd.f32 %v5322, %v5323
    %v5325 = vrot.slane %v5324, 1
    %v5326 = vadd.f32 %v5324, %v5325
    %v5327 = vmul.f32 %v5309, %v5309
    %v5328 = vmul.f32 %v5310, %v5310
    %v5329 = vmul.f32 %v5311, %v5311
    %v5330 = vmul.f32 %v5312, %v5312
    %v5331 = vadd.f32 %v5327, %v5329
    %v5332 = vrot.slane %v5331, 4
    %v5333 = vadd.f32 %v5331, %v5332
    %v5334 = vrot.slane %v5333, 2
    %v5335 = vadd.f32 %v5333, %v5334
    %v5336 = vrot.slane %v5335, 1
    %v5337 = vadd.f32 %v5335, %v5336
    %v5338 = vadd.f32 %v5328, %v5330
    %v5339 = vrot.slane %v5338, 4
    %v5340 = vadd.f32 %v5338, %v5339
    %v5341 = vrot.slane %v5340, 2
    %v5342 = vadd.f32 %v5340, %v5341
    %v5343 = vrot.slane %v5342, 1
    %v5344 = vadd.f32 %v5342, %v5343
    %v5345 = vld [vmem:[%s10] sm:$0xff]
    %v5346 = vld [vmem:[%s10 + $0x8] sm:$0xff]
    %v5347 = vld [vmem:[%s10 + $0x10] sm:$0xff]
    %v5348 = vld [vmem:[%s10 + $0x18] sm:$0xff]
    %v5349 = vld [vmem:[%s10 + $0x20] sm:$0xff]
    %v5350 = vld [vmem:[%s10 + $0x28] sm:$0xff]
    %v5351 = vld [vmem:[%s10 + $0x30] sm:$0xff]
    %v5352 = vld [vmem:[%s10 + $0x38] sm:$0xff]
    %v5353 = vld [vmem:[%s10 + $0x40] sm:$0xff]
    %v5354 = vld [vmem:[%s10 + $0x48] sm:$0xff]
    %v5355 = vld [vmem:[%s10 + $0x50] sm:$0xff]
    %v5356 = vld [vmem:[%s10 + $0x58] sm:$0xff]
    %v5357 = vld [vmem:[%s10 + $0x60] sm:$0xff]
    %v5358 = vld [vmem:[%s10 + $0x68] sm:$0xff]
    %v5359 = vld [vmem:[%s10 + $0x70] sm:$0xff]
    %v5360 = vld [vmem:[%s10 + $0x78] sm:$0xff]
    %v5361 = vld [vmem:[%s10 + $0x80] sm:$0xff]
    %v5362 = vld [vmem:[%s10 + $0x88] sm:$0xff]
    %v5363 = vld [vmem:[%s10 + $0x90] sm:$0xff]
    %v5364 = vld [vmem:[%s10 + $0x98] sm:$0xff]
    %v5365 = vld [vmem:[%s10 + $0xa0] sm:$0xff]
    %v5366 = vld [vmem:[%s10 + $0xa8] sm:$0xff]
    %v5367 = vld [vmem:[%s10 + $0xb0] sm:$0xff]
    %v5368 = vld [vmem:[%s10 + $0xb8] sm:$0xff]
    %v5369 = vld [vmem:[%s10 + $0xc0] sm:$0xff]
    %v5370 = vld [vmem:[%s10 + $0xc8] sm:$0xff]
    %v5371 = vld [vmem:[%s10 + $0xd0] sm:$0xff]
    %v5372 = vld [vmem:[%s10 + $0xd8] sm:$0xff]
    %v5373 = vld [vmem:[%s10 + $0xe0] sm:$0xff]
    %v5374 = vld [vmem:[%s10 + $0xe8] sm:$0xff]
    %v5375 = vld [vmem:[%s10 + $0xf0] sm:$0xff]
    %v5376 = vld [vmem:[%s10 + $0xf8] sm:$0xff]
    %5377 = vmatprep.subr.mxu0 0.0
    %5378 = vmatpush1.msra.mxu0 %v5360
    %5379 = vmatprep.subr.mxu0 0.0
    %5380 = vmatpush1.msra.mxu0 %v5359
    %5381 = vmatprep.subr.mxu0 0.0
    %5382 = vmatpush1.msra.mxu0 %v5358
    %5383 = vmatprep.subr.mxu0 0.0
    %5384 = vmatpush1.msra.mxu0 %v5357
    %5385 = vmatprep.subr.mxu0 0.0
    %5386 = vmatpush1.msra.mxu0 %v5356
    %5387 = vmatprep.subr.mxu0 0.0
    %5388 = vmatpush1.msra.mxu0 %v5355
    %5389 = vmatprep.subr.mxu0 0.0
    %5390 = vmatpush1.msra.mxu0 %v5354
    %5391 = vmatprep.subr.mxu0 0.0
    %5392 = vmatpush1.msra.mxu0 %v5353
    %5393 = vmatprep.subr.mxu0 0.0
    %5394 = vmatpush1.msra.mxu0 %v5352
    %5395 = vmatprep.subr.mxu0 0.0
    %5396 = vmatpush1.msra.mxu0 %v5351
    %5397 = vmatprep.subr.mxu0 0.0
    %5398 = vmatpush1.msra.mxu0 %v5350
    %5399 = vmatprep.subr.mxu0 0.0
    %5400 = vmatpush1.msra.mxu0 %v5349
    %5401 = vmatprep.subr.mxu0 0.0
    %5402 = vmatpush1.msra.mxu0 %v5348
    %5403 = vmatprep.subr.mxu0 0.0
    %5404 = vmatpush1.msra.mxu0 %v5347
    %5405 = vmatprep.subr.mxu0 0.0
    %5406 = vmatpush1.msra.mxu0 %v5346
    %5407 = vmatprep.subr.mxu0 0.0
    %5408 = vmatpush1.msra.mxu0 %v5345
    %5409 = vmatprep.subr.mxu0 0.0
    %5410 = vmatpush2.msra.mxu0 %v5376
    %5411 = vmatprep.subr.mxu0 0.0
    %5412 = vmatpush2.msra.mxu0 %v5375
    %5413 = vmatprep.subr.mxu0 0.0
    %5414 = vmatpush2.msra.mxu0 %v5374
    %5415 = vmatprep.subr.mxu0 0.0
    %5416 = vmatpush2.msra.mxu0 %v5373
    %5417 = vmatprep.subr.mxu0 0.0
    %5418 = vmatpush2.msra.mxu0 %v5372
    %5419 = vmatprep.subr.mxu0 0.0
    %5420 = vmatpush2.msra.mxu0 %v5371
    %5421 = vmatprep.subr.mxu0 0.0
    %5422 = vmatpush2.msra.mxu0 %v5370
    %5423 = vmatprep.subr.mxu0 0.0
    %5424 = vmatpush2.msra.mxu0 %v5369
    %5425 = vmatprep.subr.mxu0 0.0
    %5426 = vmatpush2.msra.mxu0 %v5368
    %5427 = vmatprep.subr.mxu0 0.0
    %5428 = vmatpush2.msra.mxu0 %v5367
    %5429 = vmatprep.subr.mxu0 0.0
    %5430 = vmatpush2.msra.mxu0 %v5366
    %5431 = vmatprep.subr.mxu0 0.0
    %5432 = vmatpush2.msra.mxu0 %v5365
    %5433 = vmatprep.subr.mxu0 0.0
    %5434 = vmatpush2.msra.mxu0 %v5364
    %5435 = vmatprep.subr.mxu0 0.0
    %5436 = vmatpush2.msra.mxu0 %v5363
    %5437 = vmatprep.subr.mxu0 0.0
    %5438 = vmatpush2.msra.mxu0 %v5362
    %5439 = vmatprep.subr.mxu0 0.0
    %5440 = vmatpush2.msra.mxu0 %v5361
    %5441 = vmatprep.mubr.f32.mxu0 %v5326
    %5442 = vmatmul.mubr.f32.gmra.mxu0 %v5319
    %v5443 = vpop.f32.mrf.mxu0
    %v5444 = vadd.f32 0.0, %v5443
    %v5445 = vpop.f32.mrf.mxu0
    %5446 = vdwg.mxu0
    %v5447 = vmul.f32 %v5444, 0.0078125
    %5448 = vmatprep.subr.mxu0 0.0
    %5449 = vmatpush1.msra.mxu0 %v5360
    %5450 = vmatprep.subr.mxu0 0.0
    %5451 = vmatpush1.msra.mxu0 %v5359
    %5452 = vmatprep.subr.mxu0 0.0
    %5453 = vmatpush1.msra.mxu0 %v5358
    %5454 = vmatprep.subr.mxu0 0.0
    %5455 = vmatpush1.msra.mxu0 %v5357
    %5456 = vmatprep.subr.mxu0 0.0
    %5457 = vmatpush1.msra.mxu0 %v5356
    %5458 = vmatprep.subr.mxu0 0.0
    %5459 = vmatpush1.msra.mxu0 %v5355
    %5460 = vmatprep.subr.mxu0 0.0
    %5461 = vmatpush1.msra.mxu0 %v5354
    %5462 = vmatprep.subr.mxu0 0.0
    %5463 = vmatpush1.msra.mxu0 %v5353
    %5464 = vmatprep.subr.mxu0 0.0
    %5465 = vmatpush1.msra.mxu0 %v5352
    %5466 = vmatprep.subr.mxu0 0.0
    %5467 = vmatpush1.msra.mxu0 %v5351
    %5468 = vmatprep.subr.mxu0 0.0
    %5469 = vmatpush1.msra.mxu0 %v5350
    %5470 = vmatprep.subr.mxu0 0.0
    %5471 = vmatpush1.msra.mxu0 %v5349
    %5472 = vmatprep.subr.mxu0 0.0
    %5473 = vmatpush1.msra.mxu0 %v5348
    %5474 = vmatprep.subr.mxu0 0.0
    %5475 = vmatpush1.msra.mxu0 %v5347
    %5476 = vmatprep.subr.mxu0 0.0
    %5477 = vmatpush1.msra.mxu0 %v5346
    %5478 = vmatprep.subr.mxu0 0.0
    %5479 = vmatpush1.msra.mxu0 %v5345
    %5480 = vmatprep.subr.mxu0 0.0
    %5481 = vmatpush2.msra.mxu0 %v5376
    %5482 = vmatprep.subr.mxu0 0.0
    %5483 = vmatpush2.msra.mxu0 %v5375
    %5484 = vmatprep.subr.mxu0 0.0
    %5485 = vmatpush2.msra.mxu0 %v5374
    %5486 = vmatprep.subr.mxu0 0.0
    %5487 = vmatpush2.msra.mxu0 %v5373
    %5488 = vmatprep.subr.mxu0 0.0
    %5489 = vmatpush2.msra.mxu0 %v5372
    %5490 = vmatprep.subr.mxu0 0.0
    %5491 = vmatpush2.msra.mxu0 %v5371
    %5492 = vmatprep.subr.mxu0 0.0
    %5493 = vmatpush2.msra.mxu0 %v5370
    %5494 = vmatprep.subr.mxu0 0.0
    %5495 = vmatpush2.msra.mxu0 %v5369
    %5496 = vmatprep.subr.mxu0 0.0
    %5497 = vmatpush2.msra.mxu0 %v5368
    %5498 = vmatprep.subr.mxu0 0.0
    %5499 = vmatpush2.msra.mxu0 %v5367
    %5500 = vmatprep.subr.mxu0 0.0
    %5501 = vmatpush2.msra.mxu0 %v5366
    %5502 = vmatprep.subr.mxu0 0.0
    %5503 = vmatpush2.msra.mxu0 %v5365
    %5504 = vmatprep.subr.mxu0 0.0
    %5505 = vmatpush2.msra.mxu0 %v5364
    %5506 = vmatprep.subr.mxu0 0.0
    %5507 = vmatpush2.msra.mxu0 %v5363
    %5508 = vmatprep.subr.mxu0 0.0
    %5509 = vmatpush2.msra.mxu0 %v5362
    %5510 = vmatprep.subr.mxu0 0.0
    %5511 = vmatpush2.msra.mxu0 %v5361
    %5512 = vmatprep.mubr.f32.mxu0 %v5344
    %5513 = vmatmul.mubr.f32.gmra.mxu0 %v5337
    %v5514 = vpop.f32.mrf.mxu0
    %v5515 = vadd.f32 0.0, %v5514
    %v5516 = vpop.f32.mrf.mxu0
    %5517 = vdwg.mxu0
    %v5518 = vmul.f32 %v5515, 0.0078125
    %v5519 = vmul.f32 %v5447, %v5447
    %v5520 = vsub.f32 %v5518, %v5519
    %v5521 = vmax.f32 %v5520, 0.0
    %v5522 = vld [vmem:[#allocation7] sm:$0x1]
    %v5523 = vadd.f32 %v5521, 1e-05
    %v5524 = vrsqrt.pop %v5523
    %v5525 = vmul.f32 %v5522, %v5524
    %v5526 = vld [vmem:[#allocation8] sm:$0x1]
    %v5527 = vmul.f32 %v5447, %v5525
    %v5528 = vsub.f32 %v5526, %v5527
    %v5529 = vld [vmem:[%s11] sm:$0xff]
    %v5530 = vld [vmem:[%s11 + $0x8] sm:$0xff]
    %v5531 = vld [vmem:[%s11 + $0x10] sm:$0xff]
    %v5532 = vld [vmem:[%s11 + $0x18] sm:$0xff]
    %v5533 = vld [vmem:[%s11 + $0x20] sm:$0xff]
    %v5534 = vld [vmem:[%s11 + $0x28] sm:$0xff]
    %v5535 = vld [vmem:[%s11 + $0x30] sm:$0xff]
    %v5536 = vld [vmem:[%s11 + $0x38] sm:$0xff]
    %vm5537 = vcmask 261120
    %v5539 = vsel %vm5537, %v5525, 0
    %5541 = vmatprep.subr.mxu0 0.0
    %5542 = vmatpush1.msra.mxu0 0.0
    %5543 = vmatprep.subr.mxu0 0.0
    %5544 = vmatpush1.msra.mxu0 0.0
    %5545 = vmatprep.subr.mxu0 0.0
    %5546 = vmatpush1.msra.mxu0 0.0
    %5547 = vmatprep.subr.mxu0 0.0
    %5548 = vmatpush1.msra.mxu0 0.0
    %5549 = vmatprep.subr.mxu0 0.0
    %5550 = vmatpush1.msra.mxu0 0.0
    %5551 = vmatprep.subr.mxu0 0.0
    %5552 = vmatpush1.msra.mxu0 0.0
    %5553 = vmatprep.subr.mxu0 0.0
    %5554 = vmatpush1.msra.mxu0 0.0
    %5555 = vmatprep.subr.mxu0 0.0
    %5556 = vmatpush1.msra.mxu0 0.0
    %5557 = vmatprep.subr.mxu0 0.0
    %5558 = vmatpush1.msra.mxu0 0.0
    %5559 = vmatprep.subr.mxu0 0.0
    %5560 = vmatpush1.msra.mxu0 0.0
    %5561 = vmatprep.subr.mxu0 0.0
    %5562 = vmatpush1.msra.mxu0 0.0
    %5563 = vmatprep.subr.mxu0 0.0
    %5564 = vmatpush1.msra.mxu0 0.0
    %5565 = vmatprep.subr.mxu0 %v5536
    %5566 = vmatpush1.msra.mxu0 %v5535
    %5567 = vmatprep.subr.mxu0 %v5534
    %5568 = vmatpush1.msra.mxu0 %v5533
    %5569 = vmatprep.subr.mxu0 %v5532
    %5570 = vmatpush1.msra.mxu0 %v5531
    %5571 = vmatprep.subr.mxu0 %v5530
    %5572 = vmatpush1.msra.mxu0 %v5529
    %5573 = vmatprep.subr.mxu0 0.0
    %5574 = vmatpush2.msra.mxu0 0.0
    %5575 = vmatprep.subr.mxu0 0.0
    %5576 = vmatpush2.msra.mxu0 0.0
    %5577 = vmatprep.subr.mxu0 0.0
    %5578 = vmatpush2.msra.mxu0 0.0
    %5579 = vmatprep.subr.mxu0 0.0
    %5580 = vmatpush2.msra.mxu0 0.0
    %5581 = vmatprep.subr.mxu0 0.0
    %5582 = vmatpush2.msra.mxu0 0.0
    %5583 = vmatprep.subr.mxu0 0.0
    %5584 = vmatpush2.msra.mxu0 0.0
    %5585 = vmatprep.subr.mxu0 0.0
    %5586 = vmatpush2.msra.mxu0 0.0
    %5587 = vmatprep.subr.mxu0 0.0
    %5588 = vmatpush2.msra.mxu0 0.0
    %5589 = vmatprep.subr.mxu0 0.0
    %5590 = vmatpush2.msra.mxu0 0.0
    %5591 = vmatprep.subr.mxu0 0.0
    %5592 = vmatpush2.msra.mxu0 0.0
    %5593 = vmatprep.subr.mxu0 0.0
    %5594 = vmatpush2.msra.mxu0 0.0
    %5595 = vmatprep.subr.mxu0 0.0
    %5596 = vmatpush2.msra.mxu0 0.0
    %5597 = vmatprep.subr.mxu0 0.0
    %5598 = vmatpush2.msra.mxu0 0.0
    %5599 = vmatprep.subr.mxu0 0.0
    %5600 = vmatpush2.msra.mxu0 0.0
    %5601 = vmatprep.subr.mxu0 0.0
    %5602 = vmatpush2.msra.mxu0 0.0
    %5603 = vmatprep.subr.mxu0 0.0
    %5604 = vmatpush2.msra.mxu0 0.0
    %5605 = vmatprep.mubr.f32.mxu0 0.0
    %5606 = vmatmul.mubr.f32.gmra.mxu0 %v5539
    %v5607 = vpop.f32.mrf.mxu0
    %v5608 = vadd.f32 0.0, %v5607
    %v5609 = vpop.f32.mrf.mxu0
    %v5610 = vadd.f32 0.0, %v5609
    %5611 = vdwg.mxu0
    %v5613 = vsel %vm5537, %v5528, 0
    %5615 = vmatprep.subr.mxu0 0.0
    %5616 = vmatpush1.msra.mxu0 0.0
    %5617 = vmatprep.subr.mxu0 0.0
    %5618 = vmatpush1.msra.mxu0 0.0
    %5619 = vmatprep.subr.mxu0 0.0
    %5620 = vmatpush1.msra.mxu0 0.0
    %5621 = vmatprep.subr.mxu0 0.0
    %5622 = vmatpush1.msra.mxu0 0.0
    %5623 = vmatprep.subr.mxu0 0.0
    %5624 = vmatpush1.msra.mxu0 0.0
    %5625 = vmatprep.subr.mxu0 0.0
    %5626 = vmatpush1.msra.mxu0 0.0
    %5627 = vmatprep.subr.mxu0 0.0
    %5628 = vmatpush1.msra.mxu0 0.0
    %5629 = vmatprep.subr.mxu0 0.0
    %5630 = vmatpush1.msra.mxu0 0.0
    %5631 = vmatprep.subr.mxu0 0.0
    %5632 = vmatpush1.msra.mxu0 0.0
    %5633 = vmatprep.subr.mxu0 0.0
    %5634 = vmatpush1.msra.mxu0 0.0
    %5635 = vmatprep.subr.mxu0 0.0
    %5636 = vmatpush1.msra.mxu0 0.0
    %5637 = vmatprep.subr.mxu0 0.0
    %5638 = vmatpush1.msra.mxu0 0.0
    %5639 = vmatprep.subr.mxu0 %v5536
    %5640 = vmatpush1.msra.mxu0 %v5535
    %5641 = vmatprep.subr.mxu0 %v5534
    %5642 = vmatpush1.msra.mxu0 %v5533
    %5643 = vmatprep.subr.mxu0 %v5532
    %5644 = vmatpush1.msra.mxu0 %v5531
    %5645 = vmatprep.subr.mxu0 %v5530
    %5646 = vmatpush1.msra.mxu0 %v5529
    %5647 = vmatprep.subr.mxu0 0.0
    %5648 = vmatpush2.msra.mxu0 0.0
    %5649 = vmatprep.subr.mxu0 0.0
    %5650 = vmatpush2.msra.mxu0 0.0
    %5651 = vmatprep.subr.mxu0 0.0
    %5652 = vmatpush2.msra.mxu0 0.0
    %5653 = vmatprep.subr.mxu0 0.0
    %5654 = vmatpush2.msra.mxu0 0.0
    %5655 = vmatprep.subr.mxu0 0.0
    %5656 = vmatpush2.msra.mxu0 0.0
    %5657 = vmatprep.subr.mxu0 0.0
    %5658 = vmatpush2.msra.mxu0 0.0
    %5659 = vmatprep.subr.mxu0 0.0
    %5660 = vmatpush2.msra.mxu0 0.0
    %5661 = vmatprep.subr.mxu0 0.0
    %5662 = vmatpush2.msra.mxu0 0.0
    %5663 = vmatprep.subr.mxu0 0.0
    %5664 = vmatpush2.msra.mxu0 0.0
    %5665 = vmatprep.subr.mxu0 0.0
    %5666 = vmatpush2.msra.mxu0 0.0
    %5667 = vmatprep.subr.mxu0 0.0
    %5668 = vmatpush2.msra.mxu0 0.0
    %5669 = vmatprep.subr.mxu0 0.0
    %5670 = vmatpush2.msra.mxu0 0.0
    %5671 = vmatprep.subr.mxu0 0.0
    %5672 = vmatpush2.msra.mxu0 0.0
    %5673 = vmatprep.subr.mxu0 0.0
    %5674 = vmatpush2.msra.mxu0 0.0
    %5675 = vmatprep.subr.mxu0 0.0
    %5676 = vmatpush2.msra.mxu0 0.0
    %5677 = vmatprep.subr.mxu0 0.0
    %5678 = vmatpush2.msra.mxu0 0.0
    %5679 = vmatprep.mubr.f32.mxu0 0.0
    %5680 = vmatmul.mubr.f32.gmra.mxu0 %v5613
    %v5681 = vpop.f32.mrf.mxu0
    %v5682 = vadd.f32 0.0, %v5681
    %v5683 = vpop.f32.mrf.mxu0
    %v5684 = vadd.f32 0.0, %v5683
    %5685 = vdwg.mxu0
    %v5686 = vlaneseq
    %v5687 = vshrl.u32 %v5686, 7
    %v5688 = vsub.s32 0, %v5687
    %v5689 = vrot.slane %v5608, %v5688
    %v5690 = vlaneseq
    %v5691 = vshrl.u32 %v5690, 7
    %v5692 = vsub.s32 0, %v5691
    %v5693 = vrot.slane %v5610, %v5692
    %v5694 = vmul.f32 %v5309, %v5689
    %v5695 = vmul.f32 %v5310, %v5693
    %v5696 = vmul.f32 %v5311, %v5689
    %v5697 = vmul.f32 %v5312, %v5693
    %v5698 = vlaneseq
    %v5699 = vshrl.u32 %v5698, 7
    %v5700 = vsub.s32 0, %v5699
    %v5701 = vrot.slane %v5682, %v5700
    %v5702 = vlaneseq
    %v5703 = vshrl.u32 %v5702, 7
    %v5704 = vsub.s32 0, %v5703
    %v5705 = vrot.slane %v5684, %v5704
    %v5706 = vadd.f32 %v5694, %v5701
    %v5707 = vadd.f32 %v5695, %v5705
    %v5708 = vadd.f32 %v5696, %v5701
    %v5709 = vadd.f32 %v5697, %v5705
    %v5710 = vmax.f32 %v5706, 0.0
    %v5711 = vmax.f32 %v5707, 0.0
    %v5712 = vmax.f32 %v5708, 0.0
    %v5713 = vmax.f32 %v5709, 0.0
    %v5714 = vpack.c.bf16 %v5712, %v5710
    %v5715 = vpack.c.bf16 %v5713, %v5711
    %v5716 = vld [vmem:[#allocation10] sm:$0x3]
    %v5718 = vsel %vm2786, %v5716, 0
    %5720 = vmatprep.subr.bf16.mxu0 0
    %5721 = vmatpush1.bf16.msra.mxu0 0
    %5722 = vmatprep.subr.bf16.mxu0 0
    %5723 = vmatpush1.bf16.msra.mxu0 0
    %5724 = vmatprep.subr.bf16.mxu0 0
    %5725 = vmatpush1.bf16.msra.mxu0 0
    %5726 = vmatprep.subr.bf16.mxu0 0
    %5727 = vmatpush1.bf16.msra.mxu0 0
    %5728 = vmatprep.subr.bf16.mxu0 0
    %5729 = vmatpush1.bf16.msra.mxu0 0
    %5730 = vmatprep.subr.bf16.mxu0 0
    %5731 = vmatpush1.bf16.msra.mxu0 0
    %5732 = vmatprep.subr.bf16.mxu0 0
    %5733 = vmatpush1.bf16.msra.mxu0 0
    %5734 = vmatprep.subr.bf16.mxu0 %v5715
    %5735 = vmatpush1.bf16.msra.mxu0 %v5714
    %5736 = vmatprep.subr.bf16.mxu0 0
    %5737 = vmatpush2.bf16.msra.mxu0 0
    %5738 = vmatprep.subr.bf16.mxu0 0
    %5739 = vmatpush2.bf16.msra.mxu0 0
    %5740 = vmatprep.subr.bf16.mxu0 0
    %5741 = vmatpush2.bf16.msra.mxu0 0
    %5742 = vmatprep.subr.bf16.mxu0 0
    %5743 = vmatpush2.bf16.msra.mxu0 0
    %5744 = vmatprep.subr.bf16.mxu0 0
    %5745 = vmatpush2.bf16.msra.mxu0 0
    %5746 = vmatprep.subr.bf16.mxu0 0
    %5747 = vmatpush2.bf16.msra.mxu0 0
    %5748 = vmatprep.subr.bf16.mxu0 0
    %5749 = vmatpush2.bf16.msra.mxu0 0
    %5750 = vmatprep.subr.bf16.mxu0 0
    %5751 = vmatpush2.bf16.msra.mxu0 0
    %5752 = vmatprep.mubr.bf16.mxu0 0
    %5753 = vmatmul.mubr.bf16.gmra.mxu0 %v5718
    %v5754 = vpop.f32.mrf.mxu0
    %v5755 = vadd.f32 0.0, %v5754
    %v5756 = vpop.f32.mrf.mxu0
    %v5757 = vadd.f32 0.0, %v5756
    %v5758 = vpop.f32.mrf.mxu0
    %v5759 = vpop.f32.mrf.mxu0
    %5760 = vdwg.mxu0
    %v5761 = vpack.c.bf16 %v5755, %v5755
    %v5762 = vpack.c.bf16 %v5757, %v5757
    %v5763 = vld [vmem:[%s15] sm:$0xf]
    %v5764 = vld [vmem:[%s15 + $0x4] sm:$0xf]
    %v5765 = vld [vmem:[%s15 + $0x8] sm:$0xf]
    %v5766 = vld [vmem:[%s15 + $0xc] sm:$0xf]
    %v5767 = vld [vmem:[%s15 + $0x10] sm:$0xf]
    %v5768 = vld [vmem:[%s15 + $0x14] sm:$0xf]
    %v5769 = vld [vmem:[%s15 + $0x18] sm:$0xf]
    %v5770 = vld [vmem:[%s15 + $0x1c] sm:$0xf]
    %v5771 = vld [vmem:[%s15 + $0x20] sm:$0xf]
    %v5772 = vld [vmem:[%s15 + $0x24] sm:$0xf]
    %v5773 = vld [vmem:[%s15 + $0x28] sm:$0xf]
    %v5774 = vld [vmem:[%s15 + $0x2c] sm:$0xf]
    %v5775 = vld [vmem:[%s15 + $0x30] sm:$0xf]
    %v5776 = vld [vmem:[%s15 + $0x34] sm:$0xf]
    %v5777 = vld [vmem:[%s15 + $0x38] sm:$0xf]
    %v5778 = vld [vmem:[%s15 + $0x3c] sm:$0xf]
    %v5779 = vld [vmem:[%s15 + $0x40] sm:$0xf]
    %v5780 = vld [vmem:[%s15 + $0x44] sm:$0xf]
    %v5781 = vld [vmem:[%s15 + $0x48] sm:$0xf]
    %v5782 = vld [vmem:[%s15 + $0x4c] sm:$0xf]
    %v5783 = vld [vmem:[%s15 + $0x50] sm:$0xf]
    %v5784 = vld [vmem:[%s15 + $0x54] sm:$0xf]
    %v5785 = vld [vmem:[%s15 + $0x58] sm:$0xf]
    %v5786 = vld [vmem:[%s15 + $0x5c] sm:$0xf]
    %v5787 = vld [vmem:[%s15 + $0x60] sm:$0xf]
    %v5788 = vld [vmem:[%s15 + $0x64] sm:$0xf]
    %v5789 = vld [vmem:[%s15 + $0x68] sm:$0xf]
    %v5790 = vld [vmem:[%s15 + $0x6c] sm:$0xf]
    %v5791 = vld [vmem:[%s15 + $0x70] sm:$0xf]
    %v5792 = vld [vmem:[%s15 + $0x74] sm:$0xf]
    %v5793 = vld [vmem:[%s15 + $0x78] sm:$0xf]
    %v5794 = vld [vmem:[%s15 + $0x7c] sm:$0xf]
    %s5795 = scalar_lea.vmem [#allocation10], 2
    %v5796 = vld [vmem:[%s5795] sm:$0x3]
    %v5798 = vsel %vm2786, %v5796, 0
    %5800 = vmatprep.subr.bf16.mxu0 0
    %5801 = vmatpush1.bf16.msra.mxu0 0
    %5802 = vmatprep.subr.bf16.mxu0 0
    %5803 = vmatpush1.bf16.msra.mxu0 0
    %5804 = vmatprep.subr.bf16.mxu0 0
    %5805 = vmatpush1.bf16.msra.mxu0 0
    %5806 = vmatprep.subr.bf16.mxu0 0
    %5807 = vmatpush1.bf16.msra.mxu0 0
    %5808 = vmatprep.subr.bf16.mxu0 0
    %5809 = vmatpush1.bf16.msra.mxu0 0
    %5810 = vmatprep.subr.bf16.mxu0 0
    %5811 = vmatpush1.bf16.msra.mxu0 0
    %5812 = vmatprep.subr.bf16.mxu0 0
    %5813 = vmatpush1.bf16.msra.mxu0 0
    %5814 = vmatprep.subr.bf16.mxu0 %v5715
    %5815 = vmatpush1.bf16.msra.mxu0 %v5714
    %5816 = vmatprep.subr.bf16.mxu0 0
    %5817 = vmatpush2.bf16.msra.mxu0 0
    %5818 = vmatprep.subr.bf16.mxu0 0
    %5819 = vmatpush2.bf16.msra.mxu0 0
    %5820 = vmatprep.subr.bf16.mxu0 0
    %5821 = vmatpush2.bf16.msra.mxu0 0
    %5822 = vmatprep.subr.bf16.mxu0 0
    %5823 = vmatpush2.bf16.msra.mxu0 0
    %5824 = vmatprep.subr.bf16.mxu0 0
    %5825 = vmatpush2.bf16.msra.mxu0 0
    %5826 = vmatprep.subr.bf16.mxu0 0
    %5827 = vmatpush2.bf16.msra.mxu0 0
    %5828 = vmatprep.subr.bf16.mxu0 0
    %5829 = vmatpush2.bf16.msra.mxu0 0
    %5830 = vmatprep.subr.bf16.mxu0 0
    %5831 = vmatpush2.bf16.msra.mxu0 0
    %5832 = vmatprep.mubr.bf16.mxu0 0
    %5833 = vmatmul.mubr.bf16.gmra.mxu0 %v5798
    %v5834 = vpop.f32.mrf.mxu0
    %v5835 = vadd.f32 0.0, %v5834
    %v5836 = vpop.f32.mrf.mxu0
    %v5837 = vadd.f32 0.0, %v5836
    %v5838 = vpop.f32.mrf.mxu0
    %v5839 = vpop.f32.mrf.mxu0
    %5840 = vdwg.mxu0
    %v5841 = vpack.c.bf16 %v5835, %v5835
    %v5842 = vpack.c.bf16 %v5837, %v5837
    %s5843 = scalar_lea.vmem %s15, 128
    %v5844 = vld [vmem:[%s5843] sm:$0xf]
    %v5845 = vld [vmem:[%s5843 + $0x4] sm:$0xf]
    %v5846 = vld [vmem:[%s5843 + $0x8] sm:$0xf]
    %v5847 = vld [vmem:[%s5843 + $0xc] sm:$0xf]
    %v5848 = vld [vmem:[%s5843 + $0x10] sm:$0xf]
    %v5849 = vld [vmem:[%s5843 + $0x14] sm:$0xf]
    %v5850 = vld [vmem:[%s5843 + $0x18] sm:$0xf]
    %v5851 = vld [vmem:[%s5843 + $0x1c] sm:$0xf]
    %v5852 = vld [vmem:[%s5843 + $0x20] sm:$0xf]
    %v5853 = vld [vmem:[%s5843 + $0x24] sm:$0xf]
    %v5854 = vld [vmem:[%s5843 + $0x28] sm:$0xf]
    %v5855 = vld [vmem:[%s5843 + $0x2c] sm:$0xf]
    %v5856 = vld [vmem:[%s5843 + $0x30] sm:$0xf]
    %v5857 = vld [vmem:[%s5843 + $0x34] sm:$0xf]
    %v5858 = vld [vmem:[%s5843 + $0x38] sm:$0xf]
    %v5859 = vld [vmem:[%s5843 + $0x3c] sm:$0xf]
    %v5860 = vld [vmem:[%s5843 + $0x40] sm:$0xf]
    %v5861 = vld [vmem:[%s5843 + $0x44] sm:$0xf]
    %v5862 = vld [vmem:[%s5843 + $0x48] sm:$0xf]
    %v5863 = vld [vmem:[%s5843 + $0x4c] sm:$0xf]
    %v5864 = vld [vmem:[%s5843 + $0x50] sm:$0xf]
    %v5865 = vld [vmem:[%s5843 + $0x54] sm:$0xf]
    %v5866 = vld [vmem:[%s5843 + $0x58] sm:$0xf]
    %v5867 = vld [vmem:[%s5843 + $0x5c] sm:$0xf]
    %v5868 = vld [vmem:[%s5843 + $0x60] sm:$0xf]
    %v5869 = vld [vmem:[%s5843 + $0x64] sm:$0xf]
    %v5870 = vld [vmem:[%s5843 + $0x68] sm:$0xf]
    %v5871 = vld [vmem:[%s5843 + $0x6c] sm:$0xf]
    %v5872 = vld [vmem:[%s5843 + $0x70] sm:$0xf]
    %v5873 = vld [vmem:[%s5843 + $0x74] sm:$0xf]
    %v5874 = vld [vmem:[%s5843 + $0x78] sm:$0xf]
    %v5875 = vld [vmem:[%s5843 + $0x7c] sm:$0xf]
    %v5908 = vunpack.c.l.b16 %v5844
    %v5909 = vunpack.c.l.b16 %v5845
    %v5910 = vunpack.c.l.b16 %v5846
    %v5911 = vunpack.c.l.b16 %v5847
    %v5912 = vunpack.c.l.b16 %v5848
    %v5913 = vunpack.c.l.b16 %v5849
    %v5914 = vunpack.c.l.b16 %v5850
    %v5915 = vunpack.c.l.b16 %v5851
    %v5916 = vunpack.c.l.b16 %v5852
    %v5917 = vunpack.c.l.b16 %v5853
    %v5918 = vunpack.c.l.b16 %v5854
    %v5919 = vunpack.c.l.b16 %v5855
    %v5920 = vunpack.c.l.b16 %v5856
    %v5921 = vunpack.c.l.b16 %v5857
    %v5922 = vunpack.c.l.b16 %v5858
    %v5923 = vunpack.c.l.b16 %v5859
    %v5924 = vunpack.c.l.b16 %v5860
    %v5925 = vunpack.c.l.b16 %v5861
    %v5926 = vunpack.c.l.b16 %v5862
    %v5927 = vunpack.c.l.b16 %v5863
    %v5928 = vunpack.c.l.b16 %v5864
    %v5929 = vunpack.c.l.b16 %v5865
    %v5930 = vunpack.c.l.b16 %v5866
    %v5931 = vunpack.c.l.b16 %v5867
    %v5932 = vunpack.c.l.b16 %v5868
    %v5933 = vunpack.c.l.b16 %v5869
    %v5934 = vunpack.c.l.b16 %v5870
    %v5935 = vunpack.c.l.b16 %v5871
    %v5936 = vunpack.c.l.b16 %v5872
    %v5937 = vunpack.c.l.b16 %v5873
    %v5938 = vunpack.c.l.b16 %v5874
    %v5939 = vunpack.c.l.b16 %v5875
    %v5940 = vpack.c.b16 %v5909, %v5908
    %v5941 = vpack.c.b16 %v5911, %v5910
    %v5942 = vpack.c.b16 %v5913, %v5912
    %v5943 = vpack.c.b16 %v5915, %v5914
    %v5944 = vpack.c.b16 %v5917, %v5916
    %v5945 = vpack.c.b16 %v5919, %v5918
    %v5946 = vpack.c.b16 %v5921, %v5920
    %v5947 = vpack.c.b16 %v5923, %v5922
    %v5948 = vpack.c.b16 %v5925, %v5924
    %v5949 = vpack.c.b16 %v5927, %v5926
    %v5950 = vpack.c.b16 %v5929, %v5928
    %v5951 = vpack.c.b16 %v5931, %v5930
    %v5952 = vpack.c.b16 %v5933, %v5932
    %v5953 = vpack.c.b16 %v5935, %v5934
    %v5954 = vpack.c.b16 %v5937, %v5936
    %v5955 = vpack.c.b16 %v5939, %v5938
    %5972 = vmatprep.subr.bf16.mxu0 0
    %5973 = vmatpush1.bf16.msra.mxu0 %v5947
    %5974 = vmatprep.subr.bf16.mxu0 0
    %5975 = vmatpush1.bf16.msra.mxu0 %v5946
    %5976 = vmatprep.subr.bf16.mxu0 0
    %5977 = vmatpush1.bf16.msra.mxu0 %v5945
    %5978 = vmatprep.subr.bf16.mxu0 0
    %5979 = vmatpush1.bf16.msra.mxu0 %v5944
    %5980 = vmatprep.subr.bf16.mxu0 0
    %5981 = vmatpush1.bf16.msra.mxu0 %v5943
    %5982 = vmatprep.subr.bf16.mxu0 0
    %5983 = vmatpush1.bf16.msra.mxu0 %v5942
    %5984 = vmatprep.subr.bf16.mxu0 0
    %5985 = vmatpush1.bf16.msra.mxu0 %v5941
    %5986 = vmatprep.subr.bf16.mxu0 0
    %5987 = vmatpush1.bf16.msra.mxu0 %v5940
    %5988 = vmatprep.subr.bf16.mxu0 0
    %5989 = vmatpush2.bf16.msra.mxu0 %v5955
    %5990 = vmatprep.subr.bf16.mxu0 0
    %5991 = vmatpush2.bf16.msra.mxu0 %v5954
    %5992 = vmatprep.subr.bf16.mxu0 0
    %5993 = vmatpush2.bf16.msra.mxu0 %v5953
    %5994 = vmatprep.subr.bf16.mxu0 0
    %5995 = vmatpush2.bf16.msra.mxu0 %v5952
    %5996 = vmatprep.subr.bf16.mxu0 0
    %5997 = vmatpush2.bf16.msra.mxu0 %v5951
    %5998 = vmatprep.subr.bf16.mxu0 0
    %5999 = vmatpush2.bf16.msra.mxu0 %v5950
    %6000 = vmatprep.subr.bf16.mxu0 0
    %6001 = vmatpush2.bf16.msra.mxu0 %v5949
    %6002 = vmatprep.subr.bf16.mxu0 0
    %6003 = vmatpush2.bf16.msra.mxu0 %v5948
    %6004 = vmatprep.mubr.bf16.mxu0 %v5842
    %6005 = vmatmul.mubr.bf16.gmra.mxu0 %v5841
    %v6006 = vpop.f32.mrf.mxu0
    %v6007 = vadd.f32 0.0, %v6006
    %v6008 = vpop.f32.mrf.mxu0
    %v6009 = vpop.f32.mrf.mxu0
    %v6010 = vpop.f32.mrf.mxu0
    %6011 = vdwg.mxu0
    %v6044 = vunpack.c.l.b16 %v5763
    %v6045 = vunpack.c.l.b16 %v5764
    %v6046 = vunpack.c.l.b16 %v5765
    %v6047 = vunpack.c.l.b16 %v5766
    %v6048 = vunpack.c.l.b16 %v5767
    %v6049 = vunpack.c.l.b16 %v5768
    %v6050 = vunpack.c.l.b16 %v5769
    %v6051 = vunpack.c.l.b16 %v5770
    %v6052 = vunpack.c.l.b16 %v5771
    %v6053 = vunpack.c.l.b16 %v5772
    %v6054 = vunpack.c.l.b16 %v5773
    %v6055 = vunpack.c.l.b16 %v5774
    %v6056 = vunpack.c.l.b16 %v5775
    %v6057 = vunpack.c.l.b16 %v5776
    %v6058 = vunpack.c.l.b16 %v5777
    %v6059 = vunpack.c.l.b16 %v5778
    %v6060 = vunpack.c.l.b16 %v5779
    %v6061 = vunpack.c.l.b16 %v5780
    %v6062 = vunpack.c.l.b16 %v5781
    %v6063 = vunpack.c.l.b16 %v5782
    %v6064 = vunpack.c.l.b16 %v5783
    %v6065 = vunpack.c.l.b16 %v5784
    %v6066 = vunpack.c.l.b16 %v5785
    %v6067 = vunpack.c.l.b16 %v5786
    %v6068 = vunpack.c.l.b16 %v5787
    %v6069 = vunpack.c.l.b16 %v5788
    %v6070 = vunpack.c.l.b16 %v5789
    %v6071 = vunpack.c.l.b16 %v5790
    %v6072 = vunpack.c.l.b16 %v5791
    %v6073 = vunpack.c.l.b16 %v5792
    %v6074 = vunpack.c.l.b16 %v5793
    %v6075 = vunpack.c.l.b16 %v5794
    %v6076 = vpack.c.b16 %v6045, %v6044
    %v6077 = vpack.c.b16 %v6047, %v6046
    %v6078 = vpack.c.b16 %v6049, %v6048
    %v6079 = vpack.c.b16 %v6051, %v6050
    %v6080 = vpack.c.b16 %v6053, %v6052
    %v6081 = vpack.c.b16 %v6055, %v6054
    %v6082 = vpack.c.b16 %v6057, %v6056
    %v6083 = vpack.c.b16 %v6059, %v6058
    %v6084 = vpack.c.b16 %v6061, %v6060
    %v6085 = vpack.c.b16 %v6063, %v6062
    %v6086 = vpack.c.b16 %v6065, %v6064
    %v6087 = vpack.c.b16 %v6067, %v6066
    %v6088 = vpack.c.b16 %v6069, %v6068
    %v6089 = vpack.c.b16 %v6071, %v6070
    %v6090 = vpack.c.b16 %v6073, %v6072
    %v6091 = vpack.c.b16 %v6075, %v6074
    %6108 = vmatprep.subr.bf16.mxu0 0
    %6109 = vmatpush1.bf16.msra.mxu0 %v6083
    %6110 = vmatprep.subr.bf16.mxu0 0
    %6111 = vmatpush1.bf16.msra.mxu0 %v6082
    %6112 = vmatprep.subr.bf16.mxu0 0
    %6113 = vmatpush1.bf16.msra.mxu0 %v6081
    %6114 = vmatprep.subr.bf16.mxu0 0
    %6115 = vmatpush1.bf16.msra.mxu0 %v6080
    %6116 = vmatprep.subr.bf16.mxu0 0
    %6117 = vmatpush1.bf16.msra.mxu0 %v6079
    %6118 = vmatprep.subr.bf16.mxu0 0
    %6119 = vmatpush1.bf16.msra.mxu0 %v6078
    %6120 = vmatprep.subr.bf16.mxu0 0
    %6121 = vmatpush1.bf16.msra.mxu0 %v6077
    %6122 = vmatprep.subr.bf16.mxu0 0
    %6123 = vmatpush1.bf16.msra.mxu0 %v6076
    %6124 = vmatprep.subr.bf16.mxu0 0
    %6125 = vmatpush2.bf16.msra.mxu0 %v6091
    %6126 = vmatprep.subr.bf16.mxu0 0
    %6127 = vmatpush2.bf16.msra.mxu0 %v6090
    %6128 = vmatprep.subr.bf16.mxu0 0
    %6129 = vmatpush2.bf16.msra.mxu0 %v6089
    %6130 = vmatprep.subr.bf16.mxu0 0
    %6131 = vmatpush2.bf16.msra.mxu0 %v6088
    %6132 = vmatprep.subr.bf16.mxu0 0
    %6133 = vmatpush2.bf16.msra.mxu0 %v6087
    %6134 = vmatprep.subr.bf16.mxu0 0
    %6135 = vmatpush2.bf16.msra.mxu0 %v6086
    %6136 = vmatprep.subr.bf16.mxu0 0
    %6137 = vmatpush2.bf16.msra.mxu0 %v6085
    %6138 = vmatprep.subr.bf16.mxu0 0
    %6139 = vmatpush2.bf16.msra.mxu0 %v6084
    %6140 = vmatprep.mubr.bf16.mxu0 %v5762
    %6141 = vmatmul.mubr.bf16.gmra.mxu0 %v5761
    %v6142 = vpop.f32.mrf.mxu0
    %v6143 = vadd.f32 %v6007, %v6142
    %v6144 = vpop.f32.mrf.mxu0
    %v6145 = vpop.f32.mrf.mxu0
    %v6146 = vpop.f32.mrf.mxu0
    %6147 = vdwg.mxu0
    %s6148 = scalar_lea.vmem [#allocation10], 4
    %v6149 = vld [vmem:[%s6148] sm:$0x3]
    %v6151 = vsel %vm2786, %v6149, 0
    %6153 = vmatprep.subr.bf16.mxu0 0
    %6154 = vmatpush1.bf16.msra.mxu0 0
    %6155 = vmatprep.subr.bf16.mxu0 0
    %6156 = vmatpush1.bf16.msra.mxu0 0
    %6157 = vmatprep.subr.bf16.mxu0 0
    %6158 = vmatpush1.bf16.msra.mxu0 0
    %6159 = vmatprep.subr.bf16.mxu0 0
    %6160 = vmatpush1.bf16.msra.mxu0 0
    %6161 = vmatprep.subr.bf16.mxu0 0
    %6162 = vmatpush1.bf16.msra.mxu0 0
    %6163 = vmatprep.subr.bf16.mxu0 0
    %6164 = vmatpush1.bf16.msra.mxu0 0
    %6165 = vmatprep.subr.bf16.mxu0 0
    %6166 = vmatpush1.bf16.msra.mxu0 0
    %6167 = vmatprep.subr.bf16.mxu0 %v5715
    %6168 = vmatpush1.bf16.msra.mxu0 %v5714
    %6169 = vmatprep.subr.bf16.mxu0 0
    %6170 = vmatpush2.bf16.msra.mxu0 0
    %6171 = vmatprep.subr.bf16.mxu0 0
    %6172 = vmatpush2.bf16.msra.mxu0 0
    %6173 = vmatprep.subr.bf16.mxu0 0
    %6174 = vmatpush2.bf16.msra.mxu0 0
    %6175 = vmatprep.subr.bf16.mxu0 0
    %6176 = vmatpush2.bf16.msra.mxu0 0
    %6177 = vmatprep.subr.bf16.mxu0 0
    %6178 = vmatpush2.bf16.msra.mxu0 0
    %6179 = vmatprep.subr.bf16.mxu0 0
    %6180 = vmatpush2.bf16.msra.mxu0 0
    %6181 = vmatprep.subr.bf16.mxu0 0
    %6182 = vmatpush2.bf16.msra.mxu0 0
    %6183 = vmatprep.subr.bf16.mxu0 0
    %6184 = vmatpush2.bf16.msra.mxu0 0
    %6185 = vmatprep.mubr.bf16.mxu0 0
    %6186 = vmatmul.mubr.bf16.gmra.mxu0 %v6151
    %v6187 = vpop.f32.mrf.mxu0
    %v6188 = vadd.f32 0.0, %v6187
    %v6189 = vpop.f32.mrf.mxu0
    %v6190 = vadd.f32 0.0, %v6189
    %v6191 = vpop.f32.mrf.mxu0
    %v6192 = vpop.f32.mrf.mxu0
    %6193 = vdwg.mxu0
    %v6194 = vpack.c.bf16 %v6188, %v6188
    %v6195 = vpack.c.bf16 %v6190, %v6190
    %s6196 = scalar_lea.vmem %s15, 256
    %v6197 = vld [vmem:[%s6196] sm:$0xf]
    %v6198 = vld [vmem:[%s6196 + $0x4] sm:$0xf]
    %v6199 = vld [vmem:[%s6196 + $0x8] sm:$0xf]
    %v6200 = vld [vmem:[%s6196 + $0xc] sm:$0xf]
    %v6201 = vld [vmem:[%s6196 + $0x10] sm:$0xf]
    %v6202 = vld [vmem:[%s6196 + $0x14] sm:$0xf]
    %v6203 = vld [vmem:[%s6196 + $0x18] sm:$0xf]
    %v6204 = vld [vmem:[%s6196 + $0x1c] sm:$0xf]
    %v6205 = vld [vmem:[%s6196 + $0x20] sm:$0xf]
    %v6206 = vld [vmem:[%s6196 + $0x24] sm:$0xf]
    %v6207 = vld [vmem:[%s6196 + $0x28] sm:$0xf]
    %v6208 = vld [vmem:[%s6196 + $0x2c] sm:$0xf]
    %v6209 = vld [vmem:[%s6196 + $0x30] sm:$0xf]
    %v6210 = vld [vmem:[%s6196 + $0x34] sm:$0xf]
    %v6211 = vld [vmem:[%s6196 + $0x38] sm:$0xf]
    %v6212 = vld [vmem:[%s6196 + $0x3c] sm:$0xf]
    %v6213 = vld [vmem:[%s6196 + $0x40] sm:$0xf]
    %v6214 = vld [vmem:[%s6196 + $0x44] sm:$0xf]
    %v6215 = vld [vmem:[%s6196 + $0x48] sm:$0xf]
    %v6216 = vld [vmem:[%s6196 + $0x4c] sm:$0xf]
    %v6217 = vld [vmem:[%s6196 + $0x50] sm:$0xf]
    %v6218 = vld [vmem:[%s6196 + $0x54] sm:$0xf]
    %v6219 = vld [vmem:[%s6196 + $0x58] sm:$0xf]
    %v6220 = vld [vmem:[%s6196 + $0x5c] sm:$0xf]
    %v6221 = vld [vmem:[%s6196 + $0x60] sm:$0xf]
    %v6222 = vld [vmem:[%s6196 + $0x64] sm:$0xf]
    %v6223 = vld [vmem:[%s6196 + $0x68] sm:$0xf]
    %v6224 = vld [vmem:[%s6196 + $0x6c] sm:$0xf]
    %v6225 = vld [vmem:[%s6196 + $0x70] sm:$0xf]
    %v6226 = vld [vmem:[%s6196 + $0x74] sm:$0xf]
    %v6227 = vld [vmem:[%s6196 + $0x78] sm:$0xf]
    %v6228 = vld [vmem:[%s6196 + $0x7c] sm:$0xf]
    %v6261 = vunpack.c.l.b16 %v6197
    %v6262 = vunpack.c.l.b16 %v6198
    %v6263 = vunpack.c.l.b16 %v6199
    %v6264 = vunpack.c.l.b16 %v6200
    %v6265 = vunpack.c.l.b16 %v6201
    %v6266 = vunpack.c.l.b16 %v6202
    %v6267 = vunpack.c.l.b16 %v6203
    %v6268 = vunpack.c.l.b16 %v6204
    %v6269 = vunpack.c.l.b16 %v6205
    %v6270 = vunpack.c.l.b16 %v6206
    %v6271 = vunpack.c.l.b16 %v6207
    %v6272 = vunpack.c.l.b16 %v6208
    %v6273 = vunpack.c.l.b16 %v6209
    %v6274 = vunpack.c.l.b16 %v6210
    %v6275 = vunpack.c.l.b16 %v6211
    %v6276 = vunpack.c.l.b16 %v6212
    %v6277 = vunpack.c.l.b16 %v6213
    %v6278 = vunpack.c.l.b16 %v6214
    %v6279 = vunpack.c.l.b16 %v6215
    %v6280 = vunpack.c.l.b16 %v6216
    %v6281 = vunpack.c.l.b16 %v6217
    %v6282 = vunpack.c.l.b16 %v6218
    %v6283 = vunpack.c.l.b16 %v6219
    %v6284 = vunpack.c.l.b16 %v6220
    %v6285 = vunpack.c.l.b16 %v6221
    %v6286 = vunpack.c.l.b16 %v6222
    %v6287 = vunpack.c.l.b16 %v6223
    %v6288 = vunpack.c.l.b16 %v6224
    %v6289 = vunpack.c.l.b16 %v6225
    %v6290 = vunpack.c.l.b16 %v6226
    %v6291 = vunpack.c.l.b16 %v6227
    %v6292 = vunpack.c.l.b16 %v6228
    %v6293 = vpack.c.b16 %v6262, %v6261
    %v6294 = vpack.c.b16 %v6264, %v6263
    %v6295 = vpack.c.b16 %v6266, %v6265
    %v6296 = vpack.c.b16 %v6268, %v6267
    %v6297 = vpack.c.b16 %v6270, %v6269
    %v6298 = vpack.c.b16 %v6272, %v6271
    %v6299 = vpack.c.b16 %v6274, %v6273
    %v6300 = vpack.c.b16 %v6276, %v6275
    %v6301 = vpack.c.b16 %v6278, %v6277
    %v6302 = vpack.c.b16 %v6280, %v6279
    %v6303 = vpack.c.b16 %v6282, %v6281
    %v6304 = vpack.c.b16 %v6284, %v6283
    %v6305 = vpack.c.b16 %v6286, %v6285
    %v6306 = vpack.c.b16 %v6288, %v6287
    %v6307 = vpack.c.b16 %v6290, %v6289
    %v6308 = vpack.c.b16 %v6292, %v6291
    %6325 = vmatprep.subr.bf16.mxu0 0
    %6326 = vmatpush1.bf16.msra.mxu0 %v6300
    %6327 = vmatprep.subr.bf16.mxu0 0
    %6328 = vmatpush1.bf16.msra.mxu0 %v6299
    %6329 = vmatprep.subr.bf16.mxu0 0
    %6330 = vmatpush1.bf16.msra.mxu0 %v6298
    %6331 = vmatprep.subr.bf16.mxu0 0
    %6332 = vmatpush1.bf16.msra.mxu0 %v6297
    %6333 = vmatprep.subr.bf16.mxu0 0
    %6334 = vmatpush1.bf16.msra.mxu0 %v6296
    %6335 = vmatprep.subr.bf16.mxu0 0
    %6336 = vmatpush1.bf16.msra.mxu0 %v6295
    %6337 = vmatprep.subr.bf16.mxu0 0
    %6338 = vmatpush1.bf16.msra.mxu0 %v6294
    %6339 = vmatprep.subr.bf16.mxu0 0
    %6340 = vmatpush1.bf16.msra.mxu0 %v6293
    %6341 = vmatprep.subr.bf16.mxu0 0
    %6342 = vmatpush2.bf16.msra.mxu0 %v6308
    %6343 = vmatprep.subr.bf16.mxu0 0
    %6344 = vmatpush2.bf16.msra.mxu0 %v6307
    %6345 = vmatprep.subr.bf16.mxu0 0
    %6346 = vmatpush2.bf16.msra.mxu0 %v6306
    %6347 = vmatprep.subr.bf16.mxu0 0
    %6348 = vmatpush2.bf16.msra.mxu0 %v6305
    %6349 = vmatprep.subr.bf16.mxu0 0
    %6350 = vmatpush2.bf16.msra.mxu0 %v6304
    %6351 = vmatprep.subr.bf16.mxu0 0
    %6352 = vmatpush2.bf16.msra.mxu0 %v6303
    %6353 = vmatprep.subr.bf16.mxu0 0
    %6354 = vmatpush2.bf16.msra.mxu0 %v6302
    %6355 = vmatprep.subr.bf16.mxu0 0
    %6356 = vmatpush2.bf16.msra.mxu0 %v6301
    %6357 = vmatprep.mubr.bf16.mxu0 %v6195
    %6358 = vmatmul.mubr.bf16.gmra.mxu0 %v6194
    %v6359 = vpop.f32.mrf.mxu0
    %v6360 = vadd.f32 0.0, %v6359
    %v6361 = vpop.f32.mrf.mxu0
    %v6362 = vpop.f32.mrf.mxu0
    %v6363 = vpop.f32.mrf.mxu0
    %6364 = vdwg.mxu0
    %v6365 = vadd.f32 %v6143, %v6360
    %s6366 = scalar_lea.vmem [#allocation10], 6
    %v6367 = vld [vmem:[%s6366] sm:$0x3]
    %v6369 = vsel %vm2786, %v6367, 0
    %6371 = vmatprep.subr.bf16.mxu0 0
    %6372 = vmatpush1.bf16.msra.mxu0 0
    %6373 = vmatprep.subr.bf16.mxu0 0
    %6374 = vmatpush1.bf16.msra.mxu0 0
    %6375 = vmatprep.subr.bf16.mxu0 0
    %6376 = vmatpush1.bf16.msra.mxu0 0
    %6377 = vmatprep.subr.bf16.mxu0 0
    %6378 = vmatpush1.bf16.msra.mxu0 0
    %6379 = vmatprep.subr.bf16.mxu0 0
    %6380 = vmatpush1.bf16.msra.mxu0 0
    %6381 = vmatprep.subr.bf16.mxu0 0
    %6382 = vmatpush1.bf16.msra.mxu0 0
    %6383 = vmatprep.subr.bf16.mxu0 0
    %6384 = vmatpush1.bf16.msra.mxu0 0
    %6385 = vmatprep.subr.bf16.mxu0 %v5715
    %6386 = vmatpush1.bf16.msra.mxu0 %v5714
    %6387 = vmatprep.subr.bf16.mxu0 0
    %6388 = vmatpush2.bf16.msra.mxu0 0
    %6389 = vmatprep.subr.bf16.mxu0 0
    %6390 = vmatpush2.bf16.msra.mxu0 0
    %6391 = vmatprep.subr.bf16.mxu0 0
    %6392 = vmatpush2.bf16.msra.mxu0 0
    %6393 = vmatprep.subr.bf16.mxu0 0
    %6394 = vmatpush2.bf16.msra.mxu0 0
    %6395 = vmatprep.subr.bf16.mxu0 0
    %6396 = vmatpush2.bf16.msra.mxu0 0
    %6397 = vmatprep.subr.bf16.mxu0 0
    %6398 = vmatpush2.bf16.msra.mxu0 0
    %6399 = vmatprep.subr.bf16.mxu0 0
    %6400 = vmatpush2.bf16.msra.mxu0 0
    %6401 = vmatprep.subr.bf16.mxu0 0
    %6402 = vmatpush2.bf16.msra.mxu0 0
    %6403 = vmatprep.mubr.bf16.mxu0 0
    %6404 = vmatmul.mubr.bf16.gmra.mxu0 %v6369
    %v6405 = vpop.f32.mrf.mxu0
    %v6406 = vadd.f32 0.0, %v6405
    %v6407 = vpop.f32.mrf.mxu0
    %v6408 = vadd.f32 0.0, %v6407
    %v6409 = vpop.f32.mrf.mxu0
    %v6410 = vpop.f32.mrf.mxu0
    %6411 = vdwg.mxu0
    %v6412 = vpack.c.bf16 %v6406, %v6406
    %v6413 = vpack.c.bf16 %v6408, %v6408
    %s6414 = scalar_lea.vmem %s15, 384
    %v6415 = vld [vmem:[%s6414] sm:$0xf]
    %v6416 = vld [vmem:[%s6414 + $0x4] sm:$0xf]
    %v6417 = vld [vmem:[%s6414 + $0x8] sm:$0xf]
    %v6418 = vld [vmem:[%s6414 + $0xc] sm:$0xf]
    %v6419 = vld [vmem:[%s6414 + $0x10] sm:$0xf]
    %v6420 = vld [vmem:[%s6414 + $0x14] sm:$0xf]
    %v6421 = vld [vmem:[%s6414 + $0x18] sm:$0xf]
    %v6422 = vld [vmem:[%s6414 + $0x1c] sm:$0xf]
    %v6423 = vld [vmem:[%s6414 + $0x20] sm:$0xf]
    %v6424 = vld [vmem:[%s6414 + $0x24] sm:$0xf]
    %v6425 = vld [vmem:[%s6414 + $0x28] sm:$0xf]
    %v6426 = vld [vmem:[%s6414 + $0x2c] sm:$0xf]
    %v6427 = vld [vmem:[%s6414 + $0x30] sm:$0xf]
    %v6428 = vld [vmem:[%s6414 + $0x34] sm:$0xf]
    %v6429 = vld [vmem:[%s6414 + $0x38] sm:$0xf]
    %v6430 = vld [vmem:[%s6414 + $0x3c] sm:$0xf]
    %v6431 = vld [vmem:[%s6414 + $0x40] sm:$0xf]
    %v6432 = vld [vmem:[%s6414 + $0x44] sm:$0xf]
    %v6433 = vld [vmem:[%s6414 + $0x48] sm:$0xf]
    %v6434 = vld [vmem:[%s6414 + $0x4c] sm:$0xf]
    %v6435 = vld [vmem:[%s6414 + $0x50] sm:$0xf]
    %v6436 = vld [vmem:[%s6414 + $0x54] sm:$0xf]
    %v6437 = vld [vmem:[%s6414 + $0x58] sm:$0xf]
    %v6438 = vld [vmem:[%s6414 + $0x5c] sm:$0xf]
    %v6439 = vld [vmem:[%s6414 + $0x60] sm:$0xf]
    %v6440 = vld [vmem:[%s6414 + $0x64] sm:$0xf]
    %v6441 = vld [vmem:[%s6414 + $0x68] sm:$0xf]
    %v6442 = vld [vmem:[%s6414 + $0x6c] sm:$0xf]
    %v6443 = vld [vmem:[%s6414 + $0x70] sm:$0xf]
    %v6444 = vld [vmem:[%s6414 + $0x74] sm:$0xf]
    %v6445 = vld [vmem:[%s6414 + $0x78] sm:$0xf]
    %v6446 = vld [vmem:[%s6414 + $0x7c] sm:$0xf]
    %v6479 = vunpack.c.l.b16 %v6415
    %v6480 = vunpack.c.l.b16 %v6416
    %v6481 = vunpack.c.l.b16 %v6417
    %v6482 = vunpack.c.l.b16 %v6418
    %v6483 = vunpack.c.l.b16 %v6419
    %v6484 = vunpack.c.l.b16 %v6420
    %v6485 = vunpack.c.l.b16 %v6421
    %v6486 = vunpack.c.l.b16 %v6422
    %v6487 = vunpack.c.l.b16 %v6423
    %v6488 = vunpack.c.l.b16 %v6424
    %v6489 = vunpack.c.l.b16 %v6425
    %v6490 = vunpack.c.l.b16 %v6426
    %v6491 = vunpack.c.l.b16 %v6427
    %v6492 = vunpack.c.l.b16 %v6428
    %v6493 = vunpack.c.l.b16 %v6429
    %v6494 = vunpack.c.l.b16 %v6430
    %v6495 = vunpack.c.l.b16 %v6431
    %v6496 = vunpack.c.l.b16 %v6432
    %v6497 = vunpack.c.l.b16 %v6433
    %v6498 = vunpack.c.l.b16 %v6434
    %v6499 = vunpack.c.l.b16 %v6435
    %v6500 = vunpack.c.l.b16 %v6436
    %v6501 = vunpack.c.l.b16 %v6437
    %v6502 = vunpack.c.l.b16 %v6438
    %v6503 = vunpack.c.l.b16 %v6439
    %v6504 = vunpack.c.l.b16 %v6440
    %v6505 = vunpack.c.l.b16 %v6441
    %v6506 = vunpack.c.l.b16 %v6442
    %v6507 = vunpack.c.l.b16 %v6443
    %v6508 = vunpack.c.l.b16 %v6444
    %v6509 = vunpack.c.l.b16 %v6445
    %v6510 = vunpack.c.l.b16 %v6446
    %v6511 = vpack.c.b16 %v6480, %v6479
    %v6512 = vpack.c.b16 %v6482, %v6481
    %v6513 = vpack.c.b16 %v6484, %v6483
    %v6514 = vpack.c.b16 %v6486, %v6485
    %v6515 = vpack.c.b16 %v6488, %v6487
    %v6516 = vpack.c.b16 %v6490, %v6489
    %v6517 = vpack.c.b16 %v6492, %v6491
    %v6518 = vpack.c.b16 %v6494, %v6493
    %v6519 = vpack.c.b16 %v6496, %v6495
    %v6520 = vpack.c.b16 %v6498, %v6497
    %v6521 = vpack.c.b16 %v6500, %v6499
    %v6522 = vpack.c.b16 %v6502, %v6501
    %v6523 = vpack.c.b16 %v6504, %v6503
    %v6524 = vpack.c.b16 %v6506, %v6505
    %v6525 = vpack.c.b16 %v6508, %v6507
    %v6526 = vpack.c.b16 %v6510, %v6509
    %6543 = vmatprep.subr.bf16.mxu0 0
    %6544 = vmatpush1.bf16.msra.mxu0 %v6518
    %6545 = vmatprep.subr.bf16.mxu0 0
    %6546 = vmatpush1.bf16.msra.mxu0 %v6517
    %6547 = vmatprep.subr.bf16.mxu0 0
    %6548 = vmatpush1.bf16.msra.mxu0 %v6516
    %6549 = vmatprep.subr.bf16.mxu0 0
    %6550 = vmatpush1.bf16.msra.mxu0 %v6515
    %6551 = vmatprep.subr.bf16.mxu0 0
    %6552 = vmatpush1.bf16.msra.mxu0 %v6514
    %6553 = vmatprep.subr.bf16.mxu0 0
    %6554 = vmatpush1.bf16.msra.mxu0 %v6513
    %6555 = vmatprep.subr.bf16.mxu0 0
    %6556 = vmatpush1.bf16.msra.mxu0 %v6512
    %6557 = vmatprep.subr.bf16.mxu0 0
    %6558 = vmatpush1.bf16.msra.mxu0 %v6511
    %6559 = vmatprep.subr.bf16.mxu0 0
    %6560 = vmatpush2.bf16.msra.mxu0 %v6526
    %6561 = vmatprep.subr.bf16.mxu0 0
    %6562 = vmatpush2.bf16.msra.mxu0 %v6525
    %6563 = vmatprep.subr.bf16.mxu0 0
    %6564 = vmatpush2.bf16.msra.mxu0 %v6524
    %6565 = vmatprep.subr.bf16.mxu0 0
    %6566 = vmatpush2.bf16.msra.mxu0 %v6523
    %6567 = vmatprep.subr.bf16.mxu0 0
    %6568 = vmatpush2.bf16.msra.mxu0 %v6522
    %6569 = vmatprep.subr.bf16.mxu0 0
    %6570 = vmatpush2.bf16.msra.mxu0 %v6521
    %6571 = vmatprep.subr.bf16.mxu0 0
    %6572 = vmatpush2.bf16.msra.mxu0 %v6520
    %6573 = vmatprep.subr.bf16.mxu0 0
    %6574 = vmatpush2.bf16.msra.mxu0 %v6519
    %6575 = vmatprep.mubr.bf16.mxu0 %v6413
    %6576 = vmatmul.mubr.bf16.gmra.mxu0 %v6412
    %v6577 = vpop.f32.mrf.mxu0
    %v6578 = vadd.f32 0.0, %v6577
    %v6579 = vpop.f32.mrf.mxu0
    %v6580 = vpop.f32.mrf.mxu0
    %v6581 = vpop.f32.mrf.mxu0
    %6582 = vdwg.mxu0
    %v6583 = vadd.f32 %v6365, %v6578
    %s6584 = scalar_lea.vmem [#allocation10], 8
    %v6585 = vld [vmem:[%s6584] sm:$0x3]
    %v6587 = vsel %vm2786, %v6585, 0
    %6589 = vmatprep.subr.bf16.mxu0 0
    %6590 = vmatpush1.bf16.msra.mxu0 0
    %6591 = vmatprep.subr.bf16.mxu0 0
    %6592 = vmatpush1.bf16.msra.mxu0 0
    %6593 = vmatprep.subr.bf16.mxu0 0
    %6594 = vmatpush1.bf16.msra.mxu0 0
    %6595 = vmatprep.subr.bf16.mxu0 0
    %6596 = vmatpush1.bf16.msra.mxu0 0
    %6597 = vmatprep.subr.bf16.mxu0 0
    %6598 = vmatpush1.bf16.msra.mxu0 0
    %6599 = vmatprep.subr.bf16.mxu0 0
    %6600 = vmatpush1.bf16.msra.mxu0 0
    %6601 = vmatprep.subr.bf16.mxu0 0
    %6602 = vmatpush1.bf16.msra.mxu0 0
    %6603 = vmatprep.subr.bf16.mxu0 %v5715
    %6604 = vmatpush1.bf16.msra.mxu0 %v5714
    %6605 = vmatprep.subr.bf16.mxu0 0
    %6606 = vmatpush2.bf16.msra.mxu0 0
    %6607 = vmatprep.subr.bf16.mxu0 0
    %6608 = vmatpush2.bf16.msra.mxu0 0
    %6609 = vmatprep.subr.bf16.mxu0 0
    %6610 = vmatpush2.bf16.msra.mxu0 0
    %6611 = vmatprep.subr.bf16.mxu0 0
    %6612 = vmatpush2.bf16.msra.mxu0 0
    %6613 = vmatprep.subr.bf16.mxu0 0
    %6614 = vmatpush2.bf16.msra.mxu0 0
    %6615 = vmatprep.subr.bf16.mxu0 0
    %6616 = vmatpush2.bf16.msra.mxu0 0
    %6617 = vmatprep.subr.bf16.mxu0 0
    %6618 = vmatpush2.bf16.msra.mxu0 0
    %6619 = vmatprep.subr.bf16.mxu0 0
    %6620 = vmatpush2.bf16.msra.mxu0 0
    %6621 = vmatprep.mubr.bf16.mxu0 0
    %6622 = vmatmul.mubr.bf16.gmra.mxu0 %v6587
    %v6623 = vpop.f32.mrf.mxu0
    %v6624 = vadd.f32 0.0, %v6623
    %v6625 = vpop.f32.mrf.mxu0
    %v6626 = vadd.f32 0.0, %v6625
    %v6627 = vpop.f32.mrf.mxu0
    %v6628 = vpop.f32.mrf.mxu0
    %6629 = vdwg.mxu0
    %v6630 = vpack.c.bf16 %v6624, %v6624
    %v6631 = vpack.c.bf16 %v6626, %v6626
    %s6632 = scalar_lea.vmem %s15, 512
    %v6633 = vld [vmem:[%s6632] sm:$0xf]
    %v6634 = vld [vmem:[%s6632 + $0x4] sm:$0xf]
    %v6635 = vld [vmem:[%s6632 + $0x8] sm:$0xf]
    %v6636 = vld [vmem:[%s6632 + $0xc] sm:$0xf]
    %v6637 = vld [vmem:[%s6632 + $0x10] sm:$0xf]
    %v6638 = vld [vmem:[%s6632 + $0x14] sm:$0xf]
    %v6639 = vld [vmem:[%s6632 + $0x18] sm:$0xf]
    %v6640 = vld [vmem:[%s6632 + $0x1c] sm:$0xf]
    %v6641 = vld [vmem:[%s6632 + $0x20] sm:$0xf]
    %v6642 = vld [vmem:[%s6632 + $0x24] sm:$0xf]
    %v6643 = vld [vmem:[%s6632 + $0x28] sm:$0xf]
    %v6644 = vld [vmem:[%s6632 + $0x2c] sm:$0xf]
    %v6645 = vld [vmem:[%s6632 + $0x30] sm:$0xf]
    %v6646 = vld [vmem:[%s6632 + $0x34] sm:$0xf]
    %v6647 = vld [vmem:[%s6632 + $0x38] sm:$0xf]
    %v6648 = vld [vmem:[%s6632 + $0x3c] sm:$0xf]
    %v6649 = vld [vmem:[%s6632 + $0x40] sm:$0xf]
    %v6650 = vld [vmem:[%s6632 + $0x44] sm:$0xf]
    %v6651 = vld [vmem:[%s6632 + $0x48] sm:$0xf]
    %v6652 = vld [vmem:[%s6632 + $0x4c] sm:$0xf]
    %v6653 = vld [vmem:[%s6632 + $0x50] sm:$0xf]
    %v6654 = vld [vmem:[%s6632 + $0x54] sm:$0xf]
    %v6655 = vld [vmem:[%s6632 + $0x58] sm:$0xf]
    %v6656 = vld [vmem:[%s6632 + $0x5c] sm:$0xf]
    %v6657 = vld [vmem:[%s6632 + $0x60] sm:$0xf]
    %v6658 = vld [vmem:[%s6632 + $0x64] sm:$0xf]
    %v6659 = vld [vmem:[%s6632 + $0x68] sm:$0xf]
    %v6660 = vld [vmem:[%s6632 + $0x6c] sm:$0xf]
    %v6661 = vld [vmem:[%s6632 + $0x70] sm:$0xf]
    %v6662 = vld [vmem:[%s6632 + $0x74] sm:$0xf]
    %v6663 = vld [vmem:[%s6632 + $0x78] sm:$0xf]
    %v6664 = vld [vmem:[%s6632 + $0x7c] sm:$0xf]
    %v6697 = vunpack.c.l.b16 %v6633
    %v6698 = vunpack.c.l.b16 %v6634
    %v6699 = vunpack.c.l.b16 %v6635
    %v6700 = vunpack.c.l.b16 %v6636
    %v6701 = vunpack.c.l.b16 %v6637
    %v6702 = vunpack.c.l.b16 %v6638
    %v6703 = vunpack.c.l.b16 %v6639
    %v6704 = vunpack.c.l.b16 %v6640
    %v6705 = vunpack.c.l.b16 %v6641
    %v6706 = vunpack.c.l.b16 %v6642
    %v6707 = vunpack.c.l.b16 %v6643
    %v6708 = vunpack.c.l.b16 %v6644
    %v6709 = vunpack.c.l.b16 %v6645
    %v6710 = vunpack.c.l.b16 %v6646
    %v6711 = vunpack.c.l.b16 %v6647
    %v6712 = vunpack.c.l.b16 %v6648
    %v6713 = vunpack.c.l.b16 %v6649
    %v6714 = vunpack.c.l.b16 %v6650
    %v6715 = vunpack.c.l.b16 %v6651
    %v6716 = vunpack.c.l.b16 %v6652
    %v6717 = vunpack.c.l.b16 %v6653
    %v6718 = vunpack.c.l.b16 %v6654
    %v6719 = vunpack.c.l.b16 %v6655
    %v6720 = vunpack.c.l.b16 %v6656
    %v6721 = vunpack.c.l.b16 %v6657
    %v6722 = vunpack.c.l.b16 %v6658
    %v6723 = vunpack.c.l.b16 %v6659
    %v6724 = vunpack.c.l.b16 %v6660
    %v6725 = vunpack.c.l.b16 %v6661
    %v6726 = vunpack.c.l.b16 %v6662
    %v6727 = vunpack.c.l.b16 %v6663
    %v6728 = vunpack.c.l.b16 %v6664
    %v6729 = vpack.c.b16 %v6698, %v6697
    %v6730 = vpack.c.b16 %v6700, %v6699
    %v6731 = vpack.c.b16 %v6702, %v6701
    %v6732 = vpack.c.b16 %v6704, %v6703
    %v6733 = vpack.c.b16 %v6706, %v6705
    %v6734 = vpack.c.b16 %v6708, %v6707
    %v6735 = vpack.c.b16 %v6710, %v6709
    %v6736 = vpack.c.b16 %v6712, %v6711
    %v6737 = vpack.c.b16 %v6714, %v6713
    %v6738 = vpack.c.b16 %v6716, %v6715
    %v6739 = vpack.c.b16 %v6718, %v6717
    %v6740 = vpack.c.b16 %v6720, %v6719
    %v6741 = vpack.c.b16 %v6722, %v6721
    %v6742 = vpack.c.b16 %v6724, %v6723
    %v6743 = vpack.c.b16 %v6726, %v6725
    %v6744 = vpack.c.b16 %v6728, %v6727
    %6761 = vmatprep.subr.bf16.mxu0 0
    %6762 = vmatpush1.bf16.msra.mxu0 %v6736
    %6763 = vmatprep.subr.bf16.mxu0 0
    %6764 = vmatpush1.bf16.msra.mxu0 %v6735
    %6765 = vmatprep.subr.bf16.mxu0 0
    %6766 = vmatpush1.bf16.msra.mxu0 %v6734
    %6767 = vmatprep.subr.bf16.mxu0 0
    %6768 = vmatpush1.bf16.msra.mxu0 %v6733
    %6769 = vmatprep.subr.bf16.mxu0 0
    %6770 = vmatpush1.bf16.msra.mxu0 %v6732
    %6771 = vmatprep.subr.bf16.mxu0 0
    %6772 = vmatpush1.bf16.msra.mxu0 %v6731
    %6773 = vmatprep.subr.bf16.mxu0 0
    %6774 = vmatpush1.bf16.msra.mxu0 %v6730
    %6775 = vmatprep.subr.bf16.mxu0 0
    %6776 = vmatpush1.bf16.msra.mxu0 %v6729
    %6777 = vmatprep.subr.bf16.mxu0 0
    %6778 = vmatpush2.bf16.msra.mxu0 %v6744
    %6779 = vmatprep.subr.bf16.mxu0 0
    %6780 = vmatpush2.bf16.msra.mxu0 %v6743
    %6781 = vmatprep.subr.bf16.mxu0 0
    %6782 = vmatpush2.bf16.msra.mxu0 %v6742
    %6783 = vmatprep.subr.bf16.mxu0 0
    %6784 = vmatpush2.bf16.msra.mxu0 %v6741
    %6785 = vmatprep.subr.bf16.mxu0 0
    %6786 = vmatpush2.bf16.msra.mxu0 %v6740
    %6787 = vmatprep.subr.bf16.mxu0 0
    %6788 = vmatpush2.bf16.msra.mxu0 %v6739
    %6789 = vmatprep.subr.bf16.mxu0 0
    %6790 = vmatpush2.bf16.msra.mxu0 %v6738
    %6791 = vmatprep.subr.bf16.mxu0 0
    %6792 = vmatpush2.bf16.msra.mxu0 %v6737
    %6793 = vmatprep.mubr.bf16.mxu0 %v6631
    %6794 = vmatmul.mubr.bf16.gmra.mxu0 %v6630
    %v6795 = vpop.f32.mrf.mxu0
    %v6796 = vadd.f32 0.0, %v6795
    %v6797 = vpop.f32.mrf.mxu0
    %v6798 = vpop.f32.mrf.mxu0
    %v6799 = vpop.f32.mrf.mxu0
    %6800 = vdwg.mxu0
    %v6801 = vadd.f32 %v6583, %v6796
    %vm6802 = vcmask 519168
    %v6803 = vsel %vm6802, %v6801, 0.0
    %v6804 = vrot.slane %v6803, 4
    %v6805 = vadd.f32 %v6803, %v6804
    %v6806 = vrot.slane %v6805, 2
    %v6807 = vadd.f32 %v6805, %v6806
    %v6808 = vrot.slane %v6807, 1
    %v6809 = vadd.f32 %v6807, %v6808
    %v6810 = vmul.f32 %v6801, %v6801
    %v6811 = vsel %vm6802, %v6810, 0.0
    %v6812 = vrot.slane %v6811, 4
    %v6813 = vadd.f32 %v6811, %v6812
    %v6814 = vrot.slane %v6813, 2
    %v6815 = vadd.f32 %v6813, %v6814
    %v6816 = vrot.slane %v6815, 1
    %v6817 = vadd.f32 %v6815, %v6816
    %v6818 = vld [vmem:[%s16] sm:$0xff]
    %v6819 = vld [vmem:[%s16 + $0x8] sm:$0xff]
    %v6820 = vld [vmem:[%s16 + $0x10] sm:$0xff]
    %v6821 = vld [vmem:[%s16 + $0x18] sm:$0xff]
    %v6822 = vld [vmem:[%s16 + $0x20] sm:$0xff]
    %v6823 = vld [vmem:[%s16 + $0x28] sm:$0xff]
    %v6824 = vld [vmem:[%s16 + $0x30] sm:$0xff]
    %v6825 = vld [vmem:[%s16 + $0x38] sm:$0xff]
    %v6827 = vsel %vm2376, %v6809, 0
    %6829 = vmatprep.subr.mxu0 0.0
    %6830 = vmatpush1.msra.mxu0 0.0
    %6831 = vmatprep.subr.mxu0 0.0
    %6832 = vmatpush1.msra.mxu0 0.0
    %6833 = vmatprep.subr.mxu0 0.0
    %6834 = vmatpush1.msra.mxu0 0.0
    %6835 = vmatprep.subr.mxu0 0.0
    %6836 = vmatpush1.msra.mxu0 0.0
    %6837 = vmatprep.subr.mxu0 0.0
    %6838 = vmatpush1.msra.mxu0 0.0
    %6839 = vmatprep.subr.mxu0 0.0
    %6840 = vmatpush1.msra.mxu0 0.0
    %6841 = vmatprep.subr.mxu0 0.0
    %6842 = vmatpush1.msra.mxu0 0.0
    %6843 = vmatprep.subr.mxu0 0.0
    %6844 = vmatpush1.msra.mxu0 0.0
    %6845 = vmatprep.subr.mxu0 0.0
    %6846 = vmatpush1.msra.mxu0 %v6825
    %6847 = vmatprep.subr.mxu0 0.0
    %6848 = vmatpush1.msra.mxu0 %v6824
    %6849 = vmatprep.subr.mxu0 0.0
    %6850 = vmatpush1.msra.mxu0 %v6823
    %6851 = vmatprep.subr.mxu0 0.0
    %6852 = vmatpush1.msra.mxu0 %v6822
    %6853 = vmatprep.subr.mxu0 0.0
    %6854 = vmatpush1.msra.mxu0 %v6821
    %6855 = vmatprep.subr.mxu0 0.0
    %6856 = vmatpush1.msra.mxu0 %v6820
    %6857 = vmatprep.subr.mxu0 0.0
    %6858 = vmatpush1.msra.mxu0 %v6819
    %6859 = vmatprep.subr.mxu0 0.0
    %6860 = vmatpush1.msra.mxu0 %v6818
    %6861 = vmatprep.subr.mxu0 0.0
    %6862 = vmatpush2.msra.mxu0 0.0
    %6863 = vmatprep.subr.mxu0 0.0
    %6864 = vmatpush2.msra.mxu0 0.0
    %6865 = vmatprep.subr.mxu0 0.0
    %6866 = vmatpush2.msra.mxu0 0.0
    %6867 = vmatprep.subr.mxu0 0.0
    %6868 = vmatpush2.msra.mxu0 0.0
    %6869 = vmatprep.subr.mxu0 0.0
    %6870 = vmatpush2.msra.mxu0 0.0
    %6871 = vmatprep.subr.mxu0 0.0
    %6872 = vmatpush2.msra.mxu0 0.0
    %6873 = vmatprep.subr.mxu0 0.0
    %6874 = vmatpush2.msra.mxu0 0.0
    %6875 = vmatprep.subr.mxu0 0.0
    %6876 = vmatpush2.msra.mxu0 0.0
    %6877 = vmatprep.subr.mxu0 0.0
    %6878 = vmatpush2.msra.mxu0 0.0
    %6879 = vmatprep.subr.mxu0 0.0
    %6880 = vmatpush2.msra.mxu0 0.0
    %6881 = vmatprep.subr.mxu0 0.0
    %6882 = vmatpush2.msra.mxu0 0.0
    %6883 = vmatprep.subr.mxu0 0.0
    %6884 = vmatpush2.msra.mxu0 0.0
    %6885 = vmatprep.subr.mxu0 0.0
    %6886 = vmatpush2.msra.mxu0 0.0
    %6887 = vmatprep.subr.mxu0 0.0
    %6888 = vmatpush2.msra.mxu0 0.0
    %6889 = vmatprep.subr.mxu0 0.0
    %6890 = vmatpush2.msra.mxu0 0.0
    %6891 = vmatprep.subr.mxu0 0.0
    %6892 = vmatpush2.msra.mxu0 0.0
    %6893 = vmatprep.mubr.f32.mxu0 0.0
    %6894 = vmatmul.mubr.f32.gmra.mxu0 %v6827
    %v6895 = vpop.f32.mrf.mxu0
    %v6896 = vadd.f32 0.0, %v6895
    %v6897 = vpop.f32.mrf.mxu0
    %6898 = vdwg.mxu0
    %v6899 = vmul.f32 %v6896, 0.125
    %v6901 = vsel %vm2376, %v6817, 0
    %6903 = vmatprep.subr.mxu0 0.0
    %6904 = vmatpush1.msra.mxu0 0.0
    %6905 = vmatprep.subr.mxu0 0.0
    %6906 = vmatpush1.msra.mxu0 0.0
    %6907 = vmatprep.subr.mxu0 0.0
    %6908 = vmatpush1.msra.mxu0 0.0
    %6909 = vmatprep.subr.mxu0 0.0
    %6910 = vmatpush1.msra.mxu0 0.0
    %6911 = vmatprep.subr.mxu0 0.0
    %6912 = vmatpush1.msra.mxu0 0.0
    %6913 = vmatprep.subr.mxu0 0.0
    %6914 = vmatpush1.msra.mxu0 0.0
    %6915 = vmatprep.subr.mxu0 0.0
    %6916 = vmatpush1.msra.mxu0 0.0
    %6917 = vmatprep.subr.mxu0 0.0
    %6918 = vmatpush1.msra.mxu0 0.0
    %6919 = vmatprep.subr.mxu0 0.0
    %6920 = vmatpush1.msra.mxu0 %v6825
    %6921 = vmatprep.subr.mxu0 0.0
    %6922 = vmatpush1.msra.mxu0 %v6824
    %6923 = vmatprep.subr.mxu0 0.0
    %6924 = vmatpush1.msra.mxu0 %v6823
    %6925 = vmatprep.subr.mxu0 0.0
    %6926 = vmatpush1.msra.mxu0 %v6822
    %6927 = vmatprep.subr.mxu0 0.0
    %6928 = vmatpush1.msra.mxu0 %v6821
    %6929 = vmatprep.subr.mxu0 0.0
    %6930 = vmatpush1.msra.mxu0 %v6820
    %6931 = vmatprep.subr.mxu0 0.0
    %6932 = vmatpush1.msra.mxu0 %v6819
    %6933 = vmatprep.subr.mxu0 0.0
    %6934 = vmatpush1.msra.mxu0 %v6818
    %6935 = vmatprep.subr.mxu0 0.0
    %6936 = vmatpush2.msra.mxu0 0.0
    %6937 = vmatprep.subr.mxu0 0.0
    %6938 = vmatpush2.msra.mxu0 0.0
    %6939 = vmatprep.subr.mxu0 0.0
    %6940 = vmatpush2.msra.mxu0 0.0
    %6941 = vmatprep.subr.mxu0 0.0
    %6942 = vmatpush2.msra.mxu0 0.0
    %6943 = vmatprep.subr.mxu0 0.0
    %6944 = vmatpush2.msra.mxu0 0.0
    %6945 = vmatprep.subr.mxu0 0.0
    %6946 = vmatpush2.msra.mxu0 0.0
    %6947 = vmatprep.subr.mxu0 0.0
    %6948 = vmatpush2.msra.mxu0 0.0
    %6949 = vmatprep.subr.mxu0 0.0
    %6950 = vmatpush2.msra.mxu0 0.0
    %6951 = vmatprep.subr.mxu0 0.0
    %6952 = vmatpush2.msra.mxu0 0.0
    %6953 = vmatprep.subr.mxu0 0.0
    %6954 = vmatpush2.msra.mxu0 0.0
    %6955 = vmatprep.subr.mxu0 0.0
    %6956 = vmatpush2.msra.mxu0 0.0
    %6957 = vmatprep.subr.mxu0 0.0
    %6958 = vmatpush2.msra.mxu0 0.0
    %6959 = vmatprep.subr.mxu0 0.0
    %6960 = vmatpush2.msra.mxu0 0.0
    %6961 = vmatprep.subr.mxu0 0.0
    %6962 = vmatpush2.msra.mxu0 0.0
    %6963 = vmatprep.subr.mxu0 0.0
    %6964 = vmatpush2.msra.mxu0 0.0
    %6965 = vmatprep.subr.mxu0 0.0
    %6966 = vmatpush2.msra.mxu0 0.0
    %6967 = vmatprep.mubr.f32.mxu0 0.0
    %6968 = vmatmul.mubr.f32.gmra.mxu0 %v6901
    %v6969 = vpop.f32.mrf.mxu0
    %v6970 = vadd.f32 0.0, %v6969
    %v6971 = vpop.f32.mrf.mxu0
    %6972 = vdwg.mxu0
    %v6973 = vmul.f32 %v6970, 0.125
    %v6974 = vmul.f32 %v6899, %v6899
    %v6975 = vsub.f32 %v6973, %v6974
    %v6976 = vmax.f32 %v6975, 0.0
    %v6977 = vld [vmem:[#allocation13] sm:$0x1]
    %v6978 = vadd.f32 %v6976, 1e-05
    %v6979 = vrsqrt.pop %v6978
    %v6980 = vmul.f32 %v6977, %v6979
    %v6981 = vld [vmem:[#allocation14] sm:$0x1]
    %v6982 = vmul.f32 %v6899, %v6980
    %v6983 = vsub.f32 %v6981, %v6982
    %v6984 = vld [vmem:[#allocation11] sm:$0xff]
    %v6985 = vld [vmem:[#allocation11 + $0x8] sm:$0xff]
    %v6986 = vld [vmem:[#allocation11 + $0x10] sm:$0xff]
    %v6987 = vld [vmem:[#allocation11 + $0x18] sm:$0xff]
    %v6989 = vsel %vm5537, %v6980, 0
    %6991 = vmatprep.subr.mxu0 0.0
    %6992 = vmatpush1.msra.mxu0 0.0
    %6993 = vmatprep.subr.mxu0 0.0
    %6994 = vmatpush1.msra.mxu0 0.0
    %6995 = vmatprep.subr.mxu0 0.0
    %6996 = vmatpush1.msra.mxu0 0.0
    %6997 = vmatprep.subr.mxu0 0.0
    %6998 = vmatpush1.msra.mxu0 0.0
    %6999 = vmatprep.subr.mxu0 0.0
    %7000 = vmatpush1.msra.mxu0 0.0
    %7001 = vmatprep.subr.mxu0 0.0
    %7002 = vmatpush1.msra.mxu0 0.0
    %7003 = vmatprep.subr.mxu0 0.0
    %7004 = vmatpush1.msra.mxu0 0.0
    %7005 = vmatprep.subr.mxu0 0.0
    %7006 = vmatpush1.msra.mxu0 0.0
    %7007 = vmatprep.subr.mxu0 0.0
    %7008 = vmatpush1.msra.mxu0 0.0
    %7009 = vmatprep.subr.mxu0 0.0
    %7010 = vmatpush1.msra.mxu0 0.0
    %7011 = vmatprep.subr.mxu0 0.0
    %7012 = vmatpush1.msra.mxu0 0.0
    %7013 = vmatprep.subr.mxu0 0.0
    %7014 = vmatpush1.msra.mxu0 0.0
    %7015 = vmatprep.subr.mxu0 0.0
    %7016 = vmatpush1.msra.mxu0 %v6987
    %7017 = vmatprep.subr.mxu0 0.0
    %7018 = vmatpush1.msra.mxu0 %v6986
    %7019 = vmatprep.subr.mxu0 0.0
    %7020 = vmatpush1.msra.mxu0 %v6985
    %7021 = vmatprep.subr.mxu0 0.0
    %7022 = vmatpush1.msra.mxu0 %v6984
    %7023 = vmatprep.subr.mxu0 0.0
    %7024 = vmatpush2.msra.mxu0 0.0
    %7025 = vmatprep.subr.mxu0 0.0
    %7026 = vmatpush2.msra.mxu0 0.0
    %7027 = vmatprep.subr.mxu0 0.0
    %7028 = vmatpush2.msra.mxu0 0.0
    %7029 = vmatprep.subr.mxu0 0.0
    %7030 = vmatpush2.msra.mxu0 0.0
    %7031 = vmatprep.subr.mxu0 0.0
    %7032 = vmatpush2.msra.mxu0 0.0
    %7033 = vmatprep.subr.mxu0 0.0
    %7034 = vmatpush2.msra.mxu0 0.0
    %7035 = vmatprep.subr.mxu0 0.0
    %7036 = vmatpush2.msra.mxu0 0.0
    %7037 = vmatprep.subr.mxu0 0.0
    %7038 = vmatpush2.msra.mxu0 0.0
    %7039 = vmatprep.subr.mxu0 0.0
    %7040 = vmatpush2.msra.mxu0 0.0
    %7041 = vmatprep.subr.mxu0 0.0
    %7042 = vmatpush2.msra.mxu0 0.0
    %7043 = vmatprep.subr.mxu0 0.0
    %7044 = vmatpush2.msra.mxu0 0.0
    %7045 = vmatprep.subr.mxu0 0.0
    %7046 = vmatpush2.msra.mxu0 0.0
    %7047 = vmatprep.subr.mxu0 0.0
    %7048 = vmatpush2.msra.mxu0 0.0
    %7049 = vmatprep.subr.mxu0 0.0
    %7050 = vmatpush2.msra.mxu0 0.0
    %7051 = vmatprep.subr.mxu0 0.0
    %7052 = vmatpush2.msra.mxu0 0.0
    %7053 = vmatprep.subr.mxu0 0.0
    %7054 = vmatpush2.msra.mxu0 0.0
    %7055 = vmatprep.mubr.f32.mxu0 0.0
    %7056 = vmatmul.mubr.f32.gmra.mxu0 %v6989
    %v7057 = vpop.f32.mrf.mxu0
    %v7058 = vadd.f32 0.0, %v7057
    %v7059 = vpop.f32.mrf.mxu0
    %7060 = vdwg.mxu0
    %v7062 = vsel %vm5537, %v6983, 0
    %7064 = vmatprep.subr.mxu0 0.0
    %7065 = vmatpush1.msra.mxu0 0.0
    %7066 = vmatprep.subr.mxu0 0.0
    %7067 = vmatpush1.msra.mxu0 0.0
    %7068 = vmatprep.subr.mxu0 0.0
    %7069 = vmatpush1.msra.mxu0 0.0
    %7070 = vmatprep.subr.mxu0 0.0
    %7071 = vmatpush1.msra.mxu0 0.0
    %7072 = vmatprep.subr.mxu0 0.0
    %7073 = vmatpush1.msra.mxu0 0.0
    %7074 = vmatprep.subr.mxu0 0.0
    %7075 = vmatpush1.msra.mxu0 0.0
    %7076 = vmatprep.subr.mxu0 0.0
    %7077 = vmatpush1.msra.mxu0 0.0
    %7078 = vmatprep.subr.mxu0 0.0
    %7079 = vmatpush1.msra.mxu0 0.0
    %7080 = vmatprep.subr.mxu0 0.0
    %7081 = vmatpush1.msra.mxu0 0.0
    %7082 = vmatprep.subr.mxu0 0.0
    %7083 = vmatpush1.msra.mxu0 0.0
    %7084 = vmatprep.subr.mxu0 0.0
    %7085 = vmatpush1.msra.mxu0 0.0
    %7086 = vmatprep.subr.mxu0 0.0
    %7087 = vmatpush1.msra.mxu0 0.0
    %7088 = vmatprep.subr.mxu0 0.0
    %7089 = vmatpush1.msra.mxu0 %v6987
    %7090 = vmatprep.subr.mxu0 0.0
    %7091 = vmatpush1.msra.mxu0 %v6986
    %7092 = vmatprep.subr.mxu0 0.0
    %7093 = vmatpush1.msra.mxu0 %v6985
    %7094 = vmatprep.subr.mxu0 0.0
    %7095 = vmatpush1.msra.mxu0 %v6984
    %7096 = vmatprep.subr.mxu0 0.0
    %7097 = vmatpush2.msra.mxu0 0.0
    %7098 = vmatprep.subr.mxu0 0.0
    %7099 = vmatpush2.msra.mxu0 0.0
    %7100 = vmatprep.subr.mxu0 0.0
    %7101 = vmatpush2.msra.mxu0 0.0
    %7102 = vmatprep.subr.mxu0 0.0
    %7103 = vmatpush2.msra.mxu0 0.0
    %7104 = vmatprep.subr.mxu0 0.0
    %7105 = vmatpush2.msra.mxu0 0.0
    %7106 = vmatprep.subr.mxu0 0.0
    %7107 = vmatpush2.msra.mxu0 0.0
    %7108 = vmatprep.subr.mxu0 0.0
    %7109 = vmatpush2.msra.mxu0 0.0
    %7110 = vmatprep.subr.mxu0 0.0
    %7111 = vmatpush2.msra.mxu0 0.0
    %7112 = vmatprep.subr.mxu0 0.0
    %7113 = vmatpush2.msra.mxu0 0.0
    %7114 = vmatprep.subr.mxu0 0.0
    %7115 = vmatpush2.msra.mxu0 0.0
    %7116 = vmatprep.subr.mxu0 0.0
    %7117 = vmatpush2.msra.mxu0 0.0
    %7118 = vmatprep.subr.mxu0 0.0
    %7119 = vmatpush2.msra.mxu0 0.0
    %7120 = vmatprep.subr.mxu0 0.0
    %7121 = vmatpush2.msra.mxu0 0.0
    %7122 = vmatprep.subr.mxu0 0.0
    %7123 = vmatpush2.msra.mxu0 0.0
    %7124 = vmatprep.subr.mxu0 0.0
    %7125 = vmatpush2.msra.mxu0 0.0
    %7126 = vmatprep.subr.mxu0 0.0
    %7127 = vmatpush2.msra.mxu0 0.0
    %7128 = vmatprep.mubr.f32.mxu0 0.0
    %7129 = vmatmul.mubr.f32.gmra.mxu0 %v7062
    %v7130 = vpop.f32.mrf.mxu0
    %v7131 = vadd.f32 0.0, %v7130
    %v7132 = vpop.f32.mrf.mxu0
    %7133 = vdwg.mxu0
    %v7134 = vlaneseq
    %v7135 = vshrl.u32 %v7134, 7
    %v7136 = vsub.s32 0, %v7135
    %v7137 = vrot.slane %v7058, %v7136
    %v7138 = vmul.f32 %v6801, %v7137
    %v7139 = vlaneseq
    %v7140 = vshrl.u32 %v7139, 7
    %v7141 = vsub.s32 0, %v7140
    %v7142 = vrot.slane %v7131, %v7141
    %v7143 = vadd.f32 %v7138, %v7142
    %v7144 = vmax.f32 %v7143, 0.0
    %v7145 = vpack.c.bf16 %v7144, %v7144
    %v7146 = vld [vmem:[#allocation16] sm:$0xf]
    %v7147 = vld [vmem:[#allocation16 + $0x4] sm:$0xf]
    %v7148 = vld [vmem:[#allocation16 + $0x8] sm:$0xf]
    %v7149 = vld [vmem:[#allocation16 + $0xc] sm:$0xf]
    %v7150 = vld [vmem:[#allocation16 + $0x10] sm:$0xf]
    %v7151 = vld [vmem:[#allocation16 + $0x14] sm:$0xf]
    %v7152 = vld [vmem:[#allocation16 + $0x18] sm:$0xf]
    %v7153 = vld [vmem:[#allocation16 + $0x1c] sm:$0xf]
    %v7154 = vld [vmem:[#allocation17] sm:$0xf]
    %v7155 = vld [vmem:[#allocation17 + $0x4] sm:$0xf]
    %v7156 = vld [vmem:[#allocation17 + $0x8] sm:$0xf]
    %v7157 = vld [vmem:[#allocation17 + $0xc] sm:$0xf]
    %v7158 = vld [vmem:[#allocation17 + $0x10] sm:$0xf]
    %v7159 = vld [vmem:[#allocation17 + $0x14] sm:$0xf]
    %v7160 = vld [vmem:[#allocation17 + $0x18] sm:$0xf]
    %v7161 = vld [vmem:[#allocation17 + $0x1c] sm:$0xf]
    %v7163 = vrot.slane %v7145, 1
    %v7172 = vunpack.c.l.b16 %v7154
    %v7173 = vunpack.c.l.b16 %v7155
    %v7174 = vunpack.c.l.b16 %v7156
    %v7175 = vunpack.c.l.b16 %v7157
    %v7176 = vunpack.c.l.b16 %v7158
    %v7177 = vunpack.c.l.b16 %v7159
    %v7178 = vunpack.c.l.b16 %v7160
    %v7179 = vunpack.c.l.b16 %v7161
    %v7180 = vpack.c.b16 %v7173, %v7172
    %v7181 = vpack.c.b16 %v7175, %v7174
    %v7182 = vpack.c.b16 %v7177, %v7176
    %v7183 = vpack.c.b16 %v7179, %v7178
    %v7189 = vsel %vm2376, %v7163, 0
    %7191 = vmatprep.subr.bf16.mxu0 0
    %7192 = vmatpush1.bf16.msra.mxu0 0
    %7193 = vmatprep.subr.bf16.mxu0 0
    %7194 = vmatpush1.bf16.msra.mxu0 0
    %7195 = vmatprep.subr.bf16.mxu0 0
    %7196 = vmatpush1.bf16.msra.mxu0 0
    %7197 = vmatprep.subr.bf16.mxu0 0
    %7198 = vmatpush1.bf16.msra.mxu0 0
    %7199 = vmatprep.subr.bf16.mxu0 0
    %7200 = vmatpush1.bf16.msra.mxu0 %v7183
    %7201 = vmatprep.subr.bf16.mxu0 0
    %7202 = vmatpush1.bf16.msra.mxu0 %v7182
    %7203 = vmatprep.subr.bf16.mxu0 0
    %7204 = vmatpush1.bf16.msra.mxu0 %v7181
    %7205 = vmatprep.subr.bf16.mxu0 0
    %7206 = vmatpush1.bf16.msra.mxu0 %v7180
    %7207 = vmatprep.subr.bf16.mxu0 0
    %7208 = vmatpush2.bf16.msra.mxu0 0
    %7209 = vmatprep.subr.bf16.mxu0 0
    %7210 = vmatpush2.bf16.msra.mxu0 0
    %7211 = vmatprep.subr.bf16.mxu0 0
    %7212 = vmatpush2.bf16.msra.mxu0 0
    %7213 = vmatprep.subr.bf16.mxu0 0
    %7214 = vmatpush2.bf16.msra.mxu0 0
    %7215 = vmatprep.subr.bf16.mxu0 0
    %7216 = vmatpush2.bf16.msra.mxu0 0
    %7217 = vmatprep.subr.bf16.mxu0 0
    %7218 = vmatpush2.bf16.msra.mxu0 0
    %7219 = vmatprep.subr.bf16.mxu0 0
    %7220 = vmatpush2.bf16.msra.mxu0 0
    %7221 = vmatprep.subr.bf16.mxu0 0
    %7222 = vmatpush2.bf16.msra.mxu0 0
    %7223 = vmatprep.mubr.bf16.mxu0 0
    %7224 = vmatmul.mubr.bf16.gmra.mxu0 %v7189
    %v7225 = vpop.f32.mrf.mxu0
    %v7226 = vadd.f32 0.0, %v7225
    %v7227 = vpop.f32.mrf.mxu0
    %v7228 = vpop.f32.mrf.mxu0
    %v7229 = vpop.f32.mrf.mxu0
    %7230 = vdwg.mxu0
    %v7239 = vunpack.c.l.b16 %v7146
    %v7240 = vunpack.c.l.b16 %v7147
    %v7241 = vunpack.c.l.b16 %v7148
    %v7242 = vunpack.c.l.b16 %v7149
    %v7243 = vunpack.c.l.b16 %v7150
    %v7244 = vunpack.c.l.b16 %v7151
    %v7245 = vunpack.c.l.b16 %v7152
    %v7246 = vunpack.c.l.b16 %v7153
    %v7247 = vpack.c.b16 %v7240, %v7239
    %v7248 = vpack.c.b16 %v7242, %v7241
    %v7249 = vpack.c.b16 %v7244, %v7243
    %v7250 = vpack.c.b16 %v7246, %v7245
    %v7256 = vsel %vm2376, %v7145, 0
    %7258 = vmatprep.subr.bf16.mxu0 0
    %7259 = vmatpush1.bf16.msra.mxu0 0
    %7260 = vmatprep.subr.bf16.mxu0 0
    %7261 = vmatpush1.bf16.msra.mxu0 0
    %7262 = vmatprep.subr.bf16.mxu0 0
    %7263 = vmatpush1.bf16.msra.mxu0 0
    %7264 = vmatprep.subr.bf16.mxu0 0
    %7265 = vmatpush1.bf16.msra.mxu0 0
    %7266 = vmatprep.subr.bf16.mxu0 0
    %7267 = vmatpush1.bf16.msra.mxu0 %v7250
    %7268 = vmatprep.subr.bf16.mxu0 0
    %7269 = vmatpush1.bf16.msra.mxu0 %v7249
    %7270 = vmatprep.subr.bf16.mxu0 0
    %7271 = vmatpush1.bf16.msra.mxu0 %v7248
    %7272 = vmatprep.subr.bf16.mxu0 0
    %7273 = vmatpush1.bf16.msra.mxu0 %v7247
    %7274 = vmatprep.subr.bf16.mxu0 0
    %7275 = vmatpush2.bf16.msra.mxu0 0
    %7276 = vmatprep.subr.bf16.mxu0 0
    %7277 = vmatpush2.bf16.msra.mxu0 0
    %7278 = vmatprep.subr.bf16.mxu0 0
    %7279 = vmatpush2.bf16.msra.mxu0 0
    %7280 = vmatprep.subr.bf16.mxu0 0
    %7281 = vmatpush2.bf16.msra.mxu0 0
    %7282 = vmatprep.subr.bf16.mxu0 0
    %7283 = vmatpush2.bf16.msra.mxu0 0
    %7284 = vmatprep.subr.bf16.mxu0 0
    %7285 = vmatpush2.bf16.msra.mxu0 0
    %7286 = vmatprep.subr.bf16.mxu0 0
    %7287 = vmatpush2.bf16.msra.mxu0 0
    %7288 = vmatprep.subr.bf16.mxu0 0
    %7289 = vmatpush2.bf16.msra.mxu0 0
    %7290 = vmatprep.mubr.bf16.mxu0 0
    %7291 = vmatmul.mubr.bf16.gmra.mxu0 %v7256
    %v7292 = vpop.f32.mrf.mxu0
    %v7293 = vadd.f32 %v7226, %v7292
    %v7294 = vpop.f32.mrf.mxu0
    %v7295 = vpop.f32.mrf.mxu0
    %v7296 = vpop.f32.mrf.mxu0
    %7297 = vdwg.mxu0
    %v7298 = vld [vmem:[#allocation19] sm:$0x1]
    %v7300 = vlaneseq
    %v7301 = vshrl.u32 %v7300, 7
    %v7302 = vsub.s32 0, %v7301
    %v7303 = vrot.slane %v7298, %v7302
    %v7305 = vadd.f32 %v7293, %v7303
    %v7306 = vmax.f32 %v7305, 0.0
    %v7307 = vpack.c.bf16 %v7306, %v7306
    %v7308 = vld [vmem:[%s1] sm:$0x3]
    %v7309 = vld [vmem:[%s20] sm:$0xff]
    %v7310 = vld [vmem:[%s24] sm:$0xf]
    %v7311 = vld [vmem:[%s24 + $0x4] sm:$0xf]
    %v7312 = vld [vmem:[%s24 + $0x8] sm:$0xf]
    %v7313 = vld [vmem:[%s24 + $0xc] sm:$0xf]
    %v7314 = vld [vmem:[%s24 + $0x10] sm:$0xf]
    %v7315 = vld [vmem:[%s24 + $0x14] sm:$0xf]
    %v7316 = vld [vmem:[%s24 + $0x18] sm:$0xf]
    %v7317 = vld [vmem:[%s24 + $0x1c] sm:$0xf]
    %v7318 = vld [vmem:[%s24 + $0x20] sm:$0xf]
    %v7319 = vld [vmem:[%s24 + $0x24] sm:$0xf]
    %v7320 = vld [vmem:[%s24 + $0x28] sm:$0xf]
    %v7321 = vld [vmem:[%s24 + $0x2c] sm:$0xf]
    %v7322 = vld [vmem:[%s24 + $0x30] sm:$0xf]
    %v7323 = vld [vmem:[%s24 + $0x34] sm:$0xf]
    %v7324 = vld [vmem:[%s24 + $0x38] sm:$0xf]
    %v7325 = vld [vmem:[%s24 + $0x3c] sm:$0xf]
    %v7342 = vunpack.c.l.b16 %v7310
    %v7343 = vunpack.c.l.b16 %v7311
    %v7344 = vunpack.c.l.b16 %v7312
    %v7345 = vunpack.c.l.b16 %v7313
    %v7346 = vunpack.c.l.b16 %v7314
    %v7347 = vunpack.c.l.b16 %v7315
    %v7348 = vunpack.c.l.b16 %v7316
    %v7349 = vunpack.c.l.b16 %v7317
    %v7350 = vunpack.c.l.b16 %v7318
    %v7351 = vunpack.c.l.b16 %v7319
    %v7352 = vunpack.c.l.b16 %v7320
    %v7353 = vunpack.c.l.b16 %v7321
    %v7354 = vunpack.c.l.b16 %v7322
    %v7355 = vunpack.c.l.b16 %v7323
    %v7356 = vunpack.c.l.b16 %v7324
    %v7357 = vunpack.c.l.b16 %v7325
    %v7358 = vpack.c.b16 %v7343, %v7342
    %v7359 = vpack.c.b16 %v7345, %v7344
    %v7360 = vpack.c.b16 %v7347, %v7346
    %v7361 = vpack.c.b16 %v7349, %v7348
    %v7362 = vpack.c.b16 %v7351, %v7350
    %v7363 = vpack.c.b16 %v7353, %v7352
    %v7364 = vpack.c.b16 %v7355, %v7354
    %v7365 = vpack.c.b16 %v7357, %v7356
    %7374 = vmatprep.subr.bf16.mxu0 0
    %7375 = vmatpush1.bf16.msra.mxu0 %v7365
    %7376 = vmatprep.subr.bf16.mxu0 0
    %7377 = vmatpush1.bf16.msra.mxu0 %v7364
    %7378 = vmatprep.subr.bf16.mxu0 0
    %7379 = vmatpush1.bf16.msra.mxu0 %v7363
    %7380 = vmatprep.subr.bf16.mxu0 0
    %7381 = vmatpush1.bf16.msra.mxu0 %v7362
    %7382 = vmatprep.subr.bf16.mxu0 0
    %7383 = vmatpush1.bf16.msra.mxu0 %v7361
    %7384 = vmatprep.subr.bf16.mxu0 0
    %7385 = vmatpush1.bf16.msra.mxu0 %v7360
    %7386 = vmatprep.subr.bf16.mxu0 0
    %7387 = vmatpush1.bf16.msra.mxu0 %v7359
    %7388 = vmatprep.subr.bf16.mxu0 0
    %7389 = vmatpush1.bf16.msra.mxu0 %v7358
    %7390 = vmatprep.subr.bf16.mxu0 0
    %7391 = vmatpush2.bf16.msra.mxu0 0
    %7392 = vmatprep.subr.bf16.mxu0 0
    %7393 = vmatpush2.bf16.msra.mxu0 0
    %7394 = vmatprep.subr.bf16.mxu0 0
    %7395 = vmatpush2.bf16.msra.mxu0 0
    %7396 = vmatprep.subr.bf16.mxu0 0
    %7397 = vmatpush2.bf16.msra.mxu0 0
    %7398 = vmatprep.subr.bf16.mxu0 0
    %7399 = vmatpush2.bf16.msra.mxu0 0
    %7400 = vmatprep.subr.bf16.mxu0 0
    %7401 = vmatpush2.bf16.msra.mxu0 0
    %7402 = vmatprep.subr.bf16.mxu0 0
    %7403 = vmatpush2.bf16.msra.mxu0 0
    %7404 = vmatprep.subr.bf16.mxu0 0
    %7405 = vmatpush2.bf16.msra.mxu0 0
    %7406 = vmatprep.mubr.bf16.mxu0 0
    %7407 = vmatmul.mubr.bf16.gmra.mxu0 %v7307
    %v7408 = vpop.f32.mrf.mxu0
    %v7409 = vadd.f32 0.0, %v7408
    %v7410 = vpop.f32.mrf.mxu0
    %v7411 = vpop.f32.mrf.mxu0
    %v7412 = vpop.f32.mrf.mxu0
    %7413 = vdwg.mxu0
    %vm7414 = vcmask 64512
    %v7416 = vsel %vm7414, %v7308, 0
    %7418 = vmatprep.subr.mxu0 0.0
    %7419 = vmatpush1.msra.mxu0 0.0
    %7420 = vmatprep.subr.mxu0 0.0
    %7421 = vmatpush1.msra.mxu0 0.0
    %7422 = vmatprep.subr.mxu0 0.0
    %7423 = vmatpush1.msra.mxu0 0.0
    %7424 = vmatprep.subr.mxu0 0.0
    %7425 = vmatpush1.msra.mxu0 0.0
    %7426 = vmatprep.subr.mxu0 0.0
    %7427 = vmatpush1.msra.mxu0 0.0
    %7428 = vmatprep.subr.mxu0 0.0
    %7429 = vmatpush1.msra.mxu0 0.0
    %7430 = vmatprep.subr.mxu0 0.0
    %7431 = vmatpush1.msra.mxu0 0.0
    %7432 = vmatprep.subr.mxu0 0.0
    %7433 = vmatpush1.msra.mxu0 0.0
    %7434 = vmatprep.subr.mxu0 0.0
    %7435 = vmatpush1.msra.mxu0 0.0
    %7436 = vmatprep.subr.mxu0 0.0
    %7437 = vmatpush1.msra.mxu0 0.0
    %7438 = vmatprep.subr.mxu0 0.0
    %7439 = vmatpush1.msra.mxu0 0.0
    %7440 = vmatprep.subr.mxu0 0.0
    %7441 = vmatpush1.msra.mxu0 0.0
    %7442 = vmatprep.subr.mxu0 0.0
    %7443 = vmatpush1.msra.mxu0 0.0
    %7444 = vmatprep.subr.mxu0 0.0
    %7445 = vmatpush1.msra.mxu0 0.0
    %7446 = vmatprep.subr.mxu0 0.0
    %7447 = vmatpush1.msra.mxu0 0.0
    %7448 = vmatprep.subr.mxu0 0.0
    %7449 = vmatpush1.msra.mxu0 %v7309
    %7450 = vmatprep.subr.mxu0 0.0
    %7451 = vmatpush2.msra.mxu0 0.0
    %7452 = vmatprep.subr.mxu0 0.0
    %7453 = vmatpush2.msra.mxu0 0.0
    %7454 = vmatprep.subr.mxu0 0.0
    %7455 = vmatpush2.msra.mxu0 0.0
    %7456 = vmatprep.subr.mxu0 0.0
    %7457 = vmatpush2.msra.mxu0 0.0
    %7458 = vmatprep.subr.mxu0 0.0
    %7459 = vmatpush2.msra.mxu0 0.0
    %7460 = vmatprep.subr.mxu0 0.0
    %7461 = vmatpush2.msra.mxu0 0.0
    %7462 = vmatprep.subr.mxu0 0.0
    %7463 = vmatpush2.msra.mxu0 0.0
    %7464 = vmatprep.subr.mxu0 0.0
    %7465 = vmatpush2.msra.mxu0 0.0
    %7466 = vmatprep.subr.mxu0 0.0
    %7467 = vmatpush2.msra.mxu0 0.0
    %7468 = vmatprep.subr.mxu0 0.0
    %7469 = vmatpush2.msra.mxu0 0.0
    %7470 = vmatprep.subr.mxu0 0.0
    %7471 = vmatpush2.msra.mxu0 0.0
    %7472 = vmatprep.subr.mxu0 0.0
    %7473 = vmatpush2.msra.mxu0 0.0
    %7474 = vmatprep.subr.mxu0 0.0
    %7475 = vmatpush2.msra.mxu0 0.0
    %7476 = vmatprep.subr.mxu0 0.0
    %7477 = vmatpush2.msra.mxu0 0.0
    %7478 = vmatprep.subr.mxu0 0.0
    %7479 = vmatpush2.msra.mxu0 0.0
    %7480 = vmatprep.subr.mxu0 0.0
    %7481 = vmatpush2.msra.mxu0 0.0
    %7482 = vmatprep.mubr.f32.mxu0 0.0
    %7483 = vmatmul.mubr.f32.gmra.mxu0 %v7416
    %v7484 = vpop.f32.mrf.mxu0
    %v7485 = vadd.f32 %v7409, %v7484
    %v7486 = vpop.f32.mrf.mxu0
    %7487 = vdwg.mxu0
    %v7488 = vld [vmem:[#allocation20] sm:$0x1]
    %v7490 = vlaneseq
    %v7491 = vshrl.u32 %v7490, 7
    %v7492 = vsub.s32 0, %v7491
    %v7493 = vrot.slane %v7488, %v7492
    %v7495 = vadd.f32 %v7485, %v7493
    %vm7496 = vcmask 25600
    %7497 = vst.msk [vmem:[#allocation22] sm:$0x3] %vm7496, %v7495
    // Predicated region
    $region154: #{dqn_forward.1} parent=1 // pred_check
      _
    $region155: #{dqn_forward.1} parent=1 // pred_check_branch
      %7499 = sbr.rel (0) target = $region157
    $region156: #{dqn_forward.1} parent=1 // pred_region
      %s7501 = ssub.s32 32, 32
      %7502 = vsyncadd [#allocation4], %s7501
      %s7504 = sshll.u32 [#allocation22], 4
      %s7505 = int_to_ptr.vmem [resolvable:$true] %s7504
      %7507 = dma.vmem_to_hbm [thread:$0]  %s7505, 32, %s26, [#allocation4]
    $region157: #{dqn_forward.1} parent=1 // pred_fallthru
      _
    // Predicated region
    $region158: #{dqn_forward.1} parent=1 // pred_check
      _
    $region159: #{dqn_forward.1} parent=1 // pred_check_branch
      %7509 = sbr.rel (0) target = $region161
    $region160: #{dqn_forward.1} parent=1 // pred_region
      %7510 = dma.done [#allocation4], 32
    $region161: #{dqn_forward.1} parent=1 // pred_fallthru
      _
    %7511 = vsyncpa [#allocation3], 1
    %7512 = vsyncpa [#allocation6], 1
    %7513 = vsyncpa [#allocation9], 1
    %7514 = vsyncpa [#allocation12], 1
    %7515 = vsyncpa [#allocation15], 1
    %7516 = vsyncpa [#allocation18], 1
    %7517 = vsyncpa [#allocation21], 1
    %7518 = vsyncpa [#allocation4], 1

</llo_original>
